<compile_context>
chip_gen: v5e
topology: v5e:2x2
jax: 0.10.0
libtpu: 0.0.40
codegen_flags: <defaults>
</compile_context>

<pallas_src>
import functools

import numpy as np
import jax
import jax.numpy as jnp
from jax import lax
from jax.experimental import pallas as pl
from jax.experimental.pallas import tpu as pltpu


# ----------------------------------------------------------------------------
# Small helpers
# ----------------------------------------------------------------------------
def _round_up(n, m):
    return ((n + m - 1) // m) * m


_B_TILE_CAP = None


def _b_tile_cap():
    """MXU-row-filling batch tile: 16 on v5e (128x128 MXU), 32 on v6e/v7x."""
    global _B_TILE_CAP
    if _B_TILE_CAP is None:
        cap = 32
        try:
            kind = jax.devices()[0].device_kind.lower()
            if "v5 lite" in kind or "v5lite" in kind or "v5e" in kind:
                cap = 16
        except Exception:
            pass
        _B_TILE_CAP = cap
    return _B_TILE_CAP


def _choose_b_tile(N):
    cap = _b_tile_cap()
    bt = min(cap, _round_up(N, 8))
    # prefer >= 2 grid steps (v7x has 2 TensorCores) when the batch allows it
    if bt > 8 and _round_up(N, bt) // bt < 2:
        bt = max(8, min(bt, _round_up((N + 1) // 2, 8)))
    return bt


# ----------------------------------------------------------------------------
# Input / weight preparation (done once per call under jit; exact until the
# final bf16 cast)
# ----------------------------------------------------------------------------
def _prep_input(x, S, B):
    """(N,1,S,S,S) -> bf16 (NB, S*B, 5*(S+4)^2) conv1 GEMM LHS blocks.

    Per block the row order is (d&1, d//2, sample) so pool1's D reduction is a
    single aligned half-vs-half maximum; the 5 kd taps are concatenated along K
    so conv1 is a single GEMM.
    """
    N = x.shape[0]
    P = S + 4
    S2 = S // 2
    N_pad = _round_up(N, B)
    NB = N_pad // B
    x = x.reshape(N, S, S, S)
    if N_pad != N:
        x = jnp.pad(x, ((0, N_pad - N), (0, 0), (0, 0), (0, 0)))
    xpad = jnp.pad(x, ((0, 0), (2, 2), (2, 2), (2, 2)))                # (Np,P,P,P)
    taps = jnp.stack([xpad[:, kd:kd + S] for kd in range(5)], axis=2)  # (Np,S,5,P,P)
    x1 = taps.reshape(NB, B, S2, 2, 5 * P * P)                         # (nb,n,d2,dpar,K)
    x1 = jnp.transpose(x1, (0, 3, 2, 1, 4))                            # (nb,dpar,d2,n,K)
    return x1.reshape(NB, S * B, 5 * P * P).astype(jnp.bfloat16)


def _prep_conv1_weight(w1, S):
    """(C1,1,5,5,5) -> (5*(S+4)^2, 4*(S/2)^2*C1) masked GEMM weight.

    Row order (kd, hp, wp); column order (hpar, wpar, h2, w2, co) so 2x2 H/W
    pooling of the GEMM output is a max over 4 lane-aligned column chunks.
    """
    K = 5
    P = S + 4
    S2 = S // 2
    C1 = w1.shape[0]
    w1t = jnp.transpose(w1[:, 0], (1, 2, 3, 0))                # (5,5,5,C1) [kd,kh,kw,co]
    pos = jnp.arange(P)[:, None] - jnp.arange(S)[None, :]      # hp - h (== kh)
    valid = (pos >= 0) & (pos < K)
    idx = jnp.clip(pos, 0, K - 1)
    g = w1t[:, idx]                                            # (5,P,S,5,C1)   [kd,hp,h,kw,co]
    g = g[:, :, :, idx]                                        # (5,P,S,P,S,C1) [kd,hp,h,wp,w,co]
    m = valid[:, :, None, None] & valid[None, None, :, :]      # (P,S,P,S)      [hp,h,wp,w]
    g = g * m[None, :, :, :, :, None].astype(g.dtype)
    g = g.reshape(K, P, S2, 2, P, S2, 2, C1)                   # [kd,hp,h2,hpar,wp,w2,wpar,co]
    g = jnp.transpose(g, (0, 1, 4, 3, 6, 2, 5, 7))             # [kd,hp,wp,hpar,wpar,h2,w2,co]
    return g.reshape(K * P * P, 4 * S2 * S2 * C1)


def _prep_conv2_weight(w2, S2):
    """(C2,C1,3,3,3) -> (3, S2^2*C1, 4*(S2/2)^2*C2) masked GEMM weights.

    Row order (hi, wi, ci) (= pooled conv1 column order); column order
    (hpar, wpar, h4, w4, co) for lane-aligned 2x2 H/W pooling.
    """
    K = 3
    S4 = S2 // 2
    C2, C1 = w2.shape[0], w2.shape[1]
    w2t = jnp.transpose(w2, (2, 3, 4, 1, 0))                   # (3,3,3,C1,C2) [kd,kh,kw,ci,co]
    pos = jnp.arange(S2)[:, None] - jnp.arange(S2)[None, :] + 1
    valid = (pos >= 0) & (pos < K)
    idx = jnp.clip(pos, 0, K - 1)
    g = w2t[:, idx]                                            # (3,S2,S2,3,C1,C2)     [kd,hi,h,kw,ci,co]
    g = g[:, :, :, idx]                                        # (3,S2,S2,S2,S2,C1,C2) [kd,hi,h,wi,w,ci,co]
    m = valid[:, :, None, None] & valid[None, None, :, :]      # (S2,S2,S2,S2)         [hi,h,wi,w]
    g = g * m[None, :, :, :, :, None, None].astype(g.dtype)
    g = g.reshape(K, S2, S4, 2, S2, S4, 2, C1, C2)             # [kd,hi,h4,hpar,wi,w4,wpar,ci,co]
    g = jnp.transpose(g, (0, 1, 4, 7, 3, 6, 2, 5, 8))          # [kd,hi,wi,ci,hpar,wpar,h4,w4,co]
    return g.reshape(K, S2 * S2 * C1, 4 * S4 * S4 * C2)


def _prep_fc_weight(wfc, S4, C2):
    """(n_out, C2*S4^3) (PyTorch NCDHW flatten) -> (S4^3*C2, n_out) kernel order."""
    n_out = wfc.shape[0]
    w = wfc.reshape(n_out, C2, S4, S4, S4)
    w = jnp.transpose(w, (2, 3, 4, 1, 0))                      # (d,h,w,co,n_out)
    return w.reshape(S4 * S4 * S4 * C2, n_out)


# ----------------------------------------------------------------------------
# Fused Pallas kernel: conv1+ReLU -> pool1 -> conv2+ReLU -> pool2 -> fc
# ----------------------------------------------------------------------------
def _nettest_kernel(x_ref, w1_ref, w2_ref, wfc_ref, *rest,
                    S, C1, C2, B, want_feat):
    if want_feat:
        out_ref, feat_ref, xp2_ref = rest
    else:
        out_ref, xp2_ref = rest
        feat_ref = None

    S2, S4 = S // 2, S // 4
    Q1 = S2 * S2 * C1            # pooled conv1 plane size  (h2, w2, c1)
    Q2 = S4 * S4 * C2            # pooled conv2 plane size  (h4, w4, c2)
    half = S2 * B                # rows in one D-parity half / one pooled D stack

    # ---- conv1 + ReLU: single GEMM, M=S*B rows (dpar, d2, n), K=5*(S+4)^2 -----
    acc1 = jnp.dot(x_ref[0], w1_ref[...], preferred_element_type=jnp.float32)
    acc1 = jnp.maximum(acc1, 0.0)

    # ---- maxpool1: H/W = max of 4 lane-aligned parity chunks; D = max of the
    #      two sublane-aligned dpar halves --------------------------------------
    hw1 = jnp.maximum(jnp.maximum(acc1[:, 0 * Q1:1 * Q1], acc1[:, 1 * Q1:2 * Q1]),
                      jnp.maximum(acc1[:, 2 * Q1:3 * Q1], acc1[:, 3 * Q1:4 * Q1]))
    pooled1 = jnp.maximum(hw1[0:half, :], hw1[half:2 * half, :])    # rows (d2, n)

    # ---- stage D-padded conv2 input (bf16 for the MXU).  Pad rows rewritten
    #      every step: scratch is per-core and never zero-initialised. ----------
    zeros_b = jnp.zeros((B, Q1), dtype=xp2_ref.dtype)
    xp2_ref[0:B, :] = zeros_b
    xp2_ref[(S2 + 1) * B:(S2 + 2) * B, :] = zeros_b
    xp2_ref[B:B + half, :] = pooled1.astype(xp2_ref.dtype)

    # ---- conv2 + ReLU: 3 tap GEMMs on B-row-aligned shifted slices ------------
    acc2 = jnp.dot(xp2_ref[0:half, :], w2_ref[0],
                   preferred_element_type=jnp.float32)
    acc2 = acc2 + jnp.dot(xp2_ref[B:B + half, :], w2_ref[1],
                          preferred_element_type=jnp.float32)
    acc2 = acc2 + jnp.dot(xp2_ref[2 * B:2 * B + half, :], w2_ref[2],
                          preferred_element_type=jnp.float32)
    acc2 = jnp.maximum(acc2, 0.0)

    # ---- maxpool2 (lane-aligned H/W, aligned D pairs) + fc --------------------
    hw2 = jnp.maximum(jnp.maximum(acc2[:, 0 * Q2:1 * Q2], acc2[:, 1 * Q2:2 * Q2]),
                      jnp.maximum(acc2[:, 2 * Q2:3 * Q2], acc2[:, 3 * Q2:4 * Q2]))
    logits = None
    for d4 in range(S4):
        lo = 2 * d4 * B
        slab = jnp.maximum(hw2[lo:lo + B, :], hw2[lo + B:lo + 2 * B, :])  # (B, Q2)
        if want_feat:
            feat_ref[:, d4 * Q2:(d4 + 1) * Q2] = slab
        part = jnp.dot(slab.astype(wfc_ref.dtype),
                       wfc_ref[d4 * Q2:(d4 + 1) * Q2, :],
                       preferred_element_type=jnp.float32)
        logits = part if logits is None else logits + part
    out_ref[...] = logits


# ----------------------------------------------------------------------------
# Wrapper
# ----------------------------------------------------------------------------
@functools.partial(jax.jit, static_argnums=(4, 5))
def _forward_impl(x, w_conv1, w_conv2, w_fc1, want_feat, single_buffer_weights):
    assert x.ndim == 5 and x.shape[1] == 1
    N = x.shape[0]
    S = x.shape[2]
    assert S % 4 == 0, "input_size must be divisible by 4"
    S2, S4 = S // 2, S // 4
    C1, C2 = w_conv1.shape[0], w_conv2.shape[0]
    n_out = w_fc1.shape[0]
    P = S + 4
    Q1 = S2 * S2 * C1
    Q2 = S4 * S4 * C2
    n_feat = S4 * Q2

    B = _choose_b_tile(N)
    assert B % 8 == 0
    N_pad = _round_up(N, B)
    NB = N_pad // B
    # NOTE: lane-alignment of the pooling chunks (Q1, Q2 multiples of 128) holds
    # for the default (S=8, C1=16, C2=32); other configs stay correct but may
    # pay lane-realignment cost.

    x1 = _prep_input(x, S, B)
    w1p = _prep_conv1_weight(w_conv1, S).astype(jnp.bfloat16)
    w2p = _prep_conv2_weight(w_conv2, S2).astype(jnp.bfloat16)
    wfcp = _prep_fc_weight(w_fc1, S4, C2).astype(jnp.bfloat16)

    kernel = functools.partial(_nettest_kernel, S=S, C1=C1, C2=C2, B=B,
                               want_feat=want_feat)

    # grid-invariant weights: single-buffer to halve their resident VMEM
    wkw = {"pipeline_mode": pl.Buffered(1)} if single_buffer_weights else {}
    in_specs = [
        pl.BlockSpec((1, S * B, 5 * P * P), lambda i: (i, 0, 0)),
        pl.BlockSpec((5 * P * P, 4 * Q1), lambda i: (0, 0), **wkw),
        pl.BlockSpec((3, Q1, 4 * Q2), lambda i: (0, 0, 0), **wkw),
        pl.BlockSpec((n_feat, n_out), lambda i: (0, 0), **wkw),
    ]
    out_spec = pl.BlockSpec((B, n_out), lambda i: (i, 0))
    out_shape = jax.ShapeDtypeStruct((N_pad, n_out), jnp.float32)
    if want_feat:
        out_specs = (out_spec, pl.BlockSpec((B, n_feat), lambda i: (i, 0)))
        out_shapes = (out_shape, jax.ShapeDtypeStruct((N_pad, n_feat), jnp.float32))
    else:
        out_specs = out_spec
        out_shapes = out_shape

    grid_spec = pltpu.PrefetchScalarGridSpec(
        num_scalar_prefetch=0,
        grid=(NB,),
        in_specs=in_specs,
        out_specs=out_specs,
        scratch_shapes=[pltpu.VMEM(((S2 + 2) * B, Q1), jnp.bfloat16)],
    )
    res = pl.pallas_call(
        kernel,
        grid_spec=grid_spec,
        out_shape=out_shapes,
        compiler_params=pltpu.CompilerParams(
            dimension_semantics=("parallel",),
            vmem_limit_bytes=48 * 1024 * 1024),
    )(x1, w1p, w2p, wfcp)

    if want_feat:
        out, feat = res
        out = out[:N]
        # kernel feature order is (d,h,w,co); PyTorch flatten order is (co,d,h,w)
        feat = feat[:N].reshape(N, S4, S4, S4, C2)
        feat = jnp.transpose(feat, (0, 4, 1, 2, 3)).reshape(N, n_feat)
        return out, feat
    return res[:N]


def net_test_forward(x, params, fin_feature=None):
    """Matches NetTest.forward: (N,1,S,S,S) -> logits (N,2) [, flattened features]."""
    want = fin_feature is not None
    args = (x, params["w_conv1"], params["w_conv2"], params["w_fc1"])
    try:
        return _forward_impl(*args, want, True)
    except Exception:
        # pl.Buffered(1) (single-buffered weights) unsupported on this jax
        # version -> fall back to default double-buffering.
        return _forward_impl(*args, want, False)


# ----------------------------------------------------------------------------
# Pure-JAX reference (mirrors the PyTorch ops) for validation
# ----------------------------------------------------------------------------
def reference_forward(x, params, return_feat=False):
    dn = ("NCDHW", "OIDHW", "NCDHW")
    out = lax.conv_general_dilated(
        x, params["w_conv1"], (1, 1, 1), [(2, 2)] * 3,
        dimension_numbers=dn, precision=lax.Precision.HIGHEST)
    out = jnp.maximum(out, 0.0)
    out = lax.reduce_window(out, -jnp.inf, lax.max,
                            (1, 1, 2, 2, 2), (1, 1, 2, 2, 2), "VALID")
    out = lax.conv_general_dilated(
        out, params["w_conv2"], (1, 1, 1), [(1, 1)] * 3,
        dimension_numbers=dn, precision=lax.Precision.HIGHEST)
    out = jnp.maximum(out, 0.0)
    out = lax.reduce_window(out, -jnp.inf, lax.max,
                            (1, 1, 2, 2, 2), (1, 1, 2, 2, 2), "VALID")
    feat = out.reshape(out.shape[0], -1)
    logits = jnp.dot(feat, params["w_fc1"].T, precision=lax.Precision.HIGHEST)
    if return_feat:
        return logits, feat
    return logits


# ----------------------------------------------------------------------------
if __name__ == "__main__":
    input_size = 8          # spatial size (must be divisible by 4)
    batch = 2

    key = jax.random.PRNGKey(0)
    k1, k2, k3, kx = jax.random.split(key, 4)
    params = {
        "w_conv1": jax.random.normal(k1, (16, 1, 5, 5, 5), jnp.float32) * 0.01,
        "w_conv2": jax.random.normal(k2, (32, 16, 3, 3, 3), jnp.float32) * 0.01,
        "w_fc1": jax.random.normal(
            k3, (2, (input_size // 4) ** 3 * 32), jnp.float32) * 0.01,
    }
    x = jax.random.normal(kx, (batch, 1, input_size, input_size, input_size),
                          jnp.float32)

    # logits-only path (common case: no feature writeback)
    out = jax.block_until_ready(net_test_forward(x, params))
    assert out.shape == (batch, 2) and out.dtype == jnp.float32
    ref = jax.block_until_ready(reference_forward(x, params))
    # bf16 MXU operands (== default MXU precision) vs f32 HIGHEST reference.
    np.testing.assert_allclose(np.asarray(out), np.asarray(ref),
                               rtol=2e-2, atol=1e-3)

    # feature-returning path
    out2, feat = net_test_forward(x, params, fin_feature=True)
    out2, feat = jax.block_until_ready((out2, feat))
    ref2, ref_feat = reference_forward(x, params, return_feat=True)
    assert feat.shape == (batch, (input_size // 4) ** 3 * 32)
    np.testing.assert_allclose(np.asarray(out2), np.asarray(out),
                               rtol=1e-5, atol=1e-6)
    np.testing.assert_allclose(np.asarray(feat), np.asarray(ref_feat),
                               rtol=2e-2, atol=1e-3)

    # multi-grid-step / batch-padding path (exercises scratch reuse across steps)
    xb = jax.random.normal(jax.random.PRNGKey(1),
                           (10, 1, input_size, input_size, input_size), jnp.float32)
    outb = jax.block_until_ready(net_test_forward(xb, params))
    refb = jax.block_until_ready(reference_forward(xb, params))
    np.testing.assert_allclose(np.asarray(outb), np.asarray(refb),
                               rtol=2e-2, atol=1e-3)

    print("KERNEL_OK")
</pallas_src>

<mosaic_0001>
module attributes {stable_mosaic.version = 11 : i64} {
  func.func @_nettest_kernel(%arg0: i32, %arg1: memref<1x64x720xbf16, #tpu.memory_space<vmem>>, %arg2: memref<720x1024xbf16, #tpu.memory_space<vmem>>, %arg3: memref<3x256x512xbf16, #tpu.memory_space<vmem>>, %arg4: memref<256x2xbf16, #tpu.memory_space<vmem>>, %arg5: memref<8x2xf32, #tpu.memory_space<vmem>>, %arg6: memref<48x256xbf16, #tpu.memory_space<vmem>>) attributes {dimension_semantics = [#tpu.dimension_semantics<parallel>], iteration_bounds = array<i64: 1>, scalar_prefetch = 0 : i64, scratch_operands = 1 : i64, tpu.core_type = #tpu.core_type<tc>, window_params = [{transform_indices = @transform_0, window_bounds = array<i64: 1, 64, 720>}, {pipeline_mode = #tpu.pipeline_mode<synchronous>, transform_indices = @transform_1, window_bounds = array<i64: 720, 1024>}, {pipeline_mode = #tpu.pipeline_mode<synchronous>, transform_indices = @transform_2, window_bounds = array<i64: 3, 256, 512>}, {pipeline_mode = #tpu.pipeline_mode<synchronous>, transform_indices = @transform_3, window_bounds = array<i64: 256, 2>}, {transform_indices = @transform_4, window_bounds = array<i64: 8, 2>}]} {
    %c0 = arith.constant 0 : index
    %c0_0 = arith.constant 0 : index
    %c0_1 = arith.constant 0 : index
    %0 = vector.load %arg1[%c0, %c0_0, %c0_1] : memref<1x64x720xbf16, #tpu.memory_space<vmem>>, vector<1x64x720xbf16>
    %1 = vector.shape_cast %0 : vector<1x64x720xbf16> to vector<64x720xbf16>
    %c0_2 = arith.constant 0 : index
    %c0_3 = arith.constant 0 : index
    %2 = vector.load %arg2[%c0_2, %c0_3] : memref<720x1024xbf16, #tpu.memory_space<vmem>>, vector<720x1024xbf16>
    %cst = arith.constant dense<0.000000e+00> : vector<64x1024xf32>
    %3 = tpu.matmul %1, %2, %cst {dimension_numbers = #tpu.dot_dimension_numbers<[1], [0], [0], [1], [0, 0, 1, 1], [], []>} : vector<64x720xbf16>, vector<720x1024xbf16>, vector<64x1024xf32> -> vector<64x1024xf32>
    %cst_4 = arith.constant 0.000000e+00 : f32
    %4 = vector.broadcast %cst_4 : f32 to vector<64x1024xf32>
    %5 = arith.maximumf %3, %4 : vector<64x1024xf32>
    %6 = vector.extract_strided_slice %5 {offsets = [0, 0], sizes = [64, 256], strides = [1, 1]} : vector<64x1024xf32> to vector<64x256xf32>
    %7 = vector.extract_strided_slice %5 {offsets = [0, 256], sizes = [64, 256], strides = [1, 1]} : vector<64x1024xf32> to vector<64x256xf32>
    %8 = arith.maximumf %6, %7 : vector<64x256xf32>
    %9 = vector.extract_strided_slice %5 {offsets = [0, 512], sizes = [64, 256], strides = [1, 1]} : vector<64x1024xf32> to vector<64x256xf32>
    %10 = vector.extract_strided_slice %5 {offsets = [0, 768], sizes = [64, 256], strides = [1, 1]} : vector<64x1024xf32> to vector<64x256xf32>
    %11 = arith.maximumf %9, %10 : vector<64x256xf32>
    %12 = arith.maximumf %8, %11 : vector<64x256xf32>
    %13 = vector.extract_strided_slice %12 {offsets = [0, 0], sizes = [32, 256], strides = [1, 1]} : vector<64x256xf32> to vector<32x256xf32>
    %14 = vector.extract_strided_slice %12 {offsets = [32, 0], sizes = [32, 256], strides = [1, 1]} : vector<64x256xf32> to vector<32x256xf32>
    %15 = arith.maximumf %13, %14 : vector<32x256xf32>
    %cst_5 = arith.constant 0.000000e+00 : bf16
    %16 = vector.broadcast %cst_5 : bf16 to vector<8x256xbf16>
    %c0_6 = arith.constant 0 : index
    %c0_7 = arith.constant 0 : index
    %17 = vector.load %arg6[%c0_6, %c0_7] : memref<48x256xbf16, #tpu.memory_space<vmem>>, vector<8x256xbf16>
    tpu.vector_store %arg6[%c0_6, %c0_7], %16 {strides = array<i32>} : memref<48x256xbf16, #tpu.memory_space<vmem>>, vector<8x256xbf16>,
    %c40 = arith.constant 40 : index
    %c0_8 = arith.constant 0 : index
    %18 = vector.load %arg6[%c40, %c0_8] : memref<48x256xbf16, #tpu.memory_space<vmem>>, vector<8x256xbf16>
    tpu.vector_store %arg6[%c40, %c0_8], %16 {strides = array<i32>} : memref<48x256xbf16, #tpu.memory_space<vmem>>, vector<8x256xbf16>,
    %19 = arith.truncf %15 : vector<32x256xf32> to vector<32x256xbf16>
    %c8 = arith.constant 8 : index
    %c0_9 = arith.constant 0 : index
    %20 = vector.load %arg6[%c8, %c0_9] : memref<48x256xbf16, #tpu.memory_space<vmem>>, vector<32x256xbf16>
    tpu.vector_store %arg6[%c8, %c0_9], %19 {strides = array<i32>} : memref<48x256xbf16, #tpu.memory_space<vmem>>, vector<32x256xbf16>,
    %c0_10 = arith.constant 0 : index
    %c0_11 = arith.constant 0 : index
    %21 = vector.load %arg6[%c0_10, %c0_11] : memref<48x256xbf16, #tpu.memory_space<vmem>>, vector<32x256xbf16>
    %c0_12 = arith.constant 0 : index
    %c0_13 = arith.constant 0 : index
    %c0_14 = arith.constant 0 : index
    %22 = vector.load %arg3[%c0_12, %c0_13, %c0_14] : memref<3x256x512xbf16, #tpu.memory_space<vmem>>, vector<1x256x512xbf16>
    %23 = vector.shape_cast %22 : vector<1x256x512xbf16> to vector<256x512xbf16>
    %cst_15 = arith.constant dense<0.000000e+00> : vector<32x512xf32>
    %24 = tpu.matmul %21, %23, %cst_15 {dimension_numbers = #tpu.dot_dimension_numbers<[1], [0], [0], [1], [0, 0, 1, 1], [], []>} : vector<32x256xbf16>, vector<256x512xbf16>, vector<32x512xf32> -> vector<32x512xf32>
    %c8_16 = arith.constant 8 : index
    %c0_17 = arith.constant 0 : index
    %25 = vector.load %arg6[%c8_16, %c0_17] : memref<48x256xbf16, #tpu.memory_space<vmem>>, vector<32x256xbf16>
    %c1 = arith.constant 1 : index
    %c0_18 = arith.constant 0 : index
    %c0_19 = arith.constant 0 : index
    %26 = vector.load %arg3[%c1, %c0_18, %c0_19] : memref<3x256x512xbf16, #tpu.memory_space<vmem>>, vector<1x256x512xbf16>
    %27 = vector.shape_cast %26 : vector<1x256x512xbf16> to vector<256x512xbf16>
    %cst_20 = arith.constant dense<0.000000e+00> : vector<32x512xf32>
    %28 = tpu.matmul %25, %27, %cst_20 {dimension_numbers = #tpu.dot_dimension_numbers<[1], [0], [0], [1], [0, 0, 1, 1], [], []>} : vector<32x256xbf16>, vector<256x512xbf16>, vector<32x512xf32> -> vector<32x512xf32>
    %29 = arith.addf %24, %28 : vector<32x512xf32>
    %c16 = arith.constant 16 : index
    %c0_21 = arith.constant 0 : index
    %30 = vector.load %arg6[%c16, %c0_21] : memref<48x256xbf16, #tpu.memory_space<vmem>>, vector<32x256xbf16>
    %c2 = arith.constant 2 : index
    %c0_22 = arith.constant 0 : index
    %c0_23 = arith.constant 0 : index
    %31 = vector.load %arg3[%c2, %c0_22, %c0_23] : memref<3x256x512xbf16, #tpu.memory_space<vmem>>, vector<1x256x512xbf16>
    %32 = vector.shape_cast %31 : vector<1x256x512xbf16> to vector<256x512xbf16>
    %cst_24 = arith.constant dense<0.000000e+00> : vector<32x512xf32>
    %33 = tpu.matmul %30, %32, %cst_24 {dimension_numbers = #tpu.dot_dimension_numbers<[1], [0], [0], [1], [0, 0, 1, 1], [], []>} : vector<32x256xbf16>, vector<256x512xbf16>, vector<32x512xf32> -> vector<32x512xf32>
    %34 = arith.addf %29, %33 : vector<32x512xf32>
    %cst_25 = arith.constant 0.000000e+00 : f32
    %35 = vector.broadcast %cst_25 : f32 to vector<32x512xf32>
    %36 = arith.maximumf %34, %35 : vector<32x512xf32>
    %37 = vector.extract_strided_slice %36 {offsets = [0, 0], sizes = [32, 128], strides = [1, 1]} : vector<32x512xf32> to vector<32x128xf32>
    %38 = vector.extract_strided_slice %36 {offsets = [0, 128], sizes = [32, 128], strides = [1, 1]} : vector<32x512xf32> to vector<32x128xf32>
    %39 = arith.maximumf %37, %38 : vector<32x128xf32>
    %40 = vector.extract_strided_slice %36 {offsets = [0, 256], sizes = [32, 128], strides = [1, 1]} : vector<32x512xf32> to vector<32x128xf32>
    %41 = vector.extract_strided_slice %36 {offsets = [0, 384], sizes = [32, 128], strides = [1, 1]} : vector<32x512xf32> to vector<32x128xf32>
    %42 = arith.maximumf %40, %41 : vector<32x128xf32>
    %43 = arith.maximumf %39, %42 : vector<32x128xf32>
    %44 = vector.extract_strided_slice %43 {offsets = [0, 0], sizes = [8, 128], strides = [1, 1]} : vector<32x128xf32> to vector<8x128xf32>
    %45 = vector.extract_strided_slice %43 {offsets = [8, 0], sizes = [8, 128], strides = [1, 1]} : vector<32x128xf32> to vector<8x128xf32>
    %46 = arith.maximumf %44, %45 : vector<8x128xf32>
    %47 = arith.truncf %46 : vector<8x128xf32> to vector<8x128xbf16>
    %c0_26 = arith.constant 0 : index
    %c0_27 = arith.constant 0 : index
    %48 = vector.load %arg4[%c0_26, %c0_27] : memref<256x2xbf16, #tpu.memory_space<vmem>>, vector<128x2xbf16>
    %cst_28 = arith.constant dense<0.000000e+00> : vector<8x2xf32>
    %49 = tpu.matmul %47, %48, %cst_28 {dimension_numbers = #tpu.dot_dimension_numbers<[1], [0], [0], [1], [0, 0, 1, 1], [], []>} : vector<8x128xbf16>, vector<128x2xbf16>, vector<8x2xf32> -> vector<8x2xf32>
    %50 = vector.extract_strided_slice %43 {offsets = [16, 0], sizes = [8, 128], strides = [1, 1]} : vector<32x128xf32> to vector<8x128xf32>
    %51 = vector.extract_strided_slice %43 {offsets = [24, 0], sizes = [8, 128], strides = [1, 1]} : vector<32x128xf32> to vector<8x128xf32>
    %52 = arith.maximumf %50, %51 : vector<8x128xf32>
    %53 = arith.truncf %52 : vector<8x128xf32> to vector<8x128xbf16>
    %c128 = arith.constant 128 : index
    %c0_29 = arith.constant 0 : index
    %54 = vector.load %arg4[%c128, %c0_29] : memref<256x2xbf16, #tpu.memory_space<vmem>>, vector<128x2xbf16>
    %cst_30 = arith.constant dense<0.000000e+00> : vector<8x2xf32>
    %55 = tpu.matmul %53, %54, %cst_30 {dimension_numbers = #tpu.dot_dimension_numbers<[1], [0], [0], [1], [0, 0, 1, 1], [], []>} : vector<8x128xbf16>, vector<128x2xbf16>, vector<8x2xf32> -> vector<8x2xf32>
    %56 = arith.addf %49, %55 : vector<8x2xf32>
    %c0_31 = arith.constant 0 : index
    %c0_32 = arith.constant 0 : index
    %57 = vector.load %arg5[%c0_31, %c0_32] : memref<8x2xf32, #tpu.memory_space<vmem>>, vector<8x2xf32>
    tpu.vector_store %arg5[%c0_31, %c0_32], %56 {strides = array<i32>} : memref<8x2xf32, #tpu.memory_space<vmem>>, vector<8x2xf32>,
    return
  }
  func.func @transform_0(%arg0: i32) -> (i32, i32, i32) {
    %c0_i32 = arith.constant 0 : i32
    %c0_i32_0 = arith.constant 0 : i32
    %c0_i32_1 = arith.constant 0 : i32
    return %arg0, %c0_i32, %c0_i32_0 : i32, i32, i32
  }
  func.func @transform_1(%arg0: i32) -> (i32, i32) {
    %c0_i32 = arith.constant 0 : i32
    %c0_i32_0 = arith.constant 0 : i32
    %c0_i32_1 = arith.constant 0 : i32
    return %c0_i32, %c0_i32_0 : i32, i32
  }
  func.func @transform_2(%arg0: i32) -> (i32, i32, i32) {
    %c0_i32 = arith.constant 0 : i32
    %c0_i32_0 = arith.constant 0 : i32
    %c0_i32_1 = arith.constant 0 : i32
    %c0_i32_2 = arith.constant 0 : i32
    return %c0_i32, %c0_i32_0, %c0_i32_1 : i32, i32, i32
  }
  func.func @transform_3(%arg0: i32) -> (i32, i32) {
    %c0_i32 = arith.constant 0 : i32
    %c0_i32_0 = arith.constant 0 : i32
    %c0_i32_1 = arith.constant 0 : i32
    return %c0_i32, %c0_i32_0 : i32, i32
  }
  func.func @transform_4(%arg0: i32) -> (i32, i32) {
    %c0_i32 = arith.constant 0 : i32
    %c0_i32_0 = arith.constant 0 : i32
    return %arg0, %c0_i32 : i32, i32
  }
}

module attributes {stable_mosaic.version = 11 : i64} {
  func.func @_nettest_kernel(%arg0: i32, %arg1: memref<1x64x720xbf16, #tpu.memory_space<vmem>>, %arg2: memref<720x1024xbf16, #tpu.memory_space<vmem>>, %arg3: memref<3x256x512xbf16, #tpu.memory_space<vmem>>, %arg4: memref<256x2xbf16, #tpu.memory_space<vmem>>, %arg5: memref<8x2xf32, #tpu.memory_space<vmem>>, %arg6: memref<48x256xbf16, #tpu.memory_space<vmem>>) attributes {dimension_semantics = [#tpu.dimension_semantics<parallel>], iteration_bounds = array<i64: 1>, scalar_prefetch = 0 : i64, scratch_operands = 1 : i64, tpu.core_type = #tpu.core_type<tc>, window_params = [{transform_indices = @transform_0, window_bounds = array<i64: 1, 64, 720>}, {pipeline_mode = #tpu.pipeline_mode<synchronous>, transform_indices = @transform_1, window_bounds = array<i64: 720, 1024>}, {pipeline_mode = #tpu.pipeline_mode<synchronous>, transform_indices = @transform_2, window_bounds = array<i64: 3, 256, 512>}, {pipeline_mode = #tpu.pipeline_mode<synchronous>, transform_indices = @transform_3, window_bounds = array<i64: 256, 2>}, {transform_indices = @transform_4, window_bounds = array<i64: 8, 2>}]} {
    %c0 = arith.constant 0 : index
    %c0_0 = arith.constant 0 : index
    %c0_1 = arith.constant 0 : index
    %0 = vector.load %arg1[%c0, %c0_0, %c0_1] : memref<1x64x720xbf16, #tpu.memory_space<vmem>>, vector<1x64x720xbf16>
    %1 = vector.shape_cast %0 : vector<1x64x720xbf16> to vector<64x720xbf16>
    %c0_2 = arith.constant 0 : index
    %c0_3 = arith.constant 0 : index
    %2 = vector.load %arg2[%c0_2, %c0_3] : memref<720x1024xbf16, #tpu.memory_space<vmem>>, vector<720x1024xbf16>
    %cst = arith.constant dense<0.000000e+00> : vector<64x1024xf32>
    %3 = tpu.matmul %1, %2, %cst {dimension_numbers = #tpu.dot_dimension_numbers<[1], [0], [0], [1], [0, 0, 1, 1], [], []>} : vector<64x720xbf16>, vector<720x1024xbf16>, vector<64x1024xf32> -> vector<64x1024xf32>
    %cst_4 = arith.constant 0.000000e+00 : f32
    %4 = vector.broadcast %cst_4 : f32 to vector<64x1024xf32>
    %5 = arith.maximumf %3, %4 : vector<64x1024xf32>
    %6 = vector.extract_strided_slice %5 {offsets = [0, 0], sizes = [64, 256], strides = [1, 1]} : vector<64x1024xf32> to vector<64x256xf32>
    %7 = vector.extract_strided_slice %5 {offsets = [0, 256], sizes = [64, 256], strides = [1, 1]} : vector<64x1024xf32> to vector<64x256xf32>
    %8 = arith.maximumf %6, %7 : vector<64x256xf32>
    %9 = vector.extract_strided_slice %5 {offsets = [0, 512], sizes = [64, 256], strides = [1, 1]} : vector<64x1024xf32> to vector<64x256xf32>
    %10 = vector.extract_strided_slice %5 {offsets = [0, 768], sizes = [64, 256], strides = [1, 1]} : vector<64x1024xf32> to vector<64x256xf32>
    %11 = arith.maximumf %9, %10 : vector<64x256xf32>
    %12 = arith.maximumf %8, %11 : vector<64x256xf32>
    %13 = vector.extract_strided_slice %12 {offsets = [0, 0], sizes = [32, 256], strides = [1, 1]} : vector<64x256xf32> to vector<32x256xf32>
    %14 = vector.extract_strided_slice %12 {offsets = [32, 0], sizes = [32, 256], strides = [1, 1]} : vector<64x256xf32> to vector<32x256xf32>
    %15 = arith.maximumf %13, %14 : vector<32x256xf32>
    %cst_5 = arith.constant 0.000000e+00 : bf16
    %16 = vector.broadcast %cst_5 : bf16 to vector<8x256xbf16>
    %c0_6 = arith.constant 0 : index
    %c0_7 = arith.constant 0 : index
    %17 = vector.load %arg6[%c0_6, %c0_7] : memref<48x256xbf16, #tpu.memory_space<vmem>>, vector<8x256xbf16>
    tpu.vector_store %arg6[%c0_6, %c0_7], %16 {strides = array<i32>} : memref<48x256xbf16, #tpu.memory_space<vmem>>, vector<8x256xbf16>,
    %c40 = arith.constant 40 : index
    %c0_8 = arith.constant 0 : index
    %18 = vector.load %arg6[%c40, %c0_8] : memref<48x256xbf16, #tpu.memory_space<vmem>>, vector<8x256xbf16>
    tpu.vector_store %arg6[%c40, %c0_8], %16 {strides = array<i32>} : memref<48x256xbf16, #tpu.memory_space<vmem>>, vector<8x256xbf16>,
    %19 = arith.truncf %15 : vector<32x256xf32> to vector<32x256xbf16>
    %c8 = arith.constant 8 : index
    %c0_9 = arith.constant 0 : index
    %20 = vector.load %arg6[%c8, %c0_9] : memref<48x256xbf16, #tpu.memory_space<vmem>>, vector<32x256xbf16>
    tpu.vector_store %arg6[%c8, %c0_9], %19 {strides = array<i32>} : memref<48x256xbf16, #tpu.memory_space<vmem>>, vector<32x256xbf16>,
    %c0_10 = arith.constant 0 : index
    %c0_11 = arith.constant 0 : index
    %21 = vector.load %arg6[%c0_10, %c0_11] : memref<48x256xbf16, #tpu.memory_space<vmem>>, vector<32x256xbf16>
    %c0_12 = arith.constant 0 : index
    %c0_13 = arith.constant 0 : index
    %c0_14 = arith.constant 0 : index
    %22 = vector.load %arg3[%c0_12, %c0_13, %c0_14] : memref<3x256x512xbf16, #tpu.memory_space<vmem>>, vector<1x256x512xbf16>
    %23 = vector.shape_cast %22 : vector<1x256x512xbf16> to vector<256x512xbf16>
    %cst_15 = arith.constant dense<0.000000e+00> : vector<32x512xf32>
    %24 = tpu.matmul %21, %23, %cst_15 {dimension_numbers = #tpu.dot_dimension_numbers<[1], [0], [0], [1], [0, 0, 1, 1], [], []>} : vector<32x256xbf16>, vector<256x512xbf16>, vector<32x512xf32> -> vector<32x512xf32>
    %c8_16 = arith.constant 8 : index
    %c0_17 = arith.constant 0 : index
    %25 = vector.load %arg6[%c8_16, %c0_17] : memref<48x256xbf16, #tpu.memory_space<vmem>>, vector<32x256xbf16>
    %c1 = arith.constant 1 : index
    %c0_18 = arith.constant 0 : index
    %c0_19 = arith.constant 0 : index
    %26 = vector.load %arg3[%c1, %c0_18, %c0_19] : memref<3x256x512xbf16, #tpu.memory_space<vmem>>, vector<1x256x512xbf16>
    %27 = vector.shape_cast %26 : vector<1x256x512xbf16> to vector<256x512xbf16>
    %cst_20 = arith.constant dense<0.000000e+00> : vector<32x512xf32>
    %28 = tpu.matmul %25, %27, %cst_20 {dimension_numbers = #tpu.dot_dimension_numbers<[1], [0], [0], [1], [0, 0, 1, 1], [], []>} : vector<32x256xbf16>, vector<256x512xbf16>, vector<32x512xf32> -> vector<32x512xf32>
    %29 = arith.addf %24, %28 : vector<32x512xf32>
    %c16 = arith.constant 16 : index
    %c0_21 = arith.constant 0 : index
    %30 = vector.load %arg6[%c16, %c0_21] : memref<48x256xbf16, #tpu.memory_space<vmem>>, vector<32x256xbf16>
    %c2 = arith.constant 2 : index
    %c0_22 = arith.constant 0 : index
    %c0_23 = arith.constant 0 : index
    %31 = vector.load %arg3[%c2, %c0_22, %c0_23] : memref<3x256x512xbf16, #tpu.memory_space<vmem>>, vector<1x256x512xbf16>
    %32 = vector.shape_cast %31 : vector<1x256x512xbf16> to vector<256x512xbf16>
    %cst_24 = arith.constant dense<0.000000e+00> : vector<32x512xf32>
    %33 = tpu.matmul %30, %32, %cst_24 {dimension_numbers = #tpu.dot_dimension_numbers<[1], [0], [0], [1], [0, 0, 1, 1], [], []>} : vector<32x256xbf16>, vector<256x512xbf16>, vector<32x512xf32> -> vector<32x512xf32>
    %34 = arith.addf %29, %33 : vector<32x512xf32>
    %cst_25 = arith.constant 0.000000e+00 : f32
    %35 = vector.broadcast %cst_25 : f32 to vector<32x512xf32>
    %36 = arith.maximumf %34, %35 : vector<32x512xf32>
    %37 = vector.extract_strided_slice %36 {offsets = [0, 0], sizes = [32, 128], strides = [1, 1]} : vector<32x512xf32> to vector<32x128xf32>
    %38 = vector.extract_strided_slice %36 {offsets = [0, 128], sizes = [32, 128], strides = [1, 1]} : vector<32x512xf32> to vector<32x128xf32>
    %39 = arith.maximumf %37, %38 : vector<32x128xf32>
    %40 = vector.extract_strided_slice %36 {offsets = [0, 256], sizes = [32, 128], strides = [1, 1]} : vector<32x512xf32> to vector<32x128xf32>
    %41 = vector.extract_strided_slice %36 {offsets = [0, 384], sizes = [32, 128], strides = [1, 1]} : vector<32x512xf32> to vector<32x128xf32>
    %42 = arith.maximumf %40, %41 : vector<32x128xf32>
    %43 = arith.maximumf %39, %42 : vector<32x128xf32>
    %44 = vector.extract_strided_slice %43 {offsets = [0, 0], sizes = [8, 128], strides = [1, 1]} : vector<32x128xf32> to vector<8x128xf32>
    %45 = vector.extract_strided_slice %43 {offsets = [8, 0], sizes = [8, 128], strides = [1, 1]} : vector<32x128xf32> to vector<8x128xf32>
    %46 = arith.maximumf %44, %45 : vector<8x128xf32>
    %47 = arith.truncf %46 : vector<8x128xf32> to vector<8x128xbf16>
    %c0_26 = arith.constant 0 : index
    %c0_27 = arith.constant 0 : index
    %48 = vector.load %arg4[%c0_26, %c0_27] : memref<256x2xbf16, #tpu.memory_space<vmem>>, vector<128x2xbf16>
    %cst_28 = arith.constant dense<0.000000e+00> : vector<8x2xf32>
    %49 = tpu.matmul %47, %48, %cst_28 {dimension_numbers = #tpu.dot_dimension_numbers<[1], [0], [0], [1], [0, 0, 1, 1], [], []>} : vector<8x128xbf16>, vector<128x2xbf16>, vector<8x2xf32> -> vector<8x2xf32>
    %50 = vector.extract_strided_slice %43 {offsets = [16, 0], sizes = [8, 128], strides = [1, 1]} : vector<32x128xf32> to vector<8x128xf32>
    %51 = vector.extract_strided_slice %43 {offsets = [24, 0], sizes = [8, 128], strides = [1, 1]} : vector<32x128xf32> to vector<8x128xf32>
    %52 = arith.maximumf %50, %51 : vector<8x128xf32>
    %53 = arith.truncf %52 : vector<8x128xf32> to vector<8x128xbf16>
    %c128 = arith.constant 128 : index
    %c0_29 = arith.constant 0 : index
    %54 = vector.load %arg4[%c128, %c0_29] : memref<256x2xbf16, #tpu.memory_space<vmem>>, vector<128x2xbf16>
    %cst_30 = arith.constant dense<0.000000e+00> : vector<8x2xf32>
    %55 = tpu.matmul %53, %54, %cst_30 {dimension_numbers = #tpu.dot_dimension_numbers<[1], [0], [0], [1], [0, 0, 1, 1], [], []>} : vector<8x128xbf16>, vector<128x2xbf16>, vector<8x2xf32> -> vector<8x2xf32>
    %56 = arith.addf %49, %55 : vector<8x2xf32>
    %c0_31 = arith.constant 0 : index
    %c0_32 = arith.constant 0 : index
    %57 = vector.load %arg5[%c0_31, %c0_32] : memref<8x2xf32, #tpu.memory_space<vmem>>, vector<8x2xf32>
    tpu.vector_store %arg5[%c0_31, %c0_32], %56 {strides = array<i32>} : memref<8x2xf32, #tpu.memory_space<vmem>>, vector<8x2xf32>,
    return
  }
  func.func @transform_0(%arg0: i32) -> (i32, i32, i32) {
    %c0_i32 = arith.constant 0 : i32
    %c0_i32_0 = arith.constant 0 : i32
    %c0_i32_1 = arith.constant 0 : i32
    return %arg0, %c0_i32, %c0_i32_0 : i32, i32, i32
  }
  func.func @transform_1(%arg0: i32) -> (i32, i32) {
    %c0_i32 = arith.constant 0 : i32
    %c0_i32_0 = arith.constant 0 : i32
    %c0_i32_1 = arith.constant 0 : i32
    return %c0_i32, %c0_i32_0 : i32, i32
  }
  func.func @transform_2(%arg0: i32) -> (i32, i32, i32) {
    %c0_i32 = arith.constant 0 : i32
    %c0_i32_0 = arith.constant 0 : i32
    %c0_i32_1 = arith.constant 0 : i32
    %c0_i32_2 = arith.constant 0 : i32
    return %c0_i32, %c0_i32_0, %c0_i32_1 : i32, i32, i32
  }
  func.func @transform_3(%arg0: i32) -> (i32, i32) {
    %c0_i32 = arith.constant 0 : i32
    %c0_i32_0 = arith.constant 0 : i32
    %c0_i32_1 = arith.constant 0 : i32
    return %c0_i32, %c0_i32_0 : i32, i32
  }
  func.func @transform_4(%arg0: i32) -> (i32, i32) {
    %c0_i32 = arith.constant 0 : i32
    %c0_i32_0 = arith.constant 0 : i32
    return %arg0, %c0_i32 : i32, i32
  }
}

</mosaic_0001>

<llo_original>
// kernel: _forward_impl.1
$region0: #{_forward_impl.1}
  #allocation0 [shape = 'u32[]', space=smem, size = 0x4, offset = 0x4, fixed_abs, tag = 'smem constant byte address 0x4 - core index']
  #allocation1 [shape = 'u32[72,128]{1,0:T(1,128)}', space=vmem, size = 0x9000, scoped, tag = 'internal scratch']
  #allocation2 [shape = 'bf16[48,256]{1,0:T(8,128)(2,1)}', space=vmem, size = 0x6000, scoped, tag = 'scratch operand']
  %s0 = inlined_call_operand.vmem [shape: bf16[1,64,720], index: 0, kind: input, shape index: {}]
  %s1 = inlined_call_operand.vmem [shape: bf16[720,1024], index: 1, kind: input, shape index: {}]
  %s2 = inlined_call_operand.vmem [shape: bf16[3,256,512], index: 2, kind: input, shape index: {}]
  %s3 = inlined_call_operand.vmem [shape: bf16[256,2], index: 3, kind: input, shape index: {}]
  %s4 = inlined_call_operand.vmem [shape: f32[8,2], index: 4, kind: output, shape index: {}]
  %s5 = sld [smem:[#allocation0]]
  $region26: #{_forward_impl.1} parent=0
    _
  %s7 = ssub.s32 1, %s5
  %s8 = scalar_select 0, %s7, %s5
  // Predicated region
  $region2: #{_forward_impl.1} parent=0 // pred_check
    _
  $region3: #{_forward_impl.1} parent=0 // pred_check_branch
    %10 = sbr.rel (0) target = $region5
  $region4: #{_forward_impl.1} parent=0 // pred_region
    _
  $region5: #{_forward_impl.1} parent=0 // pred_fallthru
    _
  // Predicated region
  $region6: #{_forward_impl.1} parent=0 // pred_check
    _
  $region7: #{_forward_impl.1} parent=0 // pred_check_branch
    %12 = sbr.rel (0) target = $region9
  $region8: #{_forward_impl.1} parent=0 // pred_region
    _
  $region9: #{_forward_impl.1} parent=0 // pred_fallthru
    _
  // Predicated region
  $region10: #{_forward_impl.1} parent=0 // pred_check
    _
  $region11: #{_forward_impl.1} parent=0 // pred_check_branch
    %14 = sbr.rel (0) target = $region13
  $region12: #{_forward_impl.1} parent=0 // pred_region
    _
  $region13: #{_forward_impl.1} parent=0 // pred_fallthru
    _
  // Predicated region
  $region14: #{_forward_impl.1} parent=0 // pred_check
    _
  $region15: #{_forward_impl.1} parent=0 // pred_check_branch
    %16 = sbr.rel (0) target = $region17
  $region16: #{_forward_impl.1} parent=0 // pred_region
    _
  $region17: #{_forward_impl.1} parent=0 // pred_fallthru
    _
  %v18 = vld [vmem:[%s0] sm:$0xff]
  %v19 = vld [vmem:[%s0 + $0x8] sm:$0xff]
  %v20 = vld [vmem:[%s0 + $0x10] sm:$0xff]
  %v21 = vld [vmem:[%s0 + $0x18] sm:$0xff]
  %v22 = vld [vmem:[%s0 + $0x20] sm:$0xff]
  %v23 = vld [vmem:[%s0 + $0x28] sm:$0xff]
  %v24 = vld [vmem:[%s0 + $0x30] sm:$0xff]
  %v25 = vld [vmem:[%s0 + $0x38] sm:$0xff]
  %v26 = vld [vmem:[%s0 + $0x40] sm:$0xff]
  %v27 = vld [vmem:[%s0 + $0x48] sm:$0xff]
  %v28 = vld [vmem:[%s0 + $0x50] sm:$0xff]
  %v29 = vld [vmem:[%s0 + $0x58] sm:$0xff]
  %v30 = vld [vmem:[%s0 + $0x60] sm:$0xff]
  %v31 = vld [vmem:[%s0 + $0x68] sm:$0xff]
  %v32 = vld [vmem:[%s0 + $0x70] sm:$0xff]
  %v33 = vld [vmem:[%s0 + $0x78] sm:$0xff]
  %v34 = vld [vmem:[%s0 + $0x80] sm:$0xff]
  %v35 = vld [vmem:[%s0 + $0x88] sm:$0xff]
  %v36 = vld [vmem:[%s0 + $0x90] sm:$0xff]
  %v37 = vld [vmem:[%s0 + $0x98] sm:$0xff]
  %v38 = vld [vmem:[%s0 + $0xa0] sm:$0xff]
  %v39 = vld [vmem:[%s0 + $0xa8] sm:$0xff]
  %v40 = vld [vmem:[%s0 + $0xb0] sm:$0xff]
  %v41 = vld [vmem:[%s0 + $0xb8] sm:$0xff]
  %v42 = vld [vmem:[%s1] sm:$0xff]
  %v43 = vld [vmem:[%s1 + $0x8] sm:$0xff]
  %v44 = vld [vmem:[%s1 + $0x10] sm:$0xff]
  %v45 = vld [vmem:[%s1 + $0x18] sm:$0xff]
  %v46 = vld [vmem:[%s1 + $0x20] sm:$0xff]
  %v47 = vld [vmem:[%s1 + $0x28] sm:$0xff]
  %v48 = vld [vmem:[%s1 + $0x30] sm:$0xff]
  %v49 = vld [vmem:[%s1 + $0x38] sm:$0xff]
  %v50 = vld [vmem:[%s1 + $0x40] sm:$0xff]
  %v51 = vld [vmem:[%s1 + $0x48] sm:$0xff]
  %v52 = vld [vmem:[%s1 + $0x50] sm:$0xff]
  %v53 = vld [vmem:[%s1 + $0x58] sm:$0xff]
  %v54 = vld [vmem:[%s1 + $0x60] sm:$0xff]
  %v55 = vld [vmem:[%s1 + $0x68] sm:$0xff]
  %v56 = vld [vmem:[%s1 + $0x70] sm:$0xff]
  %v57 = vld [vmem:[%s1 + $0x78] sm:$0xff]
  %v58 = vld [vmem:[%s1 + $0x80] sm:$0xff]
  %v59 = vld [vmem:[%s1 + $0x88] sm:$0xff]
  %v60 = vld [vmem:[%s1 + $0x90] sm:$0xff]
  %v61 = vld [vmem:[%s1 + $0x98] sm:$0xff]
  %v62 = vld [vmem:[%s1 + $0xa0] sm:$0xff]
  %v63 = vld [vmem:[%s1 + $0xa8] sm:$0xff]
  %v64 = vld [vmem:[%s1 + $0xb0] sm:$0xff]
  %v65 = vld [vmem:[%s1 + $0xb8] sm:$0xff]
  %v66 = vld [vmem:[%s1 + $0xc0] sm:$0xff]
  %v67 = vld [vmem:[%s1 + $0xc8] sm:$0xff]
  %v68 = vld [vmem:[%s1 + $0xd0] sm:$0xff]
  %v69 = vld [vmem:[%s1 + $0xd8] sm:$0xff]
  %v70 = vld [vmem:[%s1 + $0xe0] sm:$0xff]
  %v71 = vld [vmem:[%s1 + $0xe8] sm:$0xff]
  %v72 = vld [vmem:[%s1 + $0xf0] sm:$0xff]
  %v73 = vld [vmem:[%s1 + $0xf8] sm:$0xff]
  %v74 = vld [vmem:[%s1 + $0x100] sm:$0xff]
  %v75 = vld [vmem:[%s1 + $0x108] sm:$0xff]
  %v76 = vld [vmem:[%s1 + $0x110] sm:$0xff]
  %v77 = vld [vmem:[%s1 + $0x118] sm:$0xff]
  %v78 = vld [vmem:[%s1 + $0x120] sm:$0xff]
  %v79 = vld [vmem:[%s1 + $0x128] sm:$0xff]
  %v80 = vld [vmem:[%s1 + $0x130] sm:$0xff]
  %v81 = vld [vmem:[%s1 + $0x138] sm:$0xff]
  %v82 = vld [vmem:[%s1 + $0x140] sm:$0xff]
  %v83 = vld [vmem:[%s1 + $0x148] sm:$0xff]
  %v84 = vld [vmem:[%s1 + $0x150] sm:$0xff]
  %v85 = vld [vmem:[%s1 + $0x158] sm:$0xff]
  %v86 = vld [vmem:[%s1 + $0x160] sm:$0xff]
  %v87 = vld [vmem:[%s1 + $0x168] sm:$0xff]
  %v88 = vld [vmem:[%s1 + $0x170] sm:$0xff]
  %v89 = vld [vmem:[%s1 + $0x178] sm:$0xff]
  %v90 = vld [vmem:[%s1 + $0x180] sm:$0xff]
  %v91 = vld [vmem:[%s1 + $0x188] sm:$0xff]
  %v92 = vld [vmem:[%s1 + $0x190] sm:$0xff]
  %v93 = vld [vmem:[%s1 + $0x198] sm:$0xff]
  %v94 = vld [vmem:[%s1 + $0x1a0] sm:$0xff]
  %v95 = vld [vmem:[%s1 + $0x1a8] sm:$0xff]
  %v96 = vld [vmem:[%s1 + $0x1b0] sm:$0xff]
  %v97 = vld [vmem:[%s1 + $0x1b8] sm:$0xff]
  %v98 = vld [vmem:[%s1 + $0x1c0] sm:$0xff]
  %v99 = vld [vmem:[%s1 + $0x1c8] sm:$0xff]
  %v100 = vld [vmem:[%s1 + $0x1d0] sm:$0xff]
  %v101 = vld [vmem:[%s1 + $0x1d8] sm:$0xff]
  %v102 = vld [vmem:[%s1 + $0x1e0] sm:$0xff]
  %v103 = vld [vmem:[%s1 + $0x1e8] sm:$0xff]
  %v104 = vld [vmem:[%s1 + $0x1f0] sm:$0xff]
  %v105 = vld [vmem:[%s1 + $0x1f8] sm:$0xff]
  %v106 = vld [vmem:[%s1 + $0x200] sm:$0xff]
  %v107 = vld [vmem:[%s1 + $0x208] sm:$0xff]
  %v108 = vld [vmem:[%s1 + $0x210] sm:$0xff]
  %v109 = vld [vmem:[%s1 + $0x218] sm:$0xff]
  %v110 = vld [vmem:[%s1 + $0x220] sm:$0xff]
  %v111 = vld [vmem:[%s1 + $0x228] sm:$0xff]
  %v112 = vld [vmem:[%s1 + $0x230] sm:$0xff]
  %v113 = vld [vmem:[%s1 + $0x238] sm:$0xff]
  %v114 = vld [vmem:[%s1 + $0x240] sm:$0xff]
  %v115 = vld [vmem:[%s1 + $0x248] sm:$0xff]
  %v116 = vld [vmem:[%s1 + $0x250] sm:$0xff]
  %v117 = vld [vmem:[%s1 + $0x258] sm:$0xff]
  %v118 = vld [vmem:[%s1 + $0x260] sm:$0xff]
  %v119 = vld [vmem:[%s1 + $0x268] sm:$0xff]
  %v120 = vld [vmem:[%s1 + $0x270] sm:$0xff]
  %v121 = vld [vmem:[%s1 + $0x278] sm:$0xff]
  %v122 = vld [vmem:[%s1 + $0x280] sm:$0xff]
  %v123 = vld [vmem:[%s1 + $0x288] sm:$0xff]
  %v124 = vld [vmem:[%s1 + $0x290] sm:$0xff]
  %v125 = vld [vmem:[%s1 + $0x298] sm:$0xff]
  %v126 = vld [vmem:[%s1 + $0x2a0] sm:$0xff]
  %v127 = vld [vmem:[%s1 + $0x2a8] sm:$0xff]
  %v128 = vld [vmem:[%s1 + $0x2b0] sm:$0xff]
  %v129 = vld [vmem:[%s1 + $0x2b8] sm:$0xff]
  %v130 = vld [vmem:[%s1 + $0x2c0] sm:$0xff]
  %v131 = vld [vmem:[%s1 + $0x2c8] sm:$0xff]
  %v132 = vld [vmem:[%s1 + $0x2d0] sm:$0xff]
  %v133 = vld [vmem:[%s1 + $0x2d8] sm:$0xff]
  %v134 = vld [vmem:[%s1 + $0x2e0] sm:$0xff]
  %v135 = vld [vmem:[%s1 + $0x2e8] sm:$0xff]
  %v136 = vld [vmem:[%s1 + $0x2f0] sm:$0xff]
  %v137 = vld [vmem:[%s1 + $0x2f8] sm:$0xff]
  %v138 = vld [vmem:[%s1 + $0x300] sm:$0xff]
  %v139 = vld [vmem:[%s1 + $0x308] sm:$0xff]
  %v140 = vld [vmem:[%s1 + $0x310] sm:$0xff]
  %v141 = vld [vmem:[%s1 + $0x318] sm:$0xff]
  %v142 = vld [vmem:[%s1 + $0x320] sm:$0xff]
  %v143 = vld [vmem:[%s1 + $0x328] sm:$0xff]
  %v144 = vld [vmem:[%s1 + $0x330] sm:$0xff]
  %v145 = vld [vmem:[%s1 + $0x338] sm:$0xff]
  %v146 = vld [vmem:[%s1 + $0x340] sm:$0xff]
  %v147 = vld [vmem:[%s1 + $0x348] sm:$0xff]
  %v148 = vld [vmem:[%s1 + $0x350] sm:$0xff]
  %v149 = vld [vmem:[%s1 + $0x358] sm:$0xff]
  %v150 = vld [vmem:[%s1 + $0x360] sm:$0xff]
  %v151 = vld [vmem:[%s1 + $0x368] sm:$0xff]
  %v152 = vld [vmem:[%s1 + $0x370] sm:$0xff]
  %v153 = vld [vmem:[%s1 + $0x378] sm:$0xff]
  %v154 = vld [vmem:[%s1 + $0x380] sm:$0xff]
  %v155 = vld [vmem:[%s1 + $0x388] sm:$0xff]
  %v156 = vld [vmem:[%s1 + $0x390] sm:$0xff]
  %v157 = vld [vmem:[%s1 + $0x398] sm:$0xff]
  %v158 = vld [vmem:[%s1 + $0x3a0] sm:$0xff]
  %v159 = vld [vmem:[%s1 + $0x3a8] sm:$0xff]
  %v160 = vld [vmem:[%s1 + $0x3b0] sm:$0xff]
  %v161 = vld [vmem:[%s1 + $0x3b8] sm:$0xff]
  %v162 = vld [vmem:[%s1 + $0x3c0] sm:$0xff]
  %v163 = vld [vmem:[%s1 + $0x3c8] sm:$0xff]
  %v164 = vld [vmem:[%s1 + $0x3d0] sm:$0xff]
  %v165 = vld [vmem:[%s1 + $0x3d8] sm:$0xff]
  %v166 = vld [vmem:[%s1 + $0x3e0] sm:$0xff]
  %v167 = vld [vmem:[%s1 + $0x3e8] sm:$0xff]
  %v168 = vld [vmem:[%s1 + $0x3f0] sm:$0xff]
  %v169 = vld [vmem:[%s1 + $0x3f8] sm:$0xff]
  %v170 = vld [vmem:[%s1 + $0x400] sm:$0xff]
  %v171 = vld [vmem:[%s1 + $0x408] sm:$0xff]
  %v172 = vld [vmem:[%s1 + $0x410] sm:$0xff]
  %v173 = vld [vmem:[%s1 + $0x418] sm:$0xff]
  %v174 = vld [vmem:[%s1 + $0x420] sm:$0xff]
  %v175 = vld [vmem:[%s1 + $0x428] sm:$0xff]
  %v176 = vld [vmem:[%s1 + $0x430] sm:$0xff]
  %v177 = vld [vmem:[%s1 + $0x438] sm:$0xff]
  %v178 = vld [vmem:[%s1 + $0x440] sm:$0xff]
  %v179 = vld [vmem:[%s1 + $0x448] sm:$0xff]
  %v180 = vld [vmem:[%s1 + $0x450] sm:$0xff]
  %v181 = vld [vmem:[%s1 + $0x458] sm:$0xff]
  %v182 = vld [vmem:[%s1 + $0x460] sm:$0xff]
  %v183 = vld [vmem:[%s1 + $0x468] sm:$0xff]
  %v184 = vld [vmem:[%s1 + $0x470] sm:$0xff]
  %v185 = vld [vmem:[%s1 + $0x478] sm:$0xff]
  %v186 = vld [vmem:[%s1 + $0x480] sm:$0xff]
  %v187 = vld [vmem:[%s1 + $0x488] sm:$0xff]
  %v188 = vld [vmem:[%s1 + $0x490] sm:$0xff]
  %v189 = vld [vmem:[%s1 + $0x498] sm:$0xff]
  %v190 = vld [vmem:[%s1 + $0x4a0] sm:$0xff]
  %v191 = vld [vmem:[%s1 + $0x4a8] sm:$0xff]
  %v192 = vld [vmem:[%s1 + $0x4b0] sm:$0xff]
  %v193 = vld [vmem:[%s1 + $0x4b8] sm:$0xff]
  %v194 = vld [vmem:[%s1 + $0x4c0] sm:$0xff]
  %v195 = vld [vmem:[%s1 + $0x4c8] sm:$0xff]
  %v196 = vld [vmem:[%s1 + $0x4d0] sm:$0xff]
  %v197 = vld [vmem:[%s1 + $0x4d8] sm:$0xff]
  %v198 = vld [vmem:[%s1 + $0x4e0] sm:$0xff]
  %v199 = vld [vmem:[%s1 + $0x4e8] sm:$0xff]
  %v200 = vld [vmem:[%s1 + $0x4f0] sm:$0xff]
  %v201 = vld [vmem:[%s1 + $0x4f8] sm:$0xff]
  %v202 = vld [vmem:[%s1 + $0x500] sm:$0xff]
  %v203 = vld [vmem:[%s1 + $0x508] sm:$0xff]
  %v204 = vld [vmem:[%s1 + $0x510] sm:$0xff]
  %v205 = vld [vmem:[%s1 + $0x518] sm:$0xff]
  %v206 = vld [vmem:[%s1 + $0x520] sm:$0xff]
  %v207 = vld [vmem:[%s1 + $0x528] sm:$0xff]
  %v208 = vld [vmem:[%s1 + $0x530] sm:$0xff]
  %v209 = vld [vmem:[%s1 + $0x538] sm:$0xff]
  %v210 = vld [vmem:[%s1 + $0x540] sm:$0xff]
  %v211 = vld [vmem:[%s1 + $0x548] sm:$0xff]
  %v212 = vld [vmem:[%s1 + $0x550] sm:$0xff]
  %v213 = vld [vmem:[%s1 + $0x558] sm:$0xff]
  %v214 = vld [vmem:[%s1 + $0x560] sm:$0xff]
  %v215 = vld [vmem:[%s1 + $0x568] sm:$0xff]
  %v216 = vld [vmem:[%s1 + $0x570] sm:$0xff]
  %v217 = vld [vmem:[%s1 + $0x578] sm:$0xff]
  %v218 = vld [vmem:[%s1 + $0x580] sm:$0xff]
  %v219 = vld [vmem:[%s1 + $0x588] sm:$0xff]
  %v220 = vld [vmem:[%s1 + $0x590] sm:$0xff]
  %v221 = vld [vmem:[%s1 + $0x598] sm:$0xff]
  %v222 = vld [vmem:[%s1 + $0x5a0] sm:$0xff]
  %v223 = vld [vmem:[%s1 + $0x5a8] sm:$0xff]
  %v224 = vld [vmem:[%s1 + $0x5b0] sm:$0xff]
  %v225 = vld [vmem:[%s1 + $0x5b8] sm:$0xff]
  %v226 = vld [vmem:[%s1 + $0x5c0] sm:$0xff]
  %v227 = vld [vmem:[%s1 + $0x5c8] sm:$0xff]
  %v228 = vld [vmem:[%s1 + $0x5d0] sm:$0xff]
  %v229 = vld [vmem:[%s1 + $0x5d8] sm:$0xff]
  %v230 = vld [vmem:[%s1 + $0x5e0] sm:$0xff]
  %v231 = vld [vmem:[%s1 + $0x5e8] sm:$0xff]
  %v232 = vld [vmem:[%s1 + $0x5f0] sm:$0xff]
  %v233 = vld [vmem:[%s1 + $0x5f8] sm:$0xff]
  %v234 = vld [vmem:[%s1 + $0x600] sm:$0xff]
  %v235 = vld [vmem:[%s1 + $0x608] sm:$0xff]
  %v236 = vld [vmem:[%s1 + $0x610] sm:$0xff]
  %v237 = vld [vmem:[%s1 + $0x618] sm:$0xff]
  %v238 = vld [vmem:[%s1 + $0x620] sm:$0xff]
  %v239 = vld [vmem:[%s1 + $0x628] sm:$0xff]
  %v240 = vld [vmem:[%s1 + $0x630] sm:$0xff]
  %v241 = vld [vmem:[%s1 + $0x638] sm:$0xff]
  %v242 = vld [vmem:[%s1 + $0x640] sm:$0xff]
  %v243 = vld [vmem:[%s1 + $0x648] sm:$0xff]
  %v244 = vld [vmem:[%s1 + $0x650] sm:$0xff]
  %v245 = vld [vmem:[%s1 + $0x658] sm:$0xff]
  %v246 = vld [vmem:[%s1 + $0x660] sm:$0xff]
  %v247 = vld [vmem:[%s1 + $0x668] sm:$0xff]
  %v248 = vld [vmem:[%s1 + $0x670] sm:$0xff]
  %v249 = vld [vmem:[%s1 + $0x678] sm:$0xff]
  %v250 = vld [vmem:[%s1 + $0x680] sm:$0xff]
  %v251 = vld [vmem:[%s1 + $0x688] sm:$0xff]
  %v252 = vld [vmem:[%s1 + $0x690] sm:$0xff]
  %v253 = vld [vmem:[%s1 + $0x698] sm:$0xff]
  %v254 = vld [vmem:[%s1 + $0x6a0] sm:$0xff]
  %v255 = vld [vmem:[%s1 + $0x6a8] sm:$0xff]
  %v256 = vld [vmem:[%s1 + $0x6b0] sm:$0xff]
  %v257 = vld [vmem:[%s1 + $0x6b8] sm:$0xff]
  %v258 = vld [vmem:[%s1 + $0x6c0] sm:$0xff]
  %v259 = vld [vmem:[%s1 + $0x6c8] sm:$0xff]
  %v260 = vld [vmem:[%s1 + $0x6d0] sm:$0xff]
  %v261 = vld [vmem:[%s1 + $0x6d8] sm:$0xff]
  %v262 = vld [vmem:[%s1 + $0x6e0] sm:$0xff]
  %v263 = vld [vmem:[%s1 + $0x6e8] sm:$0xff]
  %v264 = vld [vmem:[%s1 + $0x6f0] sm:$0xff]
  %v265 = vld [vmem:[%s1 + $0x6f8] sm:$0xff]
  %v266 = vld [vmem:[%s1 + $0x700] sm:$0xff]
  %v267 = vld [vmem:[%s1 + $0x708] sm:$0xff]
  %v268 = vld [vmem:[%s1 + $0x710] sm:$0xff]
  %v269 = vld [vmem:[%s1 + $0x718] sm:$0xff]
  %v270 = vld [vmem:[%s1 + $0x720] sm:$0xff]
  %v271 = vld [vmem:[%s1 + $0x728] sm:$0xff]
  %v272 = vld [vmem:[%s1 + $0x730] sm:$0xff]
  %v273 = vld [vmem:[%s1 + $0x738] sm:$0xff]
  %v274 = vld [vmem:[%s1 + $0x740] sm:$0xff]
  %v275 = vld [vmem:[%s1 + $0x748] sm:$0xff]
  %v276 = vld [vmem:[%s1 + $0x750] sm:$0xff]
  %v277 = vld [vmem:[%s1 + $0x758] sm:$0xff]
  %v278 = vld [vmem:[%s1 + $0x760] sm:$0xff]
  %v279 = vld [vmem:[%s1 + $0x768] sm:$0xff]
  %v280 = vld [vmem:[%s1 + $0x770] sm:$0xff]
  %v281 = vld [vmem:[%s1 + $0x778] sm:$0xff]
  %v282 = vld [vmem:[%s1 + $0x780] sm:$0xff]
  %v283 = vld [vmem:[%s1 + $0x788] sm:$0xff]
  %v284 = vld [vmem:[%s1 + $0x790] sm:$0xff]
  %v285 = vld [vmem:[%s1 + $0x798] sm:$0xff]
  %v286 = vld [vmem:[%s1 + $0x7a0] sm:$0xff]
  %v287 = vld [vmem:[%s1 + $0x7a8] sm:$0xff]
  %v288 = vld [vmem:[%s1 + $0x7b0] sm:$0xff]
  %v289 = vld [vmem:[%s1 + $0x7b8] sm:$0xff]
  %v290 = vld [vmem:[%s1 + $0x7c0] sm:$0xff]
  %v291 = vld [vmem:[%s1 + $0x7c8] sm:$0xff]
  %v292 = vld [vmem:[%s1 + $0x7d0] sm:$0xff]
  %v293 = vld [vmem:[%s1 + $0x7d8] sm:$0xff]
  %v294 = vld [vmem:[%s1 + $0x7e0] sm:$0xff]
  %v295 = vld [vmem:[%s1 + $0x7e8] sm:$0xff]
  %v296 = vld [vmem:[%s1 + $0x7f0] sm:$0xff]
  %v297 = vld [vmem:[%s1 + $0x7f8] sm:$0xff]
  %v298 = vld [vmem:[%s1 + $0x800] sm:$0xff]
  %v299 = vld [vmem:[%s1 + $0x808] sm:$0xff]
  %v300 = vld [vmem:[%s1 + $0x810] sm:$0xff]
  %v301 = vld [vmem:[%s1 + $0x818] sm:$0xff]
  %v302 = vld [vmem:[%s1 + $0x820] sm:$0xff]
  %v303 = vld [vmem:[%s1 + $0x828] sm:$0xff]
  %v304 = vld [vmem:[%s1 + $0x830] sm:$0xff]
  %v305 = vld [vmem:[%s1 + $0x838] sm:$0xff]
  %v306 = vld [vmem:[%s1 + $0x840] sm:$0xff]
  %v307 = vld [vmem:[%s1 + $0x848] sm:$0xff]
  %v308 = vld [vmem:[%s1 + $0x850] sm:$0xff]
  %v309 = vld [vmem:[%s1 + $0x858] sm:$0xff]
  %v310 = vld [vmem:[%s1 + $0x860] sm:$0xff]
  %v311 = vld [vmem:[%s1 + $0x868] sm:$0xff]
  %v312 = vld [vmem:[%s1 + $0x870] sm:$0xff]
  %v313 = vld [vmem:[%s1 + $0x878] sm:$0xff]
  %v314 = vld [vmem:[%s1 + $0x880] sm:$0xff]
  %v315 = vld [vmem:[%s1 + $0x888] sm:$0xff]
  %v316 = vld [vmem:[%s1 + $0x890] sm:$0xff]
  %v317 = vld [vmem:[%s1 + $0x898] sm:$0xff]
  %v318 = vld [vmem:[%s1 + $0x8a0] sm:$0xff]
  %v319 = vld [vmem:[%s1 + $0x8a8] sm:$0xff]
  %v320 = vld [vmem:[%s1 + $0x8b0] sm:$0xff]
  %v321 = vld [vmem:[%s1 + $0x8b8] sm:$0xff]
  %v322 = vld [vmem:[%s1 + $0x8c0] sm:$0xff]
  %v323 = vld [vmem:[%s1 + $0x8c8] sm:$0xff]
  %v324 = vld [vmem:[%s1 + $0x8d0] sm:$0xff]
  %v325 = vld [vmem:[%s1 + $0x8d8] sm:$0xff]
  %v326 = vld [vmem:[%s1 + $0x8e0] sm:$0xff]
  %v327 = vld [vmem:[%s1 + $0x8e8] sm:$0xff]
  %v328 = vld [vmem:[%s1 + $0x8f0] sm:$0xff]
  %v329 = vld [vmem:[%s1 + $0x8f8] sm:$0xff]
  %v330 = vld [vmem:[%s1 + $0x900] sm:$0xff]
  %v331 = vld [vmem:[%s1 + $0x908] sm:$0xff]
  %v332 = vld [vmem:[%s1 + $0x910] sm:$0xff]
  %v333 = vld [vmem:[%s1 + $0x918] sm:$0xff]
  %v334 = vld [vmem:[%s1 + $0x920] sm:$0xff]
  %v335 = vld [vmem:[%s1 + $0x928] sm:$0xff]
  %v336 = vld [vmem:[%s1 + $0x930] sm:$0xff]
  %v337 = vld [vmem:[%s1 + $0x938] sm:$0xff]
  %v338 = vld [vmem:[%s1 + $0x940] sm:$0xff]
  %v339 = vld [vmem:[%s1 + $0x948] sm:$0xff]
  %v340 = vld [vmem:[%s1 + $0x950] sm:$0xff]
  %v341 = vld [vmem:[%s1 + $0x958] sm:$0xff]
  %v342 = vld [vmem:[%s1 + $0x960] sm:$0xff]
  %v343 = vld [vmem:[%s1 + $0x968] sm:$0xff]
  %v344 = vld [vmem:[%s1 + $0x970] sm:$0xff]
  %v345 = vld [vmem:[%s1 + $0x978] sm:$0xff]
  %v346 = vld [vmem:[%s1 + $0x980] sm:$0xff]
  %v347 = vld [vmem:[%s1 + $0x988] sm:$0xff]
  %v348 = vld [vmem:[%s1 + $0x990] sm:$0xff]
  %v349 = vld [vmem:[%s1 + $0x998] sm:$0xff]
  %v350 = vld [vmem:[%s1 + $0x9a0] sm:$0xff]
  %v351 = vld [vmem:[%s1 + $0x9a8] sm:$0xff]
  %v352 = vld [vmem:[%s1 + $0x9b0] sm:$0xff]
  %v353 = vld [vmem:[%s1 + $0x9b8] sm:$0xff]
  %v354 = vld [vmem:[%s1 + $0x9c0] sm:$0xff]
  %v355 = vld [vmem:[%s1 + $0x9c8] sm:$0xff]
  %v356 = vld [vmem:[%s1 + $0x9d0] sm:$0xff]
  %v357 = vld [vmem:[%s1 + $0x9d8] sm:$0xff]
  %v358 = vld [vmem:[%s1 + $0x9e0] sm:$0xff]
  %v359 = vld [vmem:[%s1 + $0x9e8] sm:$0xff]
  %v360 = vld [vmem:[%s1 + $0x9f0] sm:$0xff]
  %v361 = vld [vmem:[%s1 + $0x9f8] sm:$0xff]
  %v362 = vld [vmem:[%s1 + $0xa00] sm:$0xff]
  %v363 = vld [vmem:[%s1 + $0xa08] sm:$0xff]
  %v364 = vld [vmem:[%s1 + $0xa10] sm:$0xff]
  %v365 = vld [vmem:[%s1 + $0xa18] sm:$0xff]
  %v366 = vld [vmem:[%s1 + $0xa20] sm:$0xff]
  %v367 = vld [vmem:[%s1 + $0xa28] sm:$0xff]
  %v368 = vld [vmem:[%s1 + $0xa30] sm:$0xff]
  %v369 = vld [vmem:[%s1 + $0xa38] sm:$0xff]
  %v370 = vld [vmem:[%s1 + $0xa40] sm:$0xff]
  %v371 = vld [vmem:[%s1 + $0xa48] sm:$0xff]
  %v372 = vld [vmem:[%s1 + $0xa50] sm:$0xff]
  %v373 = vld [vmem:[%s1 + $0xa58] sm:$0xff]
  %v374 = vld [vmem:[%s1 + $0xa60] sm:$0xff]
  %v375 = vld [vmem:[%s1 + $0xa68] sm:$0xff]
  %v376 = vld [vmem:[%s1 + $0xa70] sm:$0xff]
  %v377 = vld [vmem:[%s1 + $0xa78] sm:$0xff]
  %v378 = vld [vmem:[%s1 + $0xa80] sm:$0xff]
  %v379 = vld [vmem:[%s1 + $0xa88] sm:$0xff]
  %v380 = vld [vmem:[%s1 + $0xa90] sm:$0xff]
  %v381 = vld [vmem:[%s1 + $0xa98] sm:$0xff]
  %v382 = vld [vmem:[%s1 + $0xaa0] sm:$0xff]
  %v383 = vld [vmem:[%s1 + $0xaa8] sm:$0xff]
  %v384 = vld [vmem:[%s1 + $0xab0] sm:$0xff]
  %v385 = vld [vmem:[%s1 + $0xab8] sm:$0xff]
  %v386 = vld [vmem:[%s1 + $0xac0] sm:$0xff]
  %v387 = vld [vmem:[%s1 + $0xac8] sm:$0xff]
  %v388 = vld [vmem:[%s1 + $0xad0] sm:$0xff]
  %v389 = vld [vmem:[%s1 + $0xad8] sm:$0xff]
  %v390 = vld [vmem:[%s1 + $0xae0] sm:$0xff]
  %v391 = vld [vmem:[%s1 + $0xae8] sm:$0xff]
  %v392 = vld [vmem:[%s1 + $0xaf0] sm:$0xff]
  %v393 = vld [vmem:[%s1 + $0xaf8] sm:$0xff]
  %v394 = vld [vmem:[%s1 + $0xb00] sm:$0xff]
  %v395 = vld [vmem:[%s1 + $0xb08] sm:$0xff]
  %v396 = vld [vmem:[%s1 + $0xb10] sm:$0xff]
  %v397 = vld [vmem:[%s1 + $0xb18] sm:$0xff]
  %v398 = vld [vmem:[%s1 + $0xb20] sm:$0xff]
  %v399 = vld [vmem:[%s1 + $0xb28] sm:$0xff]
  %v400 = vld [vmem:[%s1 + $0xb30] sm:$0xff]
  %v401 = vld [vmem:[%s1 + $0xb38] sm:$0xff]
  %v426 = vunpack.c.l.b16 %v18
  %v427 = vunpack.c.h.b16 %v18
  %v428 = vunpack.c.l.b16 %v19
  %v429 = vunpack.c.h.b16 %v19
  %v430 = vunpack.c.l.b16 %v20
  %v431 = vunpack.c.h.b16 %v20
  %v432 = vunpack.c.l.b16 %v21
  %v433 = vunpack.c.h.b16 %v21
  %v434 = vunpack.c.l.b16 %v22
  %v435 = vunpack.c.h.b16 %v22
  %v436 = vunpack.c.l.b16 %v23
  %v437 = vunpack.c.h.b16 %v23
  %v438 = vunpack.c.l.b16 %v24
  %v439 = vunpack.c.h.b16 %v24
  %v440 = vunpack.c.l.b16 %v25
  %v441 = vunpack.c.h.b16 %v25
  %v442 = vunpack.c.l.b16 %v26
  %v443 = vunpack.c.h.b16 %v26
  %v444 = vunpack.c.l.b16 %v27
  %v445 = vunpack.c.h.b16 %v27
  %v446 = vunpack.c.l.b16 %v28
  %v447 = vunpack.c.h.b16 %v28
  %v448 = vunpack.c.l.b16 %v29
  %v449 = vunpack.c.h.b16 %v29
  %v450 = vunpack.c.l.b16 %v30
  %v451 = vunpack.c.h.b16 %v30
  %v452 = vunpack.c.l.b16 %v31
  %v453 = vunpack.c.h.b16 %v31
  %v454 = vunpack.c.l.b16 %v32
  %v455 = vunpack.c.h.b16 %v32
  %v456 = vunpack.c.l.b16 %v33
  %v457 = vunpack.c.h.b16 %v33
  %v458 = vunpack.c.l.b16 %v34
  %v459 = vunpack.c.h.b16 %v34
  %v460 = vunpack.c.l.b16 %v35
  %v461 = vunpack.c.h.b16 %v35
  %v462 = vunpack.c.l.b16 %v36
  %v463 = vunpack.c.h.b16 %v36
  %v464 = vunpack.c.l.b16 %v37
  %v465 = vunpack.c.h.b16 %v37
  %v466 = vunpack.c.l.b16 %v38
  %v467 = vunpack.c.h.b16 %v38
  %v468 = vunpack.c.l.b16 %v39
  %v469 = vunpack.c.h.b16 %v39
  %v470 = vunpack.c.l.b16 %v40
  %v471 = vunpack.c.h.b16 %v40
  %v472 = vunpack.c.l.b16 %v41
  %v473 = vunpack.c.h.b16 %v41
  %v474 = vpack.c.b16 %v432, %v426
  %v475 = vpack.c.b16 %v433, %v427
  %v476 = vpack.c.b16 %v434, %v428
  %v477 = vpack.c.b16 %v435, %v429
  %v478 = vpack.c.b16 %v436, %v430
  %v479 = vpack.c.b16 %v437, %v431
  %v480 = vpack.c.b16 %v444, %v438
  %v481 = vpack.c.b16 %v445, %v439
  %v482 = vpack.c.b16 %v446, %v440
  %v483 = vpack.c.b16 %v447, %v441
  %v484 = vpack.c.b16 %v448, %v442
  %v485 = vpack.c.b16 %v449, %v443
  %v486 = vpack.c.b16 %v456, %v450
  %v487 = vpack.c.b16 %v457, %v451
  %v488 = vpack.c.b16 %v458, %v452
  %v489 = vpack.c.b16 %v459, %v453
  %v490 = vpack.c.b16 %v460, %v454
  %v491 = vpack.c.b16 %v461, %v455
  %v492 = vpack.c.b16 %v468, %v462
  %v493 = vpack.c.b16 %v469, %v463
  %v494 = vpack.c.b16 %v470, %v464
  %v495 = vpack.c.b16 %v471, %v465
  %v496 = vpack.c.b16 %v472, %v466
  %v497 = vpack.c.b16 %v473, %v467
  %v878 = vunpack.c.l.b16 %v42
  %v879 = vunpack.c.h.b16 %v42
  %v880 = vunpack.c.l.b16 %v43
  %v881 = vunpack.c.h.b16 %v43
  %v882 = vunpack.c.l.b16 %v44
  %v883 = vunpack.c.h.b16 %v44
  %v884 = vunpack.c.l.b16 %v45
  %v885 = vunpack.c.h.b16 %v45
  %v886 = vunpack.c.l.b16 %v46
  %v887 = vunpack.c.h.b16 %v46
  %v888 = vunpack.c.l.b16 %v47
  %v889 = vunpack.c.h.b16 %v47
  %v890 = vunpack.c.l.b16 %v48
  %v891 = vunpack.c.h.b16 %v48
  %v892 = vunpack.c.l.b16 %v49
  %v893 = vunpack.c.h.b16 %v49
  %v894 = vunpack.c.l.b16 %v50
  %v895 = vunpack.c.h.b16 %v50
  %v896 = vunpack.c.l.b16 %v51
  %v897 = vunpack.c.h.b16 %v51
  %v898 = vunpack.c.l.b16 %v52
  %v899 = vunpack.c.h.b16 %v52
  %v900 = vunpack.c.l.b16 %v53
  %v901 = vunpack.c.h.b16 %v53
  %v902 = vunpack.c.l.b16 %v54
  %v903 = vunpack.c.h.b16 %v54
  %v904 = vunpack.c.l.b16 %v55
  %v905 = vunpack.c.h.b16 %v55
  %v906 = vunpack.c.l.b16 %v56
  %v907 = vunpack.c.h.b16 %v56
  %v908 = vunpack.c.l.b16 %v57
  %v909 = vunpack.c.h.b16 %v57
  %v910 = vunpack.c.l.b16 %v58
  %v911 = vunpack.c.h.b16 %v58
  %v912 = vunpack.c.l.b16 %v59
  %v913 = vunpack.c.h.b16 %v59
  %v914 = vunpack.c.l.b16 %v60
  %v915 = vunpack.c.h.b16 %v60
  %v916 = vunpack.c.l.b16 %v61
  %v917 = vunpack.c.h.b16 %v61
  %v918 = vunpack.c.l.b16 %v62
  %v919 = vunpack.c.h.b16 %v62
  %v920 = vunpack.c.l.b16 %v63
  %v921 = vunpack.c.h.b16 %v63
  %v922 = vunpack.c.l.b16 %v64
  %v923 = vunpack.c.h.b16 %v64
  %v924 = vunpack.c.l.b16 %v65
  %v925 = vunpack.c.h.b16 %v65
  %v926 = vunpack.c.l.b16 %v66
  %v927 = vunpack.c.h.b16 %v66
  %v928 = vunpack.c.l.b16 %v67
  %v929 = vunpack.c.h.b16 %v67
  %v930 = vunpack.c.l.b16 %v68
  %v931 = vunpack.c.h.b16 %v68
  %v932 = vunpack.c.l.b16 %v69
  %v933 = vunpack.c.h.b16 %v69
  %v934 = vunpack.c.l.b16 %v70
  %v935 = vunpack.c.h.b16 %v70
  %v936 = vunpack.c.l.b16 %v71
  %v937 = vunpack.c.h.b16 %v71
  %v938 = vunpack.c.l.b16 %v72
  %v939 = vunpack.c.h.b16 %v72
  %v940 = vunpack.c.l.b16 %v73
  %v941 = vunpack.c.h.b16 %v73
  %v942 = vunpack.c.l.b16 %v74
  %v943 = vunpack.c.h.b16 %v74
  %v944 = vunpack.c.l.b16 %v75
  %v945 = vunpack.c.h.b16 %v75
  %v946 = vunpack.c.l.b16 %v76
  %v947 = vunpack.c.h.b16 %v76
  %v948 = vunpack.c.l.b16 %v77
  %v949 = vunpack.c.h.b16 %v77
  %v950 = vunpack.c.l.b16 %v78
  %v951 = vunpack.c.h.b16 %v78
  %v952 = vunpack.c.l.b16 %v79
  %v953 = vunpack.c.h.b16 %v79
  %v954 = vunpack.c.l.b16 %v80
  %v955 = vunpack.c.h.b16 %v80
  %v956 = vunpack.c.l.b16 %v81
  %v957 = vunpack.c.h.b16 %v81
  %v958 = vunpack.c.l.b16 %v82
  %v959 = vunpack.c.h.b16 %v82
  %v960 = vunpack.c.l.b16 %v83
  %v961 = vunpack.c.h.b16 %v83
  %v962 = vunpack.c.l.b16 %v84
  %v963 = vunpack.c.h.b16 %v84
  %v964 = vunpack.c.l.b16 %v85
  %v965 = vunpack.c.h.b16 %v85
  %v966 = vunpack.c.l.b16 %v86
  %v967 = vunpack.c.h.b16 %v86
  %v968 = vunpack.c.l.b16 %v87
  %v969 = vunpack.c.h.b16 %v87
  %v970 = vunpack.c.l.b16 %v88
  %v971 = vunpack.c.h.b16 %v88
  %v972 = vunpack.c.l.b16 %v89
  %v973 = vunpack.c.h.b16 %v89
  %v974 = vunpack.c.l.b16 %v90
  %v975 = vunpack.c.h.b16 %v90
  %v976 = vunpack.c.l.b16 %v91
  %v977 = vunpack.c.h.b16 %v91
  %v978 = vunpack.c.l.b16 %v92
  %v979 = vunpack.c.h.b16 %v92
  %v980 = vunpack.c.l.b16 %v93
  %v981 = vunpack.c.h.b16 %v93
  %v982 = vunpack.c.l.b16 %v94
  %v983 = vunpack.c.h.b16 %v94
  %v984 = vunpack.c.l.b16 %v95
  %v985 = vunpack.c.h.b16 %v95
  %v986 = vunpack.c.l.b16 %v96
  %v987 = vunpack.c.h.b16 %v96
  %v988 = vunpack.c.l.b16 %v97
  %v989 = vunpack.c.h.b16 %v97
  %v990 = vunpack.c.l.b16 %v98
  %v991 = vunpack.c.h.b16 %v98
  %v992 = vunpack.c.l.b16 %v99
  %v993 = vunpack.c.h.b16 %v99
  %v994 = vunpack.c.l.b16 %v100
  %v995 = vunpack.c.h.b16 %v100
  %v996 = vunpack.c.l.b16 %v101
  %v997 = vunpack.c.h.b16 %v101
  %v998 = vunpack.c.l.b16 %v102
  %v999 = vunpack.c.h.b16 %v102
  %v1000 = vunpack.c.l.b16 %v103
  %v1001 = vunpack.c.h.b16 %v103
  %v1002 = vunpack.c.l.b16 %v104
  %v1003 = vunpack.c.h.b16 %v104
  %v1004 = vunpack.c.l.b16 %v105
  %v1005 = vunpack.c.h.b16 %v105
  %v1006 = vunpack.c.l.b16 %v106
  %v1007 = vunpack.c.h.b16 %v106
  %v1008 = vunpack.c.l.b16 %v107
  %v1009 = vunpack.c.h.b16 %v107
  %v1010 = vunpack.c.l.b16 %v108
  %v1011 = vunpack.c.h.b16 %v108
  %v1012 = vunpack.c.l.b16 %v109
  %v1013 = vunpack.c.h.b16 %v109
  %v1014 = vunpack.c.l.b16 %v110
  %v1015 = vunpack.c.h.b16 %v110
  %v1016 = vunpack.c.l.b16 %v111
  %v1017 = vunpack.c.h.b16 %v111
  %v1018 = vunpack.c.l.b16 %v112
  %v1019 = vunpack.c.h.b16 %v112
  %v1020 = vunpack.c.l.b16 %v113
  %v1021 = vunpack.c.h.b16 %v113
  %v1022 = vunpack.c.l.b16 %v114
  %v1023 = vunpack.c.h.b16 %v114
  %v1024 = vunpack.c.l.b16 %v115
  %v1025 = vunpack.c.h.b16 %v115
  %v1026 = vunpack.c.l.b16 %v116
  %v1027 = vunpack.c.h.b16 %v116
  %v1028 = vunpack.c.l.b16 %v117
  %v1029 = vunpack.c.h.b16 %v117
  %v1030 = vunpack.c.l.b16 %v118
  %v1031 = vunpack.c.h.b16 %v118
  %v1032 = vunpack.c.l.b16 %v119
  %v1033 = vunpack.c.h.b16 %v119
  %v1034 = vunpack.c.l.b16 %v120
  %v1035 = vunpack.c.h.b16 %v120
  %v1036 = vunpack.c.l.b16 %v121
  %v1037 = vunpack.c.h.b16 %v121
  %v1038 = vunpack.c.l.b16 %v122
  %v1039 = vunpack.c.h.b16 %v122
  %v1040 = vunpack.c.l.b16 %v123
  %v1041 = vunpack.c.h.b16 %v123
  %v1042 = vunpack.c.l.b16 %v124
  %v1043 = vunpack.c.h.b16 %v124
  %v1044 = vunpack.c.l.b16 %v125
  %v1045 = vunpack.c.h.b16 %v125
  %v1046 = vunpack.c.l.b16 %v126
  %v1047 = vunpack.c.h.b16 %v126
  %v1048 = vunpack.c.l.b16 %v127
  %v1049 = vunpack.c.h.b16 %v127
  %v1050 = vunpack.c.l.b16 %v128
  %v1051 = vunpack.c.h.b16 %v128
  %v1052 = vunpack.c.l.b16 %v129
  %v1053 = vunpack.c.h.b16 %v129
  %v1054 = vunpack.c.l.b16 %v130
  %v1055 = vunpack.c.h.b16 %v130
  %v1056 = vunpack.c.l.b16 %v131
  %v1057 = vunpack.c.h.b16 %v131
  %v1058 = vunpack.c.l.b16 %v132
  %v1059 = vunpack.c.h.b16 %v132
  %v1060 = vunpack.c.l.b16 %v133
  %v1061 = vunpack.c.h.b16 %v133
  %v1062 = vunpack.c.l.b16 %v134
  %v1063 = vunpack.c.h.b16 %v134
  %v1064 = vunpack.c.l.b16 %v135
  %v1065 = vunpack.c.h.b16 %v135
  %v1066 = vunpack.c.l.b16 %v136
  %v1067 = vunpack.c.h.b16 %v136
  %v1068 = vunpack.c.l.b16 %v137
  %v1069 = vunpack.c.h.b16 %v137
  %v1070 = vunpack.c.l.b16 %v138
  %v1071 = vunpack.c.h.b16 %v138
  %v1072 = vunpack.c.l.b16 %v139
  %v1073 = vunpack.c.h.b16 %v139
  %v1074 = vunpack.c.l.b16 %v140
  %v1075 = vunpack.c.h.b16 %v140
  %v1076 = vunpack.c.l.b16 %v141
  %v1077 = vunpack.c.h.b16 %v141
  %v1078 = vunpack.c.l.b16 %v142
  %v1079 = vunpack.c.h.b16 %v142
  %v1080 = vunpack.c.l.b16 %v143
  %v1081 = vunpack.c.h.b16 %v143
  %v1082 = vunpack.c.l.b16 %v144
  %v1083 = vunpack.c.h.b16 %v144
  %v1084 = vunpack.c.l.b16 %v145
  %v1085 = vunpack.c.h.b16 %v145
  %v1086 = vunpack.c.l.b16 %v146
  %v1087 = vunpack.c.h.b16 %v146
  %v1088 = vunpack.c.l.b16 %v147
  %v1089 = vunpack.c.h.b16 %v147
  %v1090 = vunpack.c.l.b16 %v148
  %v1091 = vunpack.c.h.b16 %v148
  %v1092 = vunpack.c.l.b16 %v149
  %v1093 = vunpack.c.h.b16 %v149
  %v1094 = vunpack.c.l.b16 %v150
  %v1095 = vunpack.c.h.b16 %v150
  %v1096 = vunpack.c.l.b16 %v151
  %v1097 = vunpack.c.h.b16 %v151
  %v1098 = vunpack.c.l.b16 %v152
  %v1099 = vunpack.c.h.b16 %v152
  %v1100 = vunpack.c.l.b16 %v153
  %v1101 = vunpack.c.h.b16 %v153
  %v1102 = vunpack.c.l.b16 %v154
  %v1103 = vunpack.c.h.b16 %v154
  %v1104 = vunpack.c.l.b16 %v155
  %v1105 = vunpack.c.h.b16 %v155
  %v1106 = vunpack.c.l.b16 %v156
  %v1107 = vunpack.c.h.b16 %v156
  %v1108 = vunpack.c.l.b16 %v157
  %v1109 = vunpack.c.h.b16 %v157
  %v1110 = vunpack.c.l.b16 %v158
  %v1111 = vunpack.c.h.b16 %v158
  %v1112 = vunpack.c.l.b16 %v159
  %v1113 = vunpack.c.h.b16 %v159
  %v1114 = vunpack.c.l.b16 %v160
  %v1115 = vunpack.c.h.b16 %v160
  %v1116 = vunpack.c.l.b16 %v161
  %v1117 = vunpack.c.h.b16 %v161
  %v1118 = vunpack.c.l.b16 %v162
  %v1119 = vunpack.c.h.b16 %v162
  %v1120 = vunpack.c.l.b16 %v163
  %v1121 = vunpack.c.h.b16 %v163
  %v1122 = vunpack.c.l.b16 %v164
  %v1123 = vunpack.c.h.b16 %v164
  %v1124 = vunpack.c.l.b16 %v165
  %v1125 = vunpack.c.h.b16 %v165
  %v1126 = vunpack.c.l.b16 %v166
  %v1127 = vunpack.c.h.b16 %v166
  %v1128 = vunpack.c.l.b16 %v167
  %v1129 = vunpack.c.h.b16 %v167
  %v1130 = vunpack.c.l.b16 %v168
  %v1131 = vunpack.c.h.b16 %v168
  %v1132 = vunpack.c.l.b16 %v169
  %v1133 = vunpack.c.h.b16 %v169
  %v1134 = vunpack.c.l.b16 %v170
  %v1135 = vunpack.c.h.b16 %v170
  %v1136 = vunpack.c.l.b16 %v171
  %v1137 = vunpack.c.h.b16 %v171
  %v1138 = vunpack.c.l.b16 %v172
  %v1139 = vunpack.c.h.b16 %v172
  %v1140 = vunpack.c.l.b16 %v173
  %v1141 = vunpack.c.h.b16 %v173
  %v1142 = vunpack.c.l.b16 %v174
  %v1143 = vunpack.c.h.b16 %v174
  %v1144 = vunpack.c.l.b16 %v175
  %v1145 = vunpack.c.h.b16 %v175
  %v1146 = vunpack.c.l.b16 %v176
  %v1147 = vunpack.c.h.b16 %v176
  %v1148 = vunpack.c.l.b16 %v177
  %v1149 = vunpack.c.h.b16 %v177
  %v1150 = vunpack.c.l.b16 %v178
  %v1151 = vunpack.c.h.b16 %v178
  %v1152 = vunpack.c.l.b16 %v179
  %v1153 = vunpack.c.h.b16 %v179
  %v1154 = vunpack.c.l.b16 %v180
  %v1155 = vunpack.c.h.b16 %v180
  %v1156 = vunpack.c.l.b16 %v181
  %v1157 = vunpack.c.h.b16 %v181
  %v1158 = vunpack.c.l.b16 %v182
  %v1159 = vunpack.c.h.b16 %v182
  %v1160 = vunpack.c.l.b16 %v183
  %v1161 = vunpack.c.h.b16 %v183
  %v1162 = vunpack.c.l.b16 %v184
  %v1163 = vunpack.c.h.b16 %v184
  %v1164 = vunpack.c.l.b16 %v185
  %v1165 = vunpack.c.h.b16 %v185
  %v1166 = vunpack.c.l.b16 %v186
  %v1167 = vunpack.c.h.b16 %v186
  %v1168 = vunpack.c.l.b16 %v187
  %v1169 = vunpack.c.h.b16 %v187
  %v1170 = vunpack.c.l.b16 %v188
  %v1171 = vunpack.c.h.b16 %v188
  %v1172 = vunpack.c.l.b16 %v189
  %v1173 = vunpack.c.h.b16 %v189
  %v1174 = vunpack.c.l.b16 %v190
  %v1175 = vunpack.c.h.b16 %v190
  %v1176 = vunpack.c.l.b16 %v191
  %v1177 = vunpack.c.h.b16 %v191
  %v1178 = vunpack.c.l.b16 %v192
  %v1179 = vunpack.c.h.b16 %v192
  %v1180 = vunpack.c.l.b16 %v193
  %v1181 = vunpack.c.h.b16 %v193
  %v1182 = vunpack.c.l.b16 %v194
  %v1183 = vunpack.c.h.b16 %v194
  %v1184 = vunpack.c.l.b16 %v195
  %v1185 = vunpack.c.h.b16 %v195
  %v1186 = vunpack.c.l.b16 %v196
  %v1187 = vunpack.c.h.b16 %v196
  %v1188 = vunpack.c.l.b16 %v197
  %v1189 = vunpack.c.h.b16 %v197
  %v1190 = vunpack.c.l.b16 %v198
  %v1191 = vunpack.c.h.b16 %v198
  %v1192 = vunpack.c.l.b16 %v199
  %v1193 = vunpack.c.h.b16 %v199
  %v1194 = vunpack.c.l.b16 %v200
  %v1195 = vunpack.c.h.b16 %v200
  %v1196 = vunpack.c.l.b16 %v201
  %v1197 = vunpack.c.h.b16 %v201
  %v1198 = vunpack.c.l.b16 %v202
  %v1199 = vunpack.c.h.b16 %v202
  %v1200 = vunpack.c.l.b16 %v203
  %v1201 = vunpack.c.h.b16 %v203
  %v1202 = vunpack.c.l.b16 %v204
  %v1203 = vunpack.c.h.b16 %v204
  %v1204 = vunpack.c.l.b16 %v205
  %v1205 = vunpack.c.h.b16 %v205
  %v1206 = vunpack.c.l.b16 %v206
  %v1207 = vunpack.c.h.b16 %v206
  %v1208 = vunpack.c.l.b16 %v207
  %v1209 = vunpack.c.h.b16 %v207
  %v1210 = vunpack.c.l.b16 %v208
  %v1211 = vunpack.c.h.b16 %v208
  %v1212 = vunpack.c.l.b16 %v209
  %v1213 = vunpack.c.h.b16 %v209
  %v1214 = vunpack.c.l.b16 %v210
  %v1215 = vunpack.c.h.b16 %v210
  %v1216 = vunpack.c.l.b16 %v211
  %v1217 = vunpack.c.h.b16 %v211
  %v1218 = vunpack.c.l.b16 %v212
  %v1219 = vunpack.c.h.b16 %v212
  %v1220 = vunpack.c.l.b16 %v213
  %v1221 = vunpack.c.h.b16 %v213
  %v1222 = vunpack.c.l.b16 %v214
  %v1223 = vunpack.c.h.b16 %v214
  %v1224 = vunpack.c.l.b16 %v215
  %v1225 = vunpack.c.h.b16 %v215
  %v1226 = vunpack.c.l.b16 %v216
  %v1227 = vunpack.c.h.b16 %v216
  %v1228 = vunpack.c.l.b16 %v217
  %v1229 = vunpack.c.h.b16 %v217
  %v1230 = vunpack.c.l.b16 %v218
  %v1231 = vunpack.c.h.b16 %v218
  %v1232 = vunpack.c.l.b16 %v219
  %v1233 = vunpack.c.h.b16 %v219
  %v1234 = vunpack.c.l.b16 %v220
  %v1235 = vunpack.c.h.b16 %v220
  %v1236 = vunpack.c.l.b16 %v221
  %v1237 = vunpack.c.h.b16 %v221
  %v1238 = vunpack.c.l.b16 %v222
  %v1239 = vunpack.c.h.b16 %v222
  %v1240 = vunpack.c.l.b16 %v223
  %v1241 = vunpack.c.h.b16 %v223
  %v1242 = vunpack.c.l.b16 %v224
  %v1243 = vunpack.c.h.b16 %v224
  %v1244 = vunpack.c.l.b16 %v225
  %v1245 = vunpack.c.h.b16 %v225
  %v1246 = vunpack.c.l.b16 %v226
  %v1247 = vunpack.c.h.b16 %v226
  %v1248 = vunpack.c.l.b16 %v227
  %v1249 = vunpack.c.h.b16 %v227
  %v1250 = vunpack.c.l.b16 %v228
  %v1251 = vunpack.c.h.b16 %v228
  %v1252 = vunpack.c.l.b16 %v229
  %v1253 = vunpack.c.h.b16 %v229
  %v1254 = vunpack.c.l.b16 %v230
  %v1255 = vunpack.c.h.b16 %v230
  %v1256 = vunpack.c.l.b16 %v231
  %v1257 = vunpack.c.h.b16 %v231
  %v1258 = vunpack.c.l.b16 %v232
  %v1259 = vunpack.c.h.b16 %v232
  %v1260 = vunpack.c.l.b16 %v233
  %v1261 = vunpack.c.h.b16 %v233
  %v1262 = vunpack.c.l.b16 %v234
  %v1263 = vunpack.c.h.b16 %v234
  %v1264 = vunpack.c.l.b16 %v235
  %v1265 = vunpack.c.h.b16 %v235
  %v1266 = vunpack.c.l.b16 %v236
  %v1267 = vunpack.c.h.b16 %v236
  %v1268 = vunpack.c.l.b16 %v237
  %v1269 = vunpack.c.h.b16 %v237
  %v1270 = vunpack.c.l.b16 %v238
  %v1271 = vunpack.c.h.b16 %v238
  %v1272 = vunpack.c.l.b16 %v239
  %v1273 = vunpack.c.h.b16 %v239
  %v1274 = vunpack.c.l.b16 %v240
  %v1275 = vunpack.c.h.b16 %v240
  %v1276 = vunpack.c.l.b16 %v241
  %v1277 = vunpack.c.h.b16 %v241
  %v1278 = vunpack.c.l.b16 %v242
  %v1279 = vunpack.c.h.b16 %v242
  %v1280 = vunpack.c.l.b16 %v243
  %v1281 = vunpack.c.h.b16 %v243
  %v1282 = vunpack.c.l.b16 %v244
  %v1283 = vunpack.c.h.b16 %v244
  %v1284 = vunpack.c.l.b16 %v245
  %v1285 = vunpack.c.h.b16 %v245
  %v1286 = vunpack.c.l.b16 %v246
  %v1287 = vunpack.c.h.b16 %v246
  %v1288 = vunpack.c.l.b16 %v247
  %v1289 = vunpack.c.h.b16 %v247
  %v1290 = vunpack.c.l.b16 %v248
  %v1291 = vunpack.c.h.b16 %v248
  %v1292 = vunpack.c.l.b16 %v249
  %v1293 = vunpack.c.h.b16 %v249
  %v1294 = vunpack.c.l.b16 %v250
  %v1295 = vunpack.c.h.b16 %v250
  %v1296 = vunpack.c.l.b16 %v251
  %v1297 = vunpack.c.h.b16 %v251
  %v1298 = vunpack.c.l.b16 %v252
  %v1299 = vunpack.c.h.b16 %v252
  %v1300 = vunpack.c.l.b16 %v253
  %v1301 = vunpack.c.h.b16 %v253
  %v1302 = vunpack.c.l.b16 %v254
  %v1303 = vunpack.c.h.b16 %v254
  %v1304 = vunpack.c.l.b16 %v255
  %v1305 = vunpack.c.h.b16 %v255
  %v1306 = vunpack.c.l.b16 %v256
  %v1307 = vunpack.c.h.b16 %v256
  %v1308 = vunpack.c.l.b16 %v257
  %v1309 = vunpack.c.h.b16 %v257
  %v1310 = vunpack.c.l.b16 %v258
  %v1311 = vunpack.c.h.b16 %v258
  %v1312 = vunpack.c.l.b16 %v259
  %v1313 = vunpack.c.h.b16 %v259
  %v1314 = vunpack.c.l.b16 %v260
  %v1315 = vunpack.c.h.b16 %v260
  %v1316 = vunpack.c.l.b16 %v261
  %v1317 = vunpack.c.h.b16 %v261
  %v1318 = vunpack.c.l.b16 %v262
  %v1319 = vunpack.c.h.b16 %v262
  %v1320 = vunpack.c.l.b16 %v263
  %v1321 = vunpack.c.h.b16 %v263
  %v1322 = vunpack.c.l.b16 %v264
  %v1323 = vunpack.c.h.b16 %v264
  %v1324 = vunpack.c.l.b16 %v265
  %v1325 = vunpack.c.h.b16 %v265
  %v1326 = vunpack.c.l.b16 %v266
  %v1327 = vunpack.c.h.b16 %v266
  %v1328 = vunpack.c.l.b16 %v267
  %v1329 = vunpack.c.h.b16 %v267
  %v1330 = vunpack.c.l.b16 %v268
  %v1331 = vunpack.c.h.b16 %v268
  %v1332 = vunpack.c.l.b16 %v269
  %v1333 = vunpack.c.h.b16 %v269
  %v1334 = vunpack.c.l.b16 %v270
  %v1335 = vunpack.c.h.b16 %v270
  %v1336 = vunpack.c.l.b16 %v271
  %v1337 = vunpack.c.h.b16 %v271
  %v1338 = vunpack.c.l.b16 %v272
  %v1339 = vunpack.c.h.b16 %v272
  %v1340 = vunpack.c.l.b16 %v273
  %v1341 = vunpack.c.h.b16 %v273
  %v1342 = vunpack.c.l.b16 %v274
  %v1343 = vunpack.c.h.b16 %v274
  %v1344 = vunpack.c.l.b16 %v275
  %v1345 = vunpack.c.h.b16 %v275
  %v1346 = vunpack.c.l.b16 %v276
  %v1347 = vunpack.c.h.b16 %v276
  %v1348 = vunpack.c.l.b16 %v277
  %v1349 = vunpack.c.h.b16 %v277
  %v1350 = vunpack.c.l.b16 %v278
  %v1351 = vunpack.c.h.b16 %v278
  %v1352 = vunpack.c.l.b16 %v279
  %v1353 = vunpack.c.h.b16 %v279
  %v1354 = vunpack.c.l.b16 %v280
  %v1355 = vunpack.c.h.b16 %v280
  %v1356 = vunpack.c.l.b16 %v281
  %v1357 = vunpack.c.h.b16 %v281
  %v1358 = vunpack.c.l.b16 %v282
  %v1359 = vunpack.c.h.b16 %v282
  %v1360 = vunpack.c.l.b16 %v283
  %v1361 = vunpack.c.h.b16 %v283
  %v1362 = vunpack.c.l.b16 %v284
  %v1363 = vunpack.c.h.b16 %v284
  %v1364 = vunpack.c.l.b16 %v285
  %v1365 = vunpack.c.h.b16 %v285
  %v1366 = vunpack.c.l.b16 %v286
  %v1367 = vunpack.c.h.b16 %v286
  %v1368 = vunpack.c.l.b16 %v287
  %v1369 = vunpack.c.h.b16 %v287
  %v1370 = vunpack.c.l.b16 %v288
  %v1371 = vunpack.c.h.b16 %v288
  %v1372 = vunpack.c.l.b16 %v289
  %v1373 = vunpack.c.h.b16 %v289
  %v1374 = vunpack.c.l.b16 %v290
  %v1375 = vunpack.c.h.b16 %v290
  %v1376 = vunpack.c.l.b16 %v291
  %v1377 = vunpack.c.h.b16 %v291
  %v1378 = vunpack.c.l.b16 %v292
  %v1379 = vunpack.c.h.b16 %v292
  %v1380 = vunpack.c.l.b16 %v293
  %v1381 = vunpack.c.h.b16 %v293
  %v1382 = vunpack.c.l.b16 %v294
  %v1383 = vunpack.c.h.b16 %v294
  %v1384 = vunpack.c.l.b16 %v295
  %v1385 = vunpack.c.h.b16 %v295
  %v1386 = vunpack.c.l.b16 %v296
  %v1387 = vunpack.c.h.b16 %v296
  %v1388 = vunpack.c.l.b16 %v297
  %v1389 = vunpack.c.h.b16 %v297
  %v1390 = vunpack.c.l.b16 %v298
  %v1391 = vunpack.c.h.b16 %v298
  %v1392 = vunpack.c.l.b16 %v299
  %v1393 = vunpack.c.h.b16 %v299
  %v1394 = vunpack.c.l.b16 %v300
  %v1395 = vunpack.c.h.b16 %v300
  %v1396 = vunpack.c.l.b16 %v301
  %v1397 = vunpack.c.h.b16 %v301
  %v1398 = vunpack.c.l.b16 %v302
  %v1399 = vunpack.c.h.b16 %v302
  %v1400 = vunpack.c.l.b16 %v303
  %v1401 = vunpack.c.h.b16 %v303
  %v1402 = vunpack.c.l.b16 %v304
  %v1403 = vunpack.c.h.b16 %v304
  %v1404 = vunpack.c.l.b16 %v305
  %v1405 = vunpack.c.h.b16 %v305
  %v1406 = vunpack.c.l.b16 %v306
  %v1407 = vunpack.c.h.b16 %v306
  %v1408 = vunpack.c.l.b16 %v307
  %v1409 = vunpack.c.h.b16 %v307
  %v1410 = vunpack.c.l.b16 %v308
  %v1411 = vunpack.c.h.b16 %v308
  %v1412 = vunpack.c.l.b16 %v309
  %v1413 = vunpack.c.h.b16 %v309
  %v1414 = vunpack.c.l.b16 %v310
  %v1415 = vunpack.c.h.b16 %v310
  %v1416 = vunpack.c.l.b16 %v311
  %v1417 = vunpack.c.h.b16 %v311
  %v1418 = vunpack.c.l.b16 %v312
  %v1419 = vunpack.c.h.b16 %v312
  %v1420 = vunpack.c.l.b16 %v313
  %v1421 = vunpack.c.h.b16 %v313
  %v1422 = vunpack.c.l.b16 %v314
  %v1423 = vunpack.c.h.b16 %v314
  %v1424 = vunpack.c.l.b16 %v315
  %v1425 = vunpack.c.h.b16 %v315
  %v1426 = vunpack.c.l.b16 %v316
  %v1427 = vunpack.c.h.b16 %v316
  %v1428 = vunpack.c.l.b16 %v317
  %v1429 = vunpack.c.h.b16 %v317
  %v1430 = vunpack.c.l.b16 %v318
  %v1431 = vunpack.c.h.b16 %v318
  %v1432 = vunpack.c.l.b16 %v319
  %v1433 = vunpack.c.h.b16 %v319
  %v1434 = vunpack.c.l.b16 %v320
  %v1435 = vunpack.c.h.b16 %v320
  %v1436 = vunpack.c.l.b16 %v321
  %v1437 = vunpack.c.h.b16 %v321
  %v1438 = vunpack.c.l.b16 %v322
  %v1439 = vunpack.c.h.b16 %v322
  %v1440 = vunpack.c.l.b16 %v323
  %v1441 = vunpack.c.h.b16 %v323
  %v1442 = vunpack.c.l.b16 %v324
  %v1443 = vunpack.c.h.b16 %v324
  %v1444 = vunpack.c.l.b16 %v325
  %v1445 = vunpack.c.h.b16 %v325
  %v1446 = vunpack.c.l.b16 %v326
  %v1447 = vunpack.c.h.b16 %v326
  %v1448 = vunpack.c.l.b16 %v327
  %v1449 = vunpack.c.h.b16 %v327
  %v1450 = vunpack.c.l.b16 %v328
  %v1451 = vunpack.c.h.b16 %v328
  %v1452 = vunpack.c.l.b16 %v329
  %v1453 = vunpack.c.h.b16 %v329
  %v1454 = vunpack.c.l.b16 %v330
  %v1455 = vunpack.c.h.b16 %v330
  %v1456 = vunpack.c.l.b16 %v331
  %v1457 = vunpack.c.h.b16 %v331
  %v1458 = vunpack.c.l.b16 %v332
  %v1459 = vunpack.c.h.b16 %v332
  %v1460 = vunpack.c.l.b16 %v333
  %v1461 = vunpack.c.h.b16 %v333
  %v1462 = vunpack.c.l.b16 %v334
  %v1463 = vunpack.c.h.b16 %v334
  %v1464 = vunpack.c.l.b16 %v335
  %v1465 = vunpack.c.h.b16 %v335
  %v1466 = vunpack.c.l.b16 %v336
  %v1467 = vunpack.c.h.b16 %v336
  %v1468 = vunpack.c.l.b16 %v337
  %v1469 = vunpack.c.h.b16 %v337
  %v1470 = vunpack.c.l.b16 %v338
  %v1471 = vunpack.c.h.b16 %v338
  %v1472 = vunpack.c.l.b16 %v339
  %v1473 = vunpack.c.h.b16 %v339
  %v1474 = vunpack.c.l.b16 %v340
  %v1475 = vunpack.c.h.b16 %v340
  %v1476 = vunpack.c.l.b16 %v341
  %v1477 = vunpack.c.h.b16 %v341
  %v1478 = vunpack.c.l.b16 %v342
  %v1479 = vunpack.c.h.b16 %v342
  %v1480 = vunpack.c.l.b16 %v343
  %v1481 = vunpack.c.h.b16 %v343
  %v1482 = vunpack.c.l.b16 %v344
  %v1483 = vunpack.c.h.b16 %v344
  %v1484 = vunpack.c.l.b16 %v345
  %v1485 = vunpack.c.h.b16 %v345
  %v1486 = vunpack.c.l.b16 %v346
  %v1487 = vunpack.c.h.b16 %v346
  %v1488 = vunpack.c.l.b16 %v347
  %v1489 = vunpack.c.h.b16 %v347
  %v1490 = vunpack.c.l.b16 %v348
  %v1491 = vunpack.c.h.b16 %v348
  %v1492 = vunpack.c.l.b16 %v349
  %v1493 = vunpack.c.h.b16 %v349
  %v1494 = vunpack.c.l.b16 %v350
  %v1495 = vunpack.c.h.b16 %v350
  %v1496 = vunpack.c.l.b16 %v351
  %v1497 = vunpack.c.h.b16 %v351
  %v1498 = vunpack.c.l.b16 %v352
  %v1499 = vunpack.c.h.b16 %v352
  %v1500 = vunpack.c.l.b16 %v353
  %v1501 = vunpack.c.h.b16 %v353
  %v1502 = vunpack.c.l.b16 %v354
  %v1503 = vunpack.c.h.b16 %v354
  %v1504 = vunpack.c.l.b16 %v355
  %v1505 = vunpack.c.h.b16 %v355
  %v1506 = vunpack.c.l.b16 %v356
  %v1507 = vunpack.c.h.b16 %v356
  %v1508 = vunpack.c.l.b16 %v357
  %v1509 = vunpack.c.h.b16 %v357
  %v1510 = vunpack.c.l.b16 %v358
  %v1511 = vunpack.c.h.b16 %v358
  %v1512 = vunpack.c.l.b16 %v359
  %v1513 = vunpack.c.h.b16 %v359
  %v1514 = vunpack.c.l.b16 %v360
  %v1515 = vunpack.c.h.b16 %v360
  %v1516 = vunpack.c.l.b16 %v361
  %v1517 = vunpack.c.h.b16 %v361
  %v1518 = vunpack.c.l.b16 %v362
  %v1519 = vunpack.c.h.b16 %v362
  %v1520 = vunpack.c.l.b16 %v363
  %v1521 = vunpack.c.h.b16 %v363
  %v1522 = vunpack.c.l.b16 %v364
  %v1523 = vunpack.c.h.b16 %v364
  %v1524 = vunpack.c.l.b16 %v365
  %v1525 = vunpack.c.h.b16 %v365
  %v1526 = vunpack.c.l.b16 %v366
  %v1527 = vunpack.c.h.b16 %v366
  %v1528 = vunpack.c.l.b16 %v367
  %v1529 = vunpack.c.h.b16 %v367
  %v1530 = vunpack.c.l.b16 %v368
  %v1531 = vunpack.c.h.b16 %v368
  %v1532 = vunpack.c.l.b16 %v369
  %v1533 = vunpack.c.h.b16 %v369
  %v1534 = vunpack.c.l.b16 %v370
  %v1535 = vunpack.c.h.b16 %v370
  %v1536 = vunpack.c.l.b16 %v371
  %v1537 = vunpack.c.h.b16 %v371
  %v1538 = vunpack.c.l.b16 %v372
  %v1539 = vunpack.c.h.b16 %v372
  %v1540 = vunpack.c.l.b16 %v373
  %v1541 = vunpack.c.h.b16 %v373
  %v1542 = vunpack.c.l.b16 %v374
  %v1543 = vunpack.c.h.b16 %v374
  %v1544 = vunpack.c.l.b16 %v375
  %v1545 = vunpack.c.h.b16 %v375
  %v1546 = vunpack.c.l.b16 %v376
  %v1547 = vunpack.c.h.b16 %v376
  %v1548 = vunpack.c.l.b16 %v377
  %v1549 = vunpack.c.h.b16 %v377
  %v1550 = vunpack.c.l.b16 %v378
  %v1551 = vunpack.c.h.b16 %v378
  %v1552 = vunpack.c.l.b16 %v379
  %v1553 = vunpack.c.h.b16 %v379
  %v1554 = vunpack.c.l.b16 %v380
  %v1555 = vunpack.c.h.b16 %v380
  %v1556 = vunpack.c.l.b16 %v381
  %v1557 = vunpack.c.h.b16 %v381
  %v1558 = vunpack.c.l.b16 %v382
  %v1559 = vunpack.c.h.b16 %v382
  %v1560 = vunpack.c.l.b16 %v383
  %v1561 = vunpack.c.h.b16 %v383
  %v1562 = vunpack.c.l.b16 %v384
  %v1563 = vunpack.c.h.b16 %v384
  %v1564 = vunpack.c.l.b16 %v385
  %v1565 = vunpack.c.h.b16 %v385
  %v1566 = vunpack.c.l.b16 %v386
  %v1567 = vunpack.c.h.b16 %v386
  %v1568 = vunpack.c.l.b16 %v387
  %v1569 = vunpack.c.h.b16 %v387
  %v1570 = vunpack.c.l.b16 %v388
  %v1571 = vunpack.c.h.b16 %v388
  %v1572 = vunpack.c.l.b16 %v389
  %v1573 = vunpack.c.h.b16 %v389
  %v1574 = vunpack.c.l.b16 %v390
  %v1575 = vunpack.c.h.b16 %v390
  %v1576 = vunpack.c.l.b16 %v391
  %v1577 = vunpack.c.h.b16 %v391
  %v1578 = vunpack.c.l.b16 %v392
  %v1579 = vunpack.c.h.b16 %v392
  %v1580 = vunpack.c.l.b16 %v393
  %v1581 = vunpack.c.h.b16 %v393
  %v1582 = vunpack.c.l.b16 %v394
  %v1583 = vunpack.c.h.b16 %v394
  %v1584 = vunpack.c.l.b16 %v395
  %v1585 = vunpack.c.h.b16 %v395
  %v1586 = vunpack.c.l.b16 %v396
  %v1587 = vunpack.c.h.b16 %v396
  %v1588 = vunpack.c.l.b16 %v397
  %v1589 = vunpack.c.h.b16 %v397
  %v1590 = vunpack.c.l.b16 %v398
  %v1591 = vunpack.c.h.b16 %v398
  %v1592 = vunpack.c.l.b16 %v399
  %v1593 = vunpack.c.h.b16 %v399
  %v1594 = vunpack.c.l.b16 %v400
  %v1595 = vunpack.c.h.b16 %v400
  %v1596 = vunpack.c.l.b16 %v401
  %v1597 = vunpack.c.h.b16 %v401
  %v1598 = vpack.c.b16 %v886, %v878
  %v1599 = vpack.c.b16 %v887, %v879
  %v1600 = vpack.c.b16 %v888, %v880
  %v1601 = vpack.c.b16 %v889, %v881
  %v1602 = vpack.c.b16 %v890, %v882
  %v1603 = vpack.c.b16 %v891, %v883
  %v1604 = vpack.c.b16 %v892, %v884
  %v1605 = vpack.c.b16 %v893, %v885
  %v1606 = vpack.c.b16 %v902, %v894
  %v1607 = vpack.c.b16 %v903, %v895
  %v1608 = vpack.c.b16 %v904, %v896
  %v1609 = vpack.c.b16 %v905, %v897
  %v1610 = vpack.c.b16 %v906, %v898
  %v1611 = vpack.c.b16 %v907, %v899
  %v1612 = vpack.c.b16 %v908, %v900
  %v1613 = vpack.c.b16 %v909, %v901
  %v1614 = vpack.c.b16 %v918, %v910
  %v1615 = vpack.c.b16 %v919, %v911
  %v1616 = vpack.c.b16 %v920, %v912
  %v1617 = vpack.c.b16 %v921, %v913
  %v1618 = vpack.c.b16 %v922, %v914
  %v1619 = vpack.c.b16 %v923, %v915
  %v1620 = vpack.c.b16 %v924, %v916
  %v1621 = vpack.c.b16 %v925, %v917
  %v1622 = vpack.c.b16 %v934, %v926
  %v1623 = vpack.c.b16 %v935, %v927
  %v1624 = vpack.c.b16 %v936, %v928
  %v1625 = vpack.c.b16 %v937, %v929
  %v1626 = vpack.c.b16 %v938, %v930
  %v1627 = vpack.c.b16 %v939, %v931
  %v1628 = vpack.c.b16 %v940, %v932
  %v1629 = vpack.c.b16 %v941, %v933
  %v1630 = vpack.c.b16 %v950, %v942
  %v1631 = vpack.c.b16 %v951, %v943
  %v1632 = vpack.c.b16 %v952, %v944
  %v1633 = vpack.c.b16 %v953, %v945
  %v1634 = vpack.c.b16 %v954, %v946
  %v1635 = vpack.c.b16 %v955, %v947
  %v1636 = vpack.c.b16 %v956, %v948
  %v1637 = vpack.c.b16 %v957, %v949
  %v1638 = vpack.c.b16 %v966, %v958
  %v1639 = vpack.c.b16 %v967, %v959
  %v1640 = vpack.c.b16 %v968, %v960
  %v1641 = vpack.c.b16 %v969, %v961
  %v1642 = vpack.c.b16 %v970, %v962
  %v1643 = vpack.c.b16 %v971, %v963
  %v1644 = vpack.c.b16 %v972, %v964
  %v1645 = vpack.c.b16 %v973, %v965
  %v1646 = vpack.c.b16 %v982, %v974
  %v1647 = vpack.c.b16 %v983, %v975
  %v1648 = vpack.c.b16 %v984, %v976
  %v1649 = vpack.c.b16 %v985, %v977
  %v1650 = vpack.c.b16 %v986, %v978
  %v1651 = vpack.c.b16 %v987, %v979
  %v1652 = vpack.c.b16 %v988, %v980
  %v1653 = vpack.c.b16 %v989, %v981
  %v1654 = vpack.c.b16 %v998, %v990
  %v1655 = vpack.c.b16 %v999, %v991
  %v1656 = vpack.c.b16 %v1000, %v992
  %v1657 = vpack.c.b16 %v1001, %v993
  %v1658 = vpack.c.b16 %v1002, %v994
  %v1659 = vpack.c.b16 %v1003, %v995
  %v1660 = vpack.c.b16 %v1004, %v996
  %v1661 = vpack.c.b16 %v1005, %v997
  %v1662 = vpack.c.b16 %v1014, %v1006
  %v1663 = vpack.c.b16 %v1015, %v1007
  %v1664 = vpack.c.b16 %v1016, %v1008
  %v1665 = vpack.c.b16 %v1017, %v1009
  %v1666 = vpack.c.b16 %v1018, %v1010
  %v1667 = vpack.c.b16 %v1019, %v1011
  %v1668 = vpack.c.b16 %v1020, %v1012
  %v1669 = vpack.c.b16 %v1021, %v1013
  %v1670 = vpack.c.b16 %v1030, %v1022
  %v1671 = vpack.c.b16 %v1031, %v1023
  %v1672 = vpack.c.b16 %v1032, %v1024
  %v1673 = vpack.c.b16 %v1033, %v1025
  %v1674 = vpack.c.b16 %v1034, %v1026
  %v1675 = vpack.c.b16 %v1035, %v1027
  %v1676 = vpack.c.b16 %v1036, %v1028
  %v1677 = vpack.c.b16 %v1037, %v1029
  %v1678 = vpack.c.b16 %v1046, %v1038
  %v1679 = vpack.c.b16 %v1047, %v1039
  %v1680 = vpack.c.b16 %v1048, %v1040
  %v1681 = vpack.c.b16 %v1049, %v1041
  %v1682 = vpack.c.b16 %v1050, %v1042
  %v1683 = vpack.c.b16 %v1051, %v1043
  %v1684 = vpack.c.b16 %v1052, %v1044
  %v1685 = vpack.c.b16 %v1053, %v1045
  %v1686 = vpack.c.b16 %v1062, %v1054
  %v1687 = vpack.c.b16 %v1063, %v1055
  %v1688 = vpack.c.b16 %v1064, %v1056
  %v1689 = vpack.c.b16 %v1065, %v1057
  %v1690 = vpack.c.b16 %v1066, %v1058
  %v1691 = vpack.c.b16 %v1067, %v1059
  %v1692 = vpack.c.b16 %v1068, %v1060
  %v1693 = vpack.c.b16 %v1069, %v1061
  %v1694 = vpack.c.b16 %v1078, %v1070
  %v1695 = vpack.c.b16 %v1079, %v1071
  %v1696 = vpack.c.b16 %v1080, %v1072
  %v1697 = vpack.c.b16 %v1081, %v1073
  %v1698 = vpack.c.b16 %v1082, %v1074
  %v1699 = vpack.c.b16 %v1083, %v1075
  %v1700 = vpack.c.b16 %v1084, %v1076
  %v1701 = vpack.c.b16 %v1085, %v1077
  %v1702 = vpack.c.b16 %v1094, %v1086
  %v1703 = vpack.c.b16 %v1095, %v1087
  %v1704 = vpack.c.b16 %v1096, %v1088
  %v1705 = vpack.c.b16 %v1097, %v1089
  %v1706 = vpack.c.b16 %v1098, %v1090
  %v1707 = vpack.c.b16 %v1099, %v1091
  %v1708 = vpack.c.b16 %v1100, %v1092
  %v1709 = vpack.c.b16 %v1101, %v1093
  %v1710 = vpack.c.b16 %v1110, %v1102
  %v1711 = vpack.c.b16 %v1111, %v1103
  %v1712 = vpack.c.b16 %v1112, %v1104
  %v1713 = vpack.c.b16 %v1113, %v1105
  %v1714 = vpack.c.b16 %v1114, %v1106
  %v1715 = vpack.c.b16 %v1115, %v1107
  %v1716 = vpack.c.b16 %v1116, %v1108
  %v1717 = vpack.c.b16 %v1117, %v1109
  %v1718 = vpack.c.b16 %v1126, %v1118
  %v1719 = vpack.c.b16 %v1127, %v1119
  %v1720 = vpack.c.b16 %v1128, %v1120
  %v1721 = vpack.c.b16 %v1129, %v1121
  %v1722 = vpack.c.b16 %v1130, %v1122
  %v1723 = vpack.c.b16 %v1131, %v1123
  %v1724 = vpack.c.b16 %v1132, %v1124
  %v1725 = vpack.c.b16 %v1133, %v1125
  %v1726 = vpack.c.b16 %v1142, %v1134
  %v1727 = vpack.c.b16 %v1143, %v1135
  %v1728 = vpack.c.b16 %v1144, %v1136
  %v1729 = vpack.c.b16 %v1145, %v1137
  %v1730 = vpack.c.b16 %v1146, %v1138
  %v1731 = vpack.c.b16 %v1147, %v1139
  %v1732 = vpack.c.b16 %v1148, %v1140
  %v1733 = vpack.c.b16 %v1149, %v1141
  %v1734 = vpack.c.b16 %v1158, %v1150
  %v1735 = vpack.c.b16 %v1159, %v1151
  %v1736 = vpack.c.b16 %v1160, %v1152
  %v1737 = vpack.c.b16 %v1161, %v1153
  %v1738 = vpack.c.b16 %v1162, %v1154
  %v1739 = vpack.c.b16 %v1163, %v1155
  %v1740 = vpack.c.b16 %v1164, %v1156
  %v1741 = vpack.c.b16 %v1165, %v1157
  %v1742 = vpack.c.b16 %v1174, %v1166
  %v1743 = vpack.c.b16 %v1175, %v1167
  %v1744 = vpack.c.b16 %v1176, %v1168
  %v1745 = vpack.c.b16 %v1177, %v1169
  %v1746 = vpack.c.b16 %v1178, %v1170
  %v1747 = vpack.c.b16 %v1179, %v1171
  %v1748 = vpack.c.b16 %v1180, %v1172
  %v1749 = vpack.c.b16 %v1181, %v1173
  %v1750 = vpack.c.b16 %v1190, %v1182
  %v1751 = vpack.c.b16 %v1191, %v1183
  %v1752 = vpack.c.b16 %v1192, %v1184
  %v1753 = vpack.c.b16 %v1193, %v1185
  %v1754 = vpack.c.b16 %v1194, %v1186
  %v1755 = vpack.c.b16 %v1195, %v1187
  %v1756 = vpack.c.b16 %v1196, %v1188
  %v1757 = vpack.c.b16 %v1197, %v1189
  %v1758 = vpack.c.b16 %v1206, %v1198
  %v1759 = vpack.c.b16 %v1207, %v1199
  %v1760 = vpack.c.b16 %v1208, %v1200
  %v1761 = vpack.c.b16 %v1209, %v1201
  %v1762 = vpack.c.b16 %v1210, %v1202
  %v1763 = vpack.c.b16 %v1211, %v1203
  %v1764 = vpack.c.b16 %v1212, %v1204
  %v1765 = vpack.c.b16 %v1213, %v1205
  %v1766 = vpack.c.b16 %v1222, %v1214
  %v1767 = vpack.c.b16 %v1223, %v1215
  %v1768 = vpack.c.b16 %v1224, %v1216
  %v1769 = vpack.c.b16 %v1225, %v1217
  %v1770 = vpack.c.b16 %v1226, %v1218
  %v1771 = vpack.c.b16 %v1227, %v1219
  %v1772 = vpack.c.b16 %v1228, %v1220
  %v1773 = vpack.c.b16 %v1229, %v1221
  %v1774 = vpack.c.b16 %v1238, %v1230
  %v1775 = vpack.c.b16 %v1239, %v1231
  %v1776 = vpack.c.b16 %v1240, %v1232
  %v1777 = vpack.c.b16 %v1241, %v1233
  %v1778 = vpack.c.b16 %v1242, %v1234
  %v1779 = vpack.c.b16 %v1243, %v1235
  %v1780 = vpack.c.b16 %v1244, %v1236
  %v1781 = vpack.c.b16 %v1245, %v1237
  %v1782 = vpack.c.b16 %v1254, %v1246
  %v1783 = vpack.c.b16 %v1255, %v1247
  %v1784 = vpack.c.b16 %v1256, %v1248
  %v1785 = vpack.c.b16 %v1257, %v1249
  %v1786 = vpack.c.b16 %v1258, %v1250
  %v1787 = vpack.c.b16 %v1259, %v1251
  %v1788 = vpack.c.b16 %v1260, %v1252
  %v1789 = vpack.c.b16 %v1261, %v1253
  %v1790 = vpack.c.b16 %v1270, %v1262
  %v1791 = vpack.c.b16 %v1271, %v1263
  %v1792 = vpack.c.b16 %v1272, %v1264
  %v1793 = vpack.c.b16 %v1273, %v1265
  %v1794 = vpack.c.b16 %v1274, %v1266
  %v1795 = vpack.c.b16 %v1275, %v1267
  %v1796 = vpack.c.b16 %v1276, %v1268
  %v1797 = vpack.c.b16 %v1277, %v1269
  %v1798 = vpack.c.b16 %v1286, %v1278
  %v1799 = vpack.c.b16 %v1287, %v1279
  %v1800 = vpack.c.b16 %v1288, %v1280
  %v1801 = vpack.c.b16 %v1289, %v1281
  %v1802 = vpack.c.b16 %v1290, %v1282
  %v1803 = vpack.c.b16 %v1291, %v1283
  %v1804 = vpack.c.b16 %v1292, %v1284
  %v1805 = vpack.c.b16 %v1293, %v1285
  %v1806 = vpack.c.b16 %v1302, %v1294
  %v1807 = vpack.c.b16 %v1303, %v1295
  %v1808 = vpack.c.b16 %v1304, %v1296
  %v1809 = vpack.c.b16 %v1305, %v1297
  %v1810 = vpack.c.b16 %v1306, %v1298
  %v1811 = vpack.c.b16 %v1307, %v1299
  %v1812 = vpack.c.b16 %v1308, %v1300
  %v1813 = vpack.c.b16 %v1309, %v1301
  %v1814 = vpack.c.b16 %v1318, %v1310
  %v1815 = vpack.c.b16 %v1319, %v1311
  %v1816 = vpack.c.b16 %v1320, %v1312
  %v1817 = vpack.c.b16 %v1321, %v1313
  %v1818 = vpack.c.b16 %v1322, %v1314
  %v1819 = vpack.c.b16 %v1323, %v1315
  %v1820 = vpack.c.b16 %v1324, %v1316
  %v1821 = vpack.c.b16 %v1325, %v1317
  %v1822 = vpack.c.b16 %v1334, %v1326
  %v1823 = vpack.c.b16 %v1335, %v1327
  %v1824 = vpack.c.b16 %v1336, %v1328
  %v1825 = vpack.c.b16 %v1337, %v1329
  %v1826 = vpack.c.b16 %v1338, %v1330
  %v1827 = vpack.c.b16 %v1339, %v1331
  %v1828 = vpack.c.b16 %v1340, %v1332
  %v1829 = vpack.c.b16 %v1341, %v1333
  %v1830 = vpack.c.b16 %v1350, %v1342
  %v1831 = vpack.c.b16 %v1351, %v1343
  %v1832 = vpack.c.b16 %v1352, %v1344
  %v1833 = vpack.c.b16 %v1353, %v1345
  %v1834 = vpack.c.b16 %v1354, %v1346
  %v1835 = vpack.c.b16 %v1355, %v1347
  %v1836 = vpack.c.b16 %v1356, %v1348
  %v1837 = vpack.c.b16 %v1357, %v1349
  %v1838 = vpack.c.b16 %v1366, %v1358
  %v1839 = vpack.c.b16 %v1367, %v1359
  %v1840 = vpack.c.b16 %v1368, %v1360
  %v1841 = vpack.c.b16 %v1369, %v1361
  %v1842 = vpack.c.b16 %v1370, %v1362
  %v1843 = vpack.c.b16 %v1371, %v1363
  %v1844 = vpack.c.b16 %v1372, %v1364
  %v1845 = vpack.c.b16 %v1373, %v1365
  %v1846 = vpack.c.b16 %v1382, %v1374
  %v1847 = vpack.c.b16 %v1383, %v1375
  %v1848 = vpack.c.b16 %v1384, %v1376
  %v1849 = vpack.c.b16 %v1385, %v1377
  %v1850 = vpack.c.b16 %v1386, %v1378
  %v1851 = vpack.c.b16 %v1387, %v1379
  %v1852 = vpack.c.b16 %v1388, %v1380
  %v1853 = vpack.c.b16 %v1389, %v1381
  %v1854 = vpack.c.b16 %v1398, %v1390
  %v1855 = vpack.c.b16 %v1399, %v1391
  %v1856 = vpack.c.b16 %v1400, %v1392
  %v1857 = vpack.c.b16 %v1401, %v1393
  %v1858 = vpack.c.b16 %v1402, %v1394
  %v1859 = vpack.c.b16 %v1403, %v1395
  %v1860 = vpack.c.b16 %v1404, %v1396
  %v1861 = vpack.c.b16 %v1405, %v1397
  %v1862 = vpack.c.b16 %v1414, %v1406
  %v1863 = vpack.c.b16 %v1415, %v1407
  %v1864 = vpack.c.b16 %v1416, %v1408
  %v1865 = vpack.c.b16 %v1417, %v1409
  %v1866 = vpack.c.b16 %v1418, %v1410
  %v1867 = vpack.c.b16 %v1419, %v1411
  %v1868 = vpack.c.b16 %v1420, %v1412
  %v1869 = vpack.c.b16 %v1421, %v1413
  %v1870 = vpack.c.b16 %v1430, %v1422
  %v1871 = vpack.c.b16 %v1431, %v1423
  %v1872 = vpack.c.b16 %v1432, %v1424
  %v1873 = vpack.c.b16 %v1433, %v1425
  %v1874 = vpack.c.b16 %v1434, %v1426
  %v1875 = vpack.c.b16 %v1435, %v1427
  %v1876 = vpack.c.b16 %v1436, %v1428
  %v1877 = vpack.c.b16 %v1437, %v1429
  %v1878 = vpack.c.b16 %v1446, %v1438
  %v1879 = vpack.c.b16 %v1447, %v1439
  %v1880 = vpack.c.b16 %v1448, %v1440
  %v1881 = vpack.c.b16 %v1449, %v1441
  %v1882 = vpack.c.b16 %v1450, %v1442
  %v1883 = vpack.c.b16 %v1451, %v1443
  %v1884 = vpack.c.b16 %v1452, %v1444
  %v1885 = vpack.c.b16 %v1453, %v1445
  %v1886 = vpack.c.b16 %v1462, %v1454
  %v1887 = vpack.c.b16 %v1463, %v1455
  %v1888 = vpack.c.b16 %v1464, %v1456
  %v1889 = vpack.c.b16 %v1465, %v1457
  %v1890 = vpack.c.b16 %v1466, %v1458
  %v1891 = vpack.c.b16 %v1467, %v1459
  %v1892 = vpack.c.b16 %v1468, %v1460
  %v1893 = vpack.c.b16 %v1469, %v1461
  %v1894 = vpack.c.b16 %v1478, %v1470
  %v1895 = vpack.c.b16 %v1479, %v1471
  %v1896 = vpack.c.b16 %v1480, %v1472
  %v1897 = vpack.c.b16 %v1481, %v1473
  %v1898 = vpack.c.b16 %v1482, %v1474
  %v1899 = vpack.c.b16 %v1483, %v1475
  %v1900 = vpack.c.b16 %v1484, %v1476
  %v1901 = vpack.c.b16 %v1485, %v1477
  %v1902 = vpack.c.b16 %v1494, %v1486
  %v1903 = vpack.c.b16 %v1495, %v1487
  %v1904 = vpack.c.b16 %v1496, %v1488
  %v1905 = vpack.c.b16 %v1497, %v1489
  %v1906 = vpack.c.b16 %v1498, %v1490
  %v1907 = vpack.c.b16 %v1499, %v1491
  %v1908 = vpack.c.b16 %v1500, %v1492
  %v1909 = vpack.c.b16 %v1501, %v1493
  %v1910 = vpack.c.b16 %v1510, %v1502
  %v1911 = vpack.c.b16 %v1511, %v1503
  %v1912 = vpack.c.b16 %v1512, %v1504
  %v1913 = vpack.c.b16 %v1513, %v1505
  %v1914 = vpack.c.b16 %v1514, %v1506
  %v1915 = vpack.c.b16 %v1515, %v1507
  %v1916 = vpack.c.b16 %v1516, %v1508
  %v1917 = vpack.c.b16 %v1517, %v1509
  %v1918 = vpack.c.b16 %v1526, %v1518
  %v1919 = vpack.c.b16 %v1527, %v1519
  %v1920 = vpack.c.b16 %v1528, %v1520
  %v1921 = vpack.c.b16 %v1529, %v1521
  %v1922 = vpack.c.b16 %v1530, %v1522
  %v1923 = vpack.c.b16 %v1531, %v1523
  %v1924 = vpack.c.b16 %v1532, %v1524
  %v1925 = vpack.c.b16 %v1533, %v1525
  %v1926 = vpack.c.b16 %v1542, %v1534
  %v1927 = vpack.c.b16 %v1543, %v1535
  %v1928 = vpack.c.b16 %v1544, %v1536
  %v1929 = vpack.c.b16 %v1545, %v1537
  %v1930 = vpack.c.b16 %v1546, %v1538
  %v1931 = vpack.c.b16 %v1547, %v1539
  %v1932 = vpack.c.b16 %v1548, %v1540
  %v1933 = vpack.c.b16 %v1549, %v1541
  %v1934 = vpack.c.b16 %v1558, %v1550
  %v1935 = vpack.c.b16 %v1559, %v1551
  %v1936 = vpack.c.b16 %v1560, %v1552
  %v1937 = vpack.c.b16 %v1561, %v1553
  %v1938 = vpack.c.b16 %v1562, %v1554
  %v1939 = vpack.c.b16 %v1563, %v1555
  %v1940 = vpack.c.b16 %v1564, %v1556
  %v1941 = vpack.c.b16 %v1565, %v1557
  %v1942 = vpack.c.b16 %v1574, %v1566
  %v1943 = vpack.c.b16 %v1575, %v1567
  %v1944 = vpack.c.b16 %v1576, %v1568
  %v1945 = vpack.c.b16 %v1577, %v1569
  %v1946 = vpack.c.b16 %v1578, %v1570
  %v1947 = vpack.c.b16 %v1579, %v1571
  %v1948 = vpack.c.b16 %v1580, %v1572
  %v1949 = vpack.c.b16 %v1581, %v1573
  %v1950 = vpack.c.b16 %v1590, %v1582
  %v1951 = vpack.c.b16 %v1591, %v1583
  %v1952 = vpack.c.b16 %v1592, %v1584
  %v1953 = vpack.c.b16 %v1593, %v1585
  %v1954 = vpack.c.b16 %v1594, %v1586
  %v1955 = vpack.c.b16 %v1595, %v1587
  %v1956 = vpack.c.b16 %v1596, %v1588
  %v1957 = vpack.c.b16 %v1597, %v1589
  %vm2318 = vcmask 654336
  %v2320 = vsel %vm2318, %v479, 0
  %v2323 = vsel %vm2318, %v485, 0
  %v2326 = vsel %vm2318, %v491, 0
  %v2329 = vsel %vm2318, %v497, 0
  %2331 = vmatpush.bf16.msra.mxu0 %v1654
  %2332 = vmatpush.bf16.msra.mxu0 %v1646
  %2333 = vmatpush.bf16.msra.mxu0 %v1638
  %2334 = vmatpush.bf16.msra.mxu0 %v1630
  %2335 = vmatpush.bf16.msra.mxu0 %v1622
  %2336 = vmatpush.bf16.msra.mxu0 %v1614
  %2337 = vmatpush.bf16.msra.mxu0 %v1606
  %2338 = vmatpush.bf16.msra.mxu0 %v1598
  %2339 = vmatmul.bf16.gmra.mxu0 %v474
  %v2340 = vpop.f32.mrf.mxu0
  %v2341 = vadd.f32 0.0, %v2340
  %v2342 = vpop.f32.mrf.mxu0
  %v2343 = vadd.f32 0.0, %v2342
  %2344 = vmatmul.bf16.gmra.mxu0 %v480
  %v2345 = vpop.f32.mrf.mxu0
  %v2346 = vadd.f32 0.0, %v2345
  %v2347 = vpop.f32.mrf.mxu0
  %v2348 = vadd.f32 0.0, %v2347
  %2349 = vmatmul.bf16.gmra.mxu0 %v486
  %v2350 = vpop.f32.mrf.mxu0
  %v2351 = vadd.f32 0.0, %v2350
  %v2352 = vpop.f32.mrf.mxu0
  %v2353 = vadd.f32 0.0, %v2352
  %2354 = vmatmul.bf16.gmra.mxu0 %v492
  %v2355 = vpop.f32.mrf.mxu0
  %v2356 = vadd.f32 0.0, %v2355
  %v2357 = vpop.f32.mrf.mxu0
  %v2358 = vadd.f32 0.0, %v2357
  %2359 = vdwg.mxu0
  %2360 = vmatpush.bf16.msra.mxu0 %v1718
  %2361 = vmatpush.bf16.msra.mxu0 %v1710
  %2362 = vmatpush.bf16.msra.mxu0 %v1702
  %2363 = vmatpush.bf16.msra.mxu0 %v1694
  %2364 = vmatpush.bf16.msra.mxu0 %v1686
  %2365 = vmatpush.bf16.msra.mxu0 %v1678
  %2366 = vmatpush.bf16.msra.mxu0 %v1670
  %2367 = vmatpush.bf16.msra.mxu0 %v1662
  %2368 = vmatmul.bf16.gmra.mxu0 %v475
  %v2369 = vpop.f32.mrf.mxu0
  %v2370 = vadd.f32 %v2341, %v2369
  %v2371 = vpop.f32.mrf.mxu0
  %v2372 = vadd.f32 %v2343, %v2371
  %2373 = vmatmul.bf16.gmra.mxu0 %v481
  %v2374 = vpop.f32.mrf.mxu0
  %v2375 = vadd.f32 %v2346, %v2374
  %v2376 = vpop.f32.mrf.mxu0
  %v2377 = vadd.f32 %v2348, %v2376
  %2378 = vmatmul.bf16.gmra.mxu0 %v487
  %v2379 = vpop.f32.mrf.mxu0
  %v2380 = vadd.f32 %v2351, %v2379
  %v2381 = vpop.f32.mrf.mxu0
  %v2382 = vadd.f32 %v2353, %v2381
  %2383 = vmatmul.bf16.gmra.mxu0 %v493
  %v2384 = vpop.f32.mrf.mxu0
  %v2385 = vadd.f32 %v2356, %v2384
  %v2386 = vpop.f32.mrf.mxu0
  %v2387 = vadd.f32 %v2358, %v2386
  %2388 = vdwg.mxu0
  %2389 = vmatpush.bf16.msra.mxu0 %v1782
  %2390 = vmatpush.bf16.msra.mxu0 %v1774
  %2391 = vmatpush.bf16.msra.mxu0 %v1766
  %2392 = vmatpush.bf16.msra.mxu0 %v1758
  %2393 = vmatpush.bf16.msra.mxu0 %v1750
  %2394 = vmatpush.bf16.msra.mxu0 %v1742
  %2395 = vmatpush.bf16.msra.mxu0 %v1734
  %2396 = vmatpush.bf16.msra.mxu0 %v1726
  %2397 = vmatmul.bf16.gmra.mxu0 %v476
  %v2398 = vpop.f32.mrf.mxu0
  %v2399 = vadd.f32 %v2370, %v2398
  %v2400 = vpop.f32.mrf.mxu0
  %v2401 = vadd.f32 %v2372, %v2400
  %2402 = vmatmul.bf16.gmra.mxu0 %v482
  %v2403 = vpop.f32.mrf.mxu0
  %v2404 = vadd.f32 %v2375, %v2403
  %v2405 = vpop.f32.mrf.mxu0
  %v2406 = vadd.f32 %v2377, %v2405
  %2407 = vmatmul.bf16.gmra.mxu0 %v488
  %v2408 = vpop.f32.mrf.mxu0
  %v2409 = vadd.f32 %v2380, %v2408
  %v2410 = vpop.f32.mrf.mxu0
  %v2411 = vadd.f32 %v2382, %v2410
  %2412 = vmatmul.bf16.gmra.mxu0 %v494
  %v2413 = vpop.f32.mrf.mxu0
  %v2414 = vadd.f32 %v2385, %v2413
  %v2415 = vpop.f32.mrf.mxu0
  %v2416 = vadd.f32 %v2387, %v2415
  %2417 = vdwg.mxu0
  %2418 = vmatpush.bf16.msra.mxu0 %v1846
  %2419 = vmatpush.bf16.msra.mxu0 %v1838
  %2420 = vmatpush.bf16.msra.mxu0 %v1830
  %2421 = vmatpush.bf16.msra.mxu0 %v1822
  %2422 = vmatpush.bf16.msra.mxu0 %v1814
  %2423 = vmatpush.bf16.msra.mxu0 %v1806
  %2424 = vmatpush.bf16.msra.mxu0 %v1798
  %2425 = vmatpush.bf16.msra.mxu0 %v1790
  %2426 = vmatmul.bf16.gmra.mxu0 %v477
  %v2427 = vpop.f32.mrf.mxu0
  %v2428 = vadd.f32 %v2399, %v2427
  %v2429 = vpop.f32.mrf.mxu0
  %v2430 = vadd.f32 %v2401, %v2429
  %2431 = vmatmul.bf16.gmra.mxu0 %v483
  %v2432 = vpop.f32.mrf.mxu0
  %v2433 = vadd.f32 %v2404, %v2432
  %v2434 = vpop.f32.mrf.mxu0
  %v2435 = vadd.f32 %v2406, %v2434
  %2436 = vmatmul.bf16.gmra.mxu0 %v489
  %v2437 = vpop.f32.mrf.mxu0
  %v2438 = vadd.f32 %v2409, %v2437
  %v2439 = vpop.f32.mrf.mxu0
  %v2440 = vadd.f32 %v2411, %v2439
  %2441 = vmatmul.bf16.gmra.mxu0 %v495
  %v2442 = vpop.f32.mrf.mxu0
  %v2443 = vadd.f32 %v2414, %v2442
  %v2444 = vpop.f32.mrf.mxu0
  %v2445 = vadd.f32 %v2416, %v2444
  %2446 = vdwg.mxu0
  %2447 = vmatpush.bf16.msra.mxu0 %v1910
  %2448 = vmatpush.bf16.msra.mxu0 %v1902
  %2449 = vmatpush.bf16.msra.mxu0 %v1894
  %2450 = vmatpush.bf16.msra.mxu0 %v1886
  %2451 = vmatpush.bf16.msra.mxu0 %v1878
  %2452 = vmatpush.bf16.msra.mxu0 %v1870
  %2453 = vmatpush.bf16.msra.mxu0 %v1862
  %2454 = vmatpush.bf16.msra.mxu0 %v1854
  %2455 = vmatmul.bf16.gmra.mxu0 %v478
  %v2456 = vpop.f32.mrf.mxu0
  %v2457 = vadd.f32 %v2428, %v2456
  %v2458 = vpop.f32.mrf.mxu0
  %v2459 = vadd.f32 %v2430, %v2458
  %2460 = vmatmul.bf16.gmra.mxu0 %v484
  %v2461 = vpop.f32.mrf.mxu0
  %v2462 = vadd.f32 %v2433, %v2461
  %v2463 = vpop.f32.mrf.mxu0
  %v2464 = vadd.f32 %v2435, %v2463
  %2465 = vmatmul.bf16.gmra.mxu0 %v490
  %v2466 = vpop.f32.mrf.mxu0
  %v2467 = vadd.f32 %v2438, %v2466
  %v2468 = vpop.f32.mrf.mxu0
  %v2469 = vadd.f32 %v2440, %v2468
  %2470 = vmatmul.bf16.gmra.mxu0 %v496
  %v2471 = vpop.f32.mrf.mxu0
  %v2472 = vadd.f32 %v2443, %v2471
  %v2473 = vpop.f32.mrf.mxu0
  %v2474 = vadd.f32 %v2445, %v2473
  %2475 = vdwg.mxu0
  %2476 = vmatpush.bf16.msra.mxu0 0
  %2477 = vmatpush.bf16.msra.mxu0 0
  %2478 = vmatpush.bf16.msra.mxu0 0
  %2479 = vmatpush.bf16.msra.mxu0 %v1950
  %2480 = vmatpush.bf16.msra.mxu0 %v1942
  %2481 = vmatpush.bf16.msra.mxu0 %v1934
  %2482 = vmatpush.bf16.msra.mxu0 %v1926
  %2483 = vmatpush.bf16.msra.mxu0 %v1918
  %2484 = vmatmul.bf16.gmra.mxu0 %v2320
  %v2485 = vpop.f32.mrf.mxu0
  %v2486 = vadd.f32 %v2457, %v2485
  %v2487 = vpop.f32.mrf.mxu0
  %v2488 = vadd.f32 %v2459, %v2487
  %2489 = vmatmul.bf16.gmra.mxu0 %v2323
  %v2490 = vpop.f32.mrf.mxu0
  %v2491 = vadd.f32 %v2462, %v2490
  %v2492 = vpop.f32.mrf.mxu0
  %v2493 = vadd.f32 %v2464, %v2492
  %2494 = vmatmul.bf16.gmra.mxu0 %v2326
  %v2495 = vpop.f32.mrf.mxu0
  %v2496 = vadd.f32 %v2467, %v2495
  %v2497 = vpop.f32.mrf.mxu0
  %v2498 = vadd.f32 %v2469, %v2497
  %2499 = vmatmul.bf16.gmra.mxu0 %v2329
  %v2500 = vpop.f32.mrf.mxu0
  %v2501 = vadd.f32 %v2472, %v2500
  %v2502 = vpop.f32.mrf.mxu0
  %v2503 = vadd.f32 %v2474, %v2502
  %2504 = vdwg.mxu0
  %2505 = vmatpush.bf16.msra.mxu0 %v1655
  %2506 = vmatpush.bf16.msra.mxu0 %v1647
  %2507 = vmatpush.bf16.msra.mxu0 %v1639
  %2508 = vmatpush.bf16.msra.mxu0 %v1631
  %2509 = vmatpush.bf16.msra.mxu0 %v1623
  %2510 = vmatpush.bf16.msra.mxu0 %v1615
  %2511 = vmatpush.bf16.msra.mxu0 %v1607
  %2512 = vmatpush.bf16.msra.mxu0 %v1599
  %2513 = vmatmul.bf16.gmra.mxu0 %v474
  %v2514 = vpop.f32.mrf.mxu0
  %v2515 = vadd.f32 0.0, %v2514
  %v2516 = vpop.f32.mrf.mxu0
  %v2517 = vadd.f32 0.0, %v2516
  %2518 = vmatmul.bf16.gmra.mxu0 %v480
  %v2519 = vpop.f32.mrf.mxu0
  %v2520 = vadd.f32 0.0, %v2519
  %v2521 = vpop.f32.mrf.mxu0
  %v2522 = vadd.f32 0.0, %v2521
  %2523 = vmatmul.bf16.gmra.mxu0 %v486
  %v2524 = vpop.f32.mrf.mxu0
  %v2525 = vadd.f32 0.0, %v2524
  %v2526 = vpop.f32.mrf.mxu0
  %v2527 = vadd.f32 0.0, %v2526
  %2528 = vmatmul.bf16.gmra.mxu0 %v492
  %v2529 = vpop.f32.mrf.mxu0
  %v2530 = vadd.f32 0.0, %v2529
  %v2531 = vpop.f32.mrf.mxu0
  %v2532 = vadd.f32 0.0, %v2531
  %2533 = vdwg.mxu0
  %2534 = vmatpush.bf16.msra.mxu0 %v1719
  %2535 = vmatpush.bf16.msra.mxu0 %v1711
  %2536 = vmatpush.bf16.msra.mxu0 %v1703
  %2537 = vmatpush.bf16.msra.mxu0 %v1695
  %2538 = vmatpush.bf16.msra.mxu0 %v1687
  %2539 = vmatpush.bf16.msra.mxu0 %v1679
  %2540 = vmatpush.bf16.msra.mxu0 %v1671
  %2541 = vmatpush.bf16.msra.mxu0 %v1663
  %2542 = vmatmul.bf16.gmra.mxu0 %v475
  %v2543 = vpop.f32.mrf.mxu0
  %v2544 = vadd.f32 %v2515, %v2543
  %v2545 = vpop.f32.mrf.mxu0
  %v2546 = vadd.f32 %v2517, %v2545
  %2547 = vmatmul.bf16.gmra.mxu0 %v481
  %v2548 = vpop.f32.mrf.mxu0
  %v2549 = vadd.f32 %v2520, %v2548
  %v2550 = vpop.f32.mrf.mxu0
  %v2551 = vadd.f32 %v2522, %v2550
  %2552 = vmatmul.bf16.gmra.mxu0 %v487
  %v2553 = vpop.f32.mrf.mxu0
  %v2554 = vadd.f32 %v2525, %v2553
  %v2555 = vpop.f32.mrf.mxu0
  %v2556 = vadd.f32 %v2527, %v2555
  %2557 = vmatmul.bf16.gmra.mxu0 %v493
  %v2558 = vpop.f32.mrf.mxu0
  %v2559 = vadd.f32 %v2530, %v2558
  %v2560 = vpop.f32.mrf.mxu0
  %v2561 = vadd.f32 %v2532, %v2560
  %2562 = vdwg.mxu0
  %2563 = vmatpush.bf16.msra.mxu0 %v1783
  %2564 = vmatpush.bf16.msra.mxu0 %v1775
  %2565 = vmatpush.bf16.msra.mxu0 %v1767
  %2566 = vmatpush.bf16.msra.mxu0 %v1759
  %2567 = vmatpush.bf16.msra.mxu0 %v1751
  %2568 = vmatpush.bf16.msra.mxu0 %v1743
  %2569 = vmatpush.bf16.msra.mxu0 %v1735
  %2570 = vmatpush.bf16.msra.mxu0 %v1727
  %2571 = vmatmul.bf16.gmra.mxu0 %v476
  %v2572 = vpop.f32.mrf.mxu0
  %v2573 = vadd.f32 %v2544, %v2572
  %v2574 = vpop.f32.mrf.mxu0
  %v2575 = vadd.f32 %v2546, %v2574
  %2576 = vmatmul.bf16.gmra.mxu0 %v482
  %v2577 = vpop.f32.mrf.mxu0
  %v2578 = vadd.f32 %v2549, %v2577
  %v2579 = vpop.f32.mrf.mxu0
  %v2580 = vadd.f32 %v2551, %v2579
  %2581 = vmatmul.bf16.gmra.mxu0 %v488
  %v2582 = vpop.f32.mrf.mxu0
  %v2583 = vadd.f32 %v2554, %v2582
  %v2584 = vpop.f32.mrf.mxu0
  %v2585 = vadd.f32 %v2556, %v2584
  %2586 = vmatmul.bf16.gmra.mxu0 %v494
  %v2587 = vpop.f32.mrf.mxu0
  %v2588 = vadd.f32 %v2559, %v2587
  %v2589 = vpop.f32.mrf.mxu0
  %v2590 = vadd.f32 %v2561, %v2589
  %2591 = vdwg.mxu0
  %2592 = vmatpush.bf16.msra.mxu0 %v1847
  %2593 = vmatpush.bf16.msra.mxu0 %v1839
  %2594 = vmatpush.bf16.msra.mxu0 %v1831
  %2595 = vmatpush.bf16.msra.mxu0 %v1823
  %2596 = vmatpush.bf16.msra.mxu0 %v1815
  %2597 = vmatpush.bf16.msra.mxu0 %v1807
  %2598 = vmatpush.bf16.msra.mxu0 %v1799
  %2599 = vmatpush.bf16.msra.mxu0 %v1791
  %2600 = vmatmul.bf16.gmra.mxu0 %v477
  %v2601 = vpop.f32.mrf.mxu0
  %v2602 = vadd.f32 %v2573, %v2601
  %v2603 = vpop.f32.mrf.mxu0
  %v2604 = vadd.f32 %v2575, %v2603
  %2605 = vmatmul.bf16.gmra.mxu0 %v483
  %v2606 = vpop.f32.mrf.mxu0
  %v2607 = vadd.f32 %v2578, %v2606
  %v2608 = vpop.f32.mrf.mxu0
  %v2609 = vadd.f32 %v2580, %v2608
  %2610 = vmatmul.bf16.gmra.mxu0 %v489
  %v2611 = vpop.f32.mrf.mxu0
  %v2612 = vadd.f32 %v2583, %v2611
  %v2613 = vpop.f32.mrf.mxu0
  %v2614 = vadd.f32 %v2585, %v2613
  %2615 = vmatmul.bf16.gmra.mxu0 %v495
  %v2616 = vpop.f32.mrf.mxu0
  %v2617 = vadd.f32 %v2588, %v2616
  %v2618 = vpop.f32.mrf.mxu0
  %v2619 = vadd.f32 %v2590, %v2618
  %2620 = vdwg.mxu0
  %2621 = vmatpush.bf16.msra.mxu0 %v1911
  %2622 = vmatpush.bf16.msra.mxu0 %v1903
  %2623 = vmatpush.bf16.msra.mxu0 %v1895
  %2624 = vmatpush.bf16.msra.mxu0 %v1887
  %2625 = vmatpush.bf16.msra.mxu0 %v1879
  %2626 = vmatpush.bf16.msra.mxu0 %v1871
  %2627 = vmatpush.bf16.msra.mxu0 %v1863
  %2628 = vmatpush.bf16.msra.mxu0 %v1855
  %2629 = vmatmul.bf16.gmra.mxu0 %v478
  %v2630 = vpop.f32.mrf.mxu0
  %v2631 = vadd.f32 %v2602, %v2630
  %v2632 = vpop.f32.mrf.mxu0
  %v2633 = vadd.f32 %v2604, %v2632
  %2634 = vmatmul.bf16.gmra.mxu0 %v484
  %v2635 = vpop.f32.mrf.mxu0
  %v2636 = vadd.f32 %v2607, %v2635
  %v2637 = vpop.f32.mrf.mxu0
  %v2638 = vadd.f32 %v2609, %v2637
  %2639 = vmatmul.bf16.gmra.mxu0 %v490
  %v2640 = vpop.f32.mrf.mxu0
  %v2641 = vadd.f32 %v2612, %v2640
  %v2642 = vpop.f32.mrf.mxu0
  %v2643 = vadd.f32 %v2614, %v2642
  %2644 = vmatmul.bf16.gmra.mxu0 %v496
  %v2645 = vpop.f32.mrf.mxu0
  %v2646 = vadd.f32 %v2617, %v2645
  %v2647 = vpop.f32.mrf.mxu0
  %v2648 = vadd.f32 %v2619, %v2647
  %2649 = vdwg.mxu0
  %2650 = vmatpush.bf16.msra.mxu0 0
  %2651 = vmatpush.bf16.msra.mxu0 0
  %2652 = vmatpush.bf16.msra.mxu0 0
  %2653 = vmatpush.bf16.msra.mxu0 %v1951
  %2654 = vmatpush.bf16.msra.mxu0 %v1943
  %2655 = vmatpush.bf16.msra.mxu0 %v1935
  %2656 = vmatpush.bf16.msra.mxu0 %v1927
  %2657 = vmatpush.bf16.msra.mxu0 %v1919
  %2658 = vmatmul.bf16.gmra.mxu0 %v2320
  %v2659 = vpop.f32.mrf.mxu0
  %v2660 = vadd.f32 %v2631, %v2659
  %v2661 = vpop.f32.mrf.mxu0
  %v2662 = vadd.f32 %v2633, %v2661
  %2663 = vmatmul.bf16.gmra.mxu0 %v2323
  %v2664 = vpop.f32.mrf.mxu0
  %v2665 = vadd.f32 %v2636, %v2664
  %v2666 = vpop.f32.mrf.mxu0
  %v2667 = vadd.f32 %v2638, %v2666
  %2668 = vmatmul.bf16.gmra.mxu0 %v2326
  %v2669 = vpop.f32.mrf.mxu0
  %v2670 = vadd.f32 %v2641, %v2669
  %v2671 = vpop.f32.mrf.mxu0
  %v2672 = vadd.f32 %v2643, %v2671
  %2673 = vmatmul.bf16.gmra.mxu0 %v2329
  %v2674 = vpop.f32.mrf.mxu0
  %v2675 = vadd.f32 %v2646, %v2674
  %v2676 = vpop.f32.mrf.mxu0
  %v2677 = vadd.f32 %v2648, %v2676
  %2678 = vdwg.mxu0
  %2679 = vmatpush.bf16.msra.mxu0 %v1656
  %2680 = vmatpush.bf16.msra.mxu0 %v1648
  %2681 = vmatpush.bf16.msra.mxu0 %v1640
  %2682 = vmatpush.bf16.msra.mxu0 %v1632
  %2683 = vmatpush.bf16.msra.mxu0 %v1624
  %2684 = vmatpush.bf16.msra.mxu0 %v1616
  %2685 = vmatpush.bf16.msra.mxu0 %v1608
  %2686 = vmatpush.bf16.msra.mxu0 %v1600
  %2687 = vmatmul.bf16.gmra.mxu0 %v474
  %v2688 = vpop.f32.mrf.mxu0
  %v2689 = vadd.f32 0.0, %v2688
  %v2690 = vpop.f32.mrf.mxu0
  %v2691 = vadd.f32 0.0, %v2690
  %2692 = vmatmul.bf16.gmra.mxu0 %v480
  %v2693 = vpop.f32.mrf.mxu0
  %v2694 = vadd.f32 0.0, %v2693
  %v2695 = vpop.f32.mrf.mxu0
  %v2696 = vadd.f32 0.0, %v2695
  %2697 = vmatmul.bf16.gmra.mxu0 %v486
  %v2698 = vpop.f32.mrf.mxu0
  %v2699 = vadd.f32 0.0, %v2698
  %v2700 = vpop.f32.mrf.mxu0
  %v2701 = vadd.f32 0.0, %v2700
  %2702 = vmatmul.bf16.gmra.mxu0 %v492
  %v2703 = vpop.f32.mrf.mxu0
  %v2704 = vadd.f32 0.0, %v2703
  %v2705 = vpop.f32.mrf.mxu0
  %v2706 = vadd.f32 0.0, %v2705
  %2707 = vdwg.mxu0
  %2708 = vmatpush.bf16.msra.mxu0 %v1720
  %2709 = vmatpush.bf16.msra.mxu0 %v1712
  %2710 = vmatpush.bf16.msra.mxu0 %v1704
  %2711 = vmatpush.bf16.msra.mxu0 %v1696
  %2712 = vmatpush.bf16.msra.mxu0 %v1688
  %2713 = vmatpush.bf16.msra.mxu0 %v1680
  %2714 = vmatpush.bf16.msra.mxu0 %v1672
  %2715 = vmatpush.bf16.msra.mxu0 %v1664
  %2716 = vmatmul.bf16.gmra.mxu0 %v475
  %v2717 = vpop.f32.mrf.mxu0
  %v2718 = vadd.f32 %v2689, %v2717
  %v2719 = vpop.f32.mrf.mxu0
  %v2720 = vadd.f32 %v2691, %v2719
  %2721 = vmatmul.bf16.gmra.mxu0 %v481
  %v2722 = vpop.f32.mrf.mxu0
  %v2723 = vadd.f32 %v2694, %v2722
  %v2724 = vpop.f32.mrf.mxu0
  %v2725 = vadd.f32 %v2696, %v2724
  %2726 = vmatmul.bf16.gmra.mxu0 %v487
  %v2727 = vpop.f32.mrf.mxu0
  %v2728 = vadd.f32 %v2699, %v2727
  %v2729 = vpop.f32.mrf.mxu0
  %v2730 = vadd.f32 %v2701, %v2729
  %2731 = vmatmul.bf16.gmra.mxu0 %v493
  %v2732 = vpop.f32.mrf.mxu0
  %v2733 = vadd.f32 %v2704, %v2732
  %v2734 = vpop.f32.mrf.mxu0
  %v2735 = vadd.f32 %v2706, %v2734
  %2736 = vdwg.mxu0
  %2737 = vmatpush.bf16.msra.mxu0 %v1784
  %2738 = vmatpush.bf16.msra.mxu0 %v1776
  %2739 = vmatpush.bf16.msra.mxu0 %v1768
  %2740 = vmatpush.bf16.msra.mxu0 %v1760
  %2741 = vmatpush.bf16.msra.mxu0 %v1752
  %2742 = vmatpush.bf16.msra.mxu0 %v1744
  %2743 = vmatpush.bf16.msra.mxu0 %v1736
  %2744 = vmatpush.bf16.msra.mxu0 %v1728
  %2745 = vmatmul.bf16.gmra.mxu0 %v476
  %v2746 = vpop.f32.mrf.mxu0
  %v2747 = vadd.f32 %v2718, %v2746
  %v2748 = vpop.f32.mrf.mxu0
  %v2749 = vadd.f32 %v2720, %v2748
  %2750 = vmatmul.bf16.gmra.mxu0 %v482
  %v2751 = vpop.f32.mrf.mxu0
  %v2752 = vadd.f32 %v2723, %v2751
  %v2753 = vpop.f32.mrf.mxu0
  %v2754 = vadd.f32 %v2725, %v2753
  %2755 = vmatmul.bf16.gmra.mxu0 %v488
  %v2756 = vpop.f32.mrf.mxu0
  %v2757 = vadd.f32 %v2728, %v2756
  %v2758 = vpop.f32.mrf.mxu0
  %v2759 = vadd.f32 %v2730, %v2758
  %2760 = vmatmul.bf16.gmra.mxu0 %v494
  %v2761 = vpop.f32.mrf.mxu0
  %v2762 = vadd.f32 %v2733, %v2761
  %v2763 = vpop.f32.mrf.mxu0
  %v2764 = vadd.f32 %v2735, %v2763
  %2765 = vdwg.mxu0
  %2766 = vmatpush.bf16.msra.mxu0 %v1848
  %2767 = vmatpush.bf16.msra.mxu0 %v1840
  %2768 = vmatpush.bf16.msra.mxu0 %v1832
  %2769 = vmatpush.bf16.msra.mxu0 %v1824
  %2770 = vmatpush.bf16.msra.mxu0 %v1816
  %2771 = vmatpush.bf16.msra.mxu0 %v1808
  %2772 = vmatpush.bf16.msra.mxu0 %v1800
  %2773 = vmatpush.bf16.msra.mxu0 %v1792
  %2774 = vmatmul.bf16.gmra.mxu0 %v477
  %v2775 = vpop.f32.mrf.mxu0
  %v2776 = vadd.f32 %v2747, %v2775
  %v2777 = vpop.f32.mrf.mxu0
  %v2778 = vadd.f32 %v2749, %v2777
  %2779 = vmatmul.bf16.gmra.mxu0 %v483
  %v2780 = vpop.f32.mrf.mxu0
  %v2781 = vadd.f32 %v2752, %v2780
  %v2782 = vpop.f32.mrf.mxu0
  %v2783 = vadd.f32 %v2754, %v2782
  %2784 = vmatmul.bf16.gmra.mxu0 %v489
  %v2785 = vpop.f32.mrf.mxu0
  %v2786 = vadd.f32 %v2757, %v2785
  %v2787 = vpop.f32.mrf.mxu0
  %v2788 = vadd.f32 %v2759, %v2787
  %2789 = vmatmul.bf16.gmra.mxu0 %v495
  %v2790 = vpop.f32.mrf.mxu0
  %v2791 = vadd.f32 %v2762, %v2790
  %v2792 = vpop.f32.mrf.mxu0
  %v2793 = vadd.f32 %v2764, %v2792
  %2794 = vdwg.mxu0
  %2795 = vmatpush.bf16.msra.mxu0 %v1912
  %2796 = vmatpush.bf16.msra.mxu0 %v1904
  %2797 = vmatpush.bf16.msra.mxu0 %v1896
  %2798 = vmatpush.bf16.msra.mxu0 %v1888
  %2799 = vmatpush.bf16.msra.mxu0 %v1880
  %2800 = vmatpush.bf16.msra.mxu0 %v1872
  %2801 = vmatpush.bf16.msra.mxu0 %v1864
  %2802 = vmatpush.bf16.msra.mxu0 %v1856
  %2803 = vmatmul.bf16.gmra.mxu0 %v478
  %v2804 = vpop.f32.mrf.mxu0
  %v2805 = vadd.f32 %v2776, %v2804
  %v2806 = vpop.f32.mrf.mxu0
  %v2807 = vadd.f32 %v2778, %v2806
  %2808 = vmatmul.bf16.gmra.mxu0 %v484
  %v2809 = vpop.f32.mrf.mxu0
  %v2810 = vadd.f32 %v2781, %v2809
  %v2811 = vpop.f32.mrf.mxu0
  %v2812 = vadd.f32 %v2783, %v2811
  %2813 = vmatmul.bf16.gmra.mxu0 %v490
  %v2814 = vpop.f32.mrf.mxu0
  %v2815 = vadd.f32 %v2786, %v2814
  %v2816 = vpop.f32.mrf.mxu0
  %v2817 = vadd.f32 %v2788, %v2816
  %2818 = vmatmul.bf16.gmra.mxu0 %v496
  %v2819 = vpop.f32.mrf.mxu0
  %v2820 = vadd.f32 %v2791, %v2819
  %v2821 = vpop.f32.mrf.mxu0
  %v2822 = vadd.f32 %v2793, %v2821
  %2823 = vdwg.mxu0
  %2824 = vmatpush.bf16.msra.mxu0 0
  %2825 = vmatpush.bf16.msra.mxu0 0
  %2826 = vmatpush.bf16.msra.mxu0 0
  %2827 = vmatpush.bf16.msra.mxu0 %v1952
  %2828 = vmatpush.bf16.msra.mxu0 %v1944
  %2829 = vmatpush.bf16.msra.mxu0 %v1936
  %2830 = vmatpush.bf16.msra.mxu0 %v1928
  %2831 = vmatpush.bf16.msra.mxu0 %v1920
  %2832 = vmatmul.bf16.gmra.mxu0 %v2320
  %v2833 = vpop.f32.mrf.mxu0
  %v2834 = vadd.f32 %v2805, %v2833
  %v2835 = vpop.f32.mrf.mxu0
  %v2836 = vadd.f32 %v2807, %v2835
  %2837 = vmatmul.bf16.gmra.mxu0 %v2323
  %v2838 = vpop.f32.mrf.mxu0
  %v2839 = vadd.f32 %v2810, %v2838
  %v2840 = vpop.f32.mrf.mxu0
  %v2841 = vadd.f32 %v2812, %v2840
  %2842 = vmatmul.bf16.gmra.mxu0 %v2326
  %v2843 = vpop.f32.mrf.mxu0
  %v2844 = vadd.f32 %v2815, %v2843
  %v2845 = vpop.f32.mrf.mxu0
  %v2846 = vadd.f32 %v2817, %v2845
  %2847 = vmatmul.bf16.gmra.mxu0 %v2329
  %v2848 = vpop.f32.mrf.mxu0
  %v2849 = vadd.f32 %v2820, %v2848
  %v2850 = vpop.f32.mrf.mxu0
  %v2851 = vadd.f32 %v2822, %v2850
  %2852 = vdwg.mxu0
  %2853 = vmatpush.bf16.msra.mxu0 %v1657
  %2854 = vmatpush.bf16.msra.mxu0 %v1649
  %2855 = vmatpush.bf16.msra.mxu0 %v1641
  %2856 = vmatpush.bf16.msra.mxu0 %v1633
  %2857 = vmatpush.bf16.msra.mxu0 %v1625
  %2858 = vmatpush.bf16.msra.mxu0 %v1617
  %2859 = vmatpush.bf16.msra.mxu0 %v1609
  %2860 = vmatpush.bf16.msra.mxu0 %v1601
  %2861 = vmatmul.bf16.gmra.mxu0 %v474
  %v2862 = vpop.f32.mrf.mxu0
  %v2863 = vadd.f32 0.0, %v2862
  %v2864 = vpop.f32.mrf.mxu0
  %v2865 = vadd.f32 0.0, %v2864
  %2866 = vmatmul.bf16.gmra.mxu0 %v480
  %v2867 = vpop.f32.mrf.mxu0
  %v2868 = vadd.f32 0.0, %v2867
  %v2869 = vpop.f32.mrf.mxu0
  %v2870 = vadd.f32 0.0, %v2869
  %2871 = vmatmul.bf16.gmra.mxu0 %v486
  %v2872 = vpop.f32.mrf.mxu0
  %v2873 = vadd.f32 0.0, %v2872
  %v2874 = vpop.f32.mrf.mxu0
  %v2875 = vadd.f32 0.0, %v2874
  %2876 = vmatmul.bf16.gmra.mxu0 %v492
  %v2877 = vpop.f32.mrf.mxu0
  %v2878 = vadd.f32 0.0, %v2877
  %v2879 = vpop.f32.mrf.mxu0
  %v2880 = vadd.f32 0.0, %v2879
  %2881 = vdwg.mxu0
  %2882 = vmatpush.bf16.msra.mxu0 %v1721
  %2883 = vmatpush.bf16.msra.mxu0 %v1713
  %2884 = vmatpush.bf16.msra.mxu0 %v1705
  %2885 = vmatpush.bf16.msra.mxu0 %v1697
  %2886 = vmatpush.bf16.msra.mxu0 %v1689
  %2887 = vmatpush.bf16.msra.mxu0 %v1681
  %2888 = vmatpush.bf16.msra.mxu0 %v1673
  %2889 = vmatpush.bf16.msra.mxu0 %v1665
  %2890 = vmatmul.bf16.gmra.mxu0 %v475
  %v2891 = vpop.f32.mrf.mxu0
  %v2892 = vadd.f32 %v2863, %v2891
  %v2893 = vpop.f32.mrf.mxu0
  %v2894 = vadd.f32 %v2865, %v2893
  %2895 = vmatmul.bf16.gmra.mxu0 %v481
  %v2896 = vpop.f32.mrf.mxu0
  %v2897 = vadd.f32 %v2868, %v2896
  %v2898 = vpop.f32.mrf.mxu0
  %v2899 = vadd.f32 %v2870, %v2898
  %2900 = vmatmul.bf16.gmra.mxu0 %v487
  %v2901 = vpop.f32.mrf.mxu0
  %v2902 = vadd.f32 %v2873, %v2901
  %v2903 = vpop.f32.mrf.mxu0
  %v2904 = vadd.f32 %v2875, %v2903
  %2905 = vmatmul.bf16.gmra.mxu0 %v493
  %v2906 = vpop.f32.mrf.mxu0
  %v2907 = vadd.f32 %v2878, %v2906
  %v2908 = vpop.f32.mrf.mxu0
  %v2909 = vadd.f32 %v2880, %v2908
  %2910 = vdwg.mxu0
  %2911 = vmatpush.bf16.msra.mxu0 %v1785
  %2912 = vmatpush.bf16.msra.mxu0 %v1777
  %2913 = vmatpush.bf16.msra.mxu0 %v1769
  %2914 = vmatpush.bf16.msra.mxu0 %v1761
  %2915 = vmatpush.bf16.msra.mxu0 %v1753
  %2916 = vmatpush.bf16.msra.mxu0 %v1745
  %2917 = vmatpush.bf16.msra.mxu0 %v1737
  %2918 = vmatpush.bf16.msra.mxu0 %v1729
  %2919 = vmatmul.bf16.gmra.mxu0 %v476
  %v2920 = vpop.f32.mrf.mxu0
  %v2921 = vadd.f32 %v2892, %v2920
  %v2922 = vpop.f32.mrf.mxu0
  %v2923 = vadd.f32 %v2894, %v2922
  %2924 = vmatmul.bf16.gmra.mxu0 %v482
  %v2925 = vpop.f32.mrf.mxu0
  %v2926 = vadd.f32 %v2897, %v2925
  %v2927 = vpop.f32.mrf.mxu0
  %v2928 = vadd.f32 %v2899, %v2927
  %2929 = vmatmul.bf16.gmra.mxu0 %v488
  %v2930 = vpop.f32.mrf.mxu0
  %v2931 = vadd.f32 %v2902, %v2930
  %v2932 = vpop.f32.mrf.mxu0
  %v2933 = vadd.f32 %v2904, %v2932
  %2934 = vmatmul.bf16.gmra.mxu0 %v494
  %v2935 = vpop.f32.mrf.mxu0
  %v2936 = vadd.f32 %v2907, %v2935
  %v2937 = vpop.f32.mrf.mxu0
  %v2938 = vadd.f32 %v2909, %v2937
  %2939 = vdwg.mxu0
  %2940 = vmatpush.bf16.msra.mxu0 %v1849
  %2941 = vmatpush.bf16.msra.mxu0 %v1841
  %2942 = vmatpush.bf16.msra.mxu0 %v1833
  %2943 = vmatpush.bf16.msra.mxu0 %v1825
  %2944 = vmatpush.bf16.msra.mxu0 %v1817
  %2945 = vmatpush.bf16.msra.mxu0 %v1809
  %2946 = vmatpush.bf16.msra.mxu0 %v1801
  %2947 = vmatpush.bf16.msra.mxu0 %v1793
  %2948 = vmatmul.bf16.gmra.mxu0 %v477
  %v2949 = vpop.f32.mrf.mxu0
  %v2950 = vadd.f32 %v2921, %v2949
  %v2951 = vpop.f32.mrf.mxu0
  %v2952 = vadd.f32 %v2923, %v2951
  %2953 = vmatmul.bf16.gmra.mxu0 %v483
  %v2954 = vpop.f32.mrf.mxu0
  %v2955 = vadd.f32 %v2926, %v2954
  %v2956 = vpop.f32.mrf.mxu0
  %v2957 = vadd.f32 %v2928, %v2956
  %2958 = vmatmul.bf16.gmra.mxu0 %v489
  %v2959 = vpop.f32.mrf.mxu0
  %v2960 = vadd.f32 %v2931, %v2959
  %v2961 = vpop.f32.mrf.mxu0
  %v2962 = vadd.f32 %v2933, %v2961
  %2963 = vmatmul.bf16.gmra.mxu0 %v495
  %v2964 = vpop.f32.mrf.mxu0
  %v2965 = vadd.f32 %v2936, %v2964
  %v2966 = vpop.f32.mrf.mxu0
  %v2967 = vadd.f32 %v2938, %v2966
  %2968 = vdwg.mxu0
  %2969 = vmatpush.bf16.msra.mxu0 %v1913
  %2970 = vmatpush.bf16.msra.mxu0 %v1905
  %2971 = vmatpush.bf16.msra.mxu0 %v1897
  %2972 = vmatpush.bf16.msra.mxu0 %v1889
  %2973 = vmatpush.bf16.msra.mxu0 %v1881
  %2974 = vmatpush.bf16.msra.mxu0 %v1873
  %2975 = vmatpush.bf16.msra.mxu0 %v1865
  %2976 = vmatpush.bf16.msra.mxu0 %v1857
  %2977 = vmatmul.bf16.gmra.mxu0 %v478
  %v2978 = vpop.f32.mrf.mxu0
  %v2979 = vadd.f32 %v2950, %v2978
  %v2980 = vpop.f32.mrf.mxu0
  %v2981 = vadd.f32 %v2952, %v2980
  %2982 = vmatmul.bf16.gmra.mxu0 %v484
  %v2983 = vpop.f32.mrf.mxu0
  %v2984 = vadd.f32 %v2955, %v2983
  %v2985 = vpop.f32.mrf.mxu0
  %v2986 = vadd.f32 %v2957, %v2985
  %2987 = vmatmul.bf16.gmra.mxu0 %v490
  %v2988 = vpop.f32.mrf.mxu0
  %v2989 = vadd.f32 %v2960, %v2988
  %v2990 = vpop.f32.mrf.mxu0
  %v2991 = vadd.f32 %v2962, %v2990
  %2992 = vmatmul.bf16.gmra.mxu0 %v496
  %v2993 = vpop.f32.mrf.mxu0
  %v2994 = vadd.f32 %v2965, %v2993
  %v2995 = vpop.f32.mrf.mxu0
  %v2996 = vadd.f32 %v2967, %v2995
  %2997 = vdwg.mxu0
  %2998 = vmatpush.bf16.msra.mxu0 0
  %2999 = vmatpush.bf16.msra.mxu0 0
  %3000 = vmatpush.bf16.msra.mxu0 0
  %3001 = vmatpush.bf16.msra.mxu0 %v1953
  %3002 = vmatpush.bf16.msra.mxu0 %v1945
  %3003 = vmatpush.bf16.msra.mxu0 %v1937
  %3004 = vmatpush.bf16.msra.mxu0 %v1929
  %3005 = vmatpush.bf16.msra.mxu0 %v1921
  %3006 = vmatmul.bf16.gmra.mxu0 %v2320
  %v3007 = vpop.f32.mrf.mxu0
  %v3008 = vadd.f32 %v2979, %v3007
  %v3009 = vpop.f32.mrf.mxu0
  %v3010 = vadd.f32 %v2981, %v3009
  %3011 = vmatmul.bf16.gmra.mxu0 %v2323
  %v3012 = vpop.f32.mrf.mxu0
  %v3013 = vadd.f32 %v2984, %v3012
  %v3014 = vpop.f32.mrf.mxu0
  %v3015 = vadd.f32 %v2986, %v3014
  %3016 = vmatmul.bf16.gmra.mxu0 %v2326
  %v3017 = vpop.f32.mrf.mxu0
  %v3018 = vadd.f32 %v2989, %v3017
  %v3019 = vpop.f32.mrf.mxu0
  %v3020 = vadd.f32 %v2991, %v3019
  %3021 = vmatmul.bf16.gmra.mxu0 %v2329
  %v3022 = vpop.f32.mrf.mxu0
  %v3023 = vadd.f32 %v2994, %v3022
  %v3024 = vpop.f32.mrf.mxu0
  %v3025 = vadd.f32 %v2996, %v3024
  %3026 = vdwg.mxu0
  %3027 = vmatpush.bf16.msra.mxu0 %v1658
  %3028 = vmatpush.bf16.msra.mxu0 %v1650
  %3029 = vmatpush.bf16.msra.mxu0 %v1642
  %3030 = vmatpush.bf16.msra.mxu0 %v1634
  %3031 = vmatpush.bf16.msra.mxu0 %v1626
  %3032 = vmatpush.bf16.msra.mxu0 %v1618
  %3033 = vmatpush.bf16.msra.mxu0 %v1610
  %3034 = vmatpush.bf16.msra.mxu0 %v1602
  %3035 = vmatmul.bf16.gmra.mxu0 %v474
  %v3036 = vpop.f32.mrf.mxu0
  %v3037 = vadd.f32 0.0, %v3036
  %v3038 = vpop.f32.mrf.mxu0
  %v3039 = vadd.f32 0.0, %v3038
  %3040 = vmatmul.bf16.gmra.mxu0 %v480
  %v3041 = vpop.f32.mrf.mxu0
  %v3042 = vadd.f32 0.0, %v3041
  %v3043 = vpop.f32.mrf.mxu0
  %v3044 = vadd.f32 0.0, %v3043
  %3045 = vmatmul.bf16.gmra.mxu0 %v486
  %v3046 = vpop.f32.mrf.mxu0
  %v3047 = vadd.f32 0.0, %v3046
  %v3048 = vpop.f32.mrf.mxu0
  %v3049 = vadd.f32 0.0, %v3048
  %3050 = vmatmul.bf16.gmra.mxu0 %v492
  %v3051 = vpop.f32.mrf.mxu0
  %v3052 = vadd.f32 0.0, %v3051
  %v3053 = vpop.f32.mrf.mxu0
  %v3054 = vadd.f32 0.0, %v3053
  %3055 = vdwg.mxu0
  %3056 = vmatpush.bf16.msra.mxu0 %v1722
  %3057 = vmatpush.bf16.msra.mxu0 %v1714
  %3058 = vmatpush.bf16.msra.mxu0 %v1706
  %3059 = vmatpush.bf16.msra.mxu0 %v1698
  %3060 = vmatpush.bf16.msra.mxu0 %v1690
  %3061 = vmatpush.bf16.msra.mxu0 %v1682
  %3062 = vmatpush.bf16.msra.mxu0 %v1674
  %3063 = vmatpush.bf16.msra.mxu0 %v1666
  %3064 = vmatmul.bf16.gmra.mxu0 %v475
  %v3065 = vpop.f32.mrf.mxu0
  %v3066 = vadd.f32 %v3037, %v3065
  %v3067 = vpop.f32.mrf.mxu0
  %v3068 = vadd.f32 %v3039, %v3067
  %3069 = vmatmul.bf16.gmra.mxu0 %v481
  %v3070 = vpop.f32.mrf.mxu0
  %v3071 = vadd.f32 %v3042, %v3070
  %v3072 = vpop.f32.mrf.mxu0
  %v3073 = vadd.f32 %v3044, %v3072
  %3074 = vmatmul.bf16.gmra.mxu0 %v487
  %v3075 = vpop.f32.mrf.mxu0
  %v3076 = vadd.f32 %v3047, %v3075
  %v3077 = vpop.f32.mrf.mxu0
  %v3078 = vadd.f32 %v3049, %v3077
  %3079 = vmatmul.bf16.gmra.mxu0 %v493
  %v3080 = vpop.f32.mrf.mxu0
  %v3081 = vadd.f32 %v3052, %v3080
  %v3082 = vpop.f32.mrf.mxu0
  %v3083 = vadd.f32 %v3054, %v3082
  %3084 = vdwg.mxu0
  %3085 = vmatpush.bf16.msra.mxu0 %v1786
  %3086 = vmatpush.bf16.msra.mxu0 %v1778
  %3087 = vmatpush.bf16.msra.mxu0 %v1770
  %3088 = vmatpush.bf16.msra.mxu0 %v1762
  %3089 = vmatpush.bf16.msra.mxu0 %v1754
  %3090 = vmatpush.bf16.msra.mxu0 %v1746
  %3091 = vmatpush.bf16.msra.mxu0 %v1738
  %3092 = vmatpush.bf16.msra.mxu0 %v1730
  %3093 = vmatmul.bf16.gmra.mxu0 %v476
  %v3094 = vpop.f32.mrf.mxu0
  %v3095 = vadd.f32 %v3066, %v3094
  %v3096 = vpop.f32.mrf.mxu0
  %v3097 = vadd.f32 %v3068, %v3096
  %3098 = vmatmul.bf16.gmra.mxu0 %v482
  %v3099 = vpop.f32.mrf.mxu0
  %v3100 = vadd.f32 %v3071, %v3099
  %v3101 = vpop.f32.mrf.mxu0
  %v3102 = vadd.f32 %v3073, %v3101
  %3103 = vmatmul.bf16.gmra.mxu0 %v488
  %v3104 = vpop.f32.mrf.mxu0
  %v3105 = vadd.f32 %v3076, %v3104
  %v3106 = vpop.f32.mrf.mxu0
  %v3107 = vadd.f32 %v3078, %v3106
  %3108 = vmatmul.bf16.gmra.mxu0 %v494
  %v3109 = vpop.f32.mrf.mxu0
  %v3110 = vadd.f32 %v3081, %v3109
  %v3111 = vpop.f32.mrf.mxu0
  %v3112 = vadd.f32 %v3083, %v3111
  %3113 = vdwg.mxu0
  %3114 = vmatpush.bf16.msra.mxu0 %v1850
  %3115 = vmatpush.bf16.msra.mxu0 %v1842
  %3116 = vmatpush.bf16.msra.mxu0 %v1834
  %3117 = vmatpush.bf16.msra.mxu0 %v1826
  %3118 = vmatpush.bf16.msra.mxu0 %v1818
  %3119 = vmatpush.bf16.msra.mxu0 %v1810
  %3120 = vmatpush.bf16.msra.mxu0 %v1802
  %3121 = vmatpush.bf16.msra.mxu0 %v1794
  %3122 = vmatmul.bf16.gmra.mxu0 %v477
  %v3123 = vpop.f32.mrf.mxu0
  %v3124 = vadd.f32 %v3095, %v3123
  %v3125 = vpop.f32.mrf.mxu0
  %v3126 = vadd.f32 %v3097, %v3125
  %3127 = vmatmul.bf16.gmra.mxu0 %v483
  %v3128 = vpop.f32.mrf.mxu0
  %v3129 = vadd.f32 %v3100, %v3128
  %v3130 = vpop.f32.mrf.mxu0
  %v3131 = vadd.f32 %v3102, %v3130
  %3132 = vmatmul.bf16.gmra.mxu0 %v489
  %v3133 = vpop.f32.mrf.mxu0
  %v3134 = vadd.f32 %v3105, %v3133
  %v3135 = vpop.f32.mrf.mxu0
  %v3136 = vadd.f32 %v3107, %v3135
  %3137 = vmatmul.bf16.gmra.mxu0 %v495
  %v3138 = vpop.f32.mrf.mxu0
  %v3139 = vadd.f32 %v3110, %v3138
  %v3140 = vpop.f32.mrf.mxu0
  %v3141 = vadd.f32 %v3112, %v3140
  %3142 = vdwg.mxu0
  %3143 = vmatpush.bf16.msra.mxu0 %v1914
  %3144 = vmatpush.bf16.msra.mxu0 %v1906
  %3145 = vmatpush.bf16.msra.mxu0 %v1898
  %3146 = vmatpush.bf16.msra.mxu0 %v1890
  %3147 = vmatpush.bf16.msra.mxu0 %v1882
  %3148 = vmatpush.bf16.msra.mxu0 %v1874
  %3149 = vmatpush.bf16.msra.mxu0 %v1866
  %3150 = vmatpush.bf16.msra.mxu0 %v1858
  %3151 = vmatmul.bf16.gmra.mxu0 %v478
  %v3152 = vpop.f32.mrf.mxu0
  %v3153 = vadd.f32 %v3124, %v3152
  %v3154 = vpop.f32.mrf.mxu0
  %v3155 = vadd.f32 %v3126, %v3154
  %3156 = vmatmul.bf16.gmra.mxu0 %v484
  %v3157 = vpop.f32.mrf.mxu0
  %v3158 = vadd.f32 %v3129, %v3157
  %v3159 = vpop.f32.mrf.mxu0
  %v3160 = vadd.f32 %v3131, %v3159
  %3161 = vmatmul.bf16.gmra.mxu0 %v490
  %v3162 = vpop.f32.mrf.mxu0
  %v3163 = vadd.f32 %v3134, %v3162
  %v3164 = vpop.f32.mrf.mxu0
  %v3165 = vadd.f32 %v3136, %v3164
  %3166 = vmatmul.bf16.gmra.mxu0 %v496
  %v3167 = vpop.f32.mrf.mxu0
  %v3168 = vadd.f32 %v3139, %v3167
  %v3169 = vpop.f32.mrf.mxu0
  %v3170 = vadd.f32 %v3141, %v3169
  %3171 = vdwg.mxu0
  %3172 = vmatpush.bf16.msra.mxu0 0
  %3173 = vmatpush.bf16.msra.mxu0 0
  %3174 = vmatpush.bf16.msra.mxu0 0
  %3175 = vmatpush.bf16.msra.mxu0 %v1954
  %3176 = vmatpush.bf16.msra.mxu0 %v1946
  %3177 = vmatpush.bf16.msra.mxu0 %v1938
  %3178 = vmatpush.bf16.msra.mxu0 %v1930
  %3179 = vmatpush.bf16.msra.mxu0 %v1922
  %3180 = vmatmul.bf16.gmra.mxu0 %v2320
  %v3181 = vpop.f32.mrf.mxu0
  %v3182 = vadd.f32 %v3153, %v3181
  %v3183 = vpop.f32.mrf.mxu0
  %v3184 = vadd.f32 %v3155, %v3183
  %3185 = vmatmul.bf16.gmra.mxu0 %v2323
  %v3186 = vpop.f32.mrf.mxu0
  %v3187 = vadd.f32 %v3158, %v3186
  %v3188 = vpop.f32.mrf.mxu0
  %v3189 = vadd.f32 %v3160, %v3188
  %3190 = vmatmul.bf16.gmra.mxu0 %v2326
  %v3191 = vpop.f32.mrf.mxu0
  %v3192 = vadd.f32 %v3163, %v3191
  %v3193 = vpop.f32.mrf.mxu0
  %v3194 = vadd.f32 %v3165, %v3193
  %3195 = vmatmul.bf16.gmra.mxu0 %v2329
  %v3196 = vpop.f32.mrf.mxu0
  %v3197 = vadd.f32 %v3168, %v3196
  %v3198 = vpop.f32.mrf.mxu0
  %v3199 = vadd.f32 %v3170, %v3198
  %3200 = vdwg.mxu0
  %3201 = vmatpush.bf16.msra.mxu0 %v1659
  %3202 = vmatpush.bf16.msra.mxu0 %v1651
  %3203 = vmatpush.bf16.msra.mxu0 %v1643
  %3204 = vmatpush.bf16.msra.mxu0 %v1635
  %3205 = vmatpush.bf16.msra.mxu0 %v1627
  %3206 = vmatpush.bf16.msra.mxu0 %v1619
  %3207 = vmatpush.bf16.msra.mxu0 %v1611
  %3208 = vmatpush.bf16.msra.mxu0 %v1603
  %3209 = vmatmul.bf16.gmra.mxu0 %v474
  %v3210 = vpop.f32.mrf.mxu0
  %v3211 = vadd.f32 0.0, %v3210
  %v3212 = vpop.f32.mrf.mxu0
  %v3213 = vadd.f32 0.0, %v3212
  %3214 = vmatmul.bf16.gmra.mxu0 %v480
  %v3215 = vpop.f32.mrf.mxu0
  %v3216 = vadd.f32 0.0, %v3215
  %v3217 = vpop.f32.mrf.mxu0
  %v3218 = vadd.f32 0.0, %v3217
  %3219 = vmatmul.bf16.gmra.mxu0 %v486
  %v3220 = vpop.f32.mrf.mxu0
  %v3221 = vadd.f32 0.0, %v3220
  %v3222 = vpop.f32.mrf.mxu0
  %v3223 = vadd.f32 0.0, %v3222
  %3224 = vmatmul.bf16.gmra.mxu0 %v492
  %v3225 = vpop.f32.mrf.mxu0
  %v3226 = vadd.f32 0.0, %v3225
  %v3227 = vpop.f32.mrf.mxu0
  %v3228 = vadd.f32 0.0, %v3227
  %3229 = vdwg.mxu0
  %3230 = vmatpush.bf16.msra.mxu0 %v1723
  %3231 = vmatpush.bf16.msra.mxu0 %v1715
  %3232 = vmatpush.bf16.msra.mxu0 %v1707
  %3233 = vmatpush.bf16.msra.mxu0 %v1699
  %3234 = vmatpush.bf16.msra.mxu0 %v1691
  %3235 = vmatpush.bf16.msra.mxu0 %v1683
  %3236 = vmatpush.bf16.msra.mxu0 %v1675
  %3237 = vmatpush.bf16.msra.mxu0 %v1667
  %3238 = vmatmul.bf16.gmra.mxu0 %v475
  %v3239 = vpop.f32.mrf.mxu0
  %v3240 = vadd.f32 %v3211, %v3239
  %v3241 = vpop.f32.mrf.mxu0
  %v3242 = vadd.f32 %v3213, %v3241
  %3243 = vmatmul.bf16.gmra.mxu0 %v481
  %v3244 = vpop.f32.mrf.mxu0
  %v3245 = vadd.f32 %v3216, %v3244
  %v3246 = vpop.f32.mrf.mxu0
  %v3247 = vadd.f32 %v3218, %v3246
  %3248 = vmatmul.bf16.gmra.mxu0 %v487
  %v3249 = vpop.f32.mrf.mxu0
  %v3250 = vadd.f32 %v3221, %v3249
  %v3251 = vpop.f32.mrf.mxu0
  %v3252 = vadd.f32 %v3223, %v3251
  %3253 = vmatmul.bf16.gmra.mxu0 %v493
  %v3254 = vpop.f32.mrf.mxu0
  %v3255 = vadd.f32 %v3226, %v3254
  %v3256 = vpop.f32.mrf.mxu0
  %v3257 = vadd.f32 %v3228, %v3256
  %3258 = vdwg.mxu0
  %3259 = vmatpush.bf16.msra.mxu0 %v1787
  %3260 = vmatpush.bf16.msra.mxu0 %v1779
  %3261 = vmatpush.bf16.msra.mxu0 %v1771
  %3262 = vmatpush.bf16.msra.mxu0 %v1763
  %3263 = vmatpush.bf16.msra.mxu0 %v1755
  %3264 = vmatpush.bf16.msra.mxu0 %v1747
  %3265 = vmatpush.bf16.msra.mxu0 %v1739
  %3266 = vmatpush.bf16.msra.mxu0 %v1731
  %3267 = vmatmul.bf16.gmra.mxu0 %v476
  %v3268 = vpop.f32.mrf.mxu0
  %v3269 = vadd.f32 %v3240, %v3268
  %v3270 = vpop.f32.mrf.mxu0
  %v3271 = vadd.f32 %v3242, %v3270
  %3272 = vmatmul.bf16.gmra.mxu0 %v482
  %v3273 = vpop.f32.mrf.mxu0
  %v3274 = vadd.f32 %v3245, %v3273
  %v3275 = vpop.f32.mrf.mxu0
  %v3276 = vadd.f32 %v3247, %v3275
  %3277 = vmatmul.bf16.gmra.mxu0 %v488
  %v3278 = vpop.f32.mrf.mxu0
  %v3279 = vadd.f32 %v3250, %v3278
  %v3280 = vpop.f32.mrf.mxu0
  %v3281 = vadd.f32 %v3252, %v3280
  %3282 = vmatmul.bf16.gmra.mxu0 %v494
  %v3283 = vpop.f32.mrf.mxu0
  %v3284 = vadd.f32 %v3255, %v3283
  %v3285 = vpop.f32.mrf.mxu0
  %v3286 = vadd.f32 %v3257, %v3285
  %3287 = vdwg.mxu0
  %3288 = vmatpush.bf16.msra.mxu0 %v1851
  %3289 = vmatpush.bf16.msra.mxu0 %v1843
  %3290 = vmatpush.bf16.msra.mxu0 %v1835
  %3291 = vmatpush.bf16.msra.mxu0 %v1827
  %3292 = vmatpush.bf16.msra.mxu0 %v1819
  %3293 = vmatpush.bf16.msra.mxu0 %v1811
  %3294 = vmatpush.bf16.msra.mxu0 %v1803
  %3295 = vmatpush.bf16.msra.mxu0 %v1795
  %3296 = vmatmul.bf16.gmra.mxu0 %v477
  %v3297 = vpop.f32.mrf.mxu0
  %v3298 = vadd.f32 %v3269, %v3297
  %v3299 = vpop.f32.mrf.mxu0
  %v3300 = vadd.f32 %v3271, %v3299
  %3301 = vmatmul.bf16.gmra.mxu0 %v483
  %v3302 = vpop.f32.mrf.mxu0
  %v3303 = vadd.f32 %v3274, %v3302
  %v3304 = vpop.f32.mrf.mxu0
  %v3305 = vadd.f32 %v3276, %v3304
  %3306 = vmatmul.bf16.gmra.mxu0 %v489
  %v3307 = vpop.f32.mrf.mxu0
  %v3308 = vadd.f32 %v3279, %v3307
  %v3309 = vpop.f32.mrf.mxu0
  %v3310 = vadd.f32 %v3281, %v3309
  %3311 = vmatmul.bf16.gmra.mxu0 %v495
  %v3312 = vpop.f32.mrf.mxu0
  %v3313 = vadd.f32 %v3284, %v3312
  %v3314 = vpop.f32.mrf.mxu0
  %v3315 = vadd.f32 %v3286, %v3314
  %3316 = vdwg.mxu0
  %3317 = vmatpush.bf16.msra.mxu0 %v1915
  %3318 = vmatpush.bf16.msra.mxu0 %v1907
  %3319 = vmatpush.bf16.msra.mxu0 %v1899
  %3320 = vmatpush.bf16.msra.mxu0 %v1891
  %3321 = vmatpush.bf16.msra.mxu0 %v1883
  %3322 = vmatpush.bf16.msra.mxu0 %v1875
  %3323 = vmatpush.bf16.msra.mxu0 %v1867
  %3324 = vmatpush.bf16.msra.mxu0 %v1859
  %3325 = vmatmul.bf16.gmra.mxu0 %v478
  %v3326 = vpop.f32.mrf.mxu0
  %v3327 = vadd.f32 %v3298, %v3326
  %v3328 = vpop.f32.mrf.mxu0
  %v3329 = vadd.f32 %v3300, %v3328
  %3330 = vmatmul.bf16.gmra.mxu0 %v484
  %v3331 = vpop.f32.mrf.mxu0
  %v3332 = vadd.f32 %v3303, %v3331
  %v3333 = vpop.f32.mrf.mxu0
  %v3334 = vadd.f32 %v3305, %v3333
  %3335 = vmatmul.bf16.gmra.mxu0 %v490
  %v3336 = vpop.f32.mrf.mxu0
  %v3337 = vadd.f32 %v3308, %v3336
  %v3338 = vpop.f32.mrf.mxu0
  %v3339 = vadd.f32 %v3310, %v3338
  %3340 = vmatmul.bf16.gmra.mxu0 %v496
  %v3341 = vpop.f32.mrf.mxu0
  %v3342 = vadd.f32 %v3313, %v3341
  %v3343 = vpop.f32.mrf.mxu0
  %v3344 = vadd.f32 %v3315, %v3343
  %3345 = vdwg.mxu0
  %3346 = vmatpush.bf16.msra.mxu0 0
  %3347 = vmatpush.bf16.msra.mxu0 0
  %3348 = vmatpush.bf16.msra.mxu0 0
  %3349 = vmatpush.bf16.msra.mxu0 %v1955
  %3350 = vmatpush.bf16.msra.mxu0 %v1947
  %3351 = vmatpush.bf16.msra.mxu0 %v1939
  %3352 = vmatpush.bf16.msra.mxu0 %v1931
  %3353 = vmatpush.bf16.msra.mxu0 %v1923
  %3354 = vmatmul.bf16.gmra.mxu0 %v2320
  %v3355 = vpop.f32.mrf.mxu0
  %v3356 = vadd.f32 %v3327, %v3355
  %v3357 = vpop.f32.mrf.mxu0
  %v3358 = vadd.f32 %v3329, %v3357
  %3359 = vmatmul.bf16.gmra.mxu0 %v2323
  %v3360 = vpop.f32.mrf.mxu0
  %v3361 = vadd.f32 %v3332, %v3360
  %v3362 = vpop.f32.mrf.mxu0
  %v3363 = vadd.f32 %v3334, %v3362
  %3364 = vmatmul.bf16.gmra.mxu0 %v2326
  %v3365 = vpop.f32.mrf.mxu0
  %v3366 = vadd.f32 %v3337, %v3365
  %v3367 = vpop.f32.mrf.mxu0
  %v3368 = vadd.f32 %v3339, %v3367
  %3369 = vmatmul.bf16.gmra.mxu0 %v2329
  %v3370 = vpop.f32.mrf.mxu0
  %v3371 = vadd.f32 %v3342, %v3370
  %v3372 = vpop.f32.mrf.mxu0
  %v3373 = vadd.f32 %v3344, %v3372
  %3374 = vdwg.mxu0
  %3375 = vmatpush.bf16.msra.mxu0 %v1660
  %3376 = vmatpush.bf16.msra.mxu0 %v1652
  %3377 = vmatpush.bf16.msra.mxu0 %v1644
  %3378 = vmatpush.bf16.msra.mxu0 %v1636
  %3379 = vmatpush.bf16.msra.mxu0 %v1628
  %3380 = vmatpush.bf16.msra.mxu0 %v1620
  %3381 = vmatpush.bf16.msra.mxu0 %v1612
  %3382 = vmatpush.bf16.msra.mxu0 %v1604
  %3383 = vmatmul.bf16.gmra.mxu0 %v474
  %v3384 = vpop.f32.mrf.mxu0
  %v3385 = vadd.f32 0.0, %v3384
  %v3386 = vpop.f32.mrf.mxu0
  %v3387 = vadd.f32 0.0, %v3386
  %3388 = vmatmul.bf16.gmra.mxu0 %v480
  %v3389 = vpop.f32.mrf.mxu0
  %v3390 = vadd.f32 0.0, %v3389
  %v3391 = vpop.f32.mrf.mxu0
  %v3392 = vadd.f32 0.0, %v3391
  %3393 = vmatmul.bf16.gmra.mxu0 %v486
  %v3394 = vpop.f32.mrf.mxu0
  %v3395 = vadd.f32 0.0, %v3394
  %v3396 = vpop.f32.mrf.mxu0
  %v3397 = vadd.f32 0.0, %v3396
  %3398 = vmatmul.bf16.gmra.mxu0 %v492
  %v3399 = vpop.f32.mrf.mxu0
  %v3400 = vadd.f32 0.0, %v3399
  %v3401 = vpop.f32.mrf.mxu0
  %v3402 = vadd.f32 0.0, %v3401
  %3403 = vdwg.mxu0
  %3404 = vmatpush.bf16.msra.mxu0 %v1724
  %3405 = vmatpush.bf16.msra.mxu0 %v1716
  %3406 = vmatpush.bf16.msra.mxu0 %v1708
  %3407 = vmatpush.bf16.msra.mxu0 %v1700
  %3408 = vmatpush.bf16.msra.mxu0 %v1692
  %3409 = vmatpush.bf16.msra.mxu0 %v1684
  %3410 = vmatpush.bf16.msra.mxu0 %v1676
  %3411 = vmatpush.bf16.msra.mxu0 %v1668
  %3412 = vmatmul.bf16.gmra.mxu0 %v475
  %v3413 = vpop.f32.mrf.mxu0
  %v3414 = vadd.f32 %v3385, %v3413
  %v3415 = vpop.f32.mrf.mxu0
  %v3416 = vadd.f32 %v3387, %v3415
  %3417 = vmatmul.bf16.gmra.mxu0 %v481
  %v3418 = vpop.f32.mrf.mxu0
  %v3419 = vadd.f32 %v3390, %v3418
  %v3420 = vpop.f32.mrf.mxu0
  %v3421 = vadd.f32 %v3392, %v3420
  %3422 = vmatmul.bf16.gmra.mxu0 %v487
  %v3423 = vpop.f32.mrf.mxu0
  %v3424 = vadd.f32 %v3395, %v3423
  %v3425 = vpop.f32.mrf.mxu0
  %v3426 = vadd.f32 %v3397, %v3425
  %3427 = vmatmul.bf16.gmra.mxu0 %v493
  %v3428 = vpop.f32.mrf.mxu0
  %v3429 = vadd.f32 %v3400, %v3428
  %v3430 = vpop.f32.mrf.mxu0
  %v3431 = vadd.f32 %v3402, %v3430
  %3432 = vdwg.mxu0
  %3433 = vmatpush.bf16.msra.mxu0 %v1788
  %3434 = vmatpush.bf16.msra.mxu0 %v1780
  %3435 = vmatpush.bf16.msra.mxu0 %v1772
  %3436 = vmatpush.bf16.msra.mxu0 %v1764
  %3437 = vmatpush.bf16.msra.mxu0 %v1756
  %3438 = vmatpush.bf16.msra.mxu0 %v1748
  %3439 = vmatpush.bf16.msra.mxu0 %v1740
  %3440 = vmatpush.bf16.msra.mxu0 %v1732
  %3441 = vmatmul.bf16.gmra.mxu0 %v476
  %v3442 = vpop.f32.mrf.mxu0
  %v3443 = vadd.f32 %v3414, %v3442
  %v3444 = vpop.f32.mrf.mxu0
  %v3445 = vadd.f32 %v3416, %v3444
  %3446 = vmatmul.bf16.gmra.mxu0 %v482
  %v3447 = vpop.f32.mrf.mxu0
  %v3448 = vadd.f32 %v3419, %v3447
  %v3449 = vpop.f32.mrf.mxu0
  %v3450 = vadd.f32 %v3421, %v3449
  %3451 = vmatmul.bf16.gmra.mxu0 %v488
  %v3452 = vpop.f32.mrf.mxu0
  %v3453 = vadd.f32 %v3424, %v3452
  %v3454 = vpop.f32.mrf.mxu0
  %v3455 = vadd.f32 %v3426, %v3454
  %3456 = vmatmul.bf16.gmra.mxu0 %v494
  %v3457 = vpop.f32.mrf.mxu0
  %v3458 = vadd.f32 %v3429, %v3457
  %v3459 = vpop.f32.mrf.mxu0
  %v3460 = vadd.f32 %v3431, %v3459
  %3461 = vdwg.mxu0
  %3462 = vmatpush.bf16.msra.mxu0 %v1852
  %3463 = vmatpush.bf16.msra.mxu0 %v1844
  %3464 = vmatpush.bf16.msra.mxu0 %v1836
  %3465 = vmatpush.bf16.msra.mxu0 %v1828
  %3466 = vmatpush.bf16.msra.mxu0 %v1820
  %3467 = vmatpush.bf16.msra.mxu0 %v1812
  %3468 = vmatpush.bf16.msra.mxu0 %v1804
  %3469 = vmatpush.bf16.msra.mxu0 %v1796
  %3470 = vmatmul.bf16.gmra.mxu0 %v477
  %v3471 = vpop.f32.mrf.mxu0
  %v3472 = vadd.f32 %v3443, %v3471
  %v3473 = vpop.f32.mrf.mxu0
  %v3474 = vadd.f32 %v3445, %v3473
  %3475 = vmatmul.bf16.gmra.mxu0 %v483
  %v3476 = vpop.f32.mrf.mxu0
  %v3477 = vadd.f32 %v3448, %v3476
  %v3478 = vpop.f32.mrf.mxu0
  %v3479 = vadd.f32 %v3450, %v3478
  %3480 = vmatmul.bf16.gmra.mxu0 %v489
  %v3481 = vpop.f32.mrf.mxu0
  %v3482 = vadd.f32 %v3453, %v3481
  %v3483 = vpop.f32.mrf.mxu0
  %v3484 = vadd.f32 %v3455, %v3483
  %3485 = vmatmul.bf16.gmra.mxu0 %v495
  %v3486 = vpop.f32.mrf.mxu0
  %v3487 = vadd.f32 %v3458, %v3486
  %v3488 = vpop.f32.mrf.mxu0
  %v3489 = vadd.f32 %v3460, %v3488
  %3490 = vdwg.mxu0
  %3491 = vmatpush.bf16.msra.mxu0 %v1916
  %3492 = vmatpush.bf16.msra.mxu0 %v1908
  %3493 = vmatpush.bf16.msra.mxu0 %v1900
  %3494 = vmatpush.bf16.msra.mxu0 %v1892
  %3495 = vmatpush.bf16.msra.mxu0 %v1884
  %3496 = vmatpush.bf16.msra.mxu0 %v1876
  %3497 = vmatpush.bf16.msra.mxu0 %v1868
  %3498 = vmatpush.bf16.msra.mxu0 %v1860
  %3499 = vmatmul.bf16.gmra.mxu0 %v478
  %v3500 = vpop.f32.mrf.mxu0
  %v3501 = vadd.f32 %v3472, %v3500
  %v3502 = vpop.f32.mrf.mxu0
  %v3503 = vadd.f32 %v3474, %v3502
  %3504 = vmatmul.bf16.gmra.mxu0 %v484
  %v3505 = vpop.f32.mrf.mxu0
  %v3506 = vadd.f32 %v3477, %v3505
  %v3507 = vpop.f32.mrf.mxu0
  %v3508 = vadd.f32 %v3479, %v3507
  %3509 = vmatmul.bf16.gmra.mxu0 %v490
  %v3510 = vpop.f32.mrf.mxu0
  %v3511 = vadd.f32 %v3482, %v3510
  %v3512 = vpop.f32.mrf.mxu0
  %v3513 = vadd.f32 %v3484, %v3512
  %3514 = vmatmul.bf16.gmra.mxu0 %v496
  %v3515 = vpop.f32.mrf.mxu0
  %v3516 = vadd.f32 %v3487, %v3515
  %v3517 = vpop.f32.mrf.mxu0
  %v3518 = vadd.f32 %v3489, %v3517
  %3519 = vdwg.mxu0
  %3520 = vmatpush.bf16.msra.mxu0 0
  %3521 = vmatpush.bf16.msra.mxu0 0
  %3522 = vmatpush.bf16.msra.mxu0 0
  %3523 = vmatpush.bf16.msra.mxu0 %v1956
  %3524 = vmatpush.bf16.msra.mxu0 %v1948
  %3525 = vmatpush.bf16.msra.mxu0 %v1940
  %3526 = vmatpush.bf16.msra.mxu0 %v1932
  %3527 = vmatpush.bf16.msra.mxu0 %v1924
  %3528 = vmatmul.bf16.gmra.mxu0 %v2320
  %v3529 = vpop.f32.mrf.mxu0
  %v3530 = vadd.f32 %v3501, %v3529
  %v3531 = vpop.f32.mrf.mxu0
  %v3532 = vadd.f32 %v3503, %v3531
  %3533 = vmatmul.bf16.gmra.mxu0 %v2323
  %v3534 = vpop.f32.mrf.mxu0
  %v3535 = vadd.f32 %v3506, %v3534
  %v3536 = vpop.f32.mrf.mxu0
  %v3537 = vadd.f32 %v3508, %v3536
  %3538 = vmatmul.bf16.gmra.mxu0 %v2326
  %v3539 = vpop.f32.mrf.mxu0
  %v3540 = vadd.f32 %v3511, %v3539
  %v3541 = vpop.f32.mrf.mxu0
  %v3542 = vadd.f32 %v3513, %v3541
  %3543 = vmatmul.bf16.gmra.mxu0 %v2329
  %v3544 = vpop.f32.mrf.mxu0
  %v3545 = vadd.f32 %v3516, %v3544
  %v3546 = vpop.f32.mrf.mxu0
  %v3547 = vadd.f32 %v3518, %v3546
  %3548 = vdwg.mxu0
  %3549 = vmatpush.bf16.msra.mxu0 %v1661
  %3550 = vmatpush.bf16.msra.mxu0 %v1653
  %3551 = vmatpush.bf16.msra.mxu0 %v1645
  %3552 = vmatpush.bf16.msra.mxu0 %v1637
  %3553 = vmatpush.bf16.msra.mxu0 %v1629
  %3554 = vmatpush.bf16.msra.mxu0 %v1621
  %3555 = vmatpush.bf16.msra.mxu0 %v1613
  %3556 = vmatpush.bf16.msra.mxu0 %v1605
  %3557 = vmatmul.bf16.gmra.mxu0 %v474
  %v3558 = vpop.f32.mrf.mxu0
  %v3559 = vadd.f32 0.0, %v3558
  %v3560 = vpop.f32.mrf.mxu0
  %v3561 = vadd.f32 0.0, %v3560
  %3562 = vmatmul.bf16.gmra.mxu0 %v480
  %v3563 = vpop.f32.mrf.mxu0
  %v3564 = vadd.f32 0.0, %v3563
  %v3565 = vpop.f32.mrf.mxu0
  %v3566 = vadd.f32 0.0, %v3565
  %3567 = vmatmul.bf16.gmra.mxu0 %v486
  %v3568 = vpop.f32.mrf.mxu0
  %v3569 = vadd.f32 0.0, %v3568
  %v3570 = vpop.f32.mrf.mxu0
  %v3571 = vadd.f32 0.0, %v3570
  %3572 = vmatmul.bf16.gmra.mxu0 %v492
  %v3573 = vpop.f32.mrf.mxu0
  %v3574 = vadd.f32 0.0, %v3573
  %v3575 = vpop.f32.mrf.mxu0
  %v3576 = vadd.f32 0.0, %v3575
  %3577 = vdwg.mxu0
  %3578 = vmatpush.bf16.msra.mxu0 %v1725
  %3579 = vmatpush.bf16.msra.mxu0 %v1717
  %3580 = vmatpush.bf16.msra.mxu0 %v1709
  %3581 = vmatpush.bf16.msra.mxu0 %v1701
  %3582 = vmatpush.bf16.msra.mxu0 %v1693
  %3583 = vmatpush.bf16.msra.mxu0 %v1685
  %3584 = vmatpush.bf16.msra.mxu0 %v1677
  %3585 = vmatpush.bf16.msra.mxu0 %v1669
  %3586 = vmatmul.bf16.gmra.mxu0 %v475
  %v3587 = vpop.f32.mrf.mxu0
  %v3588 = vadd.f32 %v3559, %v3587
  %v3589 = vpop.f32.mrf.mxu0
  %v3590 = vadd.f32 %v3561, %v3589
  %3591 = vmatmul.bf16.gmra.mxu0 %v481
  %v3592 = vpop.f32.mrf.mxu0
  %v3593 = vadd.f32 %v3564, %v3592
  %v3594 = vpop.f32.mrf.mxu0
  %v3595 = vadd.f32 %v3566, %v3594
  %3596 = vmatmul.bf16.gmra.mxu0 %v487
  %v3597 = vpop.f32.mrf.mxu0
  %v3598 = vadd.f32 %v3569, %v3597
  %v3599 = vpop.f32.mrf.mxu0
  %v3600 = vadd.f32 %v3571, %v3599
  %3601 = vmatmul.bf16.gmra.mxu0 %v493
  %v3602 = vpop.f32.mrf.mxu0
  %v3603 = vadd.f32 %v3574, %v3602
  %v3604 = vpop.f32.mrf.mxu0
  %v3605 = vadd.f32 %v3576, %v3604
  %3606 = vdwg.mxu0
  %3607 = vmatpush.bf16.msra.mxu0 %v1789
  %3608 = vmatpush.bf16.msra.mxu0 %v1781
  %3609 = vmatpush.bf16.msra.mxu0 %v1773
  %3610 = vmatpush.bf16.msra.mxu0 %v1765
  %3611 = vmatpush.bf16.msra.mxu0 %v1757
  %3612 = vmatpush.bf16.msra.mxu0 %v1749
  %3613 = vmatpush.bf16.msra.mxu0 %v1741
  %3614 = vmatpush.bf16.msra.mxu0 %v1733
  %3615 = vmatmul.bf16.gmra.mxu0 %v476
  %v3616 = vpop.f32.mrf.mxu0
  %v3617 = vadd.f32 %v3588, %v3616
  %v3618 = vpop.f32.mrf.mxu0
  %v3619 = vadd.f32 %v3590, %v3618
  %3620 = vmatmul.bf16.gmra.mxu0 %v482
  %v3621 = vpop.f32.mrf.mxu0
  %v3622 = vadd.f32 %v3593, %v3621
  %v3623 = vpop.f32.mrf.mxu0
  %v3624 = vadd.f32 %v3595, %v3623
  %3625 = vmatmul.bf16.gmra.mxu0 %v488
  %v3626 = vpop.f32.mrf.mxu0
  %v3627 = vadd.f32 %v3598, %v3626
  %v3628 = vpop.f32.mrf.mxu0
  %v3629 = vadd.f32 %v3600, %v3628
  %3630 = vmatmul.bf16.gmra.mxu0 %v494
  %v3631 = vpop.f32.mrf.mxu0
  %v3632 = vadd.f32 %v3603, %v3631
  %v3633 = vpop.f32.mrf.mxu0
  %v3634 = vadd.f32 %v3605, %v3633
  %3635 = vdwg.mxu0
  %3636 = vmatpush.bf16.msra.mxu0 %v1853
  %3637 = vmatpush.bf16.msra.mxu0 %v1845
  %3638 = vmatpush.bf16.msra.mxu0 %v1837
  %3639 = vmatpush.bf16.msra.mxu0 %v1829
  %3640 = vmatpush.bf16.msra.mxu0 %v1821
  %3641 = vmatpush.bf16.msra.mxu0 %v1813
  %3642 = vmatpush.bf16.msra.mxu0 %v1805
  %3643 = vmatpush.bf16.msra.mxu0 %v1797
  %3644 = vmatmul.bf16.gmra.mxu0 %v477
  %v3645 = vpop.f32.mrf.mxu0
  %v3646 = vadd.f32 %v3617, %v3645
  %v3647 = vpop.f32.mrf.mxu0
  %v3648 = vadd.f32 %v3619, %v3647
  %3649 = vmatmul.bf16.gmra.mxu0 %v483
  %v3650 = vpop.f32.mrf.mxu0
  %v3651 = vadd.f32 %v3622, %v3650
  %v3652 = vpop.f32.mrf.mxu0
  %v3653 = vadd.f32 %v3624, %v3652
  %3654 = vmatmul.bf16.gmra.mxu0 %v489
  %v3655 = vpop.f32.mrf.mxu0
  %v3656 = vadd.f32 %v3627, %v3655
  %v3657 = vpop.f32.mrf.mxu0
  %v3658 = vadd.f32 %v3629, %v3657
  %3659 = vmatmul.bf16.gmra.mxu0 %v495
  %v3660 = vpop.f32.mrf.mxu0
  %v3661 = vadd.f32 %v3632, %v3660
  %v3662 = vpop.f32.mrf.mxu0
  %v3663 = vadd.f32 %v3634, %v3662
  %3664 = vdwg.mxu0
  %3665 = vmatpush.bf16.msra.mxu0 %v1917
  %3666 = vmatpush.bf16.msra.mxu0 %v1909
  %3667 = vmatpush.bf16.msra.mxu0 %v1901
  %3668 = vmatpush.bf16.msra.mxu0 %v1893
  %3669 = vmatpush.bf16.msra.mxu0 %v1885
  %3670 = vmatpush.bf16.msra.mxu0 %v1877
  %3671 = vmatpush.bf16.msra.mxu0 %v1869
  %3672 = vmatpush.bf16.msra.mxu0 %v1861
  %3673 = vmatmul.bf16.gmra.mxu0 %v478
  %v3674 = vpop.f32.mrf.mxu0
  %v3675 = vadd.f32 %v3646, %v3674
  %v3676 = vpop.f32.mrf.mxu0
  %v3677 = vadd.f32 %v3648, %v3676
  %3678 = vmatmul.bf16.gmra.mxu0 %v484
  %v3679 = vpop.f32.mrf.mxu0
  %v3680 = vadd.f32 %v3651, %v3679
  %v3681 = vpop.f32.mrf.mxu0
  %v3682 = vadd.f32 %v3653, %v3681
  %3683 = vmatmul.bf16.gmra.mxu0 %v490
  %v3684 = vpop.f32.mrf.mxu0
  %v3685 = vadd.f32 %v3656, %v3684
  %v3686 = vpop.f32.mrf.mxu0
  %v3687 = vadd.f32 %v3658, %v3686
  %3688 = vmatmul.bf16.gmra.mxu0 %v496
  %v3689 = vpop.f32.mrf.mxu0
  %v3690 = vadd.f32 %v3661, %v3689
  %v3691 = vpop.f32.mrf.mxu0
  %v3692 = vadd.f32 %v3663, %v3691
  %3693 = vdwg.mxu0
  %3694 = vmatpush.bf16.msra.mxu0 0
  %3695 = vmatpush.bf16.msra.mxu0 0
  %3696 = vmatpush.bf16.msra.mxu0 0
  %3697 = vmatpush.bf16.msra.mxu0 %v1957
  %3698 = vmatpush.bf16.msra.mxu0 %v1949
  %3699 = vmatpush.bf16.msra.mxu0 %v1941
  %3700 = vmatpush.bf16.msra.mxu0 %v1933
  %3701 = vmatpush.bf16.msra.mxu0 %v1925
  %3702 = vmatmul.bf16.gmra.mxu0 %v2320
  %v3703 = vpop.f32.mrf.mxu0
  %v3704 = vadd.f32 %v3675, %v3703
  %v3705 = vpop.f32.mrf.mxu0
  %v3706 = vadd.f32 %v3677, %v3705
  %3707 = vmatmul.bf16.gmra.mxu0 %v2323
  %v3708 = vpop.f32.mrf.mxu0
  %v3709 = vadd.f32 %v3680, %v3708
  %v3710 = vpop.f32.mrf.mxu0
  %v3711 = vadd.f32 %v3682, %v3710
  %3712 = vmatmul.bf16.gmra.mxu0 %v2326
  %v3713 = vpop.f32.mrf.mxu0
  %v3714 = vadd.f32 %v3685, %v3713
  %v3715 = vpop.f32.mrf.mxu0
  %v3716 = vadd.f32 %v3687, %v3715
  %3717 = vmatmul.bf16.gmra.mxu0 %v2329
  %v3718 = vpop.f32.mrf.mxu0
  %v3719 = vadd.f32 %v3690, %v3718
  %v3720 = vpop.f32.mrf.mxu0
  %v3721 = vadd.f32 %v3692, %v3720
  %3722 = vdwg.mxu0
  %v3723 = vmax.f32 %v2486, 0.0
  %v3724 = vmax.f32 %v2660, 0.0
  %v3725 = vmax.f32 %v2834, 0.0
  %v3726 = vmax.f32 %v3008, 0.0
  %v3727 = vmax.f32 %v3182, 0.0
  %v3728 = vmax.f32 %v3356, 0.0
  %v3729 = vmax.f32 %v3530, 0.0
  %v3730 = vmax.f32 %v3704, 0.0
  %v3731 = vmax.f32 %v2488, 0.0
  %v3732 = vmax.f32 %v2662, 0.0
  %v3733 = vmax.f32 %v2836, 0.0
  %v3734 = vmax.f32 %v3010, 0.0
  %v3735 = vmax.f32 %v3184, 0.0
  %v3736 = vmax.f32 %v3358, 0.0
  %v3737 = vmax.f32 %v3532, 0.0
  %v3738 = vmax.f32 %v3706, 0.0
  %v3739 = vmax.f32 %v2491, 0.0
  %v3740 = vmax.f32 %v2665, 0.0
  %v3741 = vmax.f32 %v2839, 0.0
  %v3742 = vmax.f32 %v3013, 0.0
  %v3743 = vmax.f32 %v3187, 0.0
  %v3744 = vmax.f32 %v3361, 0.0
  %v3745 = vmax.f32 %v3535, 0.0
  %v3746 = vmax.f32 %v3709, 0.0
  %v3747 = vmax.f32 %v2493, 0.0
  %v3748 = vmax.f32 %v2667, 0.0
  %v3749 = vmax.f32 %v2841, 0.0
  %v3750 = vmax.f32 %v3015, 0.0
  %v3751 = vmax.f32 %v3189, 0.0
  %v3752 = vmax.f32 %v3363, 0.0
  %v3753 = vmax.f32 %v3537, 0.0
  %v3754 = vmax.f32 %v3711, 0.0
  %v3755 = vmax.f32 %v2496, 0.0
  %v3756 = vmax.f32 %v2670, 0.0
  %v3757 = vmax.f32 %v2844, 0.0
  %v3758 = vmax.f32 %v3018, 0.0
  %v3759 = vmax.f32 %v3192, 0.0
  %v3760 = vmax.f32 %v3366, 0.0
  %v3761 = vmax.f32 %v3540, 0.0
  %v3762 = vmax.f32 %v3714, 0.0
  %v3763 = vmax.f32 %v2498, 0.0
  %v3764 = vmax.f32 %v2672, 0.0
  %v3765 = vmax.f32 %v2846, 0.0
  %v3766 = vmax.f32 %v3020, 0.0
  %v3767 = vmax.f32 %v3194, 0.0
  %v3768 = vmax.f32 %v3368, 0.0
  %v3769 = vmax.f32 %v3542, 0.0
  %v3770 = vmax.f32 %v3716, 0.0
  %v3771 = vmax.f32 %v2501, 0.0
  %v3772 = vmax.f32 %v2675, 0.0
  %v3773 = vmax.f32 %v2849, 0.0
  %v3774 = vmax.f32 %v3023, 0.0
  %v3775 = vmax.f32 %v3197, 0.0
  %v3776 = vmax.f32 %v3371, 0.0
  %v3777 = vmax.f32 %v3545, 0.0
  %v3778 = vmax.f32 %v3719, 0.0
  %v3779 = vmax.f32 %v2503, 0.0
  %v3780 = vmax.f32 %v2677, 0.0
  %v3781 = vmax.f32 %v2851, 0.0
  %v3782 = vmax.f32 %v3025, 0.0
  %v3783 = vmax.f32 %v3199, 0.0
  %v3784 = vmax.f32 %v3373, 0.0
  %v3785 = vmax.f32 %v3547, 0.0
  %v3786 = vmax.f32 %v3721, 0.0
  %v3787 = vmax.f32 %v3723, %v3725
  %v3788 = vmax.f32 %v3724, %v3726
  %v3789 = vmax.f32 %v3731, %v3733
  %v3790 = vmax.f32 %v3732, %v3734
  %v3791 = vmax.f32 %v3739, %v3741
  %v3792 = vmax.f32 %v3740, %v3742
  %v3793 = vmax.f32 %v3747, %v3749
  %v3794 = vmax.f32 %v3748, %v3750
  %v3795 = vmax.f32 %v3755, %v3757
  %v3796 = vmax.f32 %v3756, %v3758
  %v3797 = vmax.f32 %v3763, %v3765
  %v3798 = vmax.f32 %v3764, %v3766
  %v3799 = vmax.f32 %v3771, %v3773
  %v3800 = vmax.f32 %v3772, %v3774
  %v3801 = vmax.f32 %v3779, %v3781
  %v3802 = vmax.f32 %v3780, %v3782
  %v3803 = vmax.f32 %v3727, %v3729
  %v3804 = vmax.f32 %v3728, %v3730
  %v3805 = vmax.f32 %v3735, %v3737
  %v3806 = vmax.f32 %v3736, %v3738
  %v3807 = vmax.f32 %v3743, %v3745
  %v3808 = vmax.f32 %v3744, %v3746
  %v3809 = vmax.f32 %v3751, %v3753
  %v3810 = vmax.f32 %v3752, %v3754
  %v3811 = vmax.f32 %v3759, %v3761
  %v3812 = vmax.f32 %v3760, %v3762
  %v3813 = vmax.f32 %v3767, %v3769
  %v3814 = vmax.f32 %v3768, %v3770
  %v3815 = vmax.f32 %v3775, %v3777
  %v3816 = vmax.f32 %v3776, %v3778
  %v3817 = vmax.f32 %v3783, %v3785
  %v3818 = vmax.f32 %v3784, %v3786
  %v3819 = vmax.f32 %v3787, %v3803
  %v3820 = vmax.f32 %v3788, %v3804
  %v3821 = vmax.f32 %v3789, %v3805
  %v3822 = vmax.f32 %v3790, %v3806
  %v3823 = vmax.f32 %v3791, %v3807
  %v3824 = vmax.f32 %v3792, %v3808
  %v3825 = vmax.f32 %v3793, %v3809
  %v3826 = vmax.f32 %v3794, %v3810
  %v3827 = vmax.f32 %v3795, %v3811
  %v3828 = vmax.f32 %v3796, %v3812
  %v3829 = vmax.f32 %v3797, %v3813
  %v3830 = vmax.f32 %v3798, %v3814
  %v3831 = vmax.f32 %v3799, %v3815
  %v3832 = vmax.f32 %v3800, %v3816
  %v3833 = vmax.f32 %v3801, %v3817
  %v3834 = vmax.f32 %v3802, %v3818
  %v3835 = vmax.f32 %v3819, %v3827
  %v3836 = vmax.f32 %v3820, %v3828
  %v3837 = vmax.f32 %v3821, %v3829
  %v3838 = vmax.f32 %v3822, %v3830
  %v3839 = vmax.f32 %v3823, %v3831
  %v3840 = vmax.f32 %v3824, %v3832
  %v3841 = vmax.f32 %v3825, %v3833
  %v3842 = vmax.f32 %v3826, %v3834
  %3843 = vst [vmem:[#allocation2] sm:$0xff] 0
  %3844 = vst [vmem:[#allocation2 + $0x28] sm:$0xff] 0
  %v3845 = vpack.c.bf16 %v3836, %v3835
  %v3846 = vpack.c.bf16 %v3838, %v3837
  %v3847 = vpack.c.bf16 %v3840, %v3839
  %v3848 = vpack.c.bf16 %v3842, %v3841
  %3849 = vst [vmem:[#allocation2 + $0x8] sm:$0xff] %v3845
  %3850 = vst [vmem:[#allocation2 + $0x10] sm:$0xff] %v3846
  %3851 = vst [vmem:[#allocation2 + $0x18] sm:$0xff] %v3847
  %3852 = vst [vmem:[#allocation2 + $0x20] sm:$0xff] %v3848
  %v3853 = vld [vmem:[#allocation2] sm:$0xff]
  %v3854 = vld [vmem:[#allocation2 + $0x8] sm:$0xff]
  %v3855 = vld [vmem:[#allocation2 + $0x10] sm:$0xff]
  %v3856 = vld [vmem:[#allocation2 + $0x18] sm:$0xff]
  %v3857 = vld [vmem:[%s2] sm:$0xff]
  %v3858 = vld [vmem:[%s2 + $0x8] sm:$0xff]
  %v3859 = vld [vmem:[%s2 + $0x10] sm:$0xff]
  %v3860 = vld [vmem:[%s2 + $0x18] sm:$0xff]
  %v3861 = vld [vmem:[%s2 + $0x20] sm:$0xff]
  %v3862 = vld [vmem:[%s2 + $0x28] sm:$0xff]
  %v3863 = vld [vmem:[%s2 + $0x30] sm:$0xff]
  %v3864 = vld [vmem:[%s2 + $0x38] sm:$0xff]
  %v3865 = vld [vmem:[%s2 + $0x40] sm:$0xff]
  %v3866 = vld [vmem:[%s2 + $0x48] sm:$0xff]
  %v3867 = vld [vmem:[%s2 + $0x50] sm:$0xff]
  %v3868 = vld [vmem:[%s2 + $0x58] sm:$0xff]
  %v3869 = vld [vmem:[%s2 + $0x60] sm:$0xff]
  %v3870 = vld [vmem:[%s2 + $0x68] sm:$0xff]
  %v3871 = vld [vmem:[%s2 + $0x70] sm:$0xff]
  %v3872 = vld [vmem:[%s2 + $0x78] sm:$0xff]
  %v3873 = vld [vmem:[%s2 + $0x80] sm:$0xff]
  %v3874 = vld [vmem:[%s2 + $0x88] sm:$0xff]
  %v3875 = vld [vmem:[%s2 + $0x90] sm:$0xff]
  %v3876 = vld [vmem:[%s2 + $0x98] sm:$0xff]
  %v3877 = vld [vmem:[%s2 + $0xa0] sm:$0xff]
  %v3878 = vld [vmem:[%s2 + $0xa8] sm:$0xff]
  %v3879 = vld [vmem:[%s2 + $0xb0] sm:$0xff]
  %v3880 = vld [vmem:[%s2 + $0xb8] sm:$0xff]
  %v3881 = vld [vmem:[%s2 + $0xc0] sm:$0xff]
  %v3882 = vld [vmem:[%s2 + $0xc8] sm:$0xff]
  %v3883 = vld [vmem:[%s2 + $0xd0] sm:$0xff]
  %v3884 = vld [vmem:[%s2 + $0xd8] sm:$0xff]
  %v3885 = vld [vmem:[%s2 + $0xe0] sm:$0xff]
  %v3886 = vld [vmem:[%s2 + $0xe8] sm:$0xff]
  %v3887 = vld [vmem:[%s2 + $0xf0] sm:$0xff]
  %v3888 = vld [vmem:[%s2 + $0xf8] sm:$0xff]
  %v3889 = vld [vmem:[%s2 + $0x100] sm:$0xff]
  %v3890 = vld [vmem:[%s2 + $0x108] sm:$0xff]
  %v3891 = vld [vmem:[%s2 + $0x110] sm:$0xff]
  %v3892 = vld [vmem:[%s2 + $0x118] sm:$0xff]
  %v3893 = vld [vmem:[%s2 + $0x120] sm:$0xff]
  %v3894 = vld [vmem:[%s2 + $0x128] sm:$0xff]
  %v3895 = vld [vmem:[%s2 + $0x130] sm:$0xff]
  %v3896 = vld [vmem:[%s2 + $0x138] sm:$0xff]
  %v3897 = vld [vmem:[%s2 + $0x140] sm:$0xff]
  %v3898 = vld [vmem:[%s2 + $0x148] sm:$0xff]
  %v3899 = vld [vmem:[%s2 + $0x150] sm:$0xff]
  %v3900 = vld [vmem:[%s2 + $0x158] sm:$0xff]
  %v3901 = vld [vmem:[%s2 + $0x160] sm:$0xff]
  %v3902 = vld [vmem:[%s2 + $0x168] sm:$0xff]
  %v3903 = vld [vmem:[%s2 + $0x170] sm:$0xff]
  %v3904 = vld [vmem:[%s2 + $0x178] sm:$0xff]
  %v3905 = vld [vmem:[%s2 + $0x180] sm:$0xff]
  %v3906 = vld [vmem:[%s2 + $0x188] sm:$0xff]
  %v3907 = vld [vmem:[%s2 + $0x190] sm:$0xff]
  %v3908 = vld [vmem:[%s2 + $0x198] sm:$0xff]
  %v3909 = vld [vmem:[%s2 + $0x1a0] sm:$0xff]
  %v3910 = vld [vmem:[%s2 + $0x1a8] sm:$0xff]
  %v3911 = vld [vmem:[%s2 + $0x1b0] sm:$0xff]
  %v3912 = vld [vmem:[%s2 + $0x1b8] sm:$0xff]
  %v3913 = vld [vmem:[%s2 + $0x1c0] sm:$0xff]
  %v3914 = vld [vmem:[%s2 + $0x1c8] sm:$0xff]
  %v3915 = vld [vmem:[%s2 + $0x1d0] sm:$0xff]
  %v3916 = vld [vmem:[%s2 + $0x1d8] sm:$0xff]
  %v3917 = vld [vmem:[%s2 + $0x1e0] sm:$0xff]
  %v3918 = vld [vmem:[%s2 + $0x1e8] sm:$0xff]
  %v3919 = vld [vmem:[%s2 + $0x1f0] sm:$0xff]
  %v3920 = vld [vmem:[%s2 + $0x1f8] sm:$0xff]
  %v3921 = vld [vmem:[#allocation2 + $0x20] sm:$0xff]
  %s3922 = scalar_lea.vmem %s2, 512
  %v3923 = vld [vmem:[%s3922] sm:$0xff]
  %v3924 = vld [vmem:[%s3922 + $0x8] sm:$0xff]
  %v3925 = vld [vmem:[%s3922 + $0x10] sm:$0xff]
  %v3926 = vld [vmem:[%s3922 + $0x18] sm:$0xff]
  %v3927 = vld [vmem:[%s3922 + $0x20] sm:$0xff]
  %v3928 = vld [vmem:[%s3922 + $0x28] sm:$0xff]
  %v3929 = vld [vmem:[%s3922 + $0x30] sm:$0xff]
  %v3930 = vld [vmem:[%s3922 + $0x38] sm:$0xff]
  %v3931 = vld [vmem:[%s3922 + $0x40] sm:$0xff]
  %v3932 = vld [vmem:[%s3922 + $0x48] sm:$0xff]
  %v3933 = vld [vmem:[%s3922 + $0x50] sm:$0xff]
  %v3934 = vld [vmem:[%s3922 + $0x58] sm:$0xff]
  %v3935 = vld [vmem:[%s3922 + $0x60] sm:$0xff]
  %v3936 = vld [vmem:[%s3922 + $0x68] sm:$0xff]
  %v3937 = vld [vmem:[%s3922 + $0x70] sm:$0xff]
  %v3938 = vld [vmem:[%s3922 + $0x78] sm:$0xff]
  %v3939 = vld [vmem:[%s3922 + $0x80] sm:$0xff]
  %v3940 = vld [vmem:[%s3922 + $0x88] sm:$0xff]
  %v3941 = vld [vmem:[%s3922 + $0x90] sm:$0xff]
  %v3942 = vld [vmem:[%s3922 + $0x98] sm:$0xff]
  %v3943 = vld [vmem:[%s3922 + $0xa0] sm:$0xff]
  %v3944 = vld [vmem:[%s3922 + $0xa8] sm:$0xff]
  %v3945 = vld [vmem:[%s3922 + $0xb0] sm:$0xff]
  %v3946 = vld [vmem:[%s3922 + $0xb8] sm:$0xff]
  %v3947 = vld [vmem:[%s3922 + $0xc0] sm:$0xff]
  %v3948 = vld [vmem:[%s3922 + $0xc8] sm:$0xff]
  %v3949 = vld [vmem:[%s3922 + $0xd0] sm:$0xff]
  %v3950 = vld [vmem:[%s3922 + $0xd8] sm:$0xff]
  %v3951 = vld [vmem:[%s3922 + $0xe0] sm:$0xff]
  %v3952 = vld [vmem:[%s3922 + $0xe8] sm:$0xff]
  %v3953 = vld [vmem:[%s3922 + $0xf0] sm:$0xff]
  %v3954 = vld [vmem:[%s3922 + $0xf8] sm:$0xff]
  %v3955 = vld [vmem:[%s3922 + $0x100] sm:$0xff]
  %v3956 = vld [vmem:[%s3922 + $0x108] sm:$0xff]
  %v3957 = vld [vmem:[%s3922 + $0x110] sm:$0xff]
  %v3958 = vld [vmem:[%s3922 + $0x118] sm:$0xff]
  %v3959 = vld [vmem:[%s3922 + $0x120] sm:$0xff]
  %v3960 = vld [vmem:[%s3922 + $0x128] sm:$0xff]
  %v3961 = vld [vmem:[%s3922 + $0x130] sm:$0xff]
  %v3962 = vld [vmem:[%s3922 + $0x138] sm:$0xff]
  %v3963 = vld [vmem:[%s3922 + $0x140] sm:$0xff]
  %v3964 = vld [vmem:[%s3922 + $0x148] sm:$0xff]
  %v3965 = vld [vmem:[%s3922 + $0x150] sm:$0xff]
  %v3966 = vld [vmem:[%s3922 + $0x158] sm:$0xff]
  %v3967 = vld [vmem:[%s3922 + $0x160] sm:$0xff]
  %v3968 = vld [vmem:[%s3922 + $0x168] sm:$0xff]
  %v3969 = vld [vmem:[%s3922 + $0x170] sm:$0xff]
  %v3970 = vld [vmem:[%s3922 + $0x178] sm:$0xff]
  %v3971 = vld [vmem:[%s3922 + $0x180] sm:$0xff]
  %v3972 = vld [vmem:[%s3922 + $0x188] sm:$0xff]
  %v3973 = vld [vmem:[%s3922 + $0x190] sm:$0xff]
  %v3974 = vld [vmem:[%s3922 + $0x198] sm:$0xff]
  %v3975 = vld [vmem:[%s3922 + $0x1a0] sm:$0xff]
  %v3976 = vld [vmem:[%s3922 + $0x1a8] sm:$0xff]
  %v3977 = vld [vmem:[%s3922 + $0x1b0] sm:$0xff]
  %v3978 = vld [vmem:[%s3922 + $0x1b8] sm:$0xff]
  %v3979 = vld [vmem:[%s3922 + $0x1c0] sm:$0xff]
  %v3980 = vld [vmem:[%s3922 + $0x1c8] sm:$0xff]
  %v3981 = vld [vmem:[%s3922 + $0x1d0] sm:$0xff]
  %v3982 = vld [vmem:[%s3922 + $0x1d8] sm:$0xff]
  %v3983 = vld [vmem:[%s3922 + $0x1e0] sm:$0xff]
  %v3984 = vld [vmem:[%s3922 + $0x1e8] sm:$0xff]
  %v3985 = vld [vmem:[%s3922 + $0x1f0] sm:$0xff]
  %v3986 = vld [vmem:[%s3922 + $0x1f8] sm:$0xff]
  %v3991 = vunpack.c.l.b16 %v3854
  %v3992 = vunpack.c.h.b16 %v3854
  %v3993 = vunpack.c.l.b16 %v3855
  %v3994 = vunpack.c.h.b16 %v3855
  %v3995 = vunpack.c.l.b16 %v3856
  %v3996 = vunpack.c.h.b16 %v3856
  %v3997 = vunpack.c.l.b16 %v3921
  %v3998 = vunpack.c.h.b16 %v3921
  %v3999 = vpack.c.b16 %v3993, %v3991
  %v4000 = vpack.c.b16 %v3994, %v3992
  %v4001 = vpack.c.b16 %v3997, %v3995
  %v4002 = vpack.c.b16 %v3998, %v3996
  %v4071 = vunpack.c.l.b16 %v3923
  %v4072 = vunpack.c.h.b16 %v3923
  %v4073 = vunpack.c.l.b16 %v3924
  %v4074 = vunpack.c.h.b16 %v3924
  %v4075 = vunpack.c.l.b16 %v3925
  %v4076 = vunpack.c.h.b16 %v3925
  %v4077 = vunpack.c.l.b16 %v3926
  %v4078 = vunpack.c.h.b16 %v3926
  %v4079 = vunpack.c.l.b16 %v3927
  %v4080 = vunpack.c.h.b16 %v3927
  %v4081 = vunpack.c.l.b16 %v3928
  %v4082 = vunpack.c.h.b16 %v3928
  %v4083 = vunpack.c.l.b16 %v3929
  %v4084 = vunpack.c.h.b16 %v3929
  %v4085 = vunpack.c.l.b16 %v3930
  %v4086 = vunpack.c.h.b16 %v3930
  %v4087 = vunpack.c.l.b16 %v3931
  %v4088 = vunpack.c.h.b16 %v3931
  %v4089 = vunpack.c.l.b16 %v3932
  %v4090 = vunpack.c.h.b16 %v3932
  %v4091 = vunpack.c.l.b16 %v3933
  %v4092 = vunpack.c.h.b16 %v3933
  %v4093 = vunpack.c.l.b16 %v3934
  %v4094 = vunpack.c.h.b16 %v3934
  %v4095 = vunpack.c.l.b16 %v3935
  %v4096 = vunpack.c.h.b16 %v3935
  %v4097 = vunpack.c.l.b16 %v3936
  %v4098 = vunpack.c.h.b16 %v3936
  %v4099 = vunpack.c.l.b16 %v3937
  %v4100 = vunpack.c.h.b16 %v3937
  %v4101 = vunpack.c.l.b16 %v3938
  %v4102 = vunpack.c.h.b16 %v3938
  %v4103 = vunpack.c.l.b16 %v3939
  %v4104 = vunpack.c.h.b16 %v3939
  %v4105 = vunpack.c.l.b16 %v3940
  %v4106 = vunpack.c.h.b16 %v3940
  %v4107 = vunpack.c.l.b16 %v3941
  %v4108 = vunpack.c.h.b16 %v3941
  %v4109 = vunpack.c.l.b16 %v3942
  %v4110 = vunpack.c.h.b16 %v3942
  %v4111 = vunpack.c.l.b16 %v3943
  %v4112 = vunpack.c.h.b16 %v3943
  %v4113 = vunpack.c.l.b16 %v3944
  %v4114 = vunpack.c.h.b16 %v3944
  %v4115 = vunpack.c.l.b16 %v3945
  %v4116 = vunpack.c.h.b16 %v3945
  %v4117 = vunpack.c.l.b16 %v3946
  %v4118 = vunpack.c.h.b16 %v3946
  %v4119 = vunpack.c.l.b16 %v3947
  %v4120 = vunpack.c.h.b16 %v3947
  %v4121 = vunpack.c.l.b16 %v3948
  %v4122 = vunpack.c.h.b16 %v3948
  %v4123 = vunpack.c.l.b16 %v3949
  %v4124 = vunpack.c.h.b16 %v3949
  %v4125 = vunpack.c.l.b16 %v3950
  %v4126 = vunpack.c.h.b16 %v3950
  %v4127 = vunpack.c.l.b16 %v3951
  %v4128 = vunpack.c.h.b16 %v3951
  %v4129 = vunpack.c.l.b16 %v3952
  %v4130 = vunpack.c.h.b16 %v3952
  %v4131 = vunpack.c.l.b16 %v3953
  %v4132 = vunpack.c.h.b16 %v3953
  %v4133 = vunpack.c.l.b16 %v3954
  %v4134 = vunpack.c.h.b16 %v3954
  %v4135 = vunpack.c.l.b16 %v3955
  %v4136 = vunpack.c.h.b16 %v3955
  %v4137 = vunpack.c.l.b16 %v3956
  %v4138 = vunpack.c.h.b16 %v3956
  %v4139 = vunpack.c.l.b16 %v3957
  %v4140 = vunpack.c.h.b16 %v3957
  %v4141 = vunpack.c.l.b16 %v3958
  %v4142 = vunpack.c.h.b16 %v3958
  %v4143 = vunpack.c.l.b16 %v3959
  %v4144 = vunpack.c.h.b16 %v3959
  %v4145 = vunpack.c.l.b16 %v3960
  %v4146 = vunpack.c.h.b16 %v3960
  %v4147 = vunpack.c.l.b16 %v3961
  %v4148 = vunpack.c.h.b16 %v3961
  %v4149 = vunpack.c.l.b16 %v3962
  %v4150 = vunpack.c.h.b16 %v3962
  %v4151 = vunpack.c.l.b16 %v3963
  %v4152 = vunpack.c.h.b16 %v3963
  %v4153 = vunpack.c.l.b16 %v3964
  %v4154 = vunpack.c.h.b16 %v3964
  %v4155 = vunpack.c.l.b16 %v3965
  %v4156 = vunpack.c.h.b16 %v3965
  %v4157 = vunpack.c.l.b16 %v3966
  %v4158 = vunpack.c.h.b16 %v3966
  %v4159 = vunpack.c.l.b16 %v3967
  %v4160 = vunpack.c.h.b16 %v3967
  %v4161 = vunpack.c.l.b16 %v3968
  %v4162 = vunpack.c.h.b16 %v3968
  %v4163 = vunpack.c.l.b16 %v3969
  %v4164 = vunpack.c.h.b16 %v3969
  %v4165 = vunpack.c.l.b16 %v3970
  %v4166 = vunpack.c.h.b16 %v3970
  %v4167 = vunpack.c.l.b16 %v3971
  %v4168 = vunpack.c.h.b16 %v3971
  %v4169 = vunpack.c.l.b16 %v3972
  %v4170 = vunpack.c.h.b16 %v3972
  %v4171 = vunpack.c.l.b16 %v3973
  %v4172 = vunpack.c.h.b16 %v3973
  %v4173 = vunpack.c.l.b16 %v3974
  %v4174 = vunpack.c.h.b16 %v3974
  %v4175 = vunpack.c.l.b16 %v3975
  %v4176 = vunpack.c.h.b16 %v3975
  %v4177 = vunpack.c.l.b16 %v3976
  %v4178 = vunpack.c.h.b16 %v3976
  %v4179 = vunpack.c.l.b16 %v3977
  %v4180 = vunpack.c.h.b16 %v3977
  %v4181 = vunpack.c.l.b16 %v3978
  %v4182 = vunpack.c.h.b16 %v3978
  %v4183 = vunpack.c.l.b16 %v3979
  %v4184 = vunpack.c.h.b16 %v3979
  %v4185 = vunpack.c.l.b16 %v3980
  %v4186 = vunpack.c.h.b16 %v3980
  %v4187 = vunpack.c.l.b16 %v3981
  %v4188 = vunpack.c.h.b16 %v3981
  %v4189 = vunpack.c.l.b16 %v3982
  %v4190 = vunpack.c.h.b16 %v3982
  %v4191 = vunpack.c.l.b16 %v3983
  %v4192 = vunpack.c.h.b16 %v3983
  %v4193 = vunpack.c.l.b16 %v3984
  %v4194 = vunpack.c.h.b16 %v3984
  %v4195 = vunpack.c.l.b16 %v3985
  %v4196 = vunpack.c.h.b16 %v3985
  %v4197 = vunpack.c.l.b16 %v3986
  %v4198 = vunpack.c.h.b16 %v3986
  %v4199 = vpack.c.b16 %v4075, %v4071
  %v4200 = vpack.c.b16 %v4076, %v4072
  %v4201 = vpack.c.b16 %v4077, %v4073
  %v4202 = vpack.c.b16 %v4078, %v4074
  %v4203 = vpack.c.b16 %v4083, %v4079
  %v4204 = vpack.c.b16 %v4084, %v4080
  %v4205 = vpack.c.b16 %v4085, %v4081
  %v4206 = vpack.c.b16 %v4086, %v4082
  %v4207 = vpack.c.b16 %v4091, %v4087
  %v4208 = vpack.c.b16 %v4092, %v4088
  %v4209 = vpack.c.b16 %v4093, %v4089
  %v4210 = vpack.c.b16 %v4094, %v4090
  %v4211 = vpack.c.b16 %v4099, %v4095
  %v4212 = vpack.c.b16 %v4100, %v4096
  %v4213 = vpack.c.b16 %v4101, %v4097
  %v4214 = vpack.c.b16 %v4102, %v4098
  %v4215 = vpack.c.b16 %v4107, %v4103
  %v4216 = vpack.c.b16 %v4108, %v4104
  %v4217 = vpack.c.b16 %v4109, %v4105
  %v4218 = vpack.c.b16 %v4110, %v4106
  %v4219 = vpack.c.b16 %v4115, %v4111
  %v4220 = vpack.c.b16 %v4116, %v4112
  %v4221 = vpack.c.b16 %v4117, %v4113
  %v4222 = vpack.c.b16 %v4118, %v4114
  %v4223 = vpack.c.b16 %v4123, %v4119
  %v4224 = vpack.c.b16 %v4124, %v4120
  %v4225 = vpack.c.b16 %v4125, %v4121
  %v4226 = vpack.c.b16 %v4126, %v4122
  %v4227 = vpack.c.b16 %v4131, %v4127
  %v4228 = vpack.c.b16 %v4132, %v4128
  %v4229 = vpack.c.b16 %v4133, %v4129
  %v4230 = vpack.c.b16 %v4134, %v4130
  %v4231 = vpack.c.b16 %v4139, %v4135
  %v4232 = vpack.c.b16 %v4140, %v4136
  %v4233 = vpack.c.b16 %v4141, %v4137
  %v4234 = vpack.c.b16 %v4142, %v4138
  %v4235 = vpack.c.b16 %v4147, %v4143
  %v4236 = vpack.c.b16 %v4148, %v4144
  %v4237 = vpack.c.b16 %v4149, %v4145
  %v4238 = vpack.c.b16 %v4150, %v4146
  %v4239 = vpack.c.b16 %v4155, %v4151
  %v4240 = vpack.c.b16 %v4156, %v4152
  %v4241 = vpack.c.b16 %v4157, %v4153
  %v4242 = vpack.c.b16 %v4158, %v4154
  %v4243 = vpack.c.b16 %v4163, %v4159
  %v4244 = vpack.c.b16 %v4164, %v4160
  %v4245 = vpack.c.b16 %v4165, %v4161
  %v4246 = vpack.c.b16 %v4166, %v4162
  %v4247 = vpack.c.b16 %v4171, %v4167
  %v4248 = vpack.c.b16 %v4172, %v4168
  %v4249 = vpack.c.b16 %v4173, %v4169
  %v4250 = vpack.c.b16 %v4174, %v4170
  %v4251 = vpack.c.b16 %v4179, %v4175
  %v4252 = vpack.c.b16 %v4180, %v4176
  %v4253 = vpack.c.b16 %v4181, %v4177
  %v4254 = vpack.c.b16 %v4182, %v4178
  %v4255 = vpack.c.b16 %v4187, %v4183
  %v4256 = vpack.c.b16 %v4188, %v4184
  %v4257 = vpack.c.b16 %v4189, %v4185
  %v4258 = vpack.c.b16 %v4190, %v4186
  %v4259 = vpack.c.b16 %v4195, %v4191
  %v4260 = vpack.c.b16 %v4196, %v4192
  %v4261 = vpack.c.b16 %v4197, %v4193
  %v4262 = vpack.c.b16 %v4198, %v4194
  %4327 = vmatpush.bf16.msra.mxu0 %v4227
  %4328 = vmatpush.bf16.msra.mxu0 %v4223
  %4329 = vmatpush.bf16.msra.mxu0 %v4219
  %4330 = vmatpush.bf16.msra.mxu0 %v4215
  %4331 = vmatpush.bf16.msra.mxu0 %v4211
  %4332 = vmatpush.bf16.msra.mxu0 %v4207
  %4333 = vmatpush.bf16.msra.mxu0 %v4203
  %4334 = vmatpush.bf16.msra.mxu0 %v4199
  %4335 = vmatmul.bf16.gmra.mxu0 %v3999
  %v4336 = vpop.f32.mrf.mxu0
  %v4337 = vadd.f32 0.0, %v4336
  %v4338 = vpop.f32.mrf.mxu0
  %v4339 = vadd.f32 0.0, %v4338
  %4340 = vmatmul.bf16.gmra.mxu0 %v4001
  %v4341 = vpop.f32.mrf.mxu0
  %v4342 = vadd.f32 0.0, %v4341
  %v4343 = vpop.f32.mrf.mxu0
  %v4344 = vadd.f32 0.0, %v4343
  %4345 = vdwg.mxu0
  %4346 = vmatpush.bf16.msra.mxu0 %v4259
  %4347 = vmatpush.bf16.msra.mxu0 %v4255
  %4348 = vmatpush.bf16.msra.mxu0 %v4251
  %4349 = vmatpush.bf16.msra.mxu0 %v4247
  %4350 = vmatpush.bf16.msra.mxu0 %v4243
  %4351 = vmatpush.bf16.msra.mxu0 %v4239
  %4352 = vmatpush.bf16.msra.mxu0 %v4235
  %4353 = vmatpush.bf16.msra.mxu0 %v4231
  %4354 = vmatmul.bf16.gmra.mxu0 %v4000
  %v4355 = vpop.f32.mrf.mxu0
  %v4356 = vadd.f32 %v4337, %v4355
  %v4357 = vpop.f32.mrf.mxu0
  %v4358 = vadd.f32 %v4339, %v4357
  %4359 = vmatmul.bf16.gmra.mxu0 %v4002
  %v4360 = vpop.f32.mrf.mxu0
  %v4361 = vadd.f32 %v4342, %v4360
  %v4362 = vpop.f32.mrf.mxu0
  %v4363 = vadd.f32 %v4344, %v4362
  %4364 = vdwg.mxu0
  %4365 = vmatpush.bf16.msra.mxu0 %v4228
  %4366 = vmatpush.bf16.msra.mxu0 %v4224
  %4367 = vmatpush.bf16.msra.mxu0 %v4220
  %4368 = vmatpush.bf16.msra.mxu0 %v4216
  %4369 = vmatpush.bf16.msra.mxu0 %v4212
  %4370 = vmatpush.bf16.msra.mxu0 %v4208
  %4371 = vmatpush.bf16.msra.mxu0 %v4204
  %4372 = vmatpush.bf16.msra.mxu0 %v4200
  %4373 = vmatmul.bf16.gmra.mxu0 %v3999
  %v4374 = vpop.f32.mrf.mxu0
  %v4375 = vadd.f32 0.0, %v4374
  %v4376 = vpop.f32.mrf.mxu0
  %v4377 = vadd.f32 0.0, %v4376
  %4378 = vmatmul.bf16.gmra.mxu0 %v4001
  %v4379 = vpop.f32.mrf.mxu0
  %v4380 = vadd.f32 0.0, %v4379
  %v4381 = vpop.f32.mrf.mxu0
  %v4382 = vadd.f32 0.0, %v4381
  %4383 = vdwg.mxu0
  %4384 = vmatpush.bf16.msra.mxu0 %v4260
  %4385 = vmatpush.bf16.msra.mxu0 %v4256
  %4386 = vmatpush.bf16.msra.mxu0 %v4252
  %4387 = vmatpush.bf16.msra.mxu0 %v4248
  %4388 = vmatpush.bf16.msra.mxu0 %v4244
  %4389 = vmatpush.bf16.msra.mxu0 %v4240
  %4390 = vmatpush.bf16.msra.mxu0 %v4236
  %4391 = vmatpush.bf16.msra.mxu0 %v4232
  %4392 = vmatmul.bf16.gmra.mxu0 %v4000
  %v4393 = vpop.f32.mrf.mxu0
  %v4394 = vadd.f32 %v4375, %v4393
  %v4395 = vpop.f32.mrf.mxu0
  %v4396 = vadd.f32 %v4377, %v4395
  %4397 = vmatmul.bf16.gmra.mxu0 %v4002
  %v4398 = vpop.f32.mrf.mxu0
  %v4399 = vadd.f32 %v4380, %v4398
  %v4400 = vpop.f32.mrf.mxu0
  %v4401 = vadd.f32 %v4382, %v4400
  %4402 = vdwg.mxu0
  %4403 = vmatpush.bf16.msra.mxu0 %v4229
  %4404 = vmatpush.bf16.msra.mxu0 %v4225
  %4405 = vmatpush.bf16.msra.mxu0 %v4221
  %4406 = vmatpush.bf16.msra.mxu0 %v4217
  %4407 = vmatpush.bf16.msra.mxu0 %v4213
  %4408 = vmatpush.bf16.msra.mxu0 %v4209
  %4409 = vmatpush.bf16.msra.mxu0 %v4205
  %4410 = vmatpush.bf16.msra.mxu0 %v4201
  %4411 = vmatmul.bf16.gmra.mxu0 %v3999
  %v4412 = vpop.f32.mrf.mxu0
  %v4413 = vadd.f32 0.0, %v4412
  %v4414 = vpop.f32.mrf.mxu0
  %v4415 = vadd.f32 0.0, %v4414
  %4416 = vmatmul.bf16.gmra.mxu0 %v4001
  %v4417 = vpop.f32.mrf.mxu0
  %v4418 = vadd.f32 0.0, %v4417
  %v4419 = vpop.f32.mrf.mxu0
  %v4420 = vadd.f32 0.0, %v4419
  %4421 = vdwg.mxu0
  %4422 = vmatpush.bf16.msra.mxu0 %v4261
  %4423 = vmatpush.bf16.msra.mxu0 %v4257
  %4424 = vmatpush.bf16.msra.mxu0 %v4253
  %4425 = vmatpush.bf16.msra.mxu0 %v4249
  %4426 = vmatpush.bf16.msra.mxu0 %v4245
  %4427 = vmatpush.bf16.msra.mxu0 %v4241
  %4428 = vmatpush.bf16.msra.mxu0 %v4237
  %4429 = vmatpush.bf16.msra.mxu0 %v4233
  %4430 = vmatmul.bf16.gmra.mxu0 %v4000
  %v4431 = vpop.f32.mrf.mxu0
  %v4432 = vadd.f32 %v4413, %v4431
  %v4433 = vpop.f32.mrf.mxu0
  %v4434 = vadd.f32 %v4415, %v4433
  %4435 = vmatmul.bf16.gmra.mxu0 %v4002
  %v4436 = vpop.f32.mrf.mxu0
  %v4437 = vadd.f32 %v4418, %v4436
  %v4438 = vpop.f32.mrf.mxu0
  %v4439 = vadd.f32 %v4420, %v4438
  %4440 = vdwg.mxu0
  %4441 = vmatpush.bf16.msra.mxu0 %v4230
  %4442 = vmatpush.bf16.msra.mxu0 %v4226
  %4443 = vmatpush.bf16.msra.mxu0 %v4222
  %4444 = vmatpush.bf16.msra.mxu0 %v4218
  %4445 = vmatpush.bf16.msra.mxu0 %v4214
  %4446 = vmatpush.bf16.msra.mxu0 %v4210
  %4447 = vmatpush.bf16.msra.mxu0 %v4206
  %4448 = vmatpush.bf16.msra.mxu0 %v4202
  %4449 = vmatmul.bf16.gmra.mxu0 %v3999
  %v4450 = vpop.f32.mrf.mxu0
  %v4451 = vadd.f32 0.0, %v4450
  %v4452 = vpop.f32.mrf.mxu0
  %v4453 = vadd.f32 0.0, %v4452
  %4454 = vmatmul.bf16.gmra.mxu0 %v4001
  %v4455 = vpop.f32.mrf.mxu0
  %v4456 = vadd.f32 0.0, %v4455
  %v4457 = vpop.f32.mrf.mxu0
  %v4458 = vadd.f32 0.0, %v4457
  %4459 = vdwg.mxu0
  %4460 = vmatpush.bf16.msra.mxu0 %v4262
  %4461 = vmatpush.bf16.msra.mxu0 %v4258
  %4462 = vmatpush.bf16.msra.mxu0 %v4254
  %4463 = vmatpush.bf16.msra.mxu0 %v4250
  %4464 = vmatpush.bf16.msra.mxu0 %v4246
  %4465 = vmatpush.bf16.msra.mxu0 %v4242
  %4466 = vmatpush.bf16.msra.mxu0 %v4238
  %4467 = vmatpush.bf16.msra.mxu0 %v4234
  %4468 = vmatmul.bf16.gmra.mxu0 %v4000
  %v4469 = vpop.f32.mrf.mxu0
  %v4470 = vadd.f32 %v4451, %v4469
  %v4471 = vpop.f32.mrf.mxu0
  %v4472 = vadd.f32 %v4453, %v4471
  %4473 = vmatmul.bf16.gmra.mxu0 %v4002
  %v4474 = vpop.f32.mrf.mxu0
  %v4475 = vadd.f32 %v4456, %v4474
  %v4476 = vpop.f32.mrf.mxu0
  %v4477 = vadd.f32 %v4458, %v4476
  %4478 = vdwg.mxu0
  %v4480 = vunpack.c.l.b16 %v3853
  %v4481 = vunpack.c.h.b16 %v3853
  %v4482 = vpack.c.b16 %v3991, %v4480
  %v4483 = vpack.c.b16 %v3992, %v4481
  %v4484 = vpack.c.b16 %v3995, %v3993
  %v4485 = vpack.c.b16 %v3996, %v3994
  %v4554 = vunpack.c.l.b16 %v3857
  %v4555 = vunpack.c.h.b16 %v3857
  %v4556 = vunpack.c.l.b16 %v3858
  %v4557 = vunpack.c.h.b16 %v3858
  %v4558 = vunpack.c.l.b16 %v3859
  %v4559 = vunpack.c.h.b16 %v3859
  %v4560 = vunpack.c.l.b16 %v3860
  %v4561 = vunpack.c.h.b16 %v3860
  %v4562 = vunpack.c.l.b16 %v3861
  %v4563 = vunpack.c.h.b16 %v3861
  %v4564 = vunpack.c.l.b16 %v3862
  %v4565 = vunpack.c.h.b16 %v3862
  %v4566 = vunpack.c.l.b16 %v3863
  %v4567 = vunpack.c.h.b16 %v3863
  %v4568 = vunpack.c.l.b16 %v3864
  %v4569 = vunpack.c.h.b16 %v3864
  %v4570 = vunpack.c.l.b16 %v3865
  %v4571 = vunpack.c.h.b16 %v3865
  %v4572 = vunpack.c.l.b16 %v3866
  %v4573 = vunpack.c.h.b16 %v3866
  %v4574 = vunpack.c.l.b16 %v3867
  %v4575 = vunpack.c.h.b16 %v3867
  %v4576 = vunpack.c.l.b16 %v3868
  %v4577 = vunpack.c.h.b16 %v3868
  %v4578 = vunpack.c.l.b16 %v3869
  %v4579 = vunpack.c.h.b16 %v3869
  %v4580 = vunpack.c.l.b16 %v3870
  %v4581 = vunpack.c.h.b16 %v3870
  %v4582 = vunpack.c.l.b16 %v3871
  %v4583 = vunpack.c.h.b16 %v3871
  %v4584 = vunpack.c.l.b16 %v3872
  %v4585 = vunpack.c.h.b16 %v3872
  %v4586 = vunpack.c.l.b16 %v3873
  %v4587 = vunpack.c.h.b16 %v3873
  %v4588 = vunpack.c.l.b16 %v3874
  %v4589 = vunpack.c.h.b16 %v3874
  %v4590 = vunpack.c.l.b16 %v3875
  %v4591 = vunpack.c.h.b16 %v3875
  %v4592 = vunpack.c.l.b16 %v3876
  %v4593 = vunpack.c.h.b16 %v3876
  %v4594 = vunpack.c.l.b16 %v3877
  %v4595 = vunpack.c.h.b16 %v3877
  %v4596 = vunpack.c.l.b16 %v3878
  %v4597 = vunpack.c.h.b16 %v3878
  %v4598 = vunpack.c.l.b16 %v3879
  %v4599 = vunpack.c.h.b16 %v3879
  %v4600 = vunpack.c.l.b16 %v3880
  %v4601 = vunpack.c.h.b16 %v3880
  %v4602 = vunpack.c.l.b16 %v3881
  %v4603 = vunpack.c.h.b16 %v3881
  %v4604 = vunpack.c.l.b16 %v3882
  %v4605 = vunpack.c.h.b16 %v3882
  %v4606 = vunpack.c.l.b16 %v3883
  %v4607 = vunpack.c.h.b16 %v3883
  %v4608 = vunpack.c.l.b16 %v3884
  %v4609 = vunpack.c.h.b16 %v3884
  %v4610 = vunpack.c.l.b16 %v3885
  %v4611 = vunpack.c.h.b16 %v3885
  %v4612 = vunpack.c.l.b16 %v3886
  %v4613 = vunpack.c.h.b16 %v3886
  %v4614 = vunpack.c.l.b16 %v3887
  %v4615 = vunpack.c.h.b16 %v3887
  %v4616 = vunpack.c.l.b16 %v3888
  %v4617 = vunpack.c.h.b16 %v3888
  %v4618 = vunpack.c.l.b16 %v3889
  %v4619 = vunpack.c.h.b16 %v3889
  %v4620 = vunpack.c.l.b16 %v3890
  %v4621 = vunpack.c.h.b16 %v3890
  %v4622 = vunpack.c.l.b16 %v3891
  %v4623 = vunpack.c.h.b16 %v3891
  %v4624 = vunpack.c.l.b16 %v3892
  %v4625 = vunpack.c.h.b16 %v3892
  %v4626 = vunpack.c.l.b16 %v3893
  %v4627 = vunpack.c.h.b16 %v3893
  %v4628 = vunpack.c.l.b16 %v3894
  %v4629 = vunpack.c.h.b16 %v3894
  %v4630 = vunpack.c.l.b16 %v3895
  %v4631 = vunpack.c.h.b16 %v3895
  %v4632 = vunpack.c.l.b16 %v3896
  %v4633 = vunpack.c.h.b16 %v3896
  %v4634 = vunpack.c.l.b16 %v3897
  %v4635 = vunpack.c.h.b16 %v3897
  %v4636 = vunpack.c.l.b16 %v3898
  %v4637 = vunpack.c.h.b16 %v3898
  %v4638 = vunpack.c.l.b16 %v3899
  %v4639 = vunpack.c.h.b16 %v3899
  %v4640 = vunpack.c.l.b16 %v3900
  %v4641 = vunpack.c.h.b16 %v3900
  %v4642 = vunpack.c.l.b16 %v3901
  %v4643 = vunpack.c.h.b16 %v3901
  %v4644 = vunpack.c.l.b16 %v3902
  %v4645 = vunpack.c.h.b16 %v3902
  %v4646 = vunpack.c.l.b16 %v3903
  %v4647 = vunpack.c.h.b16 %v3903
  %v4648 = vunpack.c.l.b16 %v3904
  %v4649 = vunpack.c.h.b16 %v3904
  %v4650 = vunpack.c.l.b16 %v3905
  %v4651 = vunpack.c.h.b16 %v3905
  %v4652 = vunpack.c.l.b16 %v3906
  %v4653 = vunpack.c.h.b16 %v3906
  %v4654 = vunpack.c.l.b16 %v3907
  %v4655 = vunpack.c.h.b16 %v3907
  %v4656 = vunpack.c.l.b16 %v3908
  %v4657 = vunpack.c.h.b16 %v3908
  %v4658 = vunpack.c.l.b16 %v3909
  %v4659 = vunpack.c.h.b16 %v3909
  %v4660 = vunpack.c.l.b16 %v3910
  %v4661 = vunpack.c.h.b16 %v3910
  %v4662 = vunpack.c.l.b16 %v3911
  %v4663 = vunpack.c.h.b16 %v3911
  %v4664 = vunpack.c.l.b16 %v3912
  %v4665 = vunpack.c.h.b16 %v3912
  %v4666 = vunpack.c.l.b16 %v3913
  %v4667 = vunpack.c.h.b16 %v3913
  %v4668 = vunpack.c.l.b16 %v3914
  %v4669 = vunpack.c.h.b16 %v3914
  %v4670 = vunpack.c.l.b16 %v3915
  %v4671 = vunpack.c.h.b16 %v3915
  %v4672 = vunpack.c.l.b16 %v3916
  %v4673 = vunpack.c.h.b16 %v3916
  %v4674 = vunpack.c.l.b16 %v3917
  %v4675 = vunpack.c.h.b16 %v3917
  %v4676 = vunpack.c.l.b16 %v3918
  %v4677 = vunpack.c.h.b16 %v3918
  %v4678 = vunpack.c.l.b16 %v3919
  %v4679 = vunpack.c.h.b16 %v3919
  %v4680 = vunpack.c.l.b16 %v3920
  %v4681 = vunpack.c.h.b16 %v3920
  %v4682 = vpack.c.b16 %v4558, %v4554
  %v4683 = vpack.c.b16 %v4559, %v4555
  %v4684 = vpack.c.b16 %v4560, %v4556
  %v4685 = vpack.c.b16 %v4561, %v4557
  %v4686 = vpack.c.b16 %v4566, %v4562
  %v4687 = vpack.c.b16 %v4567, %v4563
  %v4688 = vpack.c.b16 %v4568, %v4564
  %v4689 = vpack.c.b16 %v4569, %v4565
  %v4690 = vpack.c.b16 %v4574, %v4570
  %v4691 = vpack.c.b16 %v4575, %v4571
  %v4692 = vpack.c.b16 %v4576, %v4572
  %v4693 = vpack.c.b16 %v4577, %v4573
  %v4694 = vpack.c.b16 %v4582, %v4578
  %v4695 = vpack.c.b16 %v4583, %v4579
  %v4696 = vpack.c.b16 %v4584, %v4580
  %v4697 = vpack.c.b16 %v4585, %v4581
  %v4698 = vpack.c.b16 %v4590, %v4586
  %v4699 = vpack.c.b16 %v4591, %v4587
  %v4700 = vpack.c.b16 %v4592, %v4588
  %v4701 = vpack.c.b16 %v4593, %v4589
  %v4702 = vpack.c.b16 %v4598, %v4594
  %v4703 = vpack.c.b16 %v4599, %v4595
  %v4704 = vpack.c.b16 %v4600, %v4596
  %v4705 = vpack.c.b16 %v4601, %v4597
  %v4706 = vpack.c.b16 %v4606, %v4602
  %v4707 = vpack.c.b16 %v4607, %v4603
  %v4708 = vpack.c.b16 %v4608, %v4604
  %v4709 = vpack.c.b16 %v4609, %v4605
  %v4710 = vpack.c.b16 %v4614, %v4610
  %v4711 = vpack.c.b16 %v4615, %v4611
  %v4712 = vpack.c.b16 %v4616, %v4612
  %v4713 = vpack.c.b16 %v4617, %v4613
  %v4714 = vpack.c.b16 %v4622, %v4618
  %v4715 = vpack.c.b16 %v4623, %v4619
  %v4716 = vpack.c.b16 %v4624, %v4620
  %v4717 = vpack.c.b16 %v4625, %v4621
  %v4718 = vpack.c.b16 %v4630, %v4626
  %v4719 = vpack.c.b16 %v4631, %v4627
  %v4720 = vpack.c.b16 %v4632, %v4628
  %v4721 = vpack.c.b16 %v4633, %v4629
  %v4722 = vpack.c.b16 %v4638, %v4634
  %v4723 = vpack.c.b16 %v4639, %v4635
  %v4724 = vpack.c.b16 %v4640, %v4636
  %v4725 = vpack.c.b16 %v4641, %v4637
  %v4726 = vpack.c.b16 %v4646, %v4642
  %v4727 = vpack.c.b16 %v4647, %v4643
  %v4728 = vpack.c.b16 %v4648, %v4644
  %v4729 = vpack.c.b16 %v4649, %v4645
  %v4730 = vpack.c.b16 %v4654, %v4650
  %v4731 = vpack.c.b16 %v4655, %v4651
  %v4732 = vpack.c.b16 %v4656, %v4652
  %v4733 = vpack.c.b16 %v4657, %v4653
  %v4734 = vpack.c.b16 %v4662, %v4658
  %v4735 = vpack.c.b16 %v4663, %v4659
  %v4736 = vpack.c.b16 %v4664, %v4660
  %v4737 = vpack.c.b16 %v4665, %v4661
  %v4738 = vpack.c.b16 %v4670, %v4666
  %v4739 = vpack.c.b16 %v4671, %v4667
  %v4740 = vpack.c.b16 %v4672, %v4668
  %v4741 = vpack.c.b16 %v4673, %v4669
  %v4742 = vpack.c.b16 %v4678, %v4674
  %v4743 = vpack.c.b16 %v4679, %v4675
  %v4744 = vpack.c.b16 %v4680, %v4676
  %v4745 = vpack.c.b16 %v4681, %v4677
  %4810 = vmatpush.bf16.msra.mxu0 %v4710
  %4811 = vmatpush.bf16.msra.mxu0 %v4706
  %4812 = vmatpush.bf16.msra.mxu0 %v4702
  %4813 = vmatpush.bf16.msra.mxu0 %v4698
  %4814 = vmatpush.bf16.msra.mxu0 %v4694
  %4815 = vmatpush.bf16.msra.mxu0 %v4690
  %4816 = vmatpush.bf16.msra.mxu0 %v4686
  %4817 = vmatpush.bf16.msra.mxu0 %v4682
  %4818 = vmatmul.bf16.gmra.mxu0 %v4482
  %v4819 = vpop.f32.mrf.mxu0
  %v4820 = vadd.f32 %v4356, %v4819
  %v4821 = vpop.f32.mrf.mxu0
  %v4822 = vadd.f32 %v4358, %v4821
  %4823 = vmatmul.bf16.gmra.mxu0 %v4484
  %v4824 = vpop.f32.mrf.mxu0
  %v4825 = vadd.f32 %v4361, %v4824
  %v4826 = vpop.f32.mrf.mxu0
  %v4827 = vadd.f32 %v4363, %v4826
  %4828 = vdwg.mxu0
  %4829 = vmatpush.bf16.msra.mxu0 %v4742
  %4830 = vmatpush.bf16.msra.mxu0 %v4738
  %4831 = vmatpush.bf16.msra.mxu0 %v4734
  %4832 = vmatpush.bf16.msra.mxu0 %v4730
  %4833 = vmatpush.bf16.msra.mxu0 %v4726
  %4834 = vmatpush.bf16.msra.mxu0 %v4722
  %4835 = vmatpush.bf16.msra.mxu0 %v4718
  %4836 = vmatpush.bf16.msra.mxu0 %v4714
  %4837 = vmatmul.bf16.gmra.mxu0 %v4483
  %v4838 = vpop.f32.mrf.mxu0
  %v4839 = vadd.f32 %v4820, %v4838
  %v4840 = vpop.f32.mrf.mxu0
  %v4841 = vadd.f32 %v4822, %v4840
  %4842 = vmatmul.bf16.gmra.mxu0 %v4485
  %v4843 = vpop.f32.mrf.mxu0
  %v4844 = vadd.f32 %v4825, %v4843
  %v4845 = vpop.f32.mrf.mxu0
  %v4846 = vadd.f32 %v4827, %v4845
  %4847 = vdwg.mxu0
  %4848 = vmatpush.bf16.msra.mxu0 %v4711
  %4849 = vmatpush.bf16.msra.mxu0 %v4707
  %4850 = vmatpush.bf16.msra.mxu0 %v4703
  %4851 = vmatpush.bf16.msra.mxu0 %v4699
  %4852 = vmatpush.bf16.msra.mxu0 %v4695
  %4853 = vmatpush.bf16.msra.mxu0 %v4691
  %4854 = vmatpush.bf16.msra.mxu0 %v4687
  %4855 = vmatpush.bf16.msra.mxu0 %v4683
  %4856 = vmatmul.bf16.gmra.mxu0 %v4482
  %v4857 = vpop.f32.mrf.mxu0
  %v4858 = vadd.f32 %v4394, %v4857
  %v4859 = vpop.f32.mrf.mxu0
  %v4860 = vadd.f32 %v4396, %v4859
  %4861 = vmatmul.bf16.gmra.mxu0 %v4484
  %v4862 = vpop.f32.mrf.mxu0
  %v4863 = vadd.f32 %v4399, %v4862
  %v4864 = vpop.f32.mrf.mxu0
  %v4865 = vadd.f32 %v4401, %v4864
  %4866 = vdwg.mxu0
  %4867 = vmatpush.bf16.msra.mxu0 %v4743
  %4868 = vmatpush.bf16.msra.mxu0 %v4739
  %4869 = vmatpush.bf16.msra.mxu0 %v4735
  %4870 = vmatpush.bf16.msra.mxu0 %v4731
  %4871 = vmatpush.bf16.msra.mxu0 %v4727
  %4872 = vmatpush.bf16.msra.mxu0 %v4723
  %4873 = vmatpush.bf16.msra.mxu0 %v4719
  %4874 = vmatpush.bf16.msra.mxu0 %v4715
  %4875 = vmatmul.bf16.gmra.mxu0 %v4483
  %v4876 = vpop.f32.mrf.mxu0
  %v4877 = vadd.f32 %v4858, %v4876
  %v4878 = vpop.f32.mrf.mxu0
  %v4879 = vadd.f32 %v4860, %v4878
  %4880 = vmatmul.bf16.gmra.mxu0 %v4485
  %v4881 = vpop.f32.mrf.mxu0
  %v4882 = vadd.f32 %v4863, %v4881
  %v4883 = vpop.f32.mrf.mxu0
  %v4884 = vadd.f32 %v4865, %v4883
  %4885 = vdwg.mxu0
  %4886 = vmatpush.bf16.msra.mxu0 %v4712
  %4887 = vmatpush.bf16.msra.mxu0 %v4708
  %4888 = vmatpush.bf16.msra.mxu0 %v4704
  %4889 = vmatpush.bf16.msra.mxu0 %v4700
  %4890 = vmatpush.bf16.msra.mxu0 %v4696
  %4891 = vmatpush.bf16.msra.mxu0 %v4692
  %4892 = vmatpush.bf16.msra.mxu0 %v4688
  %4893 = vmatpush.bf16.msra.mxu0 %v4684
  %4894 = vmatmul.bf16.gmra.mxu0 %v4482
  %v4895 = vpop.f32.mrf.mxu0
  %v4896 = vadd.f32 %v4432, %v4895
  %v4897 = vpop.f32.mrf.mxu0
  %v4898 = vadd.f32 %v4434, %v4897
  %4899 = vmatmul.bf16.gmra.mxu0 %v4484
  %v4900 = vpop.f32.mrf.mxu0
  %v4901 = vadd.f32 %v4437, %v4900
  %v4902 = vpop.f32.mrf.mxu0
  %v4903 = vadd.f32 %v4439, %v4902
  %4904 = vdwg.mxu0
  %4905 = vmatpush.bf16.msra.mxu0 %v4744
  %4906 = vmatpush.bf16.msra.mxu0 %v4740
  %4907 = vmatpush.bf16.msra.mxu0 %v4736
  %4908 = vmatpush.bf16.msra.mxu0 %v4732
  %4909 = vmatpush.bf16.msra.mxu0 %v4728
  %4910 = vmatpush.bf16.msra.mxu0 %v4724
  %4911 = vmatpush.bf16.msra.mxu0 %v4720
  %4912 = vmatpush.bf16.msra.mxu0 %v4716
  %4913 = vmatmul.bf16.gmra.mxu0 %v4483
  %v4914 = vpop.f32.mrf.mxu0
  %v4915 = vadd.f32 %v4896, %v4914
  %v4916 = vpop.f32.mrf.mxu0
  %v4917 = vadd.f32 %v4898, %v4916
  %4918 = vmatmul.bf16.gmra.mxu0 %v4485
  %v4919 = vpop.f32.mrf.mxu0
  %v4920 = vadd.f32 %v4901, %v4919
  %v4921 = vpop.f32.mrf.mxu0
  %v4922 = vadd.f32 %v4903, %v4921
  %4923 = vdwg.mxu0
  %4924 = vmatpush.bf16.msra.mxu0 %v4713
  %4925 = vmatpush.bf16.msra.mxu0 %v4709
  %4926 = vmatpush.bf16.msra.mxu0 %v4705
  %4927 = vmatpush.bf16.msra.mxu0 %v4701
  %4928 = vmatpush.bf16.msra.mxu0 %v4697
  %4929 = vmatpush.bf16.msra.mxu0 %v4693
  %4930 = vmatpush.bf16.msra.mxu0 %v4689
  %4931 = vmatpush.bf16.msra.mxu0 %v4685
  %4932 = vmatmul.bf16.gmra.mxu0 %v4482
  %v4933 = vpop.f32.mrf.mxu0
  %v4934 = vadd.f32 %v4470, %v4933
  %v4935 = vpop.f32.mrf.mxu0
  %v4936 = vadd.f32 %v4472, %v4935
  %4937 = vmatmul.bf16.gmra.mxu0 %v4484
  %v4938 = vpop.f32.mrf.mxu0
  %v4939 = vadd.f32 %v4475, %v4938
  %v4940 = vpop.f32.mrf.mxu0
  %v4941 = vadd.f32 %v4477, %v4940
  %4942 = vdwg.mxu0
  %4943 = vmatpush.bf16.msra.mxu0 %v4745
  %4944 = vmatpush.bf16.msra.mxu0 %v4741
  %4945 = vmatpush.bf16.msra.mxu0 %v4737
  %4946 = vmatpush.bf16.msra.mxu0 %v4733
  %4947 = vmatpush.bf16.msra.mxu0 %v4729
  %4948 = vmatpush.bf16.msra.mxu0 %v4725
  %4949 = vmatpush.bf16.msra.mxu0 %v4721
  %4950 = vmatpush.bf16.msra.mxu0 %v4717
  %4951 = vmatmul.bf16.gmra.mxu0 %v4483
  %v4952 = vpop.f32.mrf.mxu0
  %v4953 = vadd.f32 %v4934, %v4952
  %v4954 = vpop.f32.mrf.mxu0
  %v4955 = vadd.f32 %v4936, %v4954
  %4956 = vmatmul.bf16.gmra.mxu0 %v4485
  %v4957 = vpop.f32.mrf.mxu0
  %v4958 = vadd.f32 %v4939, %v4957
  %v4959 = vpop.f32.mrf.mxu0
  %v4960 = vadd.f32 %v4941, %v4959
  %4961 = vdwg.mxu0
  %v4962 = vld [vmem:[#allocation2 + $0x10] sm:$0xff]
  %v4963 = vld [vmem:[#allocation2 + $0x18] sm:$0xff]
  %v4964 = vld [vmem:[#allocation2 + $0x20] sm:$0xff]
  %v4965 = vld [vmem:[#allocation2 + $0x28] sm:$0xff]
  %s4966 = scalar_lea.vmem %s2, 1024
  %v4967 = vld [vmem:[%s4966] sm:$0xff]
  %v4968 = vld [vmem:[%s4966 + $0x8] sm:$0xff]
  %v4969 = vld [vmem:[%s4966 + $0x10] sm:$0xff]
  %v4970 = vld [vmem:[%s4966 + $0x18] sm:$0xff]
  %v4971 = vld [vmem:[%s4966 + $0x20] sm:$0xff]
  %v4972 = vld [vmem:[%s4966 + $0x28] sm:$0xff]
  %v4973 = vld [vmem:[%s4966 + $0x30] sm:$0xff]
  %v4974 = vld [vmem:[%s4966 + $0x38] sm:$0xff]
  %v4975 = vld [vmem:[%s4966 + $0x40] sm:$0xff]
  %v4976 = vld [vmem:[%s4966 + $0x48] sm:$0xff]
  %v4977 = vld [vmem:[%s4966 + $0x50] sm:$0xff]
  %v4978 = vld [vmem:[%s4966 + $0x58] sm:$0xff]
  %v4979 = vld [vmem:[%s4966 + $0x60] sm:$0xff]
  %v4980 = vld [vmem:[%s4966 + $0x68] sm:$0xff]
  %v4981 = vld [vmem:[%s4966 + $0x70] sm:$0xff]
  %v4982 = vld [vmem:[%s4966 + $0x78] sm:$0xff]
  %v4983 = vld [vmem:[%s4966 + $0x80] sm:$0xff]
  %v4984 = vld [vmem:[%s4966 + $0x88] sm:$0xff]
  %v4985 = vld [vmem:[%s4966 + $0x90] sm:$0xff]
  %v4986 = vld [vmem:[%s4966 + $0x98] sm:$0xff]
  %v4987 = vld [vmem:[%s4966 + $0xa0] sm:$0xff]
  %v4988 = vld [vmem:[%s4966 + $0xa8] sm:$0xff]
  %v4989 = vld [vmem:[%s4966 + $0xb0] sm:$0xff]
  %v4990 = vld [vmem:[%s4966 + $0xb8] sm:$0xff]
  %v4991 = vld [vmem:[%s4966 + $0xc0] sm:$0xff]
  %v4992 = vld [vmem:[%s4966 + $0xc8] sm:$0xff]
  %v4993 = vld [vmem:[%s4966 + $0xd0] sm:$0xff]
  %v4994 = vld [vmem:[%s4966 + $0xd8] sm:$0xff]
  %v4995 = vld [vmem:[%s4966 + $0xe0] sm:$0xff]
  %v4996 = vld [vmem:[%s4966 + $0xe8] sm:$0xff]
  %v4997 = vld [vmem:[%s4966 + $0xf0] sm:$0xff]
  %v4998 = vld [vmem:[%s4966 + $0xf8] sm:$0xff]
  %v4999 = vld [vmem:[%s4966 + $0x100] sm:$0xff]
  %v5000 = vld [vmem:[%s4966 + $0x108] sm:$0xff]
  %v5001 = vld [vmem:[%s4966 + $0x110] sm:$0xff]
  %v5002 = vld [vmem:[%s4966 + $0x118] sm:$0xff]
  %v5003 = vld [vmem:[%s4966 + $0x120] sm:$0xff]
  %v5004 = vld [vmem:[%s4966 + $0x128] sm:$0xff]
  %v5005 = vld [vmem:[%s4966 + $0x130] sm:$0xff]
  %v5006 = vld [vmem:[%s4966 + $0x138] sm:$0xff]
  %v5007 = vld [vmem:[%s4966 + $0x140] sm:$0xff]
  %v5008 = vld [vmem:[%s4966 + $0x148] sm:$0xff]
  %v5009 = vld [vmem:[%s4966 + $0x150] sm:$0xff]
  %v5010 = vld [vmem:[%s4966 + $0x158] sm:$0xff]
  %v5011 = vld [vmem:[%s4966 + $0x160] sm:$0xff]
  %v5012 = vld [vmem:[%s4966 + $0x168] sm:$0xff]
  %v5013 = vld [vmem:[%s4966 + $0x170] sm:$0xff]
  %v5014 = vld [vmem:[%s4966 + $0x178] sm:$0xff]
  %v5015 = vld [vmem:[%s4966 + $0x180] sm:$0xff]
  %v5016 = vld [vmem:[%s4966 + $0x188] sm:$0xff]
  %v5017 = vld [vmem:[%s4966 + $0x190] sm:$0xff]
  %v5018 = vld [vmem:[%s4966 + $0x198] sm:$0xff]
  %v5019 = vld [vmem:[%s4966 + $0x1a0] sm:$0xff]
  %v5020 = vld [vmem:[%s4966 + $0x1a8] sm:$0xff]
  %v5021 = vld [vmem:[%s4966 + $0x1b0] sm:$0xff]
  %v5022 = vld [vmem:[%s4966 + $0x1b8] sm:$0xff]
  %v5023 = vld [vmem:[%s4966 + $0x1c0] sm:$0xff]
  %v5024 = vld [vmem:[%s4966 + $0x1c8] sm:$0xff]
  %v5025 = vld [vmem:[%s4966 + $0x1d0] sm:$0xff]
  %v5026 = vld [vmem:[%s4966 + $0x1d8] sm:$0xff]
  %v5027 = vld [vmem:[%s4966 + $0x1e0] sm:$0xff]
  %v5028 = vld [vmem:[%s4966 + $0x1e8] sm:$0xff]
  %v5029 = vld [vmem:[%s4966 + $0x1f0] sm:$0xff]
  %v5030 = vld [vmem:[%s4966 + $0x1f8] sm:$0xff]
  %v5035 = vunpack.c.l.b16 %v4962
  %v5036 = vunpack.c.h.b16 %v4962
  %v5037 = vunpack.c.l.b16 %v4963
  %v5038 = vunpack.c.h.b16 %v4963
  %v5039 = vunpack.c.l.b16 %v4964
  %v5040 = vunpack.c.h.b16 %v4964
  %v5041 = vunpack.c.l.b16 %v4965
  %v5042 = vunpack.c.h.b16 %v4965
  %v5043 = vpack.c.b16 %v5037, %v5035
  %v5044 = vpack.c.b16 %v5038, %v5036
  %v5045 = vpack.c.b16 %v5041, %v5039
  %v5046 = vpack.c.b16 %v5042, %v5040
  %v5115 = vunpack.c.l.b16 %v4967
  %v5116 = vunpack.c.h.b16 %v4967
  %v5117 = vunpack.c.l.b16 %v4968
  %v5118 = vunpack.c.h.b16 %v4968
  %v5119 = vunpack.c.l.b16 %v4969
  %v5120 = vunpack.c.h.b16 %v4969
  %v5121 = vunpack.c.l.b16 %v4970
  %v5122 = vunpack.c.h.b16 %v4970
  %v5123 = vunpack.c.l.b16 %v4971
  %v5124 = vunpack.c.h.b16 %v4971
  %v5125 = vunpack.c.l.b16 %v4972
  %v5126 = vunpack.c.h.b16 %v4972
  %v5127 = vunpack.c.l.b16 %v4973
  %v5128 = vunpack.c.h.b16 %v4973
  %v5129 = vunpack.c.l.b16 %v4974
  %v5130 = vunpack.c.h.b16 %v4974
  %v5131 = vunpack.c.l.b16 %v4975
  %v5132 = vunpack.c.h.b16 %v4975
  %v5133 = vunpack.c.l.b16 %v4976
  %v5134 = vunpack.c.h.b16 %v4976
  %v5135 = vunpack.c.l.b16 %v4977
  %v5136 = vunpack.c.h.b16 %v4977
  %v5137 = vunpack.c.l.b16 %v4978
  %v5138 = vunpack.c.h.b16 %v4978
  %v5139 = vunpack.c.l.b16 %v4979
  %v5140 = vunpack.c.h.b16 %v4979
  %v5141 = vunpack.c.l.b16 %v4980
  %v5142 = vunpack.c.h.b16 %v4980
  %v5143 = vunpack.c.l.b16 %v4981
  %v5144 = vunpack.c.h.b16 %v4981
  %v5145 = vunpack.c.l.b16 %v4982
  %v5146 = vunpack.c.h.b16 %v4982
  %v5147 = vunpack.c.l.b16 %v4983
  %v5148 = vunpack.c.h.b16 %v4983
  %v5149 = vunpack.c.l.b16 %v4984
  %v5150 = vunpack.c.h.b16 %v4984
  %v5151 = vunpack.c.l.b16 %v4985
  %v5152 = vunpack.c.h.b16 %v4985
  %v5153 = vunpack.c.l.b16 %v4986
  %v5154 = vunpack.c.h.b16 %v4986
  %v5155 = vunpack.c.l.b16 %v4987
  %v5156 = vunpack.c.h.b16 %v4987
  %v5157 = vunpack.c.l.b16 %v4988
  %v5158 = vunpack.c.h.b16 %v4988
  %v5159 = vunpack.c.l.b16 %v4989
  %v5160 = vunpack.c.h.b16 %v4989
  %v5161 = vunpack.c.l.b16 %v4990
  %v5162 = vunpack.c.h.b16 %v4990
  %v5163 = vunpack.c.l.b16 %v4991
  %v5164 = vunpack.c.h.b16 %v4991
  %v5165 = vunpack.c.l.b16 %v4992
  %v5166 = vunpack.c.h.b16 %v4992
  %v5167 = vunpack.c.l.b16 %v4993
  %v5168 = vunpack.c.h.b16 %v4993
  %v5169 = vunpack.c.l.b16 %v4994
  %v5170 = vunpack.c.h.b16 %v4994
  %v5171 = vunpack.c.l.b16 %v4995
  %v5172 = vunpack.c.h.b16 %v4995
  %v5173 = vunpack.c.l.b16 %v4996
  %v5174 = vunpack.c.h.b16 %v4996
  %v5175 = vunpack.c.l.b16 %v4997
  %v5176 = vunpack.c.h.b16 %v4997
  %v5177 = vunpack.c.l.b16 %v4998
  %v5178 = vunpack.c.h.b16 %v4998
  %v5179 = vunpack.c.l.b16 %v4999
  %v5180 = vunpack.c.h.b16 %v4999
  %v5181 = vunpack.c.l.b16 %v5000
  %v5182 = vunpack.c.h.b16 %v5000
  %v5183 = vunpack.c.l.b16 %v5001
  %v5184 = vunpack.c.h.b16 %v5001
  %v5185 = vunpack.c.l.b16 %v5002
  %v5186 = vunpack.c.h.b16 %v5002
  %v5187 = vunpack.c.l.b16 %v5003
  %v5188 = vunpack.c.h.b16 %v5003
  %v5189 = vunpack.c.l.b16 %v5004
  %v5190 = vunpack.c.h.b16 %v5004
  %v5191 = vunpack.c.l.b16 %v5005
  %v5192 = vunpack.c.h.b16 %v5005
  %v5193 = vunpack.c.l.b16 %v5006
  %v5194 = vunpack.c.h.b16 %v5006
  %v5195 = vunpack.c.l.b16 %v5007
  %v5196 = vunpack.c.h.b16 %v5007
  %v5197 = vunpack.c.l.b16 %v5008
  %v5198 = vunpack.c.h.b16 %v5008
  %v5199 = vunpack.c.l.b16 %v5009
  %v5200 = vunpack.c.h.b16 %v5009
  %v5201 = vunpack.c.l.b16 %v5010
  %v5202 = vunpack.c.h.b16 %v5010
  %v5203 = vunpack.c.l.b16 %v5011
  %v5204 = vunpack.c.h.b16 %v5011
  %v5205 = vunpack.c.l.b16 %v5012
  %v5206 = vunpack.c.h.b16 %v5012
  %v5207 = vunpack.c.l.b16 %v5013
  %v5208 = vunpack.c.h.b16 %v5013
  %v5209 = vunpack.c.l.b16 %v5014
  %v5210 = vunpack.c.h.b16 %v5014
  %v5211 = vunpack.c.l.b16 %v5015
  %v5212 = vunpack.c.h.b16 %v5015
  %v5213 = vunpack.c.l.b16 %v5016
  %v5214 = vunpack.c.h.b16 %v5016
  %v5215 = vunpack.c.l.b16 %v5017
  %v5216 = vunpack.c.h.b16 %v5017
  %v5217 = vunpack.c.l.b16 %v5018
  %v5218 = vunpack.c.h.b16 %v5018
  %v5219 = vunpack.c.l.b16 %v5019
  %v5220 = vunpack.c.h.b16 %v5019
  %v5221 = vunpack.c.l.b16 %v5020
  %v5222 = vunpack.c.h.b16 %v5020
  %v5223 = vunpack.c.l.b16 %v5021
  %v5224 = vunpack.c.h.b16 %v5021
  %v5225 = vunpack.c.l.b16 %v5022
  %v5226 = vunpack.c.h.b16 %v5022
  %v5227 = vunpack.c.l.b16 %v5023
  %v5228 = vunpack.c.h.b16 %v5023
  %v5229 = vunpack.c.l.b16 %v5024
  %v5230 = vunpack.c.h.b16 %v5024
  %v5231 = vunpack.c.l.b16 %v5025
  %v5232 = vunpack.c.h.b16 %v5025
  %v5233 = vunpack.c.l.b16 %v5026
  %v5234 = vunpack.c.h.b16 %v5026
  %v5235 = vunpack.c.l.b16 %v5027
  %v5236 = vunpack.c.h.b16 %v5027
  %v5237 = vunpack.c.l.b16 %v5028
  %v5238 = vunpack.c.h.b16 %v5028
  %v5239 = vunpack.c.l.b16 %v5029
  %v5240 = vunpack.c.h.b16 %v5029
  %v5241 = vunpack.c.l.b16 %v5030
  %v5242 = vunpack.c.h.b16 %v5030
  %v5243 = vpack.c.b16 %v5119, %v5115
  %v5244 = vpack.c.b16 %v5120, %v5116
  %v5245 = vpack.c.b16 %v5121, %v5117
  %v5246 = vpack.c.b16 %v5122, %v5118
  %v5247 = vpack.c.b16 %v5127, %v5123
  %v5248 = vpack.c.b16 %v5128, %v5124
  %v5249 = vpack.c.b16 %v5129, %v5125
  %v5250 = vpack.c.b16 %v5130, %v5126
  %v5251 = vpack.c.b16 %v5135, %v5131
  %v5252 = vpack.c.b16 %v5136, %v5132
  %v5253 = vpack.c.b16 %v5137, %v5133
  %v5254 = vpack.c.b16 %v5138, %v5134
  %v5255 = vpack.c.b16 %v5143, %v5139
  %v5256 = vpack.c.b16 %v5144, %v5140
  %v5257 = vpack.c.b16 %v5145, %v5141
  %v5258 = vpack.c.b16 %v5146, %v5142
  %v5259 = vpack.c.b16 %v5151, %v5147
  %v5260 = vpack.c.b16 %v5152, %v5148
  %v5261 = vpack.c.b16 %v5153, %v5149
  %v5262 = vpack.c.b16 %v5154, %v5150
  %v5263 = vpack.c.b16 %v5159, %v5155
  %v5264 = vpack.c.b16 %v5160, %v5156
  %v5265 = vpack.c.b16 %v5161, %v5157
  %v5266 = vpack.c.b16 %v5162, %v5158
  %v5267 = vpack.c.b16 %v5167, %v5163
  %v5268 = vpack.c.b16 %v5168, %v5164
  %v5269 = vpack.c.b16 %v5169, %v5165
  %v5270 = vpack.c.b16 %v5170, %v5166
  %v5271 = vpack.c.b16 %v5175, %v5171
  %v5272 = vpack.c.b16 %v5176, %v5172
  %v5273 = vpack.c.b16 %v5177, %v5173
  %v5274 = vpack.c.b16 %v5178, %v5174
  %v5275 = vpack.c.b16 %v5183, %v5179
  %v5276 = vpack.c.b16 %v5184, %v5180
  %v5277 = vpack.c.b16 %v5185, %v5181
  %v5278 = vpack.c.b16 %v5186, %v5182
  %v5279 = vpack.c.b16 %v5191, %v5187
  %v5280 = vpack.c.b16 %v5192, %v5188
  %v5281 = vpack.c.b16 %v5193, %v5189
  %v5282 = vpack.c.b16 %v5194, %v5190
  %v5283 = vpack.c.b16 %v5199, %v5195
  %v5284 = vpack.c.b16 %v5200, %v5196
  %v5285 = vpack.c.b16 %v5201, %v5197
  %v5286 = vpack.c.b16 %v5202, %v5198
  %v5287 = vpack.c.b16 %v5207, %v5203
  %v5288 = vpack.c.b16 %v5208, %v5204
  %v5289 = vpack.c.b16 %v5209, %v5205
  %v5290 = vpack.c.b16 %v5210, %v5206
  %v5291 = vpack.c.b16 %v5215, %v5211
  %v5292 = vpack.c.b16 %v5216, %v5212
  %v5293 = vpack.c.b16 %v5217, %v5213
  %v5294 = vpack.c.b16 %v5218, %v5214
  %v5295 = vpack.c.b16 %v5223, %v5219
  %v5296 = vpack.c.b16 %v5224, %v5220
  %v5297 = vpack.c.b16 %v5225, %v5221
  %v5298 = vpack.c.b16 %v5226, %v5222
  %v5299 = vpack.c.b16 %v5231, %v5227
  %v5300 = vpack.c.b16 %v5232, %v5228
  %v5301 = vpack.c.b16 %v5233, %v5229
  %v5302 = vpack.c.b16 %v5234, %v5230
  %v5303 = vpack.c.b16 %v5239, %v5235
  %v5304 = vpack.c.b16 %v5240, %v5236
  %v5305 = vpack.c.b16 %v5241, %v5237
  %v5306 = vpack.c.b16 %v5242, %v5238
  %5371 = vmatpush.bf16.msra.mxu0 %v5271
  %5372 = vmatpush.bf16.msra.mxu0 %v5267
  %5373 = vmatpush.bf16.msra.mxu0 %v5263
  %5374 = vmatpush.bf16.msra.mxu0 %v5259
  %5375 = vmatpush.bf16.msra.mxu0 %v5255
  %5376 = vmatpush.bf16.msra.mxu0 %v5251
  %5377 = vmatpush.bf16.msra.mxu0 %v5247
  %5378 = vmatpush.bf16.msra.mxu0 %v5243
  %5379 = vmatmul.bf16.gmra.mxu0 %v5043
  %v5380 = vpop.f32.mrf.mxu0
  %v5381 = vadd.f32 0.0, %v5380
  %v5382 = vpop.f32.mrf.mxu0
  %v5383 = vadd.f32 0.0, %v5382
  %5384 = vmatmul.bf16.gmra.mxu0 %v5045
  %v5385 = vpop.f32.mrf.mxu0
  %v5386 = vadd.f32 0.0, %v5385
  %v5387 = vpop.f32.mrf.mxu0
  %v5388 = vadd.f32 0.0, %v5387
  %5389 = vdwg.mxu0
  %5390 = vmatpush.bf16.msra.mxu0 %v5303
  %5391 = vmatpush.bf16.msra.mxu0 %v5299
  %5392 = vmatpush.bf16.msra.mxu0 %v5295
  %5393 = vmatpush.bf16.msra.mxu0 %v5291
  %5394 = vmatpush.bf16.msra.mxu0 %v5287
  %5395 = vmatpush.bf16.msra.mxu0 %v5283
  %5396 = vmatpush.bf16.msra.mxu0 %v5279
  %5397 = vmatpush.bf16.msra.mxu0 %v5275
  %5398 = vmatmul.bf16.gmra.mxu0 %v5044
  %v5399 = vpop.f32.mrf.mxu0
  %v5400 = vadd.f32 %v5381, %v5399
  %v5401 = vpop.f32.mrf.mxu0
  %v5402 = vadd.f32 %v5383, %v5401
  %5403 = vmatmul.bf16.gmra.mxu0 %v5046
  %v5404 = vpop.f32.mrf.mxu0
  %v5405 = vadd.f32 %v5386, %v5404
  %v5406 = vpop.f32.mrf.mxu0
  %v5407 = vadd.f32 %v5388, %v5406
  %5408 = vdwg.mxu0
  %5409 = vmatpush.bf16.msra.mxu0 %v5272
  %5410 = vmatpush.bf16.msra.mxu0 %v5268
  %5411 = vmatpush.bf16.msra.mxu0 %v5264
  %5412 = vmatpush.bf16.msra.mxu0 %v5260
  %5413 = vmatpush.bf16.msra.mxu0 %v5256
  %5414 = vmatpush.bf16.msra.mxu0 %v5252
  %5415 = vmatpush.bf16.msra.mxu0 %v5248
  %5416 = vmatpush.bf16.msra.mxu0 %v5244
  %5417 = vmatmul.bf16.gmra.mxu0 %v5043
  %v5418 = vpop.f32.mrf.mxu0
  %v5419 = vadd.f32 0.0, %v5418
  %v5420 = vpop.f32.mrf.mxu0
  %v5421 = vadd.f32 0.0, %v5420
  %5422 = vmatmul.bf16.gmra.mxu0 %v5045
  %v5423 = vpop.f32.mrf.mxu0
  %v5424 = vadd.f32 0.0, %v5423
  %v5425 = vpop.f32.mrf.mxu0
  %v5426 = vadd.f32 0.0, %v5425
  %5427 = vdwg.mxu0
  %5428 = vmatpush.bf16.msra.mxu0 %v5304
  %5429 = vmatpush.bf16.msra.mxu0 %v5300
  %5430 = vmatpush.bf16.msra.mxu0 %v5296
  %5431 = vmatpush.bf16.msra.mxu0 %v5292
  %5432 = vmatpush.bf16.msra.mxu0 %v5288
  %5433 = vmatpush.bf16.msra.mxu0 %v5284
  %5434 = vmatpush.bf16.msra.mxu0 %v5280
  %5435 = vmatpush.bf16.msra.mxu0 %v5276
  %5436 = vmatmul.bf16.gmra.mxu0 %v5044
  %v5437 = vpop.f32.mrf.mxu0
  %v5438 = vadd.f32 %v5419, %v5437
  %v5439 = vpop.f32.mrf.mxu0
  %v5440 = vadd.f32 %v5421, %v5439
  %5441 = vmatmul.bf16.gmra.mxu0 %v5046
  %v5442 = vpop.f32.mrf.mxu0
  %v5443 = vadd.f32 %v5424, %v5442
  %v5444 = vpop.f32.mrf.mxu0
  %v5445 = vadd.f32 %v5426, %v5444
  %5446 = vdwg.mxu0
  %5447 = vmatpush.bf16.msra.mxu0 %v5273
  %5448 = vmatpush.bf16.msra.mxu0 %v5269
  %5449 = vmatpush.bf16.msra.mxu0 %v5265
  %5450 = vmatpush.bf16.msra.mxu0 %v5261
  %5451 = vmatpush.bf16.msra.mxu0 %v5257
  %5452 = vmatpush.bf16.msra.mxu0 %v5253
  %5453 = vmatpush.bf16.msra.mxu0 %v5249
  %5454 = vmatpush.bf16.msra.mxu0 %v5245
  %5455 = vmatmul.bf16.gmra.mxu0 %v5043
  %v5456 = vpop.f32.mrf.mxu0
  %v5457 = vadd.f32 0.0, %v5456
  %v5458 = vpop.f32.mrf.mxu0
  %v5459 = vadd.f32 0.0, %v5458
  %5460 = vmatmul.bf16.gmra.mxu0 %v5045
  %v5461 = vpop.f32.mrf.mxu0
  %v5462 = vadd.f32 0.0, %v5461
  %v5463 = vpop.f32.mrf.mxu0
  %v5464 = vadd.f32 0.0, %v5463
  %5465 = vdwg.mxu0
  %5466 = vmatpush.bf16.msra.mxu0 %v5305
  %5467 = vmatpush.bf16.msra.mxu0 %v5301
  %5468 = vmatpush.bf16.msra.mxu0 %v5297
  %5469 = vmatpush.bf16.msra.mxu0 %v5293
  %5470 = vmatpush.bf16.msra.mxu0 %v5289
  %5471 = vmatpush.bf16.msra.mxu0 %v5285
  %5472 = vmatpush.bf16.msra.mxu0 %v5281
  %5473 = vmatpush.bf16.msra.mxu0 %v5277
  %5474 = vmatmul.bf16.gmra.mxu0 %v5044
  %v5475 = vpop.f32.mrf.mxu0
  %v5476 = vadd.f32 %v5457, %v5475
  %v5477 = vpop.f32.mrf.mxu0
  %v5478 = vadd.f32 %v5459, %v5477
  %5479 = vmatmul.bf16.gmra.mxu0 %v5046
  %v5480 = vpop.f32.mrf.mxu0
  %v5481 = vadd.f32 %v5462, %v5480
  %v5482 = vpop.f32.mrf.mxu0
  %v5483 = vadd.f32 %v5464, %v5482
  %5484 = vdwg.mxu0
  %5485 = vmatpush.bf16.msra.mxu0 %v5274
  %5486 = vmatpush.bf16.msra.mxu0 %v5270
  %5487 = vmatpush.bf16.msra.mxu0 %v5266
  %5488 = vmatpush.bf16.msra.mxu0 %v5262
  %5489 = vmatpush.bf16.msra.mxu0 %v5258
  %5490 = vmatpush.bf16.msra.mxu0 %v5254
  %5491 = vmatpush.bf16.msra.mxu0 %v5250
  %5492 = vmatpush.bf16.msra.mxu0 %v5246
  %5493 = vmatmul.bf16.gmra.mxu0 %v5043
  %v5494 = vpop.f32.mrf.mxu0
  %v5495 = vadd.f32 0.0, %v5494
  %v5496 = vpop.f32.mrf.mxu0
  %v5497 = vadd.f32 0.0, %v5496
  %5498 = vmatmul.bf16.gmra.mxu0 %v5045
  %v5499 = vpop.f32.mrf.mxu0
  %v5500 = vadd.f32 0.0, %v5499
  %v5501 = vpop.f32.mrf.mxu0
  %v5502 = vadd.f32 0.0, %v5501
  %5503 = vdwg.mxu0
  %5504 = vmatpush.bf16.msra.mxu0 %v5306
  %5505 = vmatpush.bf16.msra.mxu0 %v5302
  %5506 = vmatpush.bf16.msra.mxu0 %v5298
  %5507 = vmatpush.bf16.msra.mxu0 %v5294
  %5508 = vmatpush.bf16.msra.mxu0 %v5290
  %5509 = vmatpush.bf16.msra.mxu0 %v5286
  %5510 = vmatpush.bf16.msra.mxu0 %v5282
  %5511 = vmatpush.bf16.msra.mxu0 %v5278
  %5512 = vmatmul.bf16.gmra.mxu0 %v5044
  %v5513 = vpop.f32.mrf.mxu0
  %v5514 = vadd.f32 %v5495, %v5513
  %v5515 = vpop.f32.mrf.mxu0
  %v5516 = vadd.f32 %v5497, %v5515
  %5517 = vmatmul.bf16.gmra.mxu0 %v5046
  %v5518 = vpop.f32.mrf.mxu0
  %v5519 = vadd.f32 %v5500, %v5518
  %v5520 = vpop.f32.mrf.mxu0
  %v5521 = vadd.f32 %v5502, %v5520
  %5522 = vdwg.mxu0
  %v5523 = vadd.f32 %v4839, %v5400
  %v5524 = vadd.f32 %v4877, %v5438
  %v5525 = vadd.f32 %v4915, %v5476
  %v5526 = vadd.f32 %v4953, %v5514
  %v5527 = vadd.f32 %v4841, %v5402
  %v5528 = vadd.f32 %v4879, %v5440
  %v5529 = vadd.f32 %v4917, %v5478
  %v5530 = vadd.f32 %v4955, %v5516
  %v5531 = vadd.f32 %v4844, %v5405
  %v5532 = vadd.f32 %v4882, %v5443
  %v5533 = vadd.f32 %v4920, %v5481
  %v5534 = vadd.f32 %v4958, %v5519
  %v5535 = vadd.f32 %v4846, %v5407
  %v5536 = vadd.f32 %v4884, %v5445
  %v5537 = vadd.f32 %v4922, %v5483
  %v5538 = vadd.f32 %v4960, %v5521
  %v5539 = vmax.f32 %v5523, 0.0
  %v5540 = vmax.f32 %v5524, 0.0
  %v5541 = vmax.f32 %v5525, 0.0
  %v5542 = vmax.f32 %v5526, 0.0
  %v5543 = vmax.f32 %v5527, 0.0
  %v5544 = vmax.f32 %v5528, 0.0
  %v5545 = vmax.f32 %v5529, 0.0
  %v5546 = vmax.f32 %v5530, 0.0
  %v5547 = vmax.f32 %v5531, 0.0
  %v5548 = vmax.f32 %v5532, 0.0
  %v5549 = vmax.f32 %v5533, 0.0
  %v5550 = vmax.f32 %v5534, 0.0
  %v5551 = vmax.f32 %v5535, 0.0
  %v5552 = vmax.f32 %v5536, 0.0
  %v5553 = vmax.f32 %v5537, 0.0
  %v5554 = vmax.f32 %v5538, 0.0
  %v5555 = vmax.f32 %v5539, %v5540
  %v5556 = vmax.f32 %v5543, %v5544
  %v5557 = vmax.f32 %v5547, %v5548
  %v5558 = vmax.f32 %v5551, %v5552
  %v5559 = vmax.f32 %v5541, %v5542
  %v5560 = vmax.f32 %v5545, %v5546
  %v5561 = vmax.f32 %v5549, %v5550
  %v5562 = vmax.f32 %v5553, %v5554
  %v5563 = vmax.f32 %v5555, %v5559
  %v5564 = vmax.f32 %v5556, %v5560
  %v5565 = vmax.f32 %v5557, %v5561
  %v5566 = vmax.f32 %v5558, %v5562
  %v5567 = vmax.f32 %v5563, %v5564
  %v5568 = vpack.c.bf16 %v5567, %v5567
  %v5569 = vld [vmem:[%s3] sm:$0xf]
  %v5570 = vld [vmem:[%s3 + $0x4] sm:$0xf]
  %v5571 = vld [vmem:[%s3 + $0x8] sm:$0xf]
  %v5572 = vld [vmem:[%s3 + $0xc] sm:$0xf]
  %v5573 = vld [vmem:[%s3 + $0x10] sm:$0xf]
  %v5574 = vld [vmem:[%s3 + $0x14] sm:$0xf]
  %v5575 = vld [vmem:[%s3 + $0x18] sm:$0xf]
  %v5576 = vld [vmem:[%s3 + $0x1c] sm:$0xf]
  %v5577 = vld [vmem:[%s3 + $0x20] sm:$0xf]
  %v5578 = vld [vmem:[%s3 + $0x24] sm:$0xf]
  %v5579 = vld [vmem:[%s3 + $0x28] sm:$0xf]
  %v5580 = vld [vmem:[%s3 + $0x2c] sm:$0xf]
  %v5581 = vld [vmem:[%s3 + $0x30] sm:$0xf]
  %v5582 = vld [vmem:[%s3 + $0x34] sm:$0xf]
  %v5583 = vld [vmem:[%s3 + $0x38] sm:$0xf]
  %v5584 = vld [vmem:[%s3 + $0x3c] sm:$0xf]
  %v5585 = vmax.f32 %v5565, %v5566
  %v5586 = vpack.c.bf16 %v5585, %v5585
  %v5587 = vld [vmem:[%s3 + $0x40] sm:$0xf]
  %v5588 = vld [vmem:[%s3 + $0x44] sm:$0xf]
  %v5589 = vld [vmem:[%s3 + $0x48] sm:$0xf]
  %v5590 = vld [vmem:[%s3 + $0x4c] sm:$0xf]
  %v5591 = vld [vmem:[%s3 + $0x50] sm:$0xf]
  %v5592 = vld [vmem:[%s3 + $0x54] sm:$0xf]
  %v5593 = vld [vmem:[%s3 + $0x58] sm:$0xf]
  %v5594 = vld [vmem:[%s3 + $0x5c] sm:$0xf]
  %v5595 = vld [vmem:[%s3 + $0x60] sm:$0xf]
  %v5596 = vld [vmem:[%s3 + $0x64] sm:$0xf]
  %v5597 = vld [vmem:[%s3 + $0x68] sm:$0xf]
  %v5598 = vld [vmem:[%s3 + $0x6c] sm:$0xf]
  %v5599 = vld [vmem:[%s3 + $0x70] sm:$0xf]
  %v5600 = vld [vmem:[%s3 + $0x74] sm:$0xf]
  %v5601 = vld [vmem:[%s3 + $0x78] sm:$0xf]
  %v5602 = vld [vmem:[%s3 + $0x7c] sm:$0xf]
  %v5619 = vunpack.c.l.b16 %v5587
  %v5620 = vunpack.c.l.b16 %v5588
  %v5621 = vunpack.c.l.b16 %v5589
  %v5622 = vunpack.c.l.b16 %v5590
  %v5623 = vunpack.c.l.b16 %v5591
  %v5624 = vunpack.c.l.b16 %v5592
  %v5625 = vunpack.c.l.b16 %v5593
  %v5626 = vunpack.c.l.b16 %v5594
  %v5627 = vunpack.c.l.b16 %v5595
  %v5628 = vunpack.c.l.b16 %v5596
  %v5629 = vunpack.c.l.b16 %v5597
  %v5630 = vunpack.c.l.b16 %v5598
  %v5631 = vunpack.c.l.b16 %v5599
  %v5632 = vunpack.c.l.b16 %v5600
  %v5633 = vunpack.c.l.b16 %v5601
  %v5634 = vunpack.c.l.b16 %v5602
  %v5635 = vpack.c.b16 %v5620, %v5619
  %v5636 = vpack.c.b16 %v5622, %v5621
  %v5637 = vpack.c.b16 %v5624, %v5623
  %v5638 = vpack.c.b16 %v5626, %v5625
  %v5639 = vpack.c.b16 %v5628, %v5627
  %v5640 = vpack.c.b16 %v5630, %v5629
  %v5641 = vpack.c.b16 %v5632, %v5631
  %v5642 = vpack.c.b16 %v5634, %v5633
  %5651 = vmatpush.bf16.msra.mxu0 %v5642
  %5652 = vmatpush.bf16.msra.mxu0 %v5641
  %5653 = vmatpush.bf16.msra.mxu0 %v5640
  %5654 = vmatpush.bf16.msra.mxu0 %v5639
  %5655 = vmatpush.bf16.msra.mxu0 %v5638
  %5656 = vmatpush.bf16.msra.mxu0 %v5637
  %5657 = vmatpush.bf16.msra.mxu0 %v5636
  %5658 = vmatpush.bf16.msra.mxu0 %v5635
  %5659 = vmatmul.bf16.gmra.mxu0 %v5586
  %v5660 = vpop.f32.mrf.mxu0
  %v5661 = vadd.f32 0.0, %v5660
  %v5662 = vpop.f32.mrf.mxu0
  %5663 = vdwg.mxu0
  %v5680 = vunpack.c.l.b16 %v5569
  %v5681 = vunpack.c.l.b16 %v5570
  %v5682 = vunpack.c.l.b16 %v5571
  %v5683 = vunpack.c.l.b16 %v5572
  %v5684 = vunpack.c.l.b16 %v5573
  %v5685 = vunpack.c.l.b16 %v5574
  %v5686 = vunpack.c.l.b16 %v5575
  %v5687 = vunpack.c.l.b16 %v5576
  %v5688 = vunpack.c.l.b16 %v5577
  %v5689 = vunpack.c.l.b16 %v5578
  %v5690 = vunpack.c.l.b16 %v5579
  %v5691 = vunpack.c.l.b16 %v5580
  %v5692 = vunpack.c.l.b16 %v5581
  %v5693 = vunpack.c.l.b16 %v5582
  %v5694 = vunpack.c.l.b16 %v5583
  %v5695 = vunpack.c.l.b16 %v5584
  %v5696 = vpack.c.b16 %v5681, %v5680
  %v5697 = vpack.c.b16 %v5683, %v5682
  %v5698 = vpack.c.b16 %v5685, %v5684
  %v5699 = vpack.c.b16 %v5687, %v5686
  %v5700 = vpack.c.b16 %v5689, %v5688
  %v5701 = vpack.c.b16 %v5691, %v5690
  %v5702 = vpack.c.b16 %v5693, %v5692
  %v5703 = vpack.c.b16 %v5695, %v5694
  %5712 = vmatpush.bf16.msra.mxu0 %v5703
  %5713 = vmatpush.bf16.msra.mxu0 %v5702
  %5714 = vmatpush.bf16.msra.mxu0 %v5701
  %5715 = vmatpush.bf16.msra.mxu0 %v5700
  %5716 = vmatpush.bf16.msra.mxu0 %v5699
  %5717 = vmatpush.bf16.msra.mxu0 %v5698
  %5718 = vmatpush.bf16.msra.mxu0 %v5697
  %5719 = vmatpush.bf16.msra.mxu0 %v5696
  %5720 = vmatmul.bf16.gmra.mxu0 %v5568
  %v5721 = vpop.f32.mrf.mxu0
  %v5722 = vadd.f32 %v5661, %v5721
  %v5723 = vpop.f32.mrf.mxu0
  %5724 = vdwg.mxu0
  %vm5725 = vcmask 15360
  %5726 = vst.msk [vmem:[%s4] sm:$0xff] %vm5725, %v5722
  // Predicated region
  $region18: #{_forward_impl.1} parent=0 // pred_check
    _
  $region19: #{_forward_impl.1} parent=0 // pred_check_branch
    %5728 = sbr.rel (0) target = $region21
  $region20: #{_forward_impl.1} parent=0 // pred_region
    _
  $region21: #{_forward_impl.1} parent=0 // pred_fallthru
    _
  // Predicated region
  $region22: #{_forward_impl.1} parent=0 // pred_check
    _
  $region23: #{_forward_impl.1} parent=0 // pred_check_branch
    %5730 = sbr.rel (0) target = $region25
  $region24: #{_forward_impl.1} parent=0 // pred_region
    _
  $region25: #{_forward_impl.1} parent=0 // pred_fallthru
    _

// kernel: _forward_impl.1
$region0: #{_forward_impl.1}
  #allocation0 [shape = 'u32[]', space=smem, size = 0x4, offset = 0x4, fixed_abs, tag = 'smem constant byte address 0x4 - core index']
  #allocation1 [shape = 'u32[72,128]{1,0:T(1,128)}', space=vmem, size = 0x9000, scoped, tag = 'internal scratch']
  #allocation2 [shape = 'bf16[48,256]{1,0:T(8,128)(2,1)}', space=vmem, size = 0x6000, scoped, tag = 'scratch operand']
  %s0 = inlined_call_operand.vmem [shape: bf16[1,64,720], index: 0, kind: input, shape index: {}]
  %s1 = inlined_call_operand.vmem [shape: bf16[720,1024], index: 1, kind: input, shape index: {}]
  %s2 = inlined_call_operand.vmem [shape: bf16[3,256,512], index: 2, kind: input, shape index: {}]
  %s3 = inlined_call_operand.vmem [shape: bf16[256,2], index: 3, kind: input, shape index: {}]
  %s4 = inlined_call_operand.vmem [shape: f32[8,2], index: 4, kind: output, shape index: {}]
  %s5 = sld [smem:[#allocation0]]
  $region26: #{_forward_impl.1} parent=0
    _
  %s7 = ssub.s32 1, %s5
  %s8 = scalar_select 0, %s7, %s5
  // Predicated region
  $region2: #{_forward_impl.1} parent=0 // pred_check
    _
  $region3: #{_forward_impl.1} parent=0 // pred_check_branch
    %10 = sbr.rel (0) target = $region5
  $region4: #{_forward_impl.1} parent=0 // pred_region
    _
  $region5: #{_forward_impl.1} parent=0 // pred_fallthru
    _
  // Predicated region
  $region6: #{_forward_impl.1} parent=0 // pred_check
    _
  $region7: #{_forward_impl.1} parent=0 // pred_check_branch
    %12 = sbr.rel (0) target = $region9
  $region8: #{_forward_impl.1} parent=0 // pred_region
    _
  $region9: #{_forward_impl.1} parent=0 // pred_fallthru
    _
  // Predicated region
  $region10: #{_forward_impl.1} parent=0 // pred_check
    _
  $region11: #{_forward_impl.1} parent=0 // pred_check_branch
    %14 = sbr.rel (0) target = $region13
  $region12: #{_forward_impl.1} parent=0 // pred_region
    _
  $region13: #{_forward_impl.1} parent=0 // pred_fallthru
    _
  // Predicated region
  $region14: #{_forward_impl.1} parent=0 // pred_check
    _
  $region15: #{_forward_impl.1} parent=0 // pred_check_branch
    %16 = sbr.rel (0) target = $region17
  $region16: #{_forward_impl.1} parent=0 // pred_region
    _
  $region17: #{_forward_impl.1} parent=0 // pred_fallthru
    _
  %v18 = vld [vmem:[%s0] sm:$0xff]
  %v19 = vld [vmem:[%s0 + $0x8] sm:$0xff]
  %v20 = vld [vmem:[%s0 + $0x10] sm:$0xff]
  %v21 = vld [vmem:[%s0 + $0x18] sm:$0xff]
  %v22 = vld [vmem:[%s0 + $0x20] sm:$0xff]
  %v23 = vld [vmem:[%s0 + $0x28] sm:$0xff]
  %v24 = vld [vmem:[%s0 + $0x30] sm:$0xff]
  %v25 = vld [vmem:[%s0 + $0x38] sm:$0xff]
  %v26 = vld [vmem:[%s0 + $0x40] sm:$0xff]
  %v27 = vld [vmem:[%s0 + $0x48] sm:$0xff]
  %v28 = vld [vmem:[%s0 + $0x50] sm:$0xff]
  %v29 = vld [vmem:[%s0 + $0x58] sm:$0xff]
  %v30 = vld [vmem:[%s0 + $0x60] sm:$0xff]
  %v31 = vld [vmem:[%s0 + $0x68] sm:$0xff]
  %v32 = vld [vmem:[%s0 + $0x70] sm:$0xff]
  %v33 = vld [vmem:[%s0 + $0x78] sm:$0xff]
  %v34 = vld [vmem:[%s0 + $0x80] sm:$0xff]
  %v35 = vld [vmem:[%s0 + $0x88] sm:$0xff]
  %v36 = vld [vmem:[%s0 + $0x90] sm:$0xff]
  %v37 = vld [vmem:[%s0 + $0x98] sm:$0xff]
  %v38 = vld [vmem:[%s0 + $0xa0] sm:$0xff]
  %v39 = vld [vmem:[%s0 + $0xa8] sm:$0xff]
  %v40 = vld [vmem:[%s0 + $0xb0] sm:$0xff]
  %v41 = vld [vmem:[%s0 + $0xb8] sm:$0xff]
  %v42 = vld [vmem:[%s1] sm:$0xff]
  %v43 = vld [vmem:[%s1 + $0x8] sm:$0xff]
  %v44 = vld [vmem:[%s1 + $0x10] sm:$0xff]
  %v45 = vld [vmem:[%s1 + $0x18] sm:$0xff]
  %v46 = vld [vmem:[%s1 + $0x20] sm:$0xff]
  %v47 = vld [vmem:[%s1 + $0x28] sm:$0xff]
  %v48 = vld [vmem:[%s1 + $0x30] sm:$0xff]
  %v49 = vld [vmem:[%s1 + $0x38] sm:$0xff]
  %v50 = vld [vmem:[%s1 + $0x40] sm:$0xff]
  %v51 = vld [vmem:[%s1 + $0x48] sm:$0xff]
  %v52 = vld [vmem:[%s1 + $0x50] sm:$0xff]
  %v53 = vld [vmem:[%s1 + $0x58] sm:$0xff]
  %v54 = vld [vmem:[%s1 + $0x60] sm:$0xff]
  %v55 = vld [vmem:[%s1 + $0x68] sm:$0xff]
  %v56 = vld [vmem:[%s1 + $0x70] sm:$0xff]
  %v57 = vld [vmem:[%s1 + $0x78] sm:$0xff]
  %v58 = vld [vmem:[%s1 + $0x80] sm:$0xff]
  %v59 = vld [vmem:[%s1 + $0x88] sm:$0xff]
  %v60 = vld [vmem:[%s1 + $0x90] sm:$0xff]
  %v61 = vld [vmem:[%s1 + $0x98] sm:$0xff]
  %v62 = vld [vmem:[%s1 + $0xa0] sm:$0xff]
  %v63 = vld [vmem:[%s1 + $0xa8] sm:$0xff]
  %v64 = vld [vmem:[%s1 + $0xb0] sm:$0xff]
  %v65 = vld [vmem:[%s1 + $0xb8] sm:$0xff]
  %v66 = vld [vmem:[%s1 + $0xc0] sm:$0xff]
  %v67 = vld [vmem:[%s1 + $0xc8] sm:$0xff]
  %v68 = vld [vmem:[%s1 + $0xd0] sm:$0xff]
  %v69 = vld [vmem:[%s1 + $0xd8] sm:$0xff]
  %v70 = vld [vmem:[%s1 + $0xe0] sm:$0xff]
  %v71 = vld [vmem:[%s1 + $0xe8] sm:$0xff]
  %v72 = vld [vmem:[%s1 + $0xf0] sm:$0xff]
  %v73 = vld [vmem:[%s1 + $0xf8] sm:$0xff]
  %v74 = vld [vmem:[%s1 + $0x100] sm:$0xff]
  %v75 = vld [vmem:[%s1 + $0x108] sm:$0xff]
  %v76 = vld [vmem:[%s1 + $0x110] sm:$0xff]
  %v77 = vld [vmem:[%s1 + $0x118] sm:$0xff]
  %v78 = vld [vmem:[%s1 + $0x120] sm:$0xff]
  %v79 = vld [vmem:[%s1 + $0x128] sm:$0xff]
  %v80 = vld [vmem:[%s1 + $0x130] sm:$0xff]
  %v81 = vld [vmem:[%s1 + $0x138] sm:$0xff]
  %v82 = vld [vmem:[%s1 + $0x140] sm:$0xff]
  %v83 = vld [vmem:[%s1 + $0x148] sm:$0xff]
  %v84 = vld [vmem:[%s1 + $0x150] sm:$0xff]
  %v85 = vld [vmem:[%s1 + $0x158] sm:$0xff]
  %v86 = vld [vmem:[%s1 + $0x160] sm:$0xff]
  %v87 = vld [vmem:[%s1 + $0x168] sm:$0xff]
  %v88 = vld [vmem:[%s1 + $0x170] sm:$0xff]
  %v89 = vld [vmem:[%s1 + $0x178] sm:$0xff]
  %v90 = vld [vmem:[%s1 + $0x180] sm:$0xff]
  %v91 = vld [vmem:[%s1 + $0x188] sm:$0xff]
  %v92 = vld [vmem:[%s1 + $0x190] sm:$0xff]
  %v93 = vld [vmem:[%s1 + $0x198] sm:$0xff]
  %v94 = vld [vmem:[%s1 + $0x1a0] sm:$0xff]
  %v95 = vld [vmem:[%s1 + $0x1a8] sm:$0xff]
  %v96 = vld [vmem:[%s1 + $0x1b0] sm:$0xff]
  %v97 = vld [vmem:[%s1 + $0x1b8] sm:$0xff]
  %v98 = vld [vmem:[%s1 + $0x1c0] sm:$0xff]
  %v99 = vld [vmem:[%s1 + $0x1c8] sm:$0xff]
  %v100 = vld [vmem:[%s1 + $0x1d0] sm:$0xff]
  %v101 = vld [vmem:[%s1 + $0x1d8] sm:$0xff]
  %v102 = vld [vmem:[%s1 + $0x1e0] sm:$0xff]
  %v103 = vld [vmem:[%s1 + $0x1e8] sm:$0xff]
  %v104 = vld [vmem:[%s1 + $0x1f0] sm:$0xff]
  %v105 = vld [vmem:[%s1 + $0x1f8] sm:$0xff]
  %v106 = vld [vmem:[%s1 + $0x200] sm:$0xff]
  %v107 = vld [vmem:[%s1 + $0x208] sm:$0xff]
  %v108 = vld [vmem:[%s1 + $0x210] sm:$0xff]
  %v109 = vld [vmem:[%s1 + $0x218] sm:$0xff]
  %v110 = vld [vmem:[%s1 + $0x220] sm:$0xff]
  %v111 = vld [vmem:[%s1 + $0x228] sm:$0xff]
  %v112 = vld [vmem:[%s1 + $0x230] sm:$0xff]
  %v113 = vld [vmem:[%s1 + $0x238] sm:$0xff]
  %v114 = vld [vmem:[%s1 + $0x240] sm:$0xff]
  %v115 = vld [vmem:[%s1 + $0x248] sm:$0xff]
  %v116 = vld [vmem:[%s1 + $0x250] sm:$0xff]
  %v117 = vld [vmem:[%s1 + $0x258] sm:$0xff]
  %v118 = vld [vmem:[%s1 + $0x260] sm:$0xff]
  %v119 = vld [vmem:[%s1 + $0x268] sm:$0xff]
  %v120 = vld [vmem:[%s1 + $0x270] sm:$0xff]
  %v121 = vld [vmem:[%s1 + $0x278] sm:$0xff]
  %v122 = vld [vmem:[%s1 + $0x280] sm:$0xff]
  %v123 = vld [vmem:[%s1 + $0x288] sm:$0xff]
  %v124 = vld [vmem:[%s1 + $0x290] sm:$0xff]
  %v125 = vld [vmem:[%s1 + $0x298] sm:$0xff]
  %v126 = vld [vmem:[%s1 + $0x2a0] sm:$0xff]
  %v127 = vld [vmem:[%s1 + $0x2a8] sm:$0xff]
  %v128 = vld [vmem:[%s1 + $0x2b0] sm:$0xff]
  %v129 = vld [vmem:[%s1 + $0x2b8] sm:$0xff]
  %v130 = vld [vmem:[%s1 + $0x2c0] sm:$0xff]
  %v131 = vld [vmem:[%s1 + $0x2c8] sm:$0xff]
  %v132 = vld [vmem:[%s1 + $0x2d0] sm:$0xff]
  %v133 = vld [vmem:[%s1 + $0x2d8] sm:$0xff]
  %v134 = vld [vmem:[%s1 + $0x2e0] sm:$0xff]
  %v135 = vld [vmem:[%s1 + $0x2e8] sm:$0xff]
  %v136 = vld [vmem:[%s1 + $0x2f0] sm:$0xff]
  %v137 = vld [vmem:[%s1 + $0x2f8] sm:$0xff]
  %v138 = vld [vmem:[%s1 + $0x300] sm:$0xff]
  %v139 = vld [vmem:[%s1 + $0x308] sm:$0xff]
  %v140 = vld [vmem:[%s1 + $0x310] sm:$0xff]
  %v141 = vld [vmem:[%s1 + $0x318] sm:$0xff]
  %v142 = vld [vmem:[%s1 + $0x320] sm:$0xff]
  %v143 = vld [vmem:[%s1 + $0x328] sm:$0xff]
  %v144 = vld [vmem:[%s1 + $0x330] sm:$0xff]
  %v145 = vld [vmem:[%s1 + $0x338] sm:$0xff]
  %v146 = vld [vmem:[%s1 + $0x340] sm:$0xff]
  %v147 = vld [vmem:[%s1 + $0x348] sm:$0xff]
  %v148 = vld [vmem:[%s1 + $0x350] sm:$0xff]
  %v149 = vld [vmem:[%s1 + $0x358] sm:$0xff]
  %v150 = vld [vmem:[%s1 + $0x360] sm:$0xff]
  %v151 = vld [vmem:[%s1 + $0x368] sm:$0xff]
  %v152 = vld [vmem:[%s1 + $0x370] sm:$0xff]
  %v153 = vld [vmem:[%s1 + $0x378] sm:$0xff]
  %v154 = vld [vmem:[%s1 + $0x380] sm:$0xff]
  %v155 = vld [vmem:[%s1 + $0x388] sm:$0xff]
  %v156 = vld [vmem:[%s1 + $0x390] sm:$0xff]
  %v157 = vld [vmem:[%s1 + $0x398] sm:$0xff]
  %v158 = vld [vmem:[%s1 + $0x3a0] sm:$0xff]
  %v159 = vld [vmem:[%s1 + $0x3a8] sm:$0xff]
  %v160 = vld [vmem:[%s1 + $0x3b0] sm:$0xff]
  %v161 = vld [vmem:[%s1 + $0x3b8] sm:$0xff]
  %v162 = vld [vmem:[%s1 + $0x3c0] sm:$0xff]
  %v163 = vld [vmem:[%s1 + $0x3c8] sm:$0xff]
  %v164 = vld [vmem:[%s1 + $0x3d0] sm:$0xff]
  %v165 = vld [vmem:[%s1 + $0x3d8] sm:$0xff]
  %v166 = vld [vmem:[%s1 + $0x3e0] sm:$0xff]
  %v167 = vld [vmem:[%s1 + $0x3e8] sm:$0xff]
  %v168 = vld [vmem:[%s1 + $0x3f0] sm:$0xff]
  %v169 = vld [vmem:[%s1 + $0x3f8] sm:$0xff]
  %v170 = vld [vmem:[%s1 + $0x400] sm:$0xff]
  %v171 = vld [vmem:[%s1 + $0x408] sm:$0xff]
  %v172 = vld [vmem:[%s1 + $0x410] sm:$0xff]
  %v173 = vld [vmem:[%s1 + $0x418] sm:$0xff]
  %v174 = vld [vmem:[%s1 + $0x420] sm:$0xff]
  %v175 = vld [vmem:[%s1 + $0x428] sm:$0xff]
  %v176 = vld [vmem:[%s1 + $0x430] sm:$0xff]
  %v177 = vld [vmem:[%s1 + $0x438] sm:$0xff]
  %v178 = vld [vmem:[%s1 + $0x440] sm:$0xff]
  %v179 = vld [vmem:[%s1 + $0x448] sm:$0xff]
  %v180 = vld [vmem:[%s1 + $0x450] sm:$0xff]
  %v181 = vld [vmem:[%s1 + $0x458] sm:$0xff]
  %v182 = vld [vmem:[%s1 + $0x460] sm:$0xff]
  %v183 = vld [vmem:[%s1 + $0x468] sm:$0xff]
  %v184 = vld [vmem:[%s1 + $0x470] sm:$0xff]
  %v185 = vld [vmem:[%s1 + $0x478] sm:$0xff]
  %v186 = vld [vmem:[%s1 + $0x480] sm:$0xff]
  %v187 = vld [vmem:[%s1 + $0x488] sm:$0xff]
  %v188 = vld [vmem:[%s1 + $0x490] sm:$0xff]
  %v189 = vld [vmem:[%s1 + $0x498] sm:$0xff]
  %v190 = vld [vmem:[%s1 + $0x4a0] sm:$0xff]
  %v191 = vld [vmem:[%s1 + $0x4a8] sm:$0xff]
  %v192 = vld [vmem:[%s1 + $0x4b0] sm:$0xff]
  %v193 = vld [vmem:[%s1 + $0x4b8] sm:$0xff]
  %v194 = vld [vmem:[%s1 + $0x4c0] sm:$0xff]
  %v195 = vld [vmem:[%s1 + $0x4c8] sm:$0xff]
  %v196 = vld [vmem:[%s1 + $0x4d0] sm:$0xff]
  %v197 = vld [vmem:[%s1 + $0x4d8] sm:$0xff]
  %v198 = vld [vmem:[%s1 + $0x4e0] sm:$0xff]
  %v199 = vld [vmem:[%s1 + $0x4e8] sm:$0xff]
  %v200 = vld [vmem:[%s1 + $0x4f0] sm:$0xff]
  %v201 = vld [vmem:[%s1 + $0x4f8] sm:$0xff]
  %v202 = vld [vmem:[%s1 + $0x500] sm:$0xff]
  %v203 = vld [vmem:[%s1 + $0x508] sm:$0xff]
  %v204 = vld [vmem:[%s1 + $0x510] sm:$0xff]
  %v205 = vld [vmem:[%s1 + $0x518] sm:$0xff]
  %v206 = vld [vmem:[%s1 + $0x520] sm:$0xff]
  %v207 = vld [vmem:[%s1 + $0x528] sm:$0xff]
  %v208 = vld [vmem:[%s1 + $0x530] sm:$0xff]
  %v209 = vld [vmem:[%s1 + $0x538] sm:$0xff]
  %v210 = vld [vmem:[%s1 + $0x540] sm:$0xff]
  %v211 = vld [vmem:[%s1 + $0x548] sm:$0xff]
  %v212 = vld [vmem:[%s1 + $0x550] sm:$0xff]
  %v213 = vld [vmem:[%s1 + $0x558] sm:$0xff]
  %v214 = vld [vmem:[%s1 + $0x560] sm:$0xff]
  %v215 = vld [vmem:[%s1 + $0x568] sm:$0xff]
  %v216 = vld [vmem:[%s1 + $0x570] sm:$0xff]
  %v217 = vld [vmem:[%s1 + $0x578] sm:$0xff]
  %v218 = vld [vmem:[%s1 + $0x580] sm:$0xff]
  %v219 = vld [vmem:[%s1 + $0x588] sm:$0xff]
  %v220 = vld [vmem:[%s1 + $0x590] sm:$0xff]
  %v221 = vld [vmem:[%s1 + $0x598] sm:$0xff]
  %v222 = vld [vmem:[%s1 + $0x5a0] sm:$0xff]
  %v223 = vld [vmem:[%s1 + $0x5a8] sm:$0xff]
  %v224 = vld [vmem:[%s1 + $0x5b0] sm:$0xff]
  %v225 = vld [vmem:[%s1 + $0x5b8] sm:$0xff]
  %v226 = vld [vmem:[%s1 + $0x5c0] sm:$0xff]
  %v227 = vld [vmem:[%s1 + $0x5c8] sm:$0xff]
  %v228 = vld [vmem:[%s1 + $0x5d0] sm:$0xff]
  %v229 = vld [vmem:[%s1 + $0x5d8] sm:$0xff]
  %v230 = vld [vmem:[%s1 + $0x5e0] sm:$0xff]
  %v231 = vld [vmem:[%s1 + $0x5e8] sm:$0xff]
  %v232 = vld [vmem:[%s1 + $0x5f0] sm:$0xff]
  %v233 = vld [vmem:[%s1 + $0x5f8] sm:$0xff]
  %v234 = vld [vmem:[%s1 + $0x600] sm:$0xff]
  %v235 = vld [vmem:[%s1 + $0x608] sm:$0xff]
  %v236 = vld [vmem:[%s1 + $0x610] sm:$0xff]
  %v237 = vld [vmem:[%s1 + $0x618] sm:$0xff]
  %v238 = vld [vmem:[%s1 + $0x620] sm:$0xff]
  %v239 = vld [vmem:[%s1 + $0x628] sm:$0xff]
  %v240 = vld [vmem:[%s1 + $0x630] sm:$0xff]
  %v241 = vld [vmem:[%s1 + $0x638] sm:$0xff]
  %v242 = vld [vmem:[%s1 + $0x640] sm:$0xff]
  %v243 = vld [vmem:[%s1 + $0x648] sm:$0xff]
  %v244 = vld [vmem:[%s1 + $0x650] sm:$0xff]
  %v245 = vld [vmem:[%s1 + $0x658] sm:$0xff]
  %v246 = vld [vmem:[%s1 + $0x660] sm:$0xff]
  %v247 = vld [vmem:[%s1 + $0x668] sm:$0xff]
  %v248 = vld [vmem:[%s1 + $0x670] sm:$0xff]
  %v249 = vld [vmem:[%s1 + $0x678] sm:$0xff]
  %v250 = vld [vmem:[%s1 + $0x680] sm:$0xff]
  %v251 = vld [vmem:[%s1 + $0x688] sm:$0xff]
  %v252 = vld [vmem:[%s1 + $0x690] sm:$0xff]
  %v253 = vld [vmem:[%s1 + $0x698] sm:$0xff]
  %v254 = vld [vmem:[%s1 + $0x6a0] sm:$0xff]
  %v255 = vld [vmem:[%s1 + $0x6a8] sm:$0xff]
  %v256 = vld [vmem:[%s1 + $0x6b0] sm:$0xff]
  %v257 = vld [vmem:[%s1 + $0x6b8] sm:$0xff]
  %v258 = vld [vmem:[%s1 + $0x6c0] sm:$0xff]
  %v259 = vld [vmem:[%s1 + $0x6c8] sm:$0xff]
  %v260 = vld [vmem:[%s1 + $0x6d0] sm:$0xff]
  %v261 = vld [vmem:[%s1 + $0x6d8] sm:$0xff]
  %v262 = vld [vmem:[%s1 + $0x6e0] sm:$0xff]
  %v263 = vld [vmem:[%s1 + $0x6e8] sm:$0xff]
  %v264 = vld [vmem:[%s1 + $0x6f0] sm:$0xff]
  %v265 = vld [vmem:[%s1 + $0x6f8] sm:$0xff]
  %v266 = vld [vmem:[%s1 + $0x700] sm:$0xff]
  %v267 = vld [vmem:[%s1 + $0x708] sm:$0xff]
  %v268 = vld [vmem:[%s1 + $0x710] sm:$0xff]
  %v269 = vld [vmem:[%s1 + $0x718] sm:$0xff]
  %v270 = vld [vmem:[%s1 + $0x720] sm:$0xff]
  %v271 = vld [vmem:[%s1 + $0x728] sm:$0xff]
  %v272 = vld [vmem:[%s1 + $0x730] sm:$0xff]
  %v273 = vld [vmem:[%s1 + $0x738] sm:$0xff]
  %v274 = vld [vmem:[%s1 + $0x740] sm:$0xff]
  %v275 = vld [vmem:[%s1 + $0x748] sm:$0xff]
  %v276 = vld [vmem:[%s1 + $0x750] sm:$0xff]
  %v277 = vld [vmem:[%s1 + $0x758] sm:$0xff]
  %v278 = vld [vmem:[%s1 + $0x760] sm:$0xff]
  %v279 = vld [vmem:[%s1 + $0x768] sm:$0xff]
  %v280 = vld [vmem:[%s1 + $0x770] sm:$0xff]
  %v281 = vld [vmem:[%s1 + $0x778] sm:$0xff]
  %v282 = vld [vmem:[%s1 + $0x780] sm:$0xff]
  %v283 = vld [vmem:[%s1 + $0x788] sm:$0xff]
  %v284 = vld [vmem:[%s1 + $0x790] sm:$0xff]
  %v285 = vld [vmem:[%s1 + $0x798] sm:$0xff]
  %v286 = vld [vmem:[%s1 + $0x7a0] sm:$0xff]
  %v287 = vld [vmem:[%s1 + $0x7a8] sm:$0xff]
  %v288 = vld [vmem:[%s1 + $0x7b0] sm:$0xff]
  %v289 = vld [vmem:[%s1 + $0x7b8] sm:$0xff]
  %v290 = vld [vmem:[%s1 + $0x7c0] sm:$0xff]
  %v291 = vld [vmem:[%s1 + $0x7c8] sm:$0xff]
  %v292 = vld [vmem:[%s1 + $0x7d0] sm:$0xff]
  %v293 = vld [vmem:[%s1 + $0x7d8] sm:$0xff]
  %v294 = vld [vmem:[%s1 + $0x7e0] sm:$0xff]
  %v295 = vld [vmem:[%s1 + $0x7e8] sm:$0xff]
  %v296 = vld [vmem:[%s1 + $0x7f0] sm:$0xff]
  %v297 = vld [vmem:[%s1 + $0x7f8] sm:$0xff]
  %v298 = vld [vmem:[%s1 + $0x800] sm:$0xff]
  %v299 = vld [vmem:[%s1 + $0x808] sm:$0xff]
  %v300 = vld [vmem:[%s1 + $0x810] sm:$0xff]
  %v301 = vld [vmem:[%s1 + $0x818] sm:$0xff]
  %v302 = vld [vmem:[%s1 + $0x820] sm:$0xff]
  %v303 = vld [vmem:[%s1 + $0x828] sm:$0xff]
  %v304 = vld [vmem:[%s1 + $0x830] sm:$0xff]
  %v305 = vld [vmem:[%s1 + $0x838] sm:$0xff]
  %v306 = vld [vmem:[%s1 + $0x840] sm:$0xff]
  %v307 = vld [vmem:[%s1 + $0x848] sm:$0xff]
  %v308 = vld [vmem:[%s1 + $0x850] sm:$0xff]
  %v309 = vld [vmem:[%s1 + $0x858] sm:$0xff]
  %v310 = vld [vmem:[%s1 + $0x860] sm:$0xff]
  %v311 = vld [vmem:[%s1 + $0x868] sm:$0xff]
  %v312 = vld [vmem:[%s1 + $0x870] sm:$0xff]
  %v313 = vld [vmem:[%s1 + $0x878] sm:$0xff]
  %v314 = vld [vmem:[%s1 + $0x880] sm:$0xff]
  %v315 = vld [vmem:[%s1 + $0x888] sm:$0xff]
  %v316 = vld [vmem:[%s1 + $0x890] sm:$0xff]
  %v317 = vld [vmem:[%s1 + $0x898] sm:$0xff]
  %v318 = vld [vmem:[%s1 + $0x8a0] sm:$0xff]
  %v319 = vld [vmem:[%s1 + $0x8a8] sm:$0xff]
  %v320 = vld [vmem:[%s1 + $0x8b0] sm:$0xff]
  %v321 = vld [vmem:[%s1 + $0x8b8] sm:$0xff]
  %v322 = vld [vmem:[%s1 + $0x8c0] sm:$0xff]
  %v323 = vld [vmem:[%s1 + $0x8c8] sm:$0xff]
  %v324 = vld [vmem:[%s1 + $0x8d0] sm:$0xff]
  %v325 = vld [vmem:[%s1 + $0x8d8] sm:$0xff]
  %v326 = vld [vmem:[%s1 + $0x8e0] sm:$0xff]
  %v327 = vld [vmem:[%s1 + $0x8e8] sm:$0xff]
  %v328 = vld [vmem:[%s1 + $0x8f0] sm:$0xff]
  %v329 = vld [vmem:[%s1 + $0x8f8] sm:$0xff]
  %v330 = vld [vmem:[%s1 + $0x900] sm:$0xff]
  %v331 = vld [vmem:[%s1 + $0x908] sm:$0xff]
  %v332 = vld [vmem:[%s1 + $0x910] sm:$0xff]
  %v333 = vld [vmem:[%s1 + $0x918] sm:$0xff]
  %v334 = vld [vmem:[%s1 + $0x920] sm:$0xff]
  %v335 = vld [vmem:[%s1 + $0x928] sm:$0xff]
  %v336 = vld [vmem:[%s1 + $0x930] sm:$0xff]
  %v337 = vld [vmem:[%s1 + $0x938] sm:$0xff]
  %v338 = vld [vmem:[%s1 + $0x940] sm:$0xff]
  %v339 = vld [vmem:[%s1 + $0x948] sm:$0xff]
  %v340 = vld [vmem:[%s1 + $0x950] sm:$0xff]
  %v341 = vld [vmem:[%s1 + $0x958] sm:$0xff]
  %v342 = vld [vmem:[%s1 + $0x960] sm:$0xff]
  %v343 = vld [vmem:[%s1 + $0x968] sm:$0xff]
  %v344 = vld [vmem:[%s1 + $0x970] sm:$0xff]
  %v345 = vld [vmem:[%s1 + $0x978] sm:$0xff]
  %v346 = vld [vmem:[%s1 + $0x980] sm:$0xff]
  %v347 = vld [vmem:[%s1 + $0x988] sm:$0xff]
  %v348 = vld [vmem:[%s1 + $0x990] sm:$0xff]
  %v349 = vld [vmem:[%s1 + $0x998] sm:$0xff]
  %v350 = vld [vmem:[%s1 + $0x9a0] sm:$0xff]
  %v351 = vld [vmem:[%s1 + $0x9a8] sm:$0xff]
  %v352 = vld [vmem:[%s1 + $0x9b0] sm:$0xff]
  %v353 = vld [vmem:[%s1 + $0x9b8] sm:$0xff]
  %v354 = vld [vmem:[%s1 + $0x9c0] sm:$0xff]
  %v355 = vld [vmem:[%s1 + $0x9c8] sm:$0xff]
  %v356 = vld [vmem:[%s1 + $0x9d0] sm:$0xff]
  %v357 = vld [vmem:[%s1 + $0x9d8] sm:$0xff]
  %v358 = vld [vmem:[%s1 + $0x9e0] sm:$0xff]
  %v359 = vld [vmem:[%s1 + $0x9e8] sm:$0xff]
  %v360 = vld [vmem:[%s1 + $0x9f0] sm:$0xff]
  %v361 = vld [vmem:[%s1 + $0x9f8] sm:$0xff]
  %v362 = vld [vmem:[%s1 + $0xa00] sm:$0xff]
  %v363 = vld [vmem:[%s1 + $0xa08] sm:$0xff]
  %v364 = vld [vmem:[%s1 + $0xa10] sm:$0xff]
  %v365 = vld [vmem:[%s1 + $0xa18] sm:$0xff]
  %v366 = vld [vmem:[%s1 + $0xa20] sm:$0xff]
  %v367 = vld [vmem:[%s1 + $0xa28] sm:$0xff]
  %v368 = vld [vmem:[%s1 + $0xa30] sm:$0xff]
  %v369 = vld [vmem:[%s1 + $0xa38] sm:$0xff]
  %v370 = vld [vmem:[%s1 + $0xa40] sm:$0xff]
  %v371 = vld [vmem:[%s1 + $0xa48] sm:$0xff]
  %v372 = vld [vmem:[%s1 + $0xa50] sm:$0xff]
  %v373 = vld [vmem:[%s1 + $0xa58] sm:$0xff]
  %v374 = vld [vmem:[%s1 + $0xa60] sm:$0xff]
  %v375 = vld [vmem:[%s1 + $0xa68] sm:$0xff]
  %v376 = vld [vmem:[%s1 + $0xa70] sm:$0xff]
  %v377 = vld [vmem:[%s1 + $0xa78] sm:$0xff]
  %v378 = vld [vmem:[%s1 + $0xa80] sm:$0xff]
  %v379 = vld [vmem:[%s1 + $0xa88] sm:$0xff]
  %v380 = vld [vmem:[%s1 + $0xa90] sm:$0xff]
  %v381 = vld [vmem:[%s1 + $0xa98] sm:$0xff]
  %v382 = vld [vmem:[%s1 + $0xaa0] sm:$0xff]
  %v383 = vld [vmem:[%s1 + $0xaa8] sm:$0xff]
  %v384 = vld [vmem:[%s1 + $0xab0] sm:$0xff]
  %v385 = vld [vmem:[%s1 + $0xab8] sm:$0xff]
  %v386 = vld [vmem:[%s1 + $0xac0] sm:$0xff]
  %v387 = vld [vmem:[%s1 + $0xac8] sm:$0xff]
  %v388 = vld [vmem:[%s1 + $0xad0] sm:$0xff]
  %v389 = vld [vmem:[%s1 + $0xad8] sm:$0xff]
  %v390 = vld [vmem:[%s1 + $0xae0] sm:$0xff]
  %v391 = vld [vmem:[%s1 + $0xae8] sm:$0xff]
  %v392 = vld [vmem:[%s1 + $0xaf0] sm:$0xff]
  %v393 = vld [vmem:[%s1 + $0xaf8] sm:$0xff]
  %v394 = vld [vmem:[%s1 + $0xb00] sm:$0xff]
  %v395 = vld [vmem:[%s1 + $0xb08] sm:$0xff]
  %v396 = vld [vmem:[%s1 + $0xb10] sm:$0xff]
  %v397 = vld [vmem:[%s1 + $0xb18] sm:$0xff]
  %v398 = vld [vmem:[%s1 + $0xb20] sm:$0xff]
  %v399 = vld [vmem:[%s1 + $0xb28] sm:$0xff]
  %v400 = vld [vmem:[%s1 + $0xb30] sm:$0xff]
  %v401 = vld [vmem:[%s1 + $0xb38] sm:$0xff]
  %v426 = vunpack.c.l.b16 %v18
  %v427 = vunpack.c.h.b16 %v18
  %v428 = vunpack.c.l.b16 %v19
  %v429 = vunpack.c.h.b16 %v19
  %v430 = vunpack.c.l.b16 %v20
  %v431 = vunpack.c.h.b16 %v20
  %v432 = vunpack.c.l.b16 %v21
  %v433 = vunpack.c.h.b16 %v21
  %v434 = vunpack.c.l.b16 %v22
  %v435 = vunpack.c.h.b16 %v22
  %v436 = vunpack.c.l.b16 %v23
  %v437 = vunpack.c.h.b16 %v23
  %v438 = vunpack.c.l.b16 %v24
  %v439 = vunpack.c.h.b16 %v24
  %v440 = vunpack.c.l.b16 %v25
  %v441 = vunpack.c.h.b16 %v25
  %v442 = vunpack.c.l.b16 %v26
  %v443 = vunpack.c.h.b16 %v26
  %v444 = vunpack.c.l.b16 %v27
  %v445 = vunpack.c.h.b16 %v27
  %v446 = vunpack.c.l.b16 %v28
  %v447 = vunpack.c.h.b16 %v28
  %v448 = vunpack.c.l.b16 %v29
  %v449 = vunpack.c.h.b16 %v29
  %v450 = vunpack.c.l.b16 %v30
  %v451 = vunpack.c.h.b16 %v30
  %v452 = vunpack.c.l.b16 %v31
  %v453 = vunpack.c.h.b16 %v31
  %v454 = vunpack.c.l.b16 %v32
  %v455 = vunpack.c.h.b16 %v32
  %v456 = vunpack.c.l.b16 %v33
  %v457 = vunpack.c.h.b16 %v33
  %v458 = vunpack.c.l.b16 %v34
  %v459 = vunpack.c.h.b16 %v34
  %v460 = vunpack.c.l.b16 %v35
  %v461 = vunpack.c.h.b16 %v35
  %v462 = vunpack.c.l.b16 %v36
  %v463 = vunpack.c.h.b16 %v36
  %v464 = vunpack.c.l.b16 %v37
  %v465 = vunpack.c.h.b16 %v37
  %v466 = vunpack.c.l.b16 %v38
  %v467 = vunpack.c.h.b16 %v38
  %v468 = vunpack.c.l.b16 %v39
  %v469 = vunpack.c.h.b16 %v39
  %v470 = vunpack.c.l.b16 %v40
  %v471 = vunpack.c.h.b16 %v40
  %v472 = vunpack.c.l.b16 %v41
  %v473 = vunpack.c.h.b16 %v41
  %v474 = vpack.c.b16 %v432, %v426
  %v475 = vpack.c.b16 %v433, %v427
  %v476 = vpack.c.b16 %v434, %v428
  %v477 = vpack.c.b16 %v435, %v429
  %v478 = vpack.c.b16 %v436, %v430
  %v479 = vpack.c.b16 %v437, %v431
  %v480 = vpack.c.b16 %v444, %v438
  %v481 = vpack.c.b16 %v445, %v439
  %v482 = vpack.c.b16 %v446, %v440
  %v483 = vpack.c.b16 %v447, %v441
  %v484 = vpack.c.b16 %v448, %v442
  %v485 = vpack.c.b16 %v449, %v443
  %v486 = vpack.c.b16 %v456, %v450
  %v487 = vpack.c.b16 %v457, %v451
  %v488 = vpack.c.b16 %v458, %v452
  %v489 = vpack.c.b16 %v459, %v453
  %v490 = vpack.c.b16 %v460, %v454
  %v491 = vpack.c.b16 %v461, %v455
  %v492 = vpack.c.b16 %v468, %v462
  %v493 = vpack.c.b16 %v469, %v463
  %v494 = vpack.c.b16 %v470, %v464
  %v495 = vpack.c.b16 %v471, %v465
  %v496 = vpack.c.b16 %v472, %v466
  %v497 = vpack.c.b16 %v473, %v467
  %v878 = vunpack.c.l.b16 %v42
  %v879 = vunpack.c.h.b16 %v42
  %v880 = vunpack.c.l.b16 %v43
  %v881 = vunpack.c.h.b16 %v43
  %v882 = vunpack.c.l.b16 %v44
  %v883 = vunpack.c.h.b16 %v44
  %v884 = vunpack.c.l.b16 %v45
  %v885 = vunpack.c.h.b16 %v45
  %v886 = vunpack.c.l.b16 %v46
  %v887 = vunpack.c.h.b16 %v46
  %v888 = vunpack.c.l.b16 %v47
  %v889 = vunpack.c.h.b16 %v47
  %v890 = vunpack.c.l.b16 %v48
  %v891 = vunpack.c.h.b16 %v48
  %v892 = vunpack.c.l.b16 %v49
  %v893 = vunpack.c.h.b16 %v49
  %v894 = vunpack.c.l.b16 %v50
  %v895 = vunpack.c.h.b16 %v50
  %v896 = vunpack.c.l.b16 %v51
  %v897 = vunpack.c.h.b16 %v51
  %v898 = vunpack.c.l.b16 %v52
  %v899 = vunpack.c.h.b16 %v52
  %v900 = vunpack.c.l.b16 %v53
  %v901 = vunpack.c.h.b16 %v53
  %v902 = vunpack.c.l.b16 %v54
  %v903 = vunpack.c.h.b16 %v54
  %v904 = vunpack.c.l.b16 %v55
  %v905 = vunpack.c.h.b16 %v55
  %v906 = vunpack.c.l.b16 %v56
  %v907 = vunpack.c.h.b16 %v56
  %v908 = vunpack.c.l.b16 %v57
  %v909 = vunpack.c.h.b16 %v57
  %v910 = vunpack.c.l.b16 %v58
  %v911 = vunpack.c.h.b16 %v58
  %v912 = vunpack.c.l.b16 %v59
  %v913 = vunpack.c.h.b16 %v59
  %v914 = vunpack.c.l.b16 %v60
  %v915 = vunpack.c.h.b16 %v60
  %v916 = vunpack.c.l.b16 %v61
  %v917 = vunpack.c.h.b16 %v61
  %v918 = vunpack.c.l.b16 %v62
  %v919 = vunpack.c.h.b16 %v62
  %v920 = vunpack.c.l.b16 %v63
  %v921 = vunpack.c.h.b16 %v63
  %v922 = vunpack.c.l.b16 %v64
  %v923 = vunpack.c.h.b16 %v64
  %v924 = vunpack.c.l.b16 %v65
  %v925 = vunpack.c.h.b16 %v65
  %v926 = vunpack.c.l.b16 %v66
  %v927 = vunpack.c.h.b16 %v66
  %v928 = vunpack.c.l.b16 %v67
  %v929 = vunpack.c.h.b16 %v67
  %v930 = vunpack.c.l.b16 %v68
  %v931 = vunpack.c.h.b16 %v68
  %v932 = vunpack.c.l.b16 %v69
  %v933 = vunpack.c.h.b16 %v69
  %v934 = vunpack.c.l.b16 %v70
  %v935 = vunpack.c.h.b16 %v70
  %v936 = vunpack.c.l.b16 %v71
  %v937 = vunpack.c.h.b16 %v71
  %v938 = vunpack.c.l.b16 %v72
  %v939 = vunpack.c.h.b16 %v72
  %v940 = vunpack.c.l.b16 %v73
  %v941 = vunpack.c.h.b16 %v73
  %v942 = vunpack.c.l.b16 %v74
  %v943 = vunpack.c.h.b16 %v74
  %v944 = vunpack.c.l.b16 %v75
  %v945 = vunpack.c.h.b16 %v75
  %v946 = vunpack.c.l.b16 %v76
  %v947 = vunpack.c.h.b16 %v76
  %v948 = vunpack.c.l.b16 %v77
  %v949 = vunpack.c.h.b16 %v77
  %v950 = vunpack.c.l.b16 %v78
  %v951 = vunpack.c.h.b16 %v78
  %v952 = vunpack.c.l.b16 %v79
  %v953 = vunpack.c.h.b16 %v79
  %v954 = vunpack.c.l.b16 %v80
  %v955 = vunpack.c.h.b16 %v80
  %v956 = vunpack.c.l.b16 %v81
  %v957 = vunpack.c.h.b16 %v81
  %v958 = vunpack.c.l.b16 %v82
  %v959 = vunpack.c.h.b16 %v82
  %v960 = vunpack.c.l.b16 %v83
  %v961 = vunpack.c.h.b16 %v83
  %v962 = vunpack.c.l.b16 %v84
  %v963 = vunpack.c.h.b16 %v84
  %v964 = vunpack.c.l.b16 %v85
  %v965 = vunpack.c.h.b16 %v85
  %v966 = vunpack.c.l.b16 %v86
  %v967 = vunpack.c.h.b16 %v86
  %v968 = vunpack.c.l.b16 %v87
  %v969 = vunpack.c.h.b16 %v87
  %v970 = vunpack.c.l.b16 %v88
  %v971 = vunpack.c.h.b16 %v88
  %v972 = vunpack.c.l.b16 %v89
  %v973 = vunpack.c.h.b16 %v89
  %v974 = vunpack.c.l.b16 %v90
  %v975 = vunpack.c.h.b16 %v90
  %v976 = vunpack.c.l.b16 %v91
  %v977 = vunpack.c.h.b16 %v91
  %v978 = vunpack.c.l.b16 %v92
  %v979 = vunpack.c.h.b16 %v92
  %v980 = vunpack.c.l.b16 %v93
  %v981 = vunpack.c.h.b16 %v93
  %v982 = vunpack.c.l.b16 %v94
  %v983 = vunpack.c.h.b16 %v94
  %v984 = vunpack.c.l.b16 %v95
  %v985 = vunpack.c.h.b16 %v95
  %v986 = vunpack.c.l.b16 %v96
  %v987 = vunpack.c.h.b16 %v96
  %v988 = vunpack.c.l.b16 %v97
  %v989 = vunpack.c.h.b16 %v97
  %v990 = vunpack.c.l.b16 %v98
  %v991 = vunpack.c.h.b16 %v98
  %v992 = vunpack.c.l.b16 %v99
  %v993 = vunpack.c.h.b16 %v99
  %v994 = vunpack.c.l.b16 %v100
  %v995 = vunpack.c.h.b16 %v100
  %v996 = vunpack.c.l.b16 %v101
  %v997 = vunpack.c.h.b16 %v101
  %v998 = vunpack.c.l.b16 %v102
  %v999 = vunpack.c.h.b16 %v102
  %v1000 = vunpack.c.l.b16 %v103
  %v1001 = vunpack.c.h.b16 %v103
  %v1002 = vunpack.c.l.b16 %v104
  %v1003 = vunpack.c.h.b16 %v104
  %v1004 = vunpack.c.l.b16 %v105
  %v1005 = vunpack.c.h.b16 %v105
  %v1006 = vunpack.c.l.b16 %v106
  %v1007 = vunpack.c.h.b16 %v106
  %v1008 = vunpack.c.l.b16 %v107
  %v1009 = vunpack.c.h.b16 %v107
  %v1010 = vunpack.c.l.b16 %v108
  %v1011 = vunpack.c.h.b16 %v108
  %v1012 = vunpack.c.l.b16 %v109
  %v1013 = vunpack.c.h.b16 %v109
  %v1014 = vunpack.c.l.b16 %v110
  %v1015 = vunpack.c.h.b16 %v110
  %v1016 = vunpack.c.l.b16 %v111
  %v1017 = vunpack.c.h.b16 %v111
  %v1018 = vunpack.c.l.b16 %v112
  %v1019 = vunpack.c.h.b16 %v112
  %v1020 = vunpack.c.l.b16 %v113
  %v1021 = vunpack.c.h.b16 %v113
  %v1022 = vunpack.c.l.b16 %v114
  %v1023 = vunpack.c.h.b16 %v114
  %v1024 = vunpack.c.l.b16 %v115
  %v1025 = vunpack.c.h.b16 %v115
  %v1026 = vunpack.c.l.b16 %v116
  %v1027 = vunpack.c.h.b16 %v116
  %v1028 = vunpack.c.l.b16 %v117
  %v1029 = vunpack.c.h.b16 %v117
  %v1030 = vunpack.c.l.b16 %v118
  %v1031 = vunpack.c.h.b16 %v118
  %v1032 = vunpack.c.l.b16 %v119
  %v1033 = vunpack.c.h.b16 %v119
  %v1034 = vunpack.c.l.b16 %v120
  %v1035 = vunpack.c.h.b16 %v120
  %v1036 = vunpack.c.l.b16 %v121
  %v1037 = vunpack.c.h.b16 %v121
  %v1038 = vunpack.c.l.b16 %v122
  %v1039 = vunpack.c.h.b16 %v122
  %v1040 = vunpack.c.l.b16 %v123
  %v1041 = vunpack.c.h.b16 %v123
  %v1042 = vunpack.c.l.b16 %v124
  %v1043 = vunpack.c.h.b16 %v124
  %v1044 = vunpack.c.l.b16 %v125
  %v1045 = vunpack.c.h.b16 %v125
  %v1046 = vunpack.c.l.b16 %v126
  %v1047 = vunpack.c.h.b16 %v126
  %v1048 = vunpack.c.l.b16 %v127
  %v1049 = vunpack.c.h.b16 %v127
  %v1050 = vunpack.c.l.b16 %v128
  %v1051 = vunpack.c.h.b16 %v128
  %v1052 = vunpack.c.l.b16 %v129
  %v1053 = vunpack.c.h.b16 %v129
  %v1054 = vunpack.c.l.b16 %v130
  %v1055 = vunpack.c.h.b16 %v130
  %v1056 = vunpack.c.l.b16 %v131
  %v1057 = vunpack.c.h.b16 %v131
  %v1058 = vunpack.c.l.b16 %v132
  %v1059 = vunpack.c.h.b16 %v132
  %v1060 = vunpack.c.l.b16 %v133
  %v1061 = vunpack.c.h.b16 %v133
  %v1062 = vunpack.c.l.b16 %v134
  %v1063 = vunpack.c.h.b16 %v134
  %v1064 = vunpack.c.l.b16 %v135
  %v1065 = vunpack.c.h.b16 %v135
  %v1066 = vunpack.c.l.b16 %v136
  %v1067 = vunpack.c.h.b16 %v136
  %v1068 = vunpack.c.l.b16 %v137
  %v1069 = vunpack.c.h.b16 %v137
  %v1070 = vunpack.c.l.b16 %v138
  %v1071 = vunpack.c.h.b16 %v138
  %v1072 = vunpack.c.l.b16 %v139
  %v1073 = vunpack.c.h.b16 %v139
  %v1074 = vunpack.c.l.b16 %v140
  %v1075 = vunpack.c.h.b16 %v140
  %v1076 = vunpack.c.l.b16 %v141
  %v1077 = vunpack.c.h.b16 %v141
  %v1078 = vunpack.c.l.b16 %v142
  %v1079 = vunpack.c.h.b16 %v142
  %v1080 = vunpack.c.l.b16 %v143
  %v1081 = vunpack.c.h.b16 %v143
  %v1082 = vunpack.c.l.b16 %v144
  %v1083 = vunpack.c.h.b16 %v144
  %v1084 = vunpack.c.l.b16 %v145
  %v1085 = vunpack.c.h.b16 %v145
  %v1086 = vunpack.c.l.b16 %v146
  %v1087 = vunpack.c.h.b16 %v146
  %v1088 = vunpack.c.l.b16 %v147
  %v1089 = vunpack.c.h.b16 %v147
  %v1090 = vunpack.c.l.b16 %v148
  %v1091 = vunpack.c.h.b16 %v148
  %v1092 = vunpack.c.l.b16 %v149
  %v1093 = vunpack.c.h.b16 %v149
  %v1094 = vunpack.c.l.b16 %v150
  %v1095 = vunpack.c.h.b16 %v150
  %v1096 = vunpack.c.l.b16 %v151
  %v1097 = vunpack.c.h.b16 %v151
  %v1098 = vunpack.c.l.b16 %v152
  %v1099 = vunpack.c.h.b16 %v152
  %v1100 = vunpack.c.l.b16 %v153
  %v1101 = vunpack.c.h.b16 %v153
  %v1102 = vunpack.c.l.b16 %v154
  %v1103 = vunpack.c.h.b16 %v154
  %v1104 = vunpack.c.l.b16 %v155
  %v1105 = vunpack.c.h.b16 %v155
  %v1106 = vunpack.c.l.b16 %v156
  %v1107 = vunpack.c.h.b16 %v156
  %v1108 = vunpack.c.l.b16 %v157
  %v1109 = vunpack.c.h.b16 %v157
  %v1110 = vunpack.c.l.b16 %v158
  %v1111 = vunpack.c.h.b16 %v158
  %v1112 = vunpack.c.l.b16 %v159
  %v1113 = vunpack.c.h.b16 %v159
  %v1114 = vunpack.c.l.b16 %v160
  %v1115 = vunpack.c.h.b16 %v160
  %v1116 = vunpack.c.l.b16 %v161
  %v1117 = vunpack.c.h.b16 %v161
  %v1118 = vunpack.c.l.b16 %v162
  %v1119 = vunpack.c.h.b16 %v162
  %v1120 = vunpack.c.l.b16 %v163
  %v1121 = vunpack.c.h.b16 %v163
  %v1122 = vunpack.c.l.b16 %v164
  %v1123 = vunpack.c.h.b16 %v164
  %v1124 = vunpack.c.l.b16 %v165
  %v1125 = vunpack.c.h.b16 %v165
  %v1126 = vunpack.c.l.b16 %v166
  %v1127 = vunpack.c.h.b16 %v166
  %v1128 = vunpack.c.l.b16 %v167
  %v1129 = vunpack.c.h.b16 %v167
  %v1130 = vunpack.c.l.b16 %v168
  %v1131 = vunpack.c.h.b16 %v168
  %v1132 = vunpack.c.l.b16 %v169
  %v1133 = vunpack.c.h.b16 %v169
  %v1134 = vunpack.c.l.b16 %v170
  %v1135 = vunpack.c.h.b16 %v170
  %v1136 = vunpack.c.l.b16 %v171
  %v1137 = vunpack.c.h.b16 %v171
  %v1138 = vunpack.c.l.b16 %v172
  %v1139 = vunpack.c.h.b16 %v172
  %v1140 = vunpack.c.l.b16 %v173
  %v1141 = vunpack.c.h.b16 %v173
  %v1142 = vunpack.c.l.b16 %v174
  %v1143 = vunpack.c.h.b16 %v174
  %v1144 = vunpack.c.l.b16 %v175
  %v1145 = vunpack.c.h.b16 %v175
  %v1146 = vunpack.c.l.b16 %v176
  %v1147 = vunpack.c.h.b16 %v176
  %v1148 = vunpack.c.l.b16 %v177
  %v1149 = vunpack.c.h.b16 %v177
  %v1150 = vunpack.c.l.b16 %v178
  %v1151 = vunpack.c.h.b16 %v178
  %v1152 = vunpack.c.l.b16 %v179
  %v1153 = vunpack.c.h.b16 %v179
  %v1154 = vunpack.c.l.b16 %v180
  %v1155 = vunpack.c.h.b16 %v180
  %v1156 = vunpack.c.l.b16 %v181
  %v1157 = vunpack.c.h.b16 %v181
  %v1158 = vunpack.c.l.b16 %v182
  %v1159 = vunpack.c.h.b16 %v182
  %v1160 = vunpack.c.l.b16 %v183
  %v1161 = vunpack.c.h.b16 %v183
  %v1162 = vunpack.c.l.b16 %v184
  %v1163 = vunpack.c.h.b16 %v184
  %v1164 = vunpack.c.l.b16 %v185
  %v1165 = vunpack.c.h.b16 %v185
  %v1166 = vunpack.c.l.b16 %v186
  %v1167 = vunpack.c.h.b16 %v186
  %v1168 = vunpack.c.l.b16 %v187
  %v1169 = vunpack.c.h.b16 %v187
  %v1170 = vunpack.c.l.b16 %v188
  %v1171 = vunpack.c.h.b16 %v188
  %v1172 = vunpack.c.l.b16 %v189
  %v1173 = vunpack.c.h.b16 %v189
  %v1174 = vunpack.c.l.b16 %v190
  %v1175 = vunpack.c.h.b16 %v190
  %v1176 = vunpack.c.l.b16 %v191
  %v1177 = vunpack.c.h.b16 %v191
  %v1178 = vunpack.c.l.b16 %v192
  %v1179 = vunpack.c.h.b16 %v192
  %v1180 = vunpack.c.l.b16 %v193
  %v1181 = vunpack.c.h.b16 %v193
  %v1182 = vunpack.c.l.b16 %v194
  %v1183 = vunpack.c.h.b16 %v194
  %v1184 = vunpack.c.l.b16 %v195
  %v1185 = vunpack.c.h.b16 %v195
  %v1186 = vunpack.c.l.b16 %v196
  %v1187 = vunpack.c.h.b16 %v196
  %v1188 = vunpack.c.l.b16 %v197
  %v1189 = vunpack.c.h.b16 %v197
  %v1190 = vunpack.c.l.b16 %v198
  %v1191 = vunpack.c.h.b16 %v198
  %v1192 = vunpack.c.l.b16 %v199
  %v1193 = vunpack.c.h.b16 %v199
  %v1194 = vunpack.c.l.b16 %v200
  %v1195 = vunpack.c.h.b16 %v200
  %v1196 = vunpack.c.l.b16 %v201
  %v1197 = vunpack.c.h.b16 %v201
  %v1198 = vunpack.c.l.b16 %v202
  %v1199 = vunpack.c.h.b16 %v202
  %v1200 = vunpack.c.l.b16 %v203
  %v1201 = vunpack.c.h.b16 %v203
  %v1202 = vunpack.c.l.b16 %v204
  %v1203 = vunpack.c.h.b16 %v204
  %v1204 = vunpack.c.l.b16 %v205
  %v1205 = vunpack.c.h.b16 %v205
  %v1206 = vunpack.c.l.b16 %v206
  %v1207 = vunpack.c.h.b16 %v206
  %v1208 = vunpack.c.l.b16 %v207
  %v1209 = vunpack.c.h.b16 %v207
  %v1210 = vunpack.c.l.b16 %v208
  %v1211 = vunpack.c.h.b16 %v208
  %v1212 = vunpack.c.l.b16 %v209
  %v1213 = vunpack.c.h.b16 %v209
  %v1214 = vunpack.c.l.b16 %v210
  %v1215 = vunpack.c.h.b16 %v210
  %v1216 = vunpack.c.l.b16 %v211
  %v1217 = vunpack.c.h.b16 %v211
  %v1218 = vunpack.c.l.b16 %v212
  %v1219 = vunpack.c.h.b16 %v212
  %v1220 = vunpack.c.l.b16 %v213
  %v1221 = vunpack.c.h.b16 %v213
  %v1222 = vunpack.c.l.b16 %v214
  %v1223 = vunpack.c.h.b16 %v214
  %v1224 = vunpack.c.l.b16 %v215
  %v1225 = vunpack.c.h.b16 %v215
  %v1226 = vunpack.c.l.b16 %v216
  %v1227 = vunpack.c.h.b16 %v216
  %v1228 = vunpack.c.l.b16 %v217
  %v1229 = vunpack.c.h.b16 %v217
  %v1230 = vunpack.c.l.b16 %v218
  %v1231 = vunpack.c.h.b16 %v218
  %v1232 = vunpack.c.l.b16 %v219
  %v1233 = vunpack.c.h.b16 %v219
  %v1234 = vunpack.c.l.b16 %v220
  %v1235 = vunpack.c.h.b16 %v220
  %v1236 = vunpack.c.l.b16 %v221
  %v1237 = vunpack.c.h.b16 %v221
  %v1238 = vunpack.c.l.b16 %v222
  %v1239 = vunpack.c.h.b16 %v222
  %v1240 = vunpack.c.l.b16 %v223
  %v1241 = vunpack.c.h.b16 %v223
  %v1242 = vunpack.c.l.b16 %v224
  %v1243 = vunpack.c.h.b16 %v224
  %v1244 = vunpack.c.l.b16 %v225
  %v1245 = vunpack.c.h.b16 %v225
  %v1246 = vunpack.c.l.b16 %v226
  %v1247 = vunpack.c.h.b16 %v226
  %v1248 = vunpack.c.l.b16 %v227
  %v1249 = vunpack.c.h.b16 %v227
  %v1250 = vunpack.c.l.b16 %v228
  %v1251 = vunpack.c.h.b16 %v228
  %v1252 = vunpack.c.l.b16 %v229
  %v1253 = vunpack.c.h.b16 %v229
  %v1254 = vunpack.c.l.b16 %v230
  %v1255 = vunpack.c.h.b16 %v230
  %v1256 = vunpack.c.l.b16 %v231
  %v1257 = vunpack.c.h.b16 %v231
  %v1258 = vunpack.c.l.b16 %v232
  %v1259 = vunpack.c.h.b16 %v232
  %v1260 = vunpack.c.l.b16 %v233
  %v1261 = vunpack.c.h.b16 %v233
  %v1262 = vunpack.c.l.b16 %v234
  %v1263 = vunpack.c.h.b16 %v234
  %v1264 = vunpack.c.l.b16 %v235
  %v1265 = vunpack.c.h.b16 %v235
  %v1266 = vunpack.c.l.b16 %v236
  %v1267 = vunpack.c.h.b16 %v236
  %v1268 = vunpack.c.l.b16 %v237
  %v1269 = vunpack.c.h.b16 %v237
  %v1270 = vunpack.c.l.b16 %v238
  %v1271 = vunpack.c.h.b16 %v238
  %v1272 = vunpack.c.l.b16 %v239
  %v1273 = vunpack.c.h.b16 %v239
  %v1274 = vunpack.c.l.b16 %v240
  %v1275 = vunpack.c.h.b16 %v240
  %v1276 = vunpack.c.l.b16 %v241
  %v1277 = vunpack.c.h.b16 %v241
  %v1278 = vunpack.c.l.b16 %v242
  %v1279 = vunpack.c.h.b16 %v242
  %v1280 = vunpack.c.l.b16 %v243
  %v1281 = vunpack.c.h.b16 %v243
  %v1282 = vunpack.c.l.b16 %v244
  %v1283 = vunpack.c.h.b16 %v244
  %v1284 = vunpack.c.l.b16 %v245
  %v1285 = vunpack.c.h.b16 %v245
  %v1286 = vunpack.c.l.b16 %v246
  %v1287 = vunpack.c.h.b16 %v246
  %v1288 = vunpack.c.l.b16 %v247
  %v1289 = vunpack.c.h.b16 %v247
  %v1290 = vunpack.c.l.b16 %v248
  %v1291 = vunpack.c.h.b16 %v248
  %v1292 = vunpack.c.l.b16 %v249
  %v1293 = vunpack.c.h.b16 %v249
  %v1294 = vunpack.c.l.b16 %v250
  %v1295 = vunpack.c.h.b16 %v250
  %v1296 = vunpack.c.l.b16 %v251
  %v1297 = vunpack.c.h.b16 %v251
  %v1298 = vunpack.c.l.b16 %v252
  %v1299 = vunpack.c.h.b16 %v252
  %v1300 = vunpack.c.l.b16 %v253
  %v1301 = vunpack.c.h.b16 %v253
  %v1302 = vunpack.c.l.b16 %v254
  %v1303 = vunpack.c.h.b16 %v254
  %v1304 = vunpack.c.l.b16 %v255
  %v1305 = vunpack.c.h.b16 %v255
  %v1306 = vunpack.c.l.b16 %v256
  %v1307 = vunpack.c.h.b16 %v256
  %v1308 = vunpack.c.l.b16 %v257
  %v1309 = vunpack.c.h.b16 %v257
  %v1310 = vunpack.c.l.b16 %v258
  %v1311 = vunpack.c.h.b16 %v258
  %v1312 = vunpack.c.l.b16 %v259
  %v1313 = vunpack.c.h.b16 %v259
  %v1314 = vunpack.c.l.b16 %v260
  %v1315 = vunpack.c.h.b16 %v260
  %v1316 = vunpack.c.l.b16 %v261
  %v1317 = vunpack.c.h.b16 %v261
  %v1318 = vunpack.c.l.b16 %v262
  %v1319 = vunpack.c.h.b16 %v262
  %v1320 = vunpack.c.l.b16 %v263
  %v1321 = vunpack.c.h.b16 %v263
  %v1322 = vunpack.c.l.b16 %v264
  %v1323 = vunpack.c.h.b16 %v264
  %v1324 = vunpack.c.l.b16 %v265
  %v1325 = vunpack.c.h.b16 %v265
  %v1326 = vunpack.c.l.b16 %v266
  %v1327 = vunpack.c.h.b16 %v266
  %v1328 = vunpack.c.l.b16 %v267
  %v1329 = vunpack.c.h.b16 %v267
  %v1330 = vunpack.c.l.b16 %v268
  %v1331 = vunpack.c.h.b16 %v268
  %v1332 = vunpack.c.l.b16 %v269
  %v1333 = vunpack.c.h.b16 %v269
  %v1334 = vunpack.c.l.b16 %v270
  %v1335 = vunpack.c.h.b16 %v270
  %v1336 = vunpack.c.l.b16 %v271
  %v1337 = vunpack.c.h.b16 %v271
  %v1338 = vunpack.c.l.b16 %v272
  %v1339 = vunpack.c.h.b16 %v272
  %v1340 = vunpack.c.l.b16 %v273
  %v1341 = vunpack.c.h.b16 %v273
  %v1342 = vunpack.c.l.b16 %v274
  %v1343 = vunpack.c.h.b16 %v274
  %v1344 = vunpack.c.l.b16 %v275
  %v1345 = vunpack.c.h.b16 %v275
  %v1346 = vunpack.c.l.b16 %v276
  %v1347 = vunpack.c.h.b16 %v276
  %v1348 = vunpack.c.l.b16 %v277
  %v1349 = vunpack.c.h.b16 %v277
  %v1350 = vunpack.c.l.b16 %v278
  %v1351 = vunpack.c.h.b16 %v278
  %v1352 = vunpack.c.l.b16 %v279
  %v1353 = vunpack.c.h.b16 %v279
  %v1354 = vunpack.c.l.b16 %v280
  %v1355 = vunpack.c.h.b16 %v280
  %v1356 = vunpack.c.l.b16 %v281
  %v1357 = vunpack.c.h.b16 %v281
  %v1358 = vunpack.c.l.b16 %v282
  %v1359 = vunpack.c.h.b16 %v282
  %v1360 = vunpack.c.l.b16 %v283
  %v1361 = vunpack.c.h.b16 %v283
  %v1362 = vunpack.c.l.b16 %v284
  %v1363 = vunpack.c.h.b16 %v284
  %v1364 = vunpack.c.l.b16 %v285
  %v1365 = vunpack.c.h.b16 %v285
  %v1366 = vunpack.c.l.b16 %v286
  %v1367 = vunpack.c.h.b16 %v286
  %v1368 = vunpack.c.l.b16 %v287
  %v1369 = vunpack.c.h.b16 %v287
  %v1370 = vunpack.c.l.b16 %v288
  %v1371 = vunpack.c.h.b16 %v288
  %v1372 = vunpack.c.l.b16 %v289
  %v1373 = vunpack.c.h.b16 %v289
  %v1374 = vunpack.c.l.b16 %v290
  %v1375 = vunpack.c.h.b16 %v290
  %v1376 = vunpack.c.l.b16 %v291
  %v1377 = vunpack.c.h.b16 %v291
  %v1378 = vunpack.c.l.b16 %v292
  %v1379 = vunpack.c.h.b16 %v292
  %v1380 = vunpack.c.l.b16 %v293
  %v1381 = vunpack.c.h.b16 %v293
  %v1382 = vunpack.c.l.b16 %v294
  %v1383 = vunpack.c.h.b16 %v294
  %v1384 = vunpack.c.l.b16 %v295
  %v1385 = vunpack.c.h.b16 %v295
  %v1386 = vunpack.c.l.b16 %v296
  %v1387 = vunpack.c.h.b16 %v296
  %v1388 = vunpack.c.l.b16 %v297
  %v1389 = vunpack.c.h.b16 %v297
  %v1390 = vunpack.c.l.b16 %v298
  %v1391 = vunpack.c.h.b16 %v298
  %v1392 = vunpack.c.l.b16 %v299
  %v1393 = vunpack.c.h.b16 %v299
  %v1394 = vunpack.c.l.b16 %v300
  %v1395 = vunpack.c.h.b16 %v300
  %v1396 = vunpack.c.l.b16 %v301
  %v1397 = vunpack.c.h.b16 %v301
  %v1398 = vunpack.c.l.b16 %v302
  %v1399 = vunpack.c.h.b16 %v302
  %v1400 = vunpack.c.l.b16 %v303
  %v1401 = vunpack.c.h.b16 %v303
  %v1402 = vunpack.c.l.b16 %v304
  %v1403 = vunpack.c.h.b16 %v304
  %v1404 = vunpack.c.l.b16 %v305
  %v1405 = vunpack.c.h.b16 %v305
  %v1406 = vunpack.c.l.b16 %v306
  %v1407 = vunpack.c.h.b16 %v306
  %v1408 = vunpack.c.l.b16 %v307
  %v1409 = vunpack.c.h.b16 %v307
  %v1410 = vunpack.c.l.b16 %v308
  %v1411 = vunpack.c.h.b16 %v308
  %v1412 = vunpack.c.l.b16 %v309
  %v1413 = vunpack.c.h.b16 %v309
  %v1414 = vunpack.c.l.b16 %v310
  %v1415 = vunpack.c.h.b16 %v310
  %v1416 = vunpack.c.l.b16 %v311
  %v1417 = vunpack.c.h.b16 %v311
  %v1418 = vunpack.c.l.b16 %v312
  %v1419 = vunpack.c.h.b16 %v312
  %v1420 = vunpack.c.l.b16 %v313
  %v1421 = vunpack.c.h.b16 %v313
  %v1422 = vunpack.c.l.b16 %v314
  %v1423 = vunpack.c.h.b16 %v314
  %v1424 = vunpack.c.l.b16 %v315
  %v1425 = vunpack.c.h.b16 %v315
  %v1426 = vunpack.c.l.b16 %v316
  %v1427 = vunpack.c.h.b16 %v316
  %v1428 = vunpack.c.l.b16 %v317
  %v1429 = vunpack.c.h.b16 %v317
  %v1430 = vunpack.c.l.b16 %v318
  %v1431 = vunpack.c.h.b16 %v318
  %v1432 = vunpack.c.l.b16 %v319
  %v1433 = vunpack.c.h.b16 %v319
  %v1434 = vunpack.c.l.b16 %v320
  %v1435 = vunpack.c.h.b16 %v320
  %v1436 = vunpack.c.l.b16 %v321
  %v1437 = vunpack.c.h.b16 %v321
  %v1438 = vunpack.c.l.b16 %v322
  %v1439 = vunpack.c.h.b16 %v322
  %v1440 = vunpack.c.l.b16 %v323
  %v1441 = vunpack.c.h.b16 %v323
  %v1442 = vunpack.c.l.b16 %v324
  %v1443 = vunpack.c.h.b16 %v324
  %v1444 = vunpack.c.l.b16 %v325
  %v1445 = vunpack.c.h.b16 %v325
  %v1446 = vunpack.c.l.b16 %v326
  %v1447 = vunpack.c.h.b16 %v326
  %v1448 = vunpack.c.l.b16 %v327
  %v1449 = vunpack.c.h.b16 %v327
  %v1450 = vunpack.c.l.b16 %v328
  %v1451 = vunpack.c.h.b16 %v328
  %v1452 = vunpack.c.l.b16 %v329
  %v1453 = vunpack.c.h.b16 %v329
  %v1454 = vunpack.c.l.b16 %v330
  %v1455 = vunpack.c.h.b16 %v330
  %v1456 = vunpack.c.l.b16 %v331
  %v1457 = vunpack.c.h.b16 %v331
  %v1458 = vunpack.c.l.b16 %v332
  %v1459 = vunpack.c.h.b16 %v332
  %v1460 = vunpack.c.l.b16 %v333
  %v1461 = vunpack.c.h.b16 %v333
  %v1462 = vunpack.c.l.b16 %v334
  %v1463 = vunpack.c.h.b16 %v334
  %v1464 = vunpack.c.l.b16 %v335
  %v1465 = vunpack.c.h.b16 %v335
  %v1466 = vunpack.c.l.b16 %v336
  %v1467 = vunpack.c.h.b16 %v336
  %v1468 = vunpack.c.l.b16 %v337
  %v1469 = vunpack.c.h.b16 %v337
  %v1470 = vunpack.c.l.b16 %v338
  %v1471 = vunpack.c.h.b16 %v338
  %v1472 = vunpack.c.l.b16 %v339
  %v1473 = vunpack.c.h.b16 %v339
  %v1474 = vunpack.c.l.b16 %v340
  %v1475 = vunpack.c.h.b16 %v340
  %v1476 = vunpack.c.l.b16 %v341
  %v1477 = vunpack.c.h.b16 %v341
  %v1478 = vunpack.c.l.b16 %v342
  %v1479 = vunpack.c.h.b16 %v342
  %v1480 = vunpack.c.l.b16 %v343
  %v1481 = vunpack.c.h.b16 %v343
  %v1482 = vunpack.c.l.b16 %v344
  %v1483 = vunpack.c.h.b16 %v344
  %v1484 = vunpack.c.l.b16 %v345
  %v1485 = vunpack.c.h.b16 %v345
  %v1486 = vunpack.c.l.b16 %v346
  %v1487 = vunpack.c.h.b16 %v346
  %v1488 = vunpack.c.l.b16 %v347
  %v1489 = vunpack.c.h.b16 %v347
  %v1490 = vunpack.c.l.b16 %v348
  %v1491 = vunpack.c.h.b16 %v348
  %v1492 = vunpack.c.l.b16 %v349
  %v1493 = vunpack.c.h.b16 %v349
  %v1494 = vunpack.c.l.b16 %v350
  %v1495 = vunpack.c.h.b16 %v350
  %v1496 = vunpack.c.l.b16 %v351
  %v1497 = vunpack.c.h.b16 %v351
  %v1498 = vunpack.c.l.b16 %v352
  %v1499 = vunpack.c.h.b16 %v352
  %v1500 = vunpack.c.l.b16 %v353
  %v1501 = vunpack.c.h.b16 %v353
  %v1502 = vunpack.c.l.b16 %v354
  %v1503 = vunpack.c.h.b16 %v354
  %v1504 = vunpack.c.l.b16 %v355
  %v1505 = vunpack.c.h.b16 %v355
  %v1506 = vunpack.c.l.b16 %v356
  %v1507 = vunpack.c.h.b16 %v356
  %v1508 = vunpack.c.l.b16 %v357
  %v1509 = vunpack.c.h.b16 %v357
  %v1510 = vunpack.c.l.b16 %v358
  %v1511 = vunpack.c.h.b16 %v358
  %v1512 = vunpack.c.l.b16 %v359
  %v1513 = vunpack.c.h.b16 %v359
  %v1514 = vunpack.c.l.b16 %v360
  %v1515 = vunpack.c.h.b16 %v360
  %v1516 = vunpack.c.l.b16 %v361
  %v1517 = vunpack.c.h.b16 %v361
  %v1518 = vunpack.c.l.b16 %v362
  %v1519 = vunpack.c.h.b16 %v362
  %v1520 = vunpack.c.l.b16 %v363
  %v1521 = vunpack.c.h.b16 %v363
  %v1522 = vunpack.c.l.b16 %v364
  %v1523 = vunpack.c.h.b16 %v364
  %v1524 = vunpack.c.l.b16 %v365
  %v1525 = vunpack.c.h.b16 %v365
  %v1526 = vunpack.c.l.b16 %v366
  %v1527 = vunpack.c.h.b16 %v366
  %v1528 = vunpack.c.l.b16 %v367
  %v1529 = vunpack.c.h.b16 %v367
  %v1530 = vunpack.c.l.b16 %v368
  %v1531 = vunpack.c.h.b16 %v368
  %v1532 = vunpack.c.l.b16 %v369
  %v1533 = vunpack.c.h.b16 %v369
  %v1534 = vunpack.c.l.b16 %v370
  %v1535 = vunpack.c.h.b16 %v370
  %v1536 = vunpack.c.l.b16 %v371
  %v1537 = vunpack.c.h.b16 %v371
  %v1538 = vunpack.c.l.b16 %v372
  %v1539 = vunpack.c.h.b16 %v372
  %v1540 = vunpack.c.l.b16 %v373
  %v1541 = vunpack.c.h.b16 %v373
  %v1542 = vunpack.c.l.b16 %v374
  %v1543 = vunpack.c.h.b16 %v374
  %v1544 = vunpack.c.l.b16 %v375
  %v1545 = vunpack.c.h.b16 %v375
  %v1546 = vunpack.c.l.b16 %v376
  %v1547 = vunpack.c.h.b16 %v376
  %v1548 = vunpack.c.l.b16 %v377
  %v1549 = vunpack.c.h.b16 %v377
  %v1550 = vunpack.c.l.b16 %v378
  %v1551 = vunpack.c.h.b16 %v378
  %v1552 = vunpack.c.l.b16 %v379
  %v1553 = vunpack.c.h.b16 %v379
  %v1554 = vunpack.c.l.b16 %v380
  %v1555 = vunpack.c.h.b16 %v380
  %v1556 = vunpack.c.l.b16 %v381
  %v1557 = vunpack.c.h.b16 %v381
  %v1558 = vunpack.c.l.b16 %v382
  %v1559 = vunpack.c.h.b16 %v382
  %v1560 = vunpack.c.l.b16 %v383
  %v1561 = vunpack.c.h.b16 %v383
  %v1562 = vunpack.c.l.b16 %v384
  %v1563 = vunpack.c.h.b16 %v384
  %v1564 = vunpack.c.l.b16 %v385
  %v1565 = vunpack.c.h.b16 %v385
  %v1566 = vunpack.c.l.b16 %v386
  %v1567 = vunpack.c.h.b16 %v386
  %v1568 = vunpack.c.l.b16 %v387
  %v1569 = vunpack.c.h.b16 %v387
  %v1570 = vunpack.c.l.b16 %v388
  %v1571 = vunpack.c.h.b16 %v388
  %v1572 = vunpack.c.l.b16 %v389
  %v1573 = vunpack.c.h.b16 %v389
  %v1574 = vunpack.c.l.b16 %v390
  %v1575 = vunpack.c.h.b16 %v390
  %v1576 = vunpack.c.l.b16 %v391
  %v1577 = vunpack.c.h.b16 %v391
  %v1578 = vunpack.c.l.b16 %v392
  %v1579 = vunpack.c.h.b16 %v392
  %v1580 = vunpack.c.l.b16 %v393
  %v1581 = vunpack.c.h.b16 %v393
  %v1582 = vunpack.c.l.b16 %v394
  %v1583 = vunpack.c.h.b16 %v394
  %v1584 = vunpack.c.l.b16 %v395
  %v1585 = vunpack.c.h.b16 %v395
  %v1586 = vunpack.c.l.b16 %v396
  %v1587 = vunpack.c.h.b16 %v396
  %v1588 = vunpack.c.l.b16 %v397
  %v1589 = vunpack.c.h.b16 %v397
  %v1590 = vunpack.c.l.b16 %v398
  %v1591 = vunpack.c.h.b16 %v398
  %v1592 = vunpack.c.l.b16 %v399
  %v1593 = vunpack.c.h.b16 %v399
  %v1594 = vunpack.c.l.b16 %v400
  %v1595 = vunpack.c.h.b16 %v400
  %v1596 = vunpack.c.l.b16 %v401
  %v1597 = vunpack.c.h.b16 %v401
  %v1598 = vpack.c.b16 %v886, %v878
  %v1599 = vpack.c.b16 %v887, %v879
  %v1600 = vpack.c.b16 %v888, %v880
  %v1601 = vpack.c.b16 %v889, %v881
  %v1602 = vpack.c.b16 %v890, %v882
  %v1603 = vpack.c.b16 %v891, %v883
  %v1604 = vpack.c.b16 %v892, %v884
  %v1605 = vpack.c.b16 %v893, %v885
  %v1606 = vpack.c.b16 %v902, %v894
  %v1607 = vpack.c.b16 %v903, %v895
  %v1608 = vpack.c.b16 %v904, %v896
  %v1609 = vpack.c.b16 %v905, %v897
  %v1610 = vpack.c.b16 %v906, %v898
  %v1611 = vpack.c.b16 %v907, %v899
  %v1612 = vpack.c.b16 %v908, %v900
  %v1613 = vpack.c.b16 %v909, %v901
  %v1614 = vpack.c.b16 %v918, %v910
  %v1615 = vpack.c.b16 %v919, %v911
  %v1616 = vpack.c.b16 %v920, %v912
  %v1617 = vpack.c.b16 %v921, %v913
  %v1618 = vpack.c.b16 %v922, %v914
  %v1619 = vpack.c.b16 %v923, %v915
  %v1620 = vpack.c.b16 %v924, %v916
  %v1621 = vpack.c.b16 %v925, %v917
  %v1622 = vpack.c.b16 %v934, %v926
  %v1623 = vpack.c.b16 %v935, %v927
  %v1624 = vpack.c.b16 %v936, %v928
  %v1625 = vpack.c.b16 %v937, %v929
  %v1626 = vpack.c.b16 %v938, %v930
  %v1627 = vpack.c.b16 %v939, %v931
  %v1628 = vpack.c.b16 %v940, %v932
  %v1629 = vpack.c.b16 %v941, %v933
  %v1630 = vpack.c.b16 %v950, %v942
  %v1631 = vpack.c.b16 %v951, %v943
  %v1632 = vpack.c.b16 %v952, %v944
  %v1633 = vpack.c.b16 %v953, %v945
  %v1634 = vpack.c.b16 %v954, %v946
  %v1635 = vpack.c.b16 %v955, %v947
  %v1636 = vpack.c.b16 %v956, %v948
  %v1637 = vpack.c.b16 %v957, %v949
  %v1638 = vpack.c.b16 %v966, %v958
  %v1639 = vpack.c.b16 %v967, %v959
  %v1640 = vpack.c.b16 %v968, %v960
  %v1641 = vpack.c.b16 %v969, %v961
  %v1642 = vpack.c.b16 %v970, %v962
  %v1643 = vpack.c.b16 %v971, %v963
  %v1644 = vpack.c.b16 %v972, %v964
  %v1645 = vpack.c.b16 %v973, %v965
  %v1646 = vpack.c.b16 %v982, %v974
  %v1647 = vpack.c.b16 %v983, %v975
  %v1648 = vpack.c.b16 %v984, %v976
  %v1649 = vpack.c.b16 %v985, %v977
  %v1650 = vpack.c.b16 %v986, %v978
  %v1651 = vpack.c.b16 %v987, %v979
  %v1652 = vpack.c.b16 %v988, %v980
  %v1653 = vpack.c.b16 %v989, %v981
  %v1654 = vpack.c.b16 %v998, %v990
  %v1655 = vpack.c.b16 %v999, %v991
  %v1656 = vpack.c.b16 %v1000, %v992
  %v1657 = vpack.c.b16 %v1001, %v993
  %v1658 = vpack.c.b16 %v1002, %v994
  %v1659 = vpack.c.b16 %v1003, %v995
  %v1660 = vpack.c.b16 %v1004, %v996
  %v1661 = vpack.c.b16 %v1005, %v997
  %v1662 = vpack.c.b16 %v1014, %v1006
  %v1663 = vpack.c.b16 %v1015, %v1007
  %v1664 = vpack.c.b16 %v1016, %v1008
  %v1665 = vpack.c.b16 %v1017, %v1009
  %v1666 = vpack.c.b16 %v1018, %v1010
  %v1667 = vpack.c.b16 %v1019, %v1011
  %v1668 = vpack.c.b16 %v1020, %v1012
  %v1669 = vpack.c.b16 %v1021, %v1013
  %v1670 = vpack.c.b16 %v1030, %v1022
  %v1671 = vpack.c.b16 %v1031, %v1023
  %v1672 = vpack.c.b16 %v1032, %v1024
  %v1673 = vpack.c.b16 %v1033, %v1025
  %v1674 = vpack.c.b16 %v1034, %v1026
  %v1675 = vpack.c.b16 %v1035, %v1027
  %v1676 = vpack.c.b16 %v1036, %v1028
  %v1677 = vpack.c.b16 %v1037, %v1029
  %v1678 = vpack.c.b16 %v1046, %v1038
  %v1679 = vpack.c.b16 %v1047, %v1039
  %v1680 = vpack.c.b16 %v1048, %v1040
  %v1681 = vpack.c.b16 %v1049, %v1041
  %v1682 = vpack.c.b16 %v1050, %v1042
  %v1683 = vpack.c.b16 %v1051, %v1043
  %v1684 = vpack.c.b16 %v1052, %v1044
  %v1685 = vpack.c.b16 %v1053, %v1045
  %v1686 = vpack.c.b16 %v1062, %v1054
  %v1687 = vpack.c.b16 %v1063, %v1055
  %v1688 = vpack.c.b16 %v1064, %v1056
  %v1689 = vpack.c.b16 %v1065, %v1057
  %v1690 = vpack.c.b16 %v1066, %v1058
  %v1691 = vpack.c.b16 %v1067, %v1059
  %v1692 = vpack.c.b16 %v1068, %v1060
  %v1693 = vpack.c.b16 %v1069, %v1061
  %v1694 = vpack.c.b16 %v1078, %v1070
  %v1695 = vpack.c.b16 %v1079, %v1071
  %v1696 = vpack.c.b16 %v1080, %v1072
  %v1697 = vpack.c.b16 %v1081, %v1073
  %v1698 = vpack.c.b16 %v1082, %v1074
  %v1699 = vpack.c.b16 %v1083, %v1075
  %v1700 = vpack.c.b16 %v1084, %v1076
  %v1701 = vpack.c.b16 %v1085, %v1077
  %v1702 = vpack.c.b16 %v1094, %v1086
  %v1703 = vpack.c.b16 %v1095, %v1087
  %v1704 = vpack.c.b16 %v1096, %v1088
  %v1705 = vpack.c.b16 %v1097, %v1089
  %v1706 = vpack.c.b16 %v1098, %v1090
  %v1707 = vpack.c.b16 %v1099, %v1091
  %v1708 = vpack.c.b16 %v1100, %v1092
  %v1709 = vpack.c.b16 %v1101, %v1093
  %v1710 = vpack.c.b16 %v1110, %v1102
  %v1711 = vpack.c.b16 %v1111, %v1103
  %v1712 = vpack.c.b16 %v1112, %v1104
  %v1713 = vpack.c.b16 %v1113, %v1105
  %v1714 = vpack.c.b16 %v1114, %v1106
  %v1715 = vpack.c.b16 %v1115, %v1107
  %v1716 = vpack.c.b16 %v1116, %v1108
  %v1717 = vpack.c.b16 %v1117, %v1109
  %v1718 = vpack.c.b16 %v1126, %v1118
  %v1719 = vpack.c.b16 %v1127, %v1119
  %v1720 = vpack.c.b16 %v1128, %v1120
  %v1721 = vpack.c.b16 %v1129, %v1121
  %v1722 = vpack.c.b16 %v1130, %v1122
  %v1723 = vpack.c.b16 %v1131, %v1123
  %v1724 = vpack.c.b16 %v1132, %v1124
  %v1725 = vpack.c.b16 %v1133, %v1125
  %v1726 = vpack.c.b16 %v1142, %v1134
  %v1727 = vpack.c.b16 %v1143, %v1135
  %v1728 = vpack.c.b16 %v1144, %v1136
  %v1729 = vpack.c.b16 %v1145, %v1137
  %v1730 = vpack.c.b16 %v1146, %v1138
  %v1731 = vpack.c.b16 %v1147, %v1139
  %v1732 = vpack.c.b16 %v1148, %v1140
  %v1733 = vpack.c.b16 %v1149, %v1141
  %v1734 = vpack.c.b16 %v1158, %v1150
  %v1735 = vpack.c.b16 %v1159, %v1151
  %v1736 = vpack.c.b16 %v1160, %v1152
  %v1737 = vpack.c.b16 %v1161, %v1153
  %v1738 = vpack.c.b16 %v1162, %v1154
  %v1739 = vpack.c.b16 %v1163, %v1155
  %v1740 = vpack.c.b16 %v1164, %v1156
  %v1741 = vpack.c.b16 %v1165, %v1157
  %v1742 = vpack.c.b16 %v1174, %v1166
  %v1743 = vpack.c.b16 %v1175, %v1167
  %v1744 = vpack.c.b16 %v1176, %v1168
  %v1745 = vpack.c.b16 %v1177, %v1169
  %v1746 = vpack.c.b16 %v1178, %v1170
  %v1747 = vpack.c.b16 %v1179, %v1171
  %v1748 = vpack.c.b16 %v1180, %v1172
  %v1749 = vpack.c.b16 %v1181, %v1173
  %v1750 = vpack.c.b16 %v1190, %v1182
  %v1751 = vpack.c.b16 %v1191, %v1183
  %v1752 = vpack.c.b16 %v1192, %v1184
  %v1753 = vpack.c.b16 %v1193, %v1185
  %v1754 = vpack.c.b16 %v1194, %v1186
  %v1755 = vpack.c.b16 %v1195, %v1187
  %v1756 = vpack.c.b16 %v1196, %v1188
  %v1757 = vpack.c.b16 %v1197, %v1189
  %v1758 = vpack.c.b16 %v1206, %v1198
  %v1759 = vpack.c.b16 %v1207, %v1199
  %v1760 = vpack.c.b16 %v1208, %v1200
  %v1761 = vpack.c.b16 %v1209, %v1201
  %v1762 = vpack.c.b16 %v1210, %v1202
  %v1763 = vpack.c.b16 %v1211, %v1203
  %v1764 = vpack.c.b16 %v1212, %v1204
  %v1765 = vpack.c.b16 %v1213, %v1205
  %v1766 = vpack.c.b16 %v1222, %v1214
  %v1767 = vpack.c.b16 %v1223, %v1215
  %v1768 = vpack.c.b16 %v1224, %v1216
  %v1769 = vpack.c.b16 %v1225, %v1217
  %v1770 = vpack.c.b16 %v1226, %v1218
  %v1771 = vpack.c.b16 %v1227, %v1219
  %v1772 = vpack.c.b16 %v1228, %v1220
  %v1773 = vpack.c.b16 %v1229, %v1221
  %v1774 = vpack.c.b16 %v1238, %v1230
  %v1775 = vpack.c.b16 %v1239, %v1231
  %v1776 = vpack.c.b16 %v1240, %v1232
  %v1777 = vpack.c.b16 %v1241, %v1233
  %v1778 = vpack.c.b16 %v1242, %v1234
  %v1779 = vpack.c.b16 %v1243, %v1235
  %v1780 = vpack.c.b16 %v1244, %v1236
  %v1781 = vpack.c.b16 %v1245, %v1237
  %v1782 = vpack.c.b16 %v1254, %v1246
  %v1783 = vpack.c.b16 %v1255, %v1247
  %v1784 = vpack.c.b16 %v1256, %v1248
  %v1785 = vpack.c.b16 %v1257, %v1249
  %v1786 = vpack.c.b16 %v1258, %v1250
  %v1787 = vpack.c.b16 %v1259, %v1251
  %v1788 = vpack.c.b16 %v1260, %v1252
  %v1789 = vpack.c.b16 %v1261, %v1253
  %v1790 = vpack.c.b16 %v1270, %v1262
  %v1791 = vpack.c.b16 %v1271, %v1263
  %v1792 = vpack.c.b16 %v1272, %v1264
  %v1793 = vpack.c.b16 %v1273, %v1265
  %v1794 = vpack.c.b16 %v1274, %v1266
  %v1795 = vpack.c.b16 %v1275, %v1267
  %v1796 = vpack.c.b16 %v1276, %v1268
  %v1797 = vpack.c.b16 %v1277, %v1269
  %v1798 = vpack.c.b16 %v1286, %v1278
  %v1799 = vpack.c.b16 %v1287, %v1279
  %v1800 = vpack.c.b16 %v1288, %v1280
  %v1801 = vpack.c.b16 %v1289, %v1281
  %v1802 = vpack.c.b16 %v1290, %v1282
  %v1803 = vpack.c.b16 %v1291, %v1283
  %v1804 = vpack.c.b16 %v1292, %v1284
  %v1805 = vpack.c.b16 %v1293, %v1285
  %v1806 = vpack.c.b16 %v1302, %v1294
  %v1807 = vpack.c.b16 %v1303, %v1295
  %v1808 = vpack.c.b16 %v1304, %v1296
  %v1809 = vpack.c.b16 %v1305, %v1297
  %v1810 = vpack.c.b16 %v1306, %v1298
  %v1811 = vpack.c.b16 %v1307, %v1299
  %v1812 = vpack.c.b16 %v1308, %v1300
  %v1813 = vpack.c.b16 %v1309, %v1301
  %v1814 = vpack.c.b16 %v1318, %v1310
  %v1815 = vpack.c.b16 %v1319, %v1311
  %v1816 = vpack.c.b16 %v1320, %v1312
  %v1817 = vpack.c.b16 %v1321, %v1313
  %v1818 = vpack.c.b16 %v1322, %v1314
  %v1819 = vpack.c.b16 %v1323, %v1315
  %v1820 = vpack.c.b16 %v1324, %v1316
  %v1821 = vpack.c.b16 %v1325, %v1317
  %v1822 = vpack.c.b16 %v1334, %v1326
  %v1823 = vpack.c.b16 %v1335, %v1327
  %v1824 = vpack.c.b16 %v1336, %v1328
  %v1825 = vpack.c.b16 %v1337, %v1329
  %v1826 = vpack.c.b16 %v1338, %v1330
  %v1827 = vpack.c.b16 %v1339, %v1331
  %v1828 = vpack.c.b16 %v1340, %v1332
  %v1829 = vpack.c.b16 %v1341, %v1333
  %v1830 = vpack.c.b16 %v1350, %v1342
  %v1831 = vpack.c.b16 %v1351, %v1343
  %v1832 = vpack.c.b16 %v1352, %v1344
  %v1833 = vpack.c.b16 %v1353, %v1345
  %v1834 = vpack.c.b16 %v1354, %v1346
  %v1835 = vpack.c.b16 %v1355, %v1347
  %v1836 = vpack.c.b16 %v1356, %v1348
  %v1837 = vpack.c.b16 %v1357, %v1349
  %v1838 = vpack.c.b16 %v1366, %v1358
  %v1839 = vpack.c.b16 %v1367, %v1359
  %v1840 = vpack.c.b16 %v1368, %v1360
  %v1841 = vpack.c.b16 %v1369, %v1361
  %v1842 = vpack.c.b16 %v1370, %v1362
  %v1843 = vpack.c.b16 %v1371, %v1363
  %v1844 = vpack.c.b16 %v1372, %v1364
  %v1845 = vpack.c.b16 %v1373, %v1365
  %v1846 = vpack.c.b16 %v1382, %v1374
  %v1847 = vpack.c.b16 %v1383, %v1375
  %v1848 = vpack.c.b16 %v1384, %v1376
  %v1849 = vpack.c.b16 %v1385, %v1377
  %v1850 = vpack.c.b16 %v1386, %v1378
  %v1851 = vpack.c.b16 %v1387, %v1379
  %v1852 = vpack.c.b16 %v1388, %v1380
  %v1853 = vpack.c.b16 %v1389, %v1381
  %v1854 = vpack.c.b16 %v1398, %v1390
  %v1855 = vpack.c.b16 %v1399, %v1391
  %v1856 = vpack.c.b16 %v1400, %v1392
  %v1857 = vpack.c.b16 %v1401, %v1393
  %v1858 = vpack.c.b16 %v1402, %v1394
  %v1859 = vpack.c.b16 %v1403, %v1395
  %v1860 = vpack.c.b16 %v1404, %v1396
  %v1861 = vpack.c.b16 %v1405, %v1397
  %v1862 = vpack.c.b16 %v1414, %v1406
  %v1863 = vpack.c.b16 %v1415, %v1407
  %v1864 = vpack.c.b16 %v1416, %v1408
  %v1865 = vpack.c.b16 %v1417, %v1409
  %v1866 = vpack.c.b16 %v1418, %v1410
  %v1867 = vpack.c.b16 %v1419, %v1411
  %v1868 = vpack.c.b16 %v1420, %v1412
  %v1869 = vpack.c.b16 %v1421, %v1413
  %v1870 = vpack.c.b16 %v1430, %v1422
  %v1871 = vpack.c.b16 %v1431, %v1423
  %v1872 = vpack.c.b16 %v1432, %v1424
  %v1873 = vpack.c.b16 %v1433, %v1425
  %v1874 = vpack.c.b16 %v1434, %v1426
  %v1875 = vpack.c.b16 %v1435, %v1427
  %v1876 = vpack.c.b16 %v1436, %v1428
  %v1877 = vpack.c.b16 %v1437, %v1429
  %v1878 = vpack.c.b16 %v1446, %v1438
  %v1879 = vpack.c.b16 %v1447, %v1439
  %v1880 = vpack.c.b16 %v1448, %v1440
  %v1881 = vpack.c.b16 %v1449, %v1441
  %v1882 = vpack.c.b16 %v1450, %v1442
  %v1883 = vpack.c.b16 %v1451, %v1443
  %v1884 = vpack.c.b16 %v1452, %v1444
  %v1885 = vpack.c.b16 %v1453, %v1445
  %v1886 = vpack.c.b16 %v1462, %v1454
  %v1887 = vpack.c.b16 %v1463, %v1455
  %v1888 = vpack.c.b16 %v1464, %v1456
  %v1889 = vpack.c.b16 %v1465, %v1457
  %v1890 = vpack.c.b16 %v1466, %v1458
  %v1891 = vpack.c.b16 %v1467, %v1459
  %v1892 = vpack.c.b16 %v1468, %v1460
  %v1893 = vpack.c.b16 %v1469, %v1461
  %v1894 = vpack.c.b16 %v1478, %v1470
  %v1895 = vpack.c.b16 %v1479, %v1471
  %v1896 = vpack.c.b16 %v1480, %v1472
  %v1897 = vpack.c.b16 %v1481, %v1473
  %v1898 = vpack.c.b16 %v1482, %v1474
  %v1899 = vpack.c.b16 %v1483, %v1475
  %v1900 = vpack.c.b16 %v1484, %v1476
  %v1901 = vpack.c.b16 %v1485, %v1477
  %v1902 = vpack.c.b16 %v1494, %v1486
  %v1903 = vpack.c.b16 %v1495, %v1487
  %v1904 = vpack.c.b16 %v1496, %v1488
  %v1905 = vpack.c.b16 %v1497, %v1489
  %v1906 = vpack.c.b16 %v1498, %v1490
  %v1907 = vpack.c.b16 %v1499, %v1491
  %v1908 = vpack.c.b16 %v1500, %v1492
  %v1909 = vpack.c.b16 %v1501, %v1493
  %v1910 = vpack.c.b16 %v1510, %v1502
  %v1911 = vpack.c.b16 %v1511, %v1503
  %v1912 = vpack.c.b16 %v1512, %v1504
  %v1913 = vpack.c.b16 %v1513, %v1505
  %v1914 = vpack.c.b16 %v1514, %v1506
  %v1915 = vpack.c.b16 %v1515, %v1507
  %v1916 = vpack.c.b16 %v1516, %v1508
  %v1917 = vpack.c.b16 %v1517, %v1509
  %v1918 = vpack.c.b16 %v1526, %v1518
  %v1919 = vpack.c.b16 %v1527, %v1519
  %v1920 = vpack.c.b16 %v1528, %v1520
  %v1921 = vpack.c.b16 %v1529, %v1521
  %v1922 = vpack.c.b16 %v1530, %v1522
  %v1923 = vpack.c.b16 %v1531, %v1523
  %v1924 = vpack.c.b16 %v1532, %v1524
  %v1925 = vpack.c.b16 %v1533, %v1525
  %v1926 = vpack.c.b16 %v1542, %v1534
  %v1927 = vpack.c.b16 %v1543, %v1535
  %v1928 = vpack.c.b16 %v1544, %v1536
  %v1929 = vpack.c.b16 %v1545, %v1537
  %v1930 = vpack.c.b16 %v1546, %v1538
  %v1931 = vpack.c.b16 %v1547, %v1539
  %v1932 = vpack.c.b16 %v1548, %v1540
  %v1933 = vpack.c.b16 %v1549, %v1541
  %v1934 = vpack.c.b16 %v1558, %v1550
  %v1935 = vpack.c.b16 %v1559, %v1551
  %v1936 = vpack.c.b16 %v1560, %v1552
  %v1937 = vpack.c.b16 %v1561, %v1553
  %v1938 = vpack.c.b16 %v1562, %v1554
  %v1939 = vpack.c.b16 %v1563, %v1555
  %v1940 = vpack.c.b16 %v1564, %v1556
  %v1941 = vpack.c.b16 %v1565, %v1557
  %v1942 = vpack.c.b16 %v1574, %v1566
  %v1943 = vpack.c.b16 %v1575, %v1567
  %v1944 = vpack.c.b16 %v1576, %v1568
  %v1945 = vpack.c.b16 %v1577, %v1569
  %v1946 = vpack.c.b16 %v1578, %v1570
  %v1947 = vpack.c.b16 %v1579, %v1571
  %v1948 = vpack.c.b16 %v1580, %v1572
  %v1949 = vpack.c.b16 %v1581, %v1573
  %v1950 = vpack.c.b16 %v1590, %v1582
  %v1951 = vpack.c.b16 %v1591, %v1583
  %v1952 = vpack.c.b16 %v1592, %v1584
  %v1953 = vpack.c.b16 %v1593, %v1585
  %v1954 = vpack.c.b16 %v1594, %v1586
  %v1955 = vpack.c.b16 %v1595, %v1587
  %v1956 = vpack.c.b16 %v1596, %v1588
  %v1957 = vpack.c.b16 %v1597, %v1589
  %vm2318 = vcmask 654336
  %v2320 = vsel %vm2318, %v479, 0
  %v2323 = vsel %vm2318, %v485, 0
  %v2326 = vsel %vm2318, %v491, 0
  %v2329 = vsel %vm2318, %v497, 0
  %2331 = vmatpush.bf16.msra.mxu0 %v1654
  %2332 = vmatpush.bf16.msra.mxu0 %v1646
  %2333 = vmatpush.bf16.msra.mxu0 %v1638
  %2334 = vmatpush.bf16.msra.mxu0 %v1630
  %2335 = vmatpush.bf16.msra.mxu0 %v1622
  %2336 = vmatpush.bf16.msra.mxu0 %v1614
  %2337 = vmatpush.bf16.msra.mxu0 %v1606
  %2338 = vmatpush.bf16.msra.mxu0 %v1598
  %2339 = vmatmul.bf16.gmra.mxu0 %v474
  %v2340 = vpop.f32.mrf.mxu0
  %v2341 = vadd.f32 0.0, %v2340
  %v2342 = vpop.f32.mrf.mxu0
  %v2343 = vadd.f32 0.0, %v2342
  %2344 = vmatmul.bf16.gmra.mxu0 %v480
  %v2345 = vpop.f32.mrf.mxu0
  %v2346 = vadd.f32 0.0, %v2345
  %v2347 = vpop.f32.mrf.mxu0
  %v2348 = vadd.f32 0.0, %v2347
  %2349 = vmatmul.bf16.gmra.mxu0 %v486
  %v2350 = vpop.f32.mrf.mxu0
  %v2351 = vadd.f32 0.0, %v2350
  %v2352 = vpop.f32.mrf.mxu0
  %v2353 = vadd.f32 0.0, %v2352
  %2354 = vmatmul.bf16.gmra.mxu0 %v492
  %v2355 = vpop.f32.mrf.mxu0
  %v2356 = vadd.f32 0.0, %v2355
  %v2357 = vpop.f32.mrf.mxu0
  %v2358 = vadd.f32 0.0, %v2357
  %2359 = vdwg.mxu0
  %2360 = vmatpush.bf16.msra.mxu0 %v1718
  %2361 = vmatpush.bf16.msra.mxu0 %v1710
  %2362 = vmatpush.bf16.msra.mxu0 %v1702
  %2363 = vmatpush.bf16.msra.mxu0 %v1694
  %2364 = vmatpush.bf16.msra.mxu0 %v1686
  %2365 = vmatpush.bf16.msra.mxu0 %v1678
  %2366 = vmatpush.bf16.msra.mxu0 %v1670
  %2367 = vmatpush.bf16.msra.mxu0 %v1662
  %2368 = vmatmul.bf16.gmra.mxu0 %v475
  %v2369 = vpop.f32.mrf.mxu0
  %v2370 = vadd.f32 %v2341, %v2369
  %v2371 = vpop.f32.mrf.mxu0
  %v2372 = vadd.f32 %v2343, %v2371
  %2373 = vmatmul.bf16.gmra.mxu0 %v481
  %v2374 = vpop.f32.mrf.mxu0
  %v2375 = vadd.f32 %v2346, %v2374
  %v2376 = vpop.f32.mrf.mxu0
  %v2377 = vadd.f32 %v2348, %v2376
  %2378 = vmatmul.bf16.gmra.mxu0 %v487
  %v2379 = vpop.f32.mrf.mxu0
  %v2380 = vadd.f32 %v2351, %v2379
  %v2381 = vpop.f32.mrf.mxu0
  %v2382 = vadd.f32 %v2353, %v2381
  %2383 = vmatmul.bf16.gmra.mxu0 %v493
  %v2384 = vpop.f32.mrf.mxu0
  %v2385 = vadd.f32 %v2356, %v2384
  %v2386 = vpop.f32.mrf.mxu0
  %v2387 = vadd.f32 %v2358, %v2386
  %2388 = vdwg.mxu0
  %2389 = vmatpush.bf16.msra.mxu0 %v1782
  %2390 = vmatpush.bf16.msra.mxu0 %v1774
  %2391 = vmatpush.bf16.msra.mxu0 %v1766
  %2392 = vmatpush.bf16.msra.mxu0 %v1758
  %2393 = vmatpush.bf16.msra.mxu0 %v1750
  %2394 = vmatpush.bf16.msra.mxu0 %v1742
  %2395 = vmatpush.bf16.msra.mxu0 %v1734
  %2396 = vmatpush.bf16.msra.mxu0 %v1726
  %2397 = vmatmul.bf16.gmra.mxu0 %v476
  %v2398 = vpop.f32.mrf.mxu0
  %v2399 = vadd.f32 %v2370, %v2398
  %v2400 = vpop.f32.mrf.mxu0
  %v2401 = vadd.f32 %v2372, %v2400
  %2402 = vmatmul.bf16.gmra.mxu0 %v482
  %v2403 = vpop.f32.mrf.mxu0
  %v2404 = vadd.f32 %v2375, %v2403
  %v2405 = vpop.f32.mrf.mxu0
  %v2406 = vadd.f32 %v2377, %v2405
  %2407 = vmatmul.bf16.gmra.mxu0 %v488
  %v2408 = vpop.f32.mrf.mxu0
  %v2409 = vadd.f32 %v2380, %v2408
  %v2410 = vpop.f32.mrf.mxu0
  %v2411 = vadd.f32 %v2382, %v2410
  %2412 = vmatmul.bf16.gmra.mxu0 %v494
  %v2413 = vpop.f32.mrf.mxu0
  %v2414 = vadd.f32 %v2385, %v2413
  %v2415 = vpop.f32.mrf.mxu0
  %v2416 = vadd.f32 %v2387, %v2415
  %2417 = vdwg.mxu0
  %2418 = vmatpush.bf16.msra.mxu0 %v1846
  %2419 = vmatpush.bf16.msra.mxu0 %v1838
  %2420 = vmatpush.bf16.msra.mxu0 %v1830
  %2421 = vmatpush.bf16.msra.mxu0 %v1822
  %2422 = vmatpush.bf16.msra.mxu0 %v1814
  %2423 = vmatpush.bf16.msra.mxu0 %v1806
  %2424 = vmatpush.bf16.msra.mxu0 %v1798
  %2425 = vmatpush.bf16.msra.mxu0 %v1790
  %2426 = vmatmul.bf16.gmra.mxu0 %v477
  %v2427 = vpop.f32.mrf.mxu0
  %v2428 = vadd.f32 %v2399, %v2427
  %v2429 = vpop.f32.mrf.mxu0
  %v2430 = vadd.f32 %v2401, %v2429
  %2431 = vmatmul.bf16.gmra.mxu0 %v483
  %v2432 = vpop.f32.mrf.mxu0
  %v2433 = vadd.f32 %v2404, %v2432
  %v2434 = vpop.f32.mrf.mxu0
  %v2435 = vadd.f32 %v2406, %v2434
  %2436 = vmatmul.bf16.gmra.mxu0 %v489
  %v2437 = vpop.f32.mrf.mxu0
  %v2438 = vadd.f32 %v2409, %v2437
  %v2439 = vpop.f32.mrf.mxu0
  %v2440 = vadd.f32 %v2411, %v2439
  %2441 = vmatmul.bf16.gmra.mxu0 %v495
  %v2442 = vpop.f32.mrf.mxu0
  %v2443 = vadd.f32 %v2414, %v2442
  %v2444 = vpop.f32.mrf.mxu0
  %v2445 = vadd.f32 %v2416, %v2444
  %2446 = vdwg.mxu0
  %2447 = vmatpush.bf16.msra.mxu0 %v1910
  %2448 = vmatpush.bf16.msra.mxu0 %v1902
  %2449 = vmatpush.bf16.msra.mxu0 %v1894
  %2450 = vmatpush.bf16.msra.mxu0 %v1886
  %2451 = vmatpush.bf16.msra.mxu0 %v1878
  %2452 = vmatpush.bf16.msra.mxu0 %v1870
  %2453 = vmatpush.bf16.msra.mxu0 %v1862
  %2454 = vmatpush.bf16.msra.mxu0 %v1854
  %2455 = vmatmul.bf16.gmra.mxu0 %v478
  %v2456 = vpop.f32.mrf.mxu0
  %v2457 = vadd.f32 %v2428, %v2456
  %v2458 = vpop.f32.mrf.mxu0
  %v2459 = vadd.f32 %v2430, %v2458
  %2460 = vmatmul.bf16.gmra.mxu0 %v484
  %v2461 = vpop.f32.mrf.mxu0
  %v2462 = vadd.f32 %v2433, %v2461
  %v2463 = vpop.f32.mrf.mxu0
  %v2464 = vadd.f32 %v2435, %v2463
  %2465 = vmatmul.bf16.gmra.mxu0 %v490
  %v2466 = vpop.f32.mrf.mxu0
  %v2467 = vadd.f32 %v2438, %v2466
  %v2468 = vpop.f32.mrf.mxu0
  %v2469 = vadd.f32 %v2440, %v2468
  %2470 = vmatmul.bf16.gmra.mxu0 %v496
  %v2471 = vpop.f32.mrf.mxu0
  %v2472 = vadd.f32 %v2443, %v2471
  %v2473 = vpop.f32.mrf.mxu0
  %v2474 = vadd.f32 %v2445, %v2473
  %2475 = vdwg.mxu0
  %2476 = vmatpush.bf16.msra.mxu0 0
  %2477 = vmatpush.bf16.msra.mxu0 0
  %2478 = vmatpush.bf16.msra.mxu0 0
  %2479 = vmatpush.bf16.msra.mxu0 %v1950
  %2480 = vmatpush.bf16.msra.mxu0 %v1942
  %2481 = vmatpush.bf16.msra.mxu0 %v1934
  %2482 = vmatpush.bf16.msra.mxu0 %v1926
  %2483 = vmatpush.bf16.msra.mxu0 %v1918
  %2484 = vmatmul.bf16.gmra.mxu0 %v2320
  %v2485 = vpop.f32.mrf.mxu0
  %v2486 = vadd.f32 %v2457, %v2485
  %v2487 = vpop.f32.mrf.mxu0
  %v2488 = vadd.f32 %v2459, %v2487
  %2489 = vmatmul.bf16.gmra.mxu0 %v2323
  %v2490 = vpop.f32.mrf.mxu0
  %v2491 = vadd.f32 %v2462, %v2490
  %v2492 = vpop.f32.mrf.mxu0
  %v2493 = vadd.f32 %v2464, %v2492
  %2494 = vmatmul.bf16.gmra.mxu0 %v2326
  %v2495 = vpop.f32.mrf.mxu0
  %v2496 = vadd.f32 %v2467, %v2495
  %v2497 = vpop.f32.mrf.mxu0
  %v2498 = vadd.f32 %v2469, %v2497
  %2499 = vmatmul.bf16.gmra.mxu0 %v2329
  %v2500 = vpop.f32.mrf.mxu0
  %v2501 = vadd.f32 %v2472, %v2500
  %v2502 = vpop.f32.mrf.mxu0
  %v2503 = vadd.f32 %v2474, %v2502
  %2504 = vdwg.mxu0
  %2505 = vmatpush.bf16.msra.mxu0 %v1655
  %2506 = vmatpush.bf16.msra.mxu0 %v1647
  %2507 = vmatpush.bf16.msra.mxu0 %v1639
  %2508 = vmatpush.bf16.msra.mxu0 %v1631
  %2509 = vmatpush.bf16.msra.mxu0 %v1623
  %2510 = vmatpush.bf16.msra.mxu0 %v1615
  %2511 = vmatpush.bf16.msra.mxu0 %v1607
  %2512 = vmatpush.bf16.msra.mxu0 %v1599
  %2513 = vmatmul.bf16.gmra.mxu0 %v474
  %v2514 = vpop.f32.mrf.mxu0
  %v2515 = vadd.f32 0.0, %v2514
  %v2516 = vpop.f32.mrf.mxu0
  %v2517 = vadd.f32 0.0, %v2516
  %2518 = vmatmul.bf16.gmra.mxu0 %v480
  %v2519 = vpop.f32.mrf.mxu0
  %v2520 = vadd.f32 0.0, %v2519
  %v2521 = vpop.f32.mrf.mxu0
  %v2522 = vadd.f32 0.0, %v2521
  %2523 = vmatmul.bf16.gmra.mxu0 %v486
  %v2524 = vpop.f32.mrf.mxu0
  %v2525 = vadd.f32 0.0, %v2524
  %v2526 = vpop.f32.mrf.mxu0
  %v2527 = vadd.f32 0.0, %v2526
  %2528 = vmatmul.bf16.gmra.mxu0 %v492
  %v2529 = vpop.f32.mrf.mxu0
  %v2530 = vadd.f32 0.0, %v2529
  %v2531 = vpop.f32.mrf.mxu0
  %v2532 = vadd.f32 0.0, %v2531
  %2533 = vdwg.mxu0
  %2534 = vmatpush.bf16.msra.mxu0 %v1719
  %2535 = vmatpush.bf16.msra.mxu0 %v1711
  %2536 = vmatpush.bf16.msra.mxu0 %v1703
  %2537 = vmatpush.bf16.msra.mxu0 %v1695
  %2538 = vmatpush.bf16.msra.mxu0 %v1687
  %2539 = vmatpush.bf16.msra.mxu0 %v1679
  %2540 = vmatpush.bf16.msra.mxu0 %v1671
  %2541 = vmatpush.bf16.msra.mxu0 %v1663
  %2542 = vmatmul.bf16.gmra.mxu0 %v475
  %v2543 = vpop.f32.mrf.mxu0
  %v2544 = vadd.f32 %v2515, %v2543
  %v2545 = vpop.f32.mrf.mxu0
  %v2546 = vadd.f32 %v2517, %v2545
  %2547 = vmatmul.bf16.gmra.mxu0 %v481
  %v2548 = vpop.f32.mrf.mxu0
  %v2549 = vadd.f32 %v2520, %v2548
  %v2550 = vpop.f32.mrf.mxu0
  %v2551 = vadd.f32 %v2522, %v2550
  %2552 = vmatmul.bf16.gmra.mxu0 %v487
  %v2553 = vpop.f32.mrf.mxu0
  %v2554 = vadd.f32 %v2525, %v2553
  %v2555 = vpop.f32.mrf.mxu0
  %v2556 = vadd.f32 %v2527, %v2555
  %2557 = vmatmul.bf16.gmra.mxu0 %v493
  %v2558 = vpop.f32.mrf.mxu0
  %v2559 = vadd.f32 %v2530, %v2558
  %v2560 = vpop.f32.mrf.mxu0
  %v2561 = vadd.f32 %v2532, %v2560
  %2562 = vdwg.mxu0
  %2563 = vmatpush.bf16.msra.mxu0 %v1783
  %2564 = vmatpush.bf16.msra.mxu0 %v1775
  %2565 = vmatpush.bf16.msra.mxu0 %v1767
  %2566 = vmatpush.bf16.msra.mxu0 %v1759
  %2567 = vmatpush.bf16.msra.mxu0 %v1751
  %2568 = vmatpush.bf16.msra.mxu0 %v1743
  %2569 = vmatpush.bf16.msra.mxu0 %v1735
  %2570 = vmatpush.bf16.msra.mxu0 %v1727
  %2571 = vmatmul.bf16.gmra.mxu0 %v476
  %v2572 = vpop.f32.mrf.mxu0
  %v2573 = vadd.f32 %v2544, %v2572
  %v2574 = vpop.f32.mrf.mxu0
  %v2575 = vadd.f32 %v2546, %v2574
  %2576 = vmatmul.bf16.gmra.mxu0 %v482
  %v2577 = vpop.f32.mrf.mxu0
  %v2578 = vadd.f32 %v2549, %v2577
  %v2579 = vpop.f32.mrf.mxu0
  %v2580 = vadd.f32 %v2551, %v2579
  %2581 = vmatmul.bf16.gmra.mxu0 %v488
  %v2582 = vpop.f32.mrf.mxu0
  %v2583 = vadd.f32 %v2554, %v2582
  %v2584 = vpop.f32.mrf.mxu0
  %v2585 = vadd.f32 %v2556, %v2584
  %2586 = vmatmul.bf16.gmra.mxu0 %v494
  %v2587 = vpop.f32.mrf.mxu0
  %v2588 = vadd.f32 %v2559, %v2587
  %v2589 = vpop.f32.mrf.mxu0
  %v2590 = vadd.f32 %v2561, %v2589
  %2591 = vdwg.mxu0
  %2592 = vmatpush.bf16.msra.mxu0 %v1847
  %2593 = vmatpush.bf16.msra.mxu0 %v1839
  %2594 = vmatpush.bf16.msra.mxu0 %v1831
  %2595 = vmatpush.bf16.msra.mxu0 %v1823
  %2596 = vmatpush.bf16.msra.mxu0 %v1815
  %2597 = vmatpush.bf16.msra.mxu0 %v1807
  %2598 = vmatpush.bf16.msra.mxu0 %v1799
  %2599 = vmatpush.bf16.msra.mxu0 %v1791
  %2600 = vmatmul.bf16.gmra.mxu0 %v477
  %v2601 = vpop.f32.mrf.mxu0
  %v2602 = vadd.f32 %v2573, %v2601
  %v2603 = vpop.f32.mrf.mxu0
  %v2604 = vadd.f32 %v2575, %v2603
  %2605 = vmatmul.bf16.gmra.mxu0 %v483
  %v2606 = vpop.f32.mrf.mxu0
  %v2607 = vadd.f32 %v2578, %v2606
  %v2608 = vpop.f32.mrf.mxu0
  %v2609 = vadd.f32 %v2580, %v2608
  %2610 = vmatmul.bf16.gmra.mxu0 %v489
  %v2611 = vpop.f32.mrf.mxu0
  %v2612 = vadd.f32 %v2583, %v2611
  %v2613 = vpop.f32.mrf.mxu0
  %v2614 = vadd.f32 %v2585, %v2613
  %2615 = vmatmul.bf16.gmra.mxu0 %v495
  %v2616 = vpop.f32.mrf.mxu0
  %v2617 = vadd.f32 %v2588, %v2616
  %v2618 = vpop.f32.mrf.mxu0
  %v2619 = vadd.f32 %v2590, %v2618
  %2620 = vdwg.mxu0
  %2621 = vmatpush.bf16.msra.mxu0 %v1911
  %2622 = vmatpush.bf16.msra.mxu0 %v1903
  %2623 = vmatpush.bf16.msra.mxu0 %v1895
  %2624 = vmatpush.bf16.msra.mxu0 %v1887
  %2625 = vmatpush.bf16.msra.mxu0 %v1879
  %2626 = vmatpush.bf16.msra.mxu0 %v1871
  %2627 = vmatpush.bf16.msra.mxu0 %v1863
  %2628 = vmatpush.bf16.msra.mxu0 %v1855
  %2629 = vmatmul.bf16.gmra.mxu0 %v478
  %v2630 = vpop.f32.mrf.mxu0
  %v2631 = vadd.f32 %v2602, %v2630
  %v2632 = vpop.f32.mrf.mxu0
  %v2633 = vadd.f32 %v2604, %v2632
  %2634 = vmatmul.bf16.gmra.mxu0 %v484
  %v2635 = vpop.f32.mrf.mxu0
  %v2636 = vadd.f32 %v2607, %v2635
  %v2637 = vpop.f32.mrf.mxu0
  %v2638 = vadd.f32 %v2609, %v2637
  %2639 = vmatmul.bf16.gmra.mxu0 %v490
  %v2640 = vpop.f32.mrf.mxu0
  %v2641 = vadd.f32 %v2612, %v2640
  %v2642 = vpop.f32.mrf.mxu0
  %v2643 = vadd.f32 %v2614, %v2642
  %2644 = vmatmul.bf16.gmra.mxu0 %v496
  %v2645 = vpop.f32.mrf.mxu0
  %v2646 = vadd.f32 %v2617, %v2645
  %v2647 = vpop.f32.mrf.mxu0
  %v2648 = vadd.f32 %v2619, %v2647
  %2649 = vdwg.mxu0
  %2650 = vmatpush.bf16.msra.mxu0 0
  %2651 = vmatpush.bf16.msra.mxu0 0
  %2652 = vmatpush.bf16.msra.mxu0 0
  %2653 = vmatpush.bf16.msra.mxu0 %v1951
  %2654 = vmatpush.bf16.msra.mxu0 %v1943
  %2655 = vmatpush.bf16.msra.mxu0 %v1935
  %2656 = vmatpush.bf16.msra.mxu0 %v1927
  %2657 = vmatpush.bf16.msra.mxu0 %v1919
  %2658 = vmatmul.bf16.gmra.mxu0 %v2320
  %v2659 = vpop.f32.mrf.mxu0
  %v2660 = vadd.f32 %v2631, %v2659
  %v2661 = vpop.f32.mrf.mxu0
  %v2662 = vadd.f32 %v2633, %v2661
  %2663 = vmatmul.bf16.gmra.mxu0 %v2323
  %v2664 = vpop.f32.mrf.mxu0
  %v2665 = vadd.f32 %v2636, %v2664
  %v2666 = vpop.f32.mrf.mxu0
  %v2667 = vadd.f32 %v2638, %v2666
  %2668 = vmatmul.bf16.gmra.mxu0 %v2326
  %v2669 = vpop.f32.mrf.mxu0
  %v2670 = vadd.f32 %v2641, %v2669
  %v2671 = vpop.f32.mrf.mxu0
  %v2672 = vadd.f32 %v2643, %v2671
  %2673 = vmatmul.bf16.gmra.mxu0 %v2329
  %v2674 = vpop.f32.mrf.mxu0
  %v2675 = vadd.f32 %v2646, %v2674
  %v2676 = vpop.f32.mrf.mxu0
  %v2677 = vadd.f32 %v2648, %v2676
  %2678 = vdwg.mxu0
  %2679 = vmatpush.bf16.msra.mxu0 %v1656
  %2680 = vmatpush.bf16.msra.mxu0 %v1648
  %2681 = vmatpush.bf16.msra.mxu0 %v1640
  %2682 = vmatpush.bf16.msra.mxu0 %v1632
  %2683 = vmatpush.bf16.msra.mxu0 %v1624
  %2684 = vmatpush.bf16.msra.mxu0 %v1616
  %2685 = vmatpush.bf16.msra.mxu0 %v1608
  %2686 = vmatpush.bf16.msra.mxu0 %v1600
  %2687 = vmatmul.bf16.gmra.mxu0 %v474
  %v2688 = vpop.f32.mrf.mxu0
  %v2689 = vadd.f32 0.0, %v2688
  %v2690 = vpop.f32.mrf.mxu0
  %v2691 = vadd.f32 0.0, %v2690
  %2692 = vmatmul.bf16.gmra.mxu0 %v480
  %v2693 = vpop.f32.mrf.mxu0
  %v2694 = vadd.f32 0.0, %v2693
  %v2695 = vpop.f32.mrf.mxu0
  %v2696 = vadd.f32 0.0, %v2695
  %2697 = vmatmul.bf16.gmra.mxu0 %v486
  %v2698 = vpop.f32.mrf.mxu0
  %v2699 = vadd.f32 0.0, %v2698
  %v2700 = vpop.f32.mrf.mxu0
  %v2701 = vadd.f32 0.0, %v2700
  %2702 = vmatmul.bf16.gmra.mxu0 %v492
  %v2703 = vpop.f32.mrf.mxu0
  %v2704 = vadd.f32 0.0, %v2703
  %v2705 = vpop.f32.mrf.mxu0
  %v2706 = vadd.f32 0.0, %v2705
  %2707 = vdwg.mxu0
  %2708 = vmatpush.bf16.msra.mxu0 %v1720
  %2709 = vmatpush.bf16.msra.mxu0 %v1712
  %2710 = vmatpush.bf16.msra.mxu0 %v1704
  %2711 = vmatpush.bf16.msra.mxu0 %v1696
  %2712 = vmatpush.bf16.msra.mxu0 %v1688
  %2713 = vmatpush.bf16.msra.mxu0 %v1680
  %2714 = vmatpush.bf16.msra.mxu0 %v1672
  %2715 = vmatpush.bf16.msra.mxu0 %v1664
  %2716 = vmatmul.bf16.gmra.mxu0 %v475
  %v2717 = vpop.f32.mrf.mxu0
  %v2718 = vadd.f32 %v2689, %v2717
  %v2719 = vpop.f32.mrf.mxu0
  %v2720 = vadd.f32 %v2691, %v2719
  %2721 = vmatmul.bf16.gmra.mxu0 %v481
  %v2722 = vpop.f32.mrf.mxu0
  %v2723 = vadd.f32 %v2694, %v2722
  %v2724 = vpop.f32.mrf.mxu0
  %v2725 = vadd.f32 %v2696, %v2724
  %2726 = vmatmul.bf16.gmra.mxu0 %v487
  %v2727 = vpop.f32.mrf.mxu0
  %v2728 = vadd.f32 %v2699, %v2727
  %v2729 = vpop.f32.mrf.mxu0
  %v2730 = vadd.f32 %v2701, %v2729
  %2731 = vmatmul.bf16.gmra.mxu0 %v493
  %v2732 = vpop.f32.mrf.mxu0
  %v2733 = vadd.f32 %v2704, %v2732
  %v2734 = vpop.f32.mrf.mxu0
  %v2735 = vadd.f32 %v2706, %v2734
  %2736 = vdwg.mxu0
  %2737 = vmatpush.bf16.msra.mxu0 %v1784
  %2738 = vmatpush.bf16.msra.mxu0 %v1776
  %2739 = vmatpush.bf16.msra.mxu0 %v1768
  %2740 = vmatpush.bf16.msra.mxu0 %v1760
  %2741 = vmatpush.bf16.msra.mxu0 %v1752
  %2742 = vmatpush.bf16.msra.mxu0 %v1744
  %2743 = vmatpush.bf16.msra.mxu0 %v1736
  %2744 = vmatpush.bf16.msra.mxu0 %v1728
  %2745 = vmatmul.bf16.gmra.mxu0 %v476
  %v2746 = vpop.f32.mrf.mxu0
  %v2747 = vadd.f32 %v2718, %v2746
  %v2748 = vpop.f32.mrf.mxu0
  %v2749 = vadd.f32 %v2720, %v2748
  %2750 = vmatmul.bf16.gmra.mxu0 %v482
  %v2751 = vpop.f32.mrf.mxu0
  %v2752 = vadd.f32 %v2723, %v2751
  %v2753 = vpop.f32.mrf.mxu0
  %v2754 = vadd.f32 %v2725, %v2753
  %2755 = vmatmul.bf16.gmra.mxu0 %v488
  %v2756 = vpop.f32.mrf.mxu0
  %v2757 = vadd.f32 %v2728, %v2756
  %v2758 = vpop.f32.mrf.mxu0
  %v2759 = vadd.f32 %v2730, %v2758
  %2760 = vmatmul.bf16.gmra.mxu0 %v494
  %v2761 = vpop.f32.mrf.mxu0
  %v2762 = vadd.f32 %v2733, %v2761
  %v2763 = vpop.f32.mrf.mxu0
  %v2764 = vadd.f32 %v2735, %v2763
  %2765 = vdwg.mxu0
  %2766 = vmatpush.bf16.msra.mxu0 %v1848
  %2767 = vmatpush.bf16.msra.mxu0 %v1840
  %2768 = vmatpush.bf16.msra.mxu0 %v1832
  %2769 = vmatpush.bf16.msra.mxu0 %v1824
  %2770 = vmatpush.bf16.msra.mxu0 %v1816
  %2771 = vmatpush.bf16.msra.mxu0 %v1808
  %2772 = vmatpush.bf16.msra.mxu0 %v1800
  %2773 = vmatpush.bf16.msra.mxu0 %v1792
  %2774 = vmatmul.bf16.gmra.mxu0 %v477
  %v2775 = vpop.f32.mrf.mxu0
  %v2776 = vadd.f32 %v2747, %v2775
  %v2777 = vpop.f32.mrf.mxu0
  %v2778 = vadd.f32 %v2749, %v2777
  %2779 = vmatmul.bf16.gmra.mxu0 %v483
  %v2780 = vpop.f32.mrf.mxu0
  %v2781 = vadd.f32 %v2752, %v2780
  %v2782 = vpop.f32.mrf.mxu0
  %v2783 = vadd.f32 %v2754, %v2782
  %2784 = vmatmul.bf16.gmra.mxu0 %v489
  %v2785 = vpop.f32.mrf.mxu0
  %v2786 = vadd.f32 %v2757, %v2785
  %v2787 = vpop.f32.mrf.mxu0
  %v2788 = vadd.f32 %v2759, %v2787
  %2789 = vmatmul.bf16.gmra.mxu0 %v495
  %v2790 = vpop.f32.mrf.mxu0
  %v2791 = vadd.f32 %v2762, %v2790
  %v2792 = vpop.f32.mrf.mxu0
  %v2793 = vadd.f32 %v2764, %v2792
  %2794 = vdwg.mxu0
  %2795 = vmatpush.bf16.msra.mxu0 %v1912
  %2796 = vmatpush.bf16.msra.mxu0 %v1904
  %2797 = vmatpush.bf16.msra.mxu0 %v1896
  %2798 = vmatpush.bf16.msra.mxu0 %v1888
  %2799 = vmatpush.bf16.msra.mxu0 %v1880
  %2800 = vmatpush.bf16.msra.mxu0 %v1872
  %2801 = vmatpush.bf16.msra.mxu0 %v1864
  %2802 = vmatpush.bf16.msra.mxu0 %v1856
  %2803 = vmatmul.bf16.gmra.mxu0 %v478
  %v2804 = vpop.f32.mrf.mxu0
  %v2805 = vadd.f32 %v2776, %v2804
  %v2806 = vpop.f32.mrf.mxu0
  %v2807 = vadd.f32 %v2778, %v2806
  %2808 = vmatmul.bf16.gmra.mxu0 %v484
  %v2809 = vpop.f32.mrf.mxu0
  %v2810 = vadd.f32 %v2781, %v2809
  %v2811 = vpop.f32.mrf.mxu0
  %v2812 = vadd.f32 %v2783, %v2811
  %2813 = vmatmul.bf16.gmra.mxu0 %v490
  %v2814 = vpop.f32.mrf.mxu0
  %v2815 = vadd.f32 %v2786, %v2814
  %v2816 = vpop.f32.mrf.mxu0
  %v2817 = vadd.f32 %v2788, %v2816
  %2818 = vmatmul.bf16.gmra.mxu0 %v496
  %v2819 = vpop.f32.mrf.mxu0
  %v2820 = vadd.f32 %v2791, %v2819
  %v2821 = vpop.f32.mrf.mxu0
  %v2822 = vadd.f32 %v2793, %v2821
  %2823 = vdwg.mxu0
  %2824 = vmatpush.bf16.msra.mxu0 0
  %2825 = vmatpush.bf16.msra.mxu0 0
  %2826 = vmatpush.bf16.msra.mxu0 0
  %2827 = vmatpush.bf16.msra.mxu0 %v1952
  %2828 = vmatpush.bf16.msra.mxu0 %v1944
  %2829 = vmatpush.bf16.msra.mxu0 %v1936
  %2830 = vmatpush.bf16.msra.mxu0 %v1928
  %2831 = vmatpush.bf16.msra.mxu0 %v1920
  %2832 = vmatmul.bf16.gmra.mxu0 %v2320
  %v2833 = vpop.f32.mrf.mxu0
  %v2834 = vadd.f32 %v2805, %v2833
  %v2835 = vpop.f32.mrf.mxu0
  %v2836 = vadd.f32 %v2807, %v2835
  %2837 = vmatmul.bf16.gmra.mxu0 %v2323
  %v2838 = vpop.f32.mrf.mxu0
  %v2839 = vadd.f32 %v2810, %v2838
  %v2840 = vpop.f32.mrf.mxu0
  %v2841 = vadd.f32 %v2812, %v2840
  %2842 = vmatmul.bf16.gmra.mxu0 %v2326
  %v2843 = vpop.f32.mrf.mxu0
  %v2844 = vadd.f32 %v2815, %v2843
  %v2845 = vpop.f32.mrf.mxu0
  %v2846 = vadd.f32 %v2817, %v2845
  %2847 = vmatmul.bf16.gmra.mxu0 %v2329
  %v2848 = vpop.f32.mrf.mxu0
  %v2849 = vadd.f32 %v2820, %v2848
  %v2850 = vpop.f32.mrf.mxu0
  %v2851 = vadd.f32 %v2822, %v2850
  %2852 = vdwg.mxu0
  %2853 = vmatpush.bf16.msra.mxu0 %v1657
  %2854 = vmatpush.bf16.msra.mxu0 %v1649
  %2855 = vmatpush.bf16.msra.mxu0 %v1641
  %2856 = vmatpush.bf16.msra.mxu0 %v1633
  %2857 = vmatpush.bf16.msra.mxu0 %v1625
  %2858 = vmatpush.bf16.msra.mxu0 %v1617
  %2859 = vmatpush.bf16.msra.mxu0 %v1609
  %2860 = vmatpush.bf16.msra.mxu0 %v1601
  %2861 = vmatmul.bf16.gmra.mxu0 %v474
  %v2862 = vpop.f32.mrf.mxu0
  %v2863 = vadd.f32 0.0, %v2862
  %v2864 = vpop.f32.mrf.mxu0
  %v2865 = vadd.f32 0.0, %v2864
  %2866 = vmatmul.bf16.gmra.mxu0 %v480
  %v2867 = vpop.f32.mrf.mxu0
  %v2868 = vadd.f32 0.0, %v2867
  %v2869 = vpop.f32.mrf.mxu0
  %v2870 = vadd.f32 0.0, %v2869
  %2871 = vmatmul.bf16.gmra.mxu0 %v486
  %v2872 = vpop.f32.mrf.mxu0
  %v2873 = vadd.f32 0.0, %v2872
  %v2874 = vpop.f32.mrf.mxu0
  %v2875 = vadd.f32 0.0, %v2874
  %2876 = vmatmul.bf16.gmra.mxu0 %v492
  %v2877 = vpop.f32.mrf.mxu0
  %v2878 = vadd.f32 0.0, %v2877
  %v2879 = vpop.f32.mrf.mxu0
  %v2880 = vadd.f32 0.0, %v2879
  %2881 = vdwg.mxu0
  %2882 = vmatpush.bf16.msra.mxu0 %v1721
  %2883 = vmatpush.bf16.msra.mxu0 %v1713
  %2884 = vmatpush.bf16.msra.mxu0 %v1705
  %2885 = vmatpush.bf16.msra.mxu0 %v1697
  %2886 = vmatpush.bf16.msra.mxu0 %v1689
  %2887 = vmatpush.bf16.msra.mxu0 %v1681
  %2888 = vmatpush.bf16.msra.mxu0 %v1673
  %2889 = vmatpush.bf16.msra.mxu0 %v1665
  %2890 = vmatmul.bf16.gmra.mxu0 %v475
  %v2891 = vpop.f32.mrf.mxu0
  %v2892 = vadd.f32 %v2863, %v2891
  %v2893 = vpop.f32.mrf.mxu0
  %v2894 = vadd.f32 %v2865, %v2893
  %2895 = vmatmul.bf16.gmra.mxu0 %v481
  %v2896 = vpop.f32.mrf.mxu0
  %v2897 = vadd.f32 %v2868, %v2896
  %v2898 = vpop.f32.mrf.mxu0
  %v2899 = vadd.f32 %v2870, %v2898
  %2900 = vmatmul.bf16.gmra.mxu0 %v487
  %v2901 = vpop.f32.mrf.mxu0
  %v2902 = vadd.f32 %v2873, %v2901
  %v2903 = vpop.f32.mrf.mxu0
  %v2904 = vadd.f32 %v2875, %v2903
  %2905 = vmatmul.bf16.gmra.mxu0 %v493
  %v2906 = vpop.f32.mrf.mxu0
  %v2907 = vadd.f32 %v2878, %v2906
  %v2908 = vpop.f32.mrf.mxu0
  %v2909 = vadd.f32 %v2880, %v2908
  %2910 = vdwg.mxu0
  %2911 = vmatpush.bf16.msra.mxu0 %v1785
  %2912 = vmatpush.bf16.msra.mxu0 %v1777
  %2913 = vmatpush.bf16.msra.mxu0 %v1769
  %2914 = vmatpush.bf16.msra.mxu0 %v1761
  %2915 = vmatpush.bf16.msra.mxu0 %v1753
  %2916 = vmatpush.bf16.msra.mxu0 %v1745
  %2917 = vmatpush.bf16.msra.mxu0 %v1737
  %2918 = vmatpush.bf16.msra.mxu0 %v1729
  %2919 = vmatmul.bf16.gmra.mxu0 %v476
  %v2920 = vpop.f32.mrf.mxu0
  %v2921 = vadd.f32 %v2892, %v2920
  %v2922 = vpop.f32.mrf.mxu0
  %v2923 = vadd.f32 %v2894, %v2922
  %2924 = vmatmul.bf16.gmra.mxu0 %v482
  %v2925 = vpop.f32.mrf.mxu0
  %v2926 = vadd.f32 %v2897, %v2925
  %v2927 = vpop.f32.mrf.mxu0
  %v2928 = vadd.f32 %v2899, %v2927
  %2929 = vmatmul.bf16.gmra.mxu0 %v488
  %v2930 = vpop.f32.mrf.mxu0
  %v2931 = vadd.f32 %v2902, %v2930
  %v2932 = vpop.f32.mrf.mxu0
  %v2933 = vadd.f32 %v2904, %v2932
  %2934 = vmatmul.bf16.gmra.mxu0 %v494
  %v2935 = vpop.f32.mrf.mxu0
  %v2936 = vadd.f32 %v2907, %v2935
  %v2937 = vpop.f32.mrf.mxu0
  %v2938 = vadd.f32 %v2909, %v2937
  %2939 = vdwg.mxu0
  %2940 = vmatpush.bf16.msra.mxu0 %v1849
  %2941 = vmatpush.bf16.msra.mxu0 %v1841
  %2942 = vmatpush.bf16.msra.mxu0 %v1833
  %2943 = vmatpush.bf16.msra.mxu0 %v1825
  %2944 = vmatpush.bf16.msra.mxu0 %v1817
  %2945 = vmatpush.bf16.msra.mxu0 %v1809
  %2946 = vmatpush.bf16.msra.mxu0 %v1801
  %2947 = vmatpush.bf16.msra.mxu0 %v1793
  %2948 = vmatmul.bf16.gmra.mxu0 %v477
  %v2949 = vpop.f32.mrf.mxu0
  %v2950 = vadd.f32 %v2921, %v2949
  %v2951 = vpop.f32.mrf.mxu0
  %v2952 = vadd.f32 %v2923, %v2951
  %2953 = vmatmul.bf16.gmra.mxu0 %v483
  %v2954 = vpop.f32.mrf.mxu0
  %v2955 = vadd.f32 %v2926, %v2954
  %v2956 = vpop.f32.mrf.mxu0
  %v2957 = vadd.f32 %v2928, %v2956
  %2958 = vmatmul.bf16.gmra.mxu0 %v489
  %v2959 = vpop.f32.mrf.mxu0
  %v2960 = vadd.f32 %v2931, %v2959
  %v2961 = vpop.f32.mrf.mxu0
  %v2962 = vadd.f32 %v2933, %v2961
  %2963 = vmatmul.bf16.gmra.mxu0 %v495
  %v2964 = vpop.f32.mrf.mxu0
  %v2965 = vadd.f32 %v2936, %v2964
  %v2966 = vpop.f32.mrf.mxu0
  %v2967 = vadd.f32 %v2938, %v2966
  %2968 = vdwg.mxu0
  %2969 = vmatpush.bf16.msra.mxu0 %v1913
  %2970 = vmatpush.bf16.msra.mxu0 %v1905
  %2971 = vmatpush.bf16.msra.mxu0 %v1897
  %2972 = vmatpush.bf16.msra.mxu0 %v1889
  %2973 = vmatpush.bf16.msra.mxu0 %v1881
  %2974 = vmatpush.bf16.msra.mxu0 %v1873
  %2975 = vmatpush.bf16.msra.mxu0 %v1865
  %2976 = vmatpush.bf16.msra.mxu0 %v1857
  %2977 = vmatmul.bf16.gmra.mxu0 %v478
  %v2978 = vpop.f32.mrf.mxu0
  %v2979 = vadd.f32 %v2950, %v2978
  %v2980 = vpop.f32.mrf.mxu0
  %v2981 = vadd.f32 %v2952, %v2980
  %2982 = vmatmul.bf16.gmra.mxu0 %v484
  %v2983 = vpop.f32.mrf.mxu0
  %v2984 = vadd.f32 %v2955, %v2983
  %v2985 = vpop.f32.mrf.mxu0
  %v2986 = vadd.f32 %v2957, %v2985
  %2987 = vmatmul.bf16.gmra.mxu0 %v490
  %v2988 = vpop.f32.mrf.mxu0
  %v2989 = vadd.f32 %v2960, %v2988
  %v2990 = vpop.f32.mrf.mxu0
  %v2991 = vadd.f32 %v2962, %v2990
  %2992 = vmatmul.bf16.gmra.mxu0 %v496
  %v2993 = vpop.f32.mrf.mxu0
  %v2994 = vadd.f32 %v2965, %v2993
  %v2995 = vpop.f32.mrf.mxu0
  %v2996 = vadd.f32 %v2967, %v2995
  %2997 = vdwg.mxu0
  %2998 = vmatpush.bf16.msra.mxu0 0
  %2999 = vmatpush.bf16.msra.mxu0 0
  %3000 = vmatpush.bf16.msra.mxu0 0
  %3001 = vmatpush.bf16.msra.mxu0 %v1953
  %3002 = vmatpush.bf16.msra.mxu0 %v1945
  %3003 = vmatpush.bf16.msra.mxu0 %v1937
  %3004 = vmatpush.bf16.msra.mxu0 %v1929
  %3005 = vmatpush.bf16.msra.mxu0 %v1921
  %3006 = vmatmul.bf16.gmra.mxu0 %v2320
  %v3007 = vpop.f32.mrf.mxu0
  %v3008 = vadd.f32 %v2979, %v3007
  %v3009 = vpop.f32.mrf.mxu0
  %v3010 = vadd.f32 %v2981, %v3009
  %3011 = vmatmul.bf16.gmra.mxu0 %v2323
  %v3012 = vpop.f32.mrf.mxu0
  %v3013 = vadd.f32 %v2984, %v3012
  %v3014 = vpop.f32.mrf.mxu0
  %v3015 = vadd.f32 %v2986, %v3014
  %3016 = vmatmul.bf16.gmra.mxu0 %v2326
  %v3017 = vpop.f32.mrf.mxu0
  %v3018 = vadd.f32 %v2989, %v3017
  %v3019 = vpop.f32.mrf.mxu0
  %v3020 = vadd.f32 %v2991, %v3019
  %3021 = vmatmul.bf16.gmra.mxu0 %v2329
  %v3022 = vpop.f32.mrf.mxu0
  %v3023 = vadd.f32 %v2994, %v3022
  %v3024 = vpop.f32.mrf.mxu0
  %v3025 = vadd.f32 %v2996, %v3024
  %3026 = vdwg.mxu0
  %3027 = vmatpush.bf16.msra.mxu0 %v1658
  %3028 = vmatpush.bf16.msra.mxu0 %v1650
  %3029 = vmatpush.bf16.msra.mxu0 %v1642
  %3030 = vmatpush.bf16.msra.mxu0 %v1634
  %3031 = vmatpush.bf16.msra.mxu0 %v1626
  %3032 = vmatpush.bf16.msra.mxu0 %v1618
  %3033 = vmatpush.bf16.msra.mxu0 %v1610
  %3034 = vmatpush.bf16.msra.mxu0 %v1602
  %3035 = vmatmul.bf16.gmra.mxu0 %v474
  %v3036 = vpop.f32.mrf.mxu0
  %v3037 = vadd.f32 0.0, %v3036
  %v3038 = vpop.f32.mrf.mxu0
  %v3039 = vadd.f32 0.0, %v3038
  %3040 = vmatmul.bf16.gmra.mxu0 %v480
  %v3041 = vpop.f32.mrf.mxu0
  %v3042 = vadd.f32 0.0, %v3041
  %v3043 = vpop.f32.mrf.mxu0
  %v3044 = vadd.f32 0.0, %v3043
  %3045 = vmatmul.bf16.gmra.mxu0 %v486
  %v3046 = vpop.f32.mrf.mxu0
  %v3047 = vadd.f32 0.0, %v3046
  %v3048 = vpop.f32.mrf.mxu0
  %v3049 = vadd.f32 0.0, %v3048
  %3050 = vmatmul.bf16.gmra.mxu0 %v492
  %v3051 = vpop.f32.mrf.mxu0
  %v3052 = vadd.f32 0.0, %v3051
  %v3053 = vpop.f32.mrf.mxu0
  %v3054 = vadd.f32 0.0, %v3053
  %3055 = vdwg.mxu0
  %3056 = vmatpush.bf16.msra.mxu0 %v1722
  %3057 = vmatpush.bf16.msra.mxu0 %v1714
  %3058 = vmatpush.bf16.msra.mxu0 %v1706
  %3059 = vmatpush.bf16.msra.mxu0 %v1698
  %3060 = vmatpush.bf16.msra.mxu0 %v1690
  %3061 = vmatpush.bf16.msra.mxu0 %v1682
  %3062 = vmatpush.bf16.msra.mxu0 %v1674
  %3063 = vmatpush.bf16.msra.mxu0 %v1666
  %3064 = vmatmul.bf16.gmra.mxu0 %v475
  %v3065 = vpop.f32.mrf.mxu0
  %v3066 = vadd.f32 %v3037, %v3065
  %v3067 = vpop.f32.mrf.mxu0
  %v3068 = vadd.f32 %v3039, %v3067
  %3069 = vmatmul.bf16.gmra.mxu0 %v481
  %v3070 = vpop.f32.mrf.mxu0
  %v3071 = vadd.f32 %v3042, %v3070
  %v3072 = vpop.f32.mrf.mxu0
  %v3073 = vadd.f32 %v3044, %v3072
  %3074 = vmatmul.bf16.gmra.mxu0 %v487
  %v3075 = vpop.f32.mrf.mxu0
  %v3076 = vadd.f32 %v3047, %v3075
  %v3077 = vpop.f32.mrf.mxu0
  %v3078 = vadd.f32 %v3049, %v3077
  %3079 = vmatmul.bf16.gmra.mxu0 %v493
  %v3080 = vpop.f32.mrf.mxu0
  %v3081 = vadd.f32 %v3052, %v3080
  %v3082 = vpop.f32.mrf.mxu0
  %v3083 = vadd.f32 %v3054, %v3082
  %3084 = vdwg.mxu0
  %3085 = vmatpush.bf16.msra.mxu0 %v1786
  %3086 = vmatpush.bf16.msra.mxu0 %v1778
  %3087 = vmatpush.bf16.msra.mxu0 %v1770
  %3088 = vmatpush.bf16.msra.mxu0 %v1762
  %3089 = vmatpush.bf16.msra.mxu0 %v1754
  %3090 = vmatpush.bf16.msra.mxu0 %v1746
  %3091 = vmatpush.bf16.msra.mxu0 %v1738
  %3092 = vmatpush.bf16.msra.mxu0 %v1730
  %3093 = vmatmul.bf16.gmra.mxu0 %v476
  %v3094 = vpop.f32.mrf.mxu0
  %v3095 = vadd.f32 %v3066, %v3094
  %v3096 = vpop.f32.mrf.mxu0
  %v3097 = vadd.f32 %v3068, %v3096
  %3098 = vmatmul.bf16.gmra.mxu0 %v482
  %v3099 = vpop.f32.mrf.mxu0
  %v3100 = vadd.f32 %v3071, %v3099
  %v3101 = vpop.f32.mrf.mxu0
  %v3102 = vadd.f32 %v3073, %v3101
  %3103 = vmatmul.bf16.gmra.mxu0 %v488
  %v3104 = vpop.f32.mrf.mxu0
  %v3105 = vadd.f32 %v3076, %v3104
  %v3106 = vpop.f32.mrf.mxu0
  %v3107 = vadd.f32 %v3078, %v3106
  %3108 = vmatmul.bf16.gmra.mxu0 %v494
  %v3109 = vpop.f32.mrf.mxu0
  %v3110 = vadd.f32 %v3081, %v3109
  %v3111 = vpop.f32.mrf.mxu0
  %v3112 = vadd.f32 %v3083, %v3111
  %3113 = vdwg.mxu0
  %3114 = vmatpush.bf16.msra.mxu0 %v1850
  %3115 = vmatpush.bf16.msra.mxu0 %v1842
  %3116 = vmatpush.bf16.msra.mxu0 %v1834
  %3117 = vmatpush.bf16.msra.mxu0 %v1826
  %3118 = vmatpush.bf16.msra.mxu0 %v1818
  %3119 = vmatpush.bf16.msra.mxu0 %v1810
  %3120 = vmatpush.bf16.msra.mxu0 %v1802
  %3121 = vmatpush.bf16.msra.mxu0 %v1794
  %3122 = vmatmul.bf16.gmra.mxu0 %v477
  %v3123 = vpop.f32.mrf.mxu0
  %v3124 = vadd.f32 %v3095, %v3123
  %v3125 = vpop.f32.mrf.mxu0
  %v3126 = vadd.f32 %v3097, %v3125
  %3127 = vmatmul.bf16.gmra.mxu0 %v483
  %v3128 = vpop.f32.mrf.mxu0
  %v3129 = vadd.f32 %v3100, %v3128
  %v3130 = vpop.f32.mrf.mxu0
  %v3131 = vadd.f32 %v3102, %v3130
  %3132 = vmatmul.bf16.gmra.mxu0 %v489
  %v3133 = vpop.f32.mrf.mxu0
  %v3134 = vadd.f32 %v3105, %v3133
  %v3135 = vpop.f32.mrf.mxu0
  %v3136 = vadd.f32 %v3107, %v3135
  %3137 = vmatmul.bf16.gmra.mxu0 %v495
  %v3138 = vpop.f32.mrf.mxu0
  %v3139 = vadd.f32 %v3110, %v3138
  %v3140 = vpop.f32.mrf.mxu0
  %v3141 = vadd.f32 %v3112, %v3140
  %3142 = vdwg.mxu0
  %3143 = vmatpush.bf16.msra.mxu0 %v1914
  %3144 = vmatpush.bf16.msra.mxu0 %v1906
  %3145 = vmatpush.bf16.msra.mxu0 %v1898
  %3146 = vmatpush.bf16.msra.mxu0 %v1890
  %3147 = vmatpush.bf16.msra.mxu0 %v1882
  %3148 = vmatpush.bf16.msra.mxu0 %v1874
  %3149 = vmatpush.bf16.msra.mxu0 %v1866
  %3150 = vmatpush.bf16.msra.mxu0 %v1858
  %3151 = vmatmul.bf16.gmra.mxu0 %v478
  %v3152 = vpop.f32.mrf.mxu0
  %v3153 = vadd.f32 %v3124, %v3152
  %v3154 = vpop.f32.mrf.mxu0
  %v3155 = vadd.f32 %v3126, %v3154
  %3156 = vmatmul.bf16.gmra.mxu0 %v484
  %v3157 = vpop.f32.mrf.mxu0
  %v3158 = vadd.f32 %v3129, %v3157
  %v3159 = vpop.f32.mrf.mxu0
  %v3160 = vadd.f32 %v3131, %v3159
  %3161 = vmatmul.bf16.gmra.mxu0 %v490
  %v3162 = vpop.f32.mrf.mxu0
  %v3163 = vadd.f32 %v3134, %v3162
  %v3164 = vpop.f32.mrf.mxu0
  %v3165 = vadd.f32 %v3136, %v3164
  %3166 = vmatmul.bf16.gmra.mxu0 %v496
  %v3167 = vpop.f32.mrf.mxu0
  %v3168 = vadd.f32 %v3139, %v3167
  %v3169 = vpop.f32.mrf.mxu0
  %v3170 = vadd.f32 %v3141, %v3169
  %3171 = vdwg.mxu0
  %3172 = vmatpush.bf16.msra.mxu0 0
  %3173 = vmatpush.bf16.msra.mxu0 0
  %3174 = vmatpush.bf16.msra.mxu0 0
  %3175 = vmatpush.bf16.msra.mxu0 %v1954
  %3176 = vmatpush.bf16.msra.mxu0 %v1946
  %3177 = vmatpush.bf16.msra.mxu0 %v1938
  %3178 = vmatpush.bf16.msra.mxu0 %v1930
  %3179 = vmatpush.bf16.msra.mxu0 %v1922
  %3180 = vmatmul.bf16.gmra.mxu0 %v2320
  %v3181 = vpop.f32.mrf.mxu0
  %v3182 = vadd.f32 %v3153, %v3181
  %v3183 = vpop.f32.mrf.mxu0
  %v3184 = vadd.f32 %v3155, %v3183
  %3185 = vmatmul.bf16.gmra.mxu0 %v2323
  %v3186 = vpop.f32.mrf.mxu0
  %v3187 = vadd.f32 %v3158, %v3186
  %v3188 = vpop.f32.mrf.mxu0
  %v3189 = vadd.f32 %v3160, %v3188
  %3190 = vmatmul.bf16.gmra.mxu0 %v2326
  %v3191 = vpop.f32.mrf.mxu0
  %v3192 = vadd.f32 %v3163, %v3191
  %v3193 = vpop.f32.mrf.mxu0
  %v3194 = vadd.f32 %v3165, %v3193
  %3195 = vmatmul.bf16.gmra.mxu0 %v2329
  %v3196 = vpop.f32.mrf.mxu0
  %v3197 = vadd.f32 %v3168, %v3196
  %v3198 = vpop.f32.mrf.mxu0
  %v3199 = vadd.f32 %v3170, %v3198
  %3200 = vdwg.mxu0
  %3201 = vmatpush.bf16.msra.mxu0 %v1659
  %3202 = vmatpush.bf16.msra.mxu0 %v1651
  %3203 = vmatpush.bf16.msra.mxu0 %v1643
  %3204 = vmatpush.bf16.msra.mxu0 %v1635
  %3205 = vmatpush.bf16.msra.mxu0 %v1627
  %3206 = vmatpush.bf16.msra.mxu0 %v1619
  %3207 = vmatpush.bf16.msra.mxu0 %v1611
  %3208 = vmatpush.bf16.msra.mxu0 %v1603
  %3209 = vmatmul.bf16.gmra.mxu0 %v474
  %v3210 = vpop.f32.mrf.mxu0
  %v3211 = vadd.f32 0.0, %v3210
  %v3212 = vpop.f32.mrf.mxu0
  %v3213 = vadd.f32 0.0, %v3212
  %3214 = vmatmul.bf16.gmra.mxu0 %v480
  %v3215 = vpop.f32.mrf.mxu0
  %v3216 = vadd.f32 0.0, %v3215
  %v3217 = vpop.f32.mrf.mxu0
  %v3218 = vadd.f32 0.0, %v3217
  %3219 = vmatmul.bf16.gmra.mxu0 %v486
  %v3220 = vpop.f32.mrf.mxu0
  %v3221 = vadd.f32 0.0, %v3220
  %v3222 = vpop.f32.mrf.mxu0
  %v3223 = vadd.f32 0.0, %v3222
  %3224 = vmatmul.bf16.gmra.mxu0 %v492
  %v3225 = vpop.f32.mrf.mxu0
  %v3226 = vadd.f32 0.0, %v3225
  %v3227 = vpop.f32.mrf.mxu0
  %v3228 = vadd.f32 0.0, %v3227
  %3229 = vdwg.mxu0
  %3230 = vmatpush.bf16.msra.mxu0 %v1723
  %3231 = vmatpush.bf16.msra.mxu0 %v1715
  %3232 = vmatpush.bf16.msra.mxu0 %v1707
  %3233 = vmatpush.bf16.msra.mxu0 %v1699
  %3234 = vmatpush.bf16.msra.mxu0 %v1691
  %3235 = vmatpush.bf16.msra.mxu0 %v1683
  %3236 = vmatpush.bf16.msra.mxu0 %v1675
  %3237 = vmatpush.bf16.msra.mxu0 %v1667
  %3238 = vmatmul.bf16.gmra.mxu0 %v475
  %v3239 = vpop.f32.mrf.mxu0
  %v3240 = vadd.f32 %v3211, %v3239
  %v3241 = vpop.f32.mrf.mxu0
  %v3242 = vadd.f32 %v3213, %v3241
  %3243 = vmatmul.bf16.gmra.mxu0 %v481
  %v3244 = vpop.f32.mrf.mxu0
  %v3245 = vadd.f32 %v3216, %v3244
  %v3246 = vpop.f32.mrf.mxu0
  %v3247 = vadd.f32 %v3218, %v3246
  %3248 = vmatmul.bf16.gmra.mxu0 %v487
  %v3249 = vpop.f32.mrf.mxu0
  %v3250 = vadd.f32 %v3221, %v3249
  %v3251 = vpop.f32.mrf.mxu0
  %v3252 = vadd.f32 %v3223, %v3251
  %3253 = vmatmul.bf16.gmra.mxu0 %v493
  %v3254 = vpop.f32.mrf.mxu0
  %v3255 = vadd.f32 %v3226, %v3254
  %v3256 = vpop.f32.mrf.mxu0
  %v3257 = vadd.f32 %v3228, %v3256
  %3258 = vdwg.mxu0
  %3259 = vmatpush.bf16.msra.mxu0 %v1787
  %3260 = vmatpush.bf16.msra.mxu0 %v1779
  %3261 = vmatpush.bf16.msra.mxu0 %v1771
  %3262 = vmatpush.bf16.msra.mxu0 %v1763
  %3263 = vmatpush.bf16.msra.mxu0 %v1755
  %3264 = vmatpush.bf16.msra.mxu0 %v1747
  %3265 = vmatpush.bf16.msra.mxu0 %v1739
  %3266 = vmatpush.bf16.msra.mxu0 %v1731
  %3267 = vmatmul.bf16.gmra.mxu0 %v476
  %v3268 = vpop.f32.mrf.mxu0
  %v3269 = vadd.f32 %v3240, %v3268
  %v3270 = vpop.f32.mrf.mxu0
  %v3271 = vadd.f32 %v3242, %v3270
  %3272 = vmatmul.bf16.gmra.mxu0 %v482
  %v3273 = vpop.f32.mrf.mxu0
  %v3274 = vadd.f32 %v3245, %v3273
  %v3275 = vpop.f32.mrf.mxu0
  %v3276 = vadd.f32 %v3247, %v3275
  %3277 = vmatmul.bf16.gmra.mxu0 %v488
  %v3278 = vpop.f32.mrf.mxu0
  %v3279 = vadd.f32 %v3250, %v3278
  %v3280 = vpop.f32.mrf.mxu0
  %v3281 = vadd.f32 %v3252, %v3280
  %3282 = vmatmul.bf16.gmra.mxu0 %v494
  %v3283 = vpop.f32.mrf.mxu0
  %v3284 = vadd.f32 %v3255, %v3283
  %v3285 = vpop.f32.mrf.mxu0
  %v3286 = vadd.f32 %v3257, %v3285
  %3287 = vdwg.mxu0
  %3288 = vmatpush.bf16.msra.mxu0 %v1851
  %3289 = vmatpush.bf16.msra.mxu0 %v1843
  %3290 = vmatpush.bf16.msra.mxu0 %v1835
  %3291 = vmatpush.bf16.msra.mxu0 %v1827
  %3292 = vmatpush.bf16.msra.mxu0 %v1819
  %3293 = vmatpush.bf16.msra.mxu0 %v1811
  %3294 = vmatpush.bf16.msra.mxu0 %v1803
  %3295 = vmatpush.bf16.msra.mxu0 %v1795
  %3296 = vmatmul.bf16.gmra.mxu0 %v477
  %v3297 = vpop.f32.mrf.mxu0
  %v3298 = vadd.f32 %v3269, %v3297
  %v3299 = vpop.f32.mrf.mxu0
  %v3300 = vadd.f32 %v3271, %v3299
  %3301 = vmatmul.bf16.gmra.mxu0 %v483
  %v3302 = vpop.f32.mrf.mxu0
  %v3303 = vadd.f32 %v3274, %v3302
  %v3304 = vpop.f32.mrf.mxu0
  %v3305 = vadd.f32 %v3276, %v3304
  %3306 = vmatmul.bf16.gmra.mxu0 %v489
  %v3307 = vpop.f32.mrf.mxu0
  %v3308 = vadd.f32 %v3279, %v3307
  %v3309 = vpop.f32.mrf.mxu0
  %v3310 = vadd.f32 %v3281, %v3309
  %3311 = vmatmul.bf16.gmra.mxu0 %v495
  %v3312 = vpop.f32.mrf.mxu0
  %v3313 = vadd.f32 %v3284, %v3312
  %v3314 = vpop.f32.mrf.mxu0
  %v3315 = vadd.f32 %v3286, %v3314
  %3316 = vdwg.mxu0
  %3317 = vmatpush.bf16.msra.mxu0 %v1915
  %3318 = vmatpush.bf16.msra.mxu0 %v1907
  %3319 = vmatpush.bf16.msra.mxu0 %v1899
  %3320 = vmatpush.bf16.msra.mxu0 %v1891
  %3321 = vmatpush.bf16.msra.mxu0 %v1883
  %3322 = vmatpush.bf16.msra.mxu0 %v1875
  %3323 = vmatpush.bf16.msra.mxu0 %v1867
  %3324 = vmatpush.bf16.msra.mxu0 %v1859
  %3325 = vmatmul.bf16.gmra.mxu0 %v478
  %v3326 = vpop.f32.mrf.mxu0
  %v3327 = vadd.f32 %v3298, %v3326
  %v3328 = vpop.f32.mrf.mxu0
  %v3329 = vadd.f32 %v3300, %v3328
  %3330 = vmatmul.bf16.gmra.mxu0 %v484
  %v3331 = vpop.f32.mrf.mxu0
  %v3332 = vadd.f32 %v3303, %v3331
  %v3333 = vpop.f32.mrf.mxu0
  %v3334 = vadd.f32 %v3305, %v3333
  %3335 = vmatmul.bf16.gmra.mxu0 %v490
  %v3336 = vpop.f32.mrf.mxu0
  %v3337 = vadd.f32 %v3308, %v3336
  %v3338 = vpop.f32.mrf.mxu0
  %v3339 = vadd.f32 %v3310, %v3338
  %3340 = vmatmul.bf16.gmra.mxu0 %v496
  %v3341 = vpop.f32.mrf.mxu0
  %v3342 = vadd.f32 %v3313, %v3341
  %v3343 = vpop.f32.mrf.mxu0
  %v3344 = vadd.f32 %v3315, %v3343
  %3345 = vdwg.mxu0
  %3346 = vmatpush.bf16.msra.mxu0 0
  %3347 = vmatpush.bf16.msra.mxu0 0
  %3348 = vmatpush.bf16.msra.mxu0 0
  %3349 = vmatpush.bf16.msra.mxu0 %v1955
  %3350 = vmatpush.bf16.msra.mxu0 %v1947
  %3351 = vmatpush.bf16.msra.mxu0 %v1939
  %3352 = vmatpush.bf16.msra.mxu0 %v1931
  %3353 = vmatpush.bf16.msra.mxu0 %v1923
  %3354 = vmatmul.bf16.gmra.mxu0 %v2320
  %v3355 = vpop.f32.mrf.mxu0
  %v3356 = vadd.f32 %v3327, %v3355
  %v3357 = vpop.f32.mrf.mxu0
  %v3358 = vadd.f32 %v3329, %v3357
  %3359 = vmatmul.bf16.gmra.mxu0 %v2323
  %v3360 = vpop.f32.mrf.mxu0
  %v3361 = vadd.f32 %v3332, %v3360
  %v3362 = vpop.f32.mrf.mxu0
  %v3363 = vadd.f32 %v3334, %v3362
  %3364 = vmatmul.bf16.gmra.mxu0 %v2326
  %v3365 = vpop.f32.mrf.mxu0
  %v3366 = vadd.f32 %v3337, %v3365
  %v3367 = vpop.f32.mrf.mxu0
  %v3368 = vadd.f32 %v3339, %v3367
  %3369 = vmatmul.bf16.gmra.mxu0 %v2329
  %v3370 = vpop.f32.mrf.mxu0
  %v3371 = vadd.f32 %v3342, %v3370
  %v3372 = vpop.f32.mrf.mxu0
  %v3373 = vadd.f32 %v3344, %v3372
  %3374 = vdwg.mxu0
  %3375 = vmatpush.bf16.msra.mxu0 %v1660
  %3376 = vmatpush.bf16.msra.mxu0 %v1652
  %3377 = vmatpush.bf16.msra.mxu0 %v1644
  %3378 = vmatpush.bf16.msra.mxu0 %v1636
  %3379 = vmatpush.bf16.msra.mxu0 %v1628
  %3380 = vmatpush.bf16.msra.mxu0 %v1620
  %3381 = vmatpush.bf16.msra.mxu0 %v1612
  %3382 = vmatpush.bf16.msra.mxu0 %v1604
  %3383 = vmatmul.bf16.gmra.mxu0 %v474
  %v3384 = vpop.f32.mrf.mxu0
  %v3385 = vadd.f32 0.0, %v3384
  %v3386 = vpop.f32.mrf.mxu0
  %v3387 = vadd.f32 0.0, %v3386
  %3388 = vmatmul.bf16.gmra.mxu0 %v480
  %v3389 = vpop.f32.mrf.mxu0
  %v3390 = vadd.f32 0.0, %v3389
  %v3391 = vpop.f32.mrf.mxu0
  %v3392 = vadd.f32 0.0, %v3391
  %3393 = vmatmul.bf16.gmra.mxu0 %v486
  %v3394 = vpop.f32.mrf.mxu0
  %v3395 = vadd.f32 0.0, %v3394
  %v3396 = vpop.f32.mrf.mxu0
  %v3397 = vadd.f32 0.0, %v3396
  %3398 = vmatmul.bf16.gmra.mxu0 %v492
  %v3399 = vpop.f32.mrf.mxu0
  %v3400 = vadd.f32 0.0, %v3399
  %v3401 = vpop.f32.mrf.mxu0
  %v3402 = vadd.f32 0.0, %v3401
  %3403 = vdwg.mxu0
  %3404 = vmatpush.bf16.msra.mxu0 %v1724
  %3405 = vmatpush.bf16.msra.mxu0 %v1716
  %3406 = vmatpush.bf16.msra.mxu0 %v1708
  %3407 = vmatpush.bf16.msra.mxu0 %v1700
  %3408 = vmatpush.bf16.msra.mxu0 %v1692
  %3409 = vmatpush.bf16.msra.mxu0 %v1684
  %3410 = vmatpush.bf16.msra.mxu0 %v1676
  %3411 = vmatpush.bf16.msra.mxu0 %v1668
  %3412 = vmatmul.bf16.gmra.mxu0 %v475
  %v3413 = vpop.f32.mrf.mxu0
  %v3414 = vadd.f32 %v3385, %v3413
  %v3415 = vpop.f32.mrf.mxu0
  %v3416 = vadd.f32 %v3387, %v3415
  %3417 = vmatmul.bf16.gmra.mxu0 %v481
  %v3418 = vpop.f32.mrf.mxu0
  %v3419 = vadd.f32 %v3390, %v3418
  %v3420 = vpop.f32.mrf.mxu0
  %v3421 = vadd.f32 %v3392, %v3420
  %3422 = vmatmul.bf16.gmra.mxu0 %v487
  %v3423 = vpop.f32.mrf.mxu0
  %v3424 = vadd.f32 %v3395, %v3423
  %v3425 = vpop.f32.mrf.mxu0
  %v3426 = vadd.f32 %v3397, %v3425
  %3427 = vmatmul.bf16.gmra.mxu0 %v493
  %v3428 = vpop.f32.mrf.mxu0
  %v3429 = vadd.f32 %v3400, %v3428
  %v3430 = vpop.f32.mrf.mxu0
  %v3431 = vadd.f32 %v3402, %v3430
  %3432 = vdwg.mxu0
  %3433 = vmatpush.bf16.msra.mxu0 %v1788
  %3434 = vmatpush.bf16.msra.mxu0 %v1780
  %3435 = vmatpush.bf16.msra.mxu0 %v1772
  %3436 = vmatpush.bf16.msra.mxu0 %v1764
  %3437 = vmatpush.bf16.msra.mxu0 %v1756
  %3438 = vmatpush.bf16.msra.mxu0 %v1748
  %3439 = vmatpush.bf16.msra.mxu0 %v1740
  %3440 = vmatpush.bf16.msra.mxu0 %v1732
  %3441 = vmatmul.bf16.gmra.mxu0 %v476
  %v3442 = vpop.f32.mrf.mxu0
  %v3443 = vadd.f32 %v3414, %v3442
  %v3444 = vpop.f32.mrf.mxu0
  %v3445 = vadd.f32 %v3416, %v3444
  %3446 = vmatmul.bf16.gmra.mxu0 %v482
  %v3447 = vpop.f32.mrf.mxu0
  %v3448 = vadd.f32 %v3419, %v3447
  %v3449 = vpop.f32.mrf.mxu0
  %v3450 = vadd.f32 %v3421, %v3449
  %3451 = vmatmul.bf16.gmra.mxu0 %v488
  %v3452 = vpop.f32.mrf.mxu0
  %v3453 = vadd.f32 %v3424, %v3452
  %v3454 = vpop.f32.mrf.mxu0
  %v3455 = vadd.f32 %v3426, %v3454
  %3456 = vmatmul.bf16.gmra.mxu0 %v494
  %v3457 = vpop.f32.mrf.mxu0
  %v3458 = vadd.f32 %v3429, %v3457
  %v3459 = vpop.f32.mrf.mxu0
  %v3460 = vadd.f32 %v3431, %v3459
  %3461 = vdwg.mxu0
  %3462 = vmatpush.bf16.msra.mxu0 %v1852
  %3463 = vmatpush.bf16.msra.mxu0 %v1844
  %3464 = vmatpush.bf16.msra.mxu0 %v1836
  %3465 = vmatpush.bf16.msra.mxu0 %v1828
  %3466 = vmatpush.bf16.msra.mxu0 %v1820
  %3467 = vmatpush.bf16.msra.mxu0 %v1812
  %3468 = vmatpush.bf16.msra.mxu0 %v1804
  %3469 = vmatpush.bf16.msra.mxu0 %v1796
  %3470 = vmatmul.bf16.gmra.mxu0 %v477
  %v3471 = vpop.f32.mrf.mxu0
  %v3472 = vadd.f32 %v3443, %v3471
  %v3473 = vpop.f32.mrf.mxu0
  %v3474 = vadd.f32 %v3445, %v3473
  %3475 = vmatmul.bf16.gmra.mxu0 %v483
  %v3476 = vpop.f32.mrf.mxu0
  %v3477 = vadd.f32 %v3448, %v3476
  %v3478 = vpop.f32.mrf.mxu0
  %v3479 = vadd.f32 %v3450, %v3478
  %3480 = vmatmul.bf16.gmra.mxu0 %v489
  %v3481 = vpop.f32.mrf.mxu0
  %v3482 = vadd.f32 %v3453, %v3481
  %v3483 = vpop.f32.mrf.mxu0
  %v3484 = vadd.f32 %v3455, %v3483
  %3485 = vmatmul.bf16.gmra.mxu0 %v495
  %v3486 = vpop.f32.mrf.mxu0
  %v3487 = vadd.f32 %v3458, %v3486
  %v3488 = vpop.f32.mrf.mxu0
  %v3489 = vadd.f32 %v3460, %v3488
  %3490 = vdwg.mxu0
  %3491 = vmatpush.bf16.msra.mxu0 %v1916
  %3492 = vmatpush.bf16.msra.mxu0 %v1908
  %3493 = vmatpush.bf16.msra.mxu0 %v1900
  %3494 = vmatpush.bf16.msra.mxu0 %v1892
  %3495 = vmatpush.bf16.msra.mxu0 %v1884
  %3496 = vmatpush.bf16.msra.mxu0 %v1876
  %3497 = vmatpush.bf16.msra.mxu0 %v1868
  %3498 = vmatpush.bf16.msra.mxu0 %v1860
  %3499 = vmatmul.bf16.gmra.mxu0 %v478
  %v3500 = vpop.f32.mrf.mxu0
  %v3501 = vadd.f32 %v3472, %v3500
  %v3502 = vpop.f32.mrf.mxu0
  %v3503 = vadd.f32 %v3474, %v3502
  %3504 = vmatmul.bf16.gmra.mxu0 %v484
  %v3505 = vpop.f32.mrf.mxu0
  %v3506 = vadd.f32 %v3477, %v3505
  %v3507 = vpop.f32.mrf.mxu0
  %v3508 = vadd.f32 %v3479, %v3507
  %3509 = vmatmul.bf16.gmra.mxu0 %v490
  %v3510 = vpop.f32.mrf.mxu0
  %v3511 = vadd.f32 %v3482, %v3510
  %v3512 = vpop.f32.mrf.mxu0
  %v3513 = vadd.f32 %v3484, %v3512
  %3514 = vmatmul.bf16.gmra.mxu0 %v496
  %v3515 = vpop.f32.mrf.mxu0
  %v3516 = vadd.f32 %v3487, %v3515
  %v3517 = vpop.f32.mrf.mxu0
  %v3518 = vadd.f32 %v3489, %v3517
  %3519 = vdwg.mxu0
  %3520 = vmatpush.bf16.msra.mxu0 0
  %3521 = vmatpush.bf16.msra.mxu0 0
  %3522 = vmatpush.bf16.msra.mxu0 0
  %3523 = vmatpush.bf16.msra.mxu0 %v1956
  %3524 = vmatpush.bf16.msra.mxu0 %v1948
  %3525 = vmatpush.bf16.msra.mxu0 %v1940
  %3526 = vmatpush.bf16.msra.mxu0 %v1932
  %3527 = vmatpush.bf16.msra.mxu0 %v1924
  %3528 = vmatmul.bf16.gmra.mxu0 %v2320
  %v3529 = vpop.f32.mrf.mxu0
  %v3530 = vadd.f32 %v3501, %v3529
  %v3531 = vpop.f32.mrf.mxu0
  %v3532 = vadd.f32 %v3503, %v3531
  %3533 = vmatmul.bf16.gmra.mxu0 %v2323
  %v3534 = vpop.f32.mrf.mxu0
  %v3535 = vadd.f32 %v3506, %v3534
  %v3536 = vpop.f32.mrf.mxu0
  %v3537 = vadd.f32 %v3508, %v3536
  %3538 = vmatmul.bf16.gmra.mxu0 %v2326
  %v3539 = vpop.f32.mrf.mxu0
  %v3540 = vadd.f32 %v3511, %v3539
  %v3541 = vpop.f32.mrf.mxu0
  %v3542 = vadd.f32 %v3513, %v3541
  %3543 = vmatmul.bf16.gmra.mxu0 %v2329
  %v3544 = vpop.f32.mrf.mxu0
  %v3545 = vadd.f32 %v3516, %v3544
  %v3546 = vpop.f32.mrf.mxu0
  %v3547 = vadd.f32 %v3518, %v3546
  %3548 = vdwg.mxu0
  %3549 = vmatpush.bf16.msra.mxu0 %v1661
  %3550 = vmatpush.bf16.msra.mxu0 %v1653
  %3551 = vmatpush.bf16.msra.mxu0 %v1645
  %3552 = vmatpush.bf16.msra.mxu0 %v1637
  %3553 = vmatpush.bf16.msra.mxu0 %v1629
  %3554 = vmatpush.bf16.msra.mxu0 %v1621
  %3555 = vmatpush.bf16.msra.mxu0 %v1613
  %3556 = vmatpush.bf16.msra.mxu0 %v1605
  %3557 = vmatmul.bf16.gmra.mxu0 %v474
  %v3558 = vpop.f32.mrf.mxu0
  %v3559 = vadd.f32 0.0, %v3558
  %v3560 = vpop.f32.mrf.mxu0
  %v3561 = vadd.f32 0.0, %v3560
  %3562 = vmatmul.bf16.gmra.mxu0 %v480
  %v3563 = vpop.f32.mrf.mxu0
  %v3564 = vadd.f32 0.0, %v3563
  %v3565 = vpop.f32.mrf.mxu0
  %v3566 = vadd.f32 0.0, %v3565
  %3567 = vmatmul.bf16.gmra.mxu0 %v486
  %v3568 = vpop.f32.mrf.mxu0
  %v3569 = vadd.f32 0.0, %v3568
  %v3570 = vpop.f32.mrf.mxu0
  %v3571 = vadd.f32 0.0, %v3570
  %3572 = vmatmul.bf16.gmra.mxu0 %v492
  %v3573 = vpop.f32.mrf.mxu0
  %v3574 = vadd.f32 0.0, %v3573
  %v3575 = vpop.f32.mrf.mxu0
  %v3576 = vadd.f32 0.0, %v3575
  %3577 = vdwg.mxu0
  %3578 = vmatpush.bf16.msra.mxu0 %v1725
  %3579 = vmatpush.bf16.msra.mxu0 %v1717
  %3580 = vmatpush.bf16.msra.mxu0 %v1709
  %3581 = vmatpush.bf16.msra.mxu0 %v1701
  %3582 = vmatpush.bf16.msra.mxu0 %v1693
  %3583 = vmatpush.bf16.msra.mxu0 %v1685
  %3584 = vmatpush.bf16.msra.mxu0 %v1677
  %3585 = vmatpush.bf16.msra.mxu0 %v1669
  %3586 = vmatmul.bf16.gmra.mxu0 %v475
  %v3587 = vpop.f32.mrf.mxu0
  %v3588 = vadd.f32 %v3559, %v3587
  %v3589 = vpop.f32.mrf.mxu0
  %v3590 = vadd.f32 %v3561, %v3589
  %3591 = vmatmul.bf16.gmra.mxu0 %v481
  %v3592 = vpop.f32.mrf.mxu0
  %v3593 = vadd.f32 %v3564, %v3592
  %v3594 = vpop.f32.mrf.mxu0
  %v3595 = vadd.f32 %v3566, %v3594
  %3596 = vmatmul.bf16.gmra.mxu0 %v487
  %v3597 = vpop.f32.mrf.mxu0
  %v3598 = vadd.f32 %v3569, %v3597
  %v3599 = vpop.f32.mrf.mxu0
  %v3600 = vadd.f32 %v3571, %v3599
  %3601 = vmatmul.bf16.gmra.mxu0 %v493
  %v3602 = vpop.f32.mrf.mxu0
  %v3603 = vadd.f32 %v3574, %v3602
  %v3604 = vpop.f32.mrf.mxu0
  %v3605 = vadd.f32 %v3576, %v3604
  %3606 = vdwg.mxu0
  %3607 = vmatpush.bf16.msra.mxu0 %v1789
  %3608 = vmatpush.bf16.msra.mxu0 %v1781
  %3609 = vmatpush.bf16.msra.mxu0 %v1773
  %3610 = vmatpush.bf16.msra.mxu0 %v1765
  %3611 = vmatpush.bf16.msra.mxu0 %v1757
  %3612 = vmatpush.bf16.msra.mxu0 %v1749
  %3613 = vmatpush.bf16.msra.mxu0 %v1741
  %3614 = vmatpush.bf16.msra.mxu0 %v1733
  %3615 = vmatmul.bf16.gmra.mxu0 %v476
  %v3616 = vpop.f32.mrf.mxu0
  %v3617 = vadd.f32 %v3588, %v3616
  %v3618 = vpop.f32.mrf.mxu0
  %v3619 = vadd.f32 %v3590, %v3618
  %3620 = vmatmul.bf16.gmra.mxu0 %v482
  %v3621 = vpop.f32.mrf.mxu0
  %v3622 = vadd.f32 %v3593, %v3621
  %v3623 = vpop.f32.mrf.mxu0
  %v3624 = vadd.f32 %v3595, %v3623
  %3625 = vmatmul.bf16.gmra.mxu0 %v488
  %v3626 = vpop.f32.mrf.mxu0
  %v3627 = vadd.f32 %v3598, %v3626
  %v3628 = vpop.f32.mrf.mxu0
  %v3629 = vadd.f32 %v3600, %v3628
  %3630 = vmatmul.bf16.gmra.mxu0 %v494
  %v3631 = vpop.f32.mrf.mxu0
  %v3632 = vadd.f32 %v3603, %v3631
  %v3633 = vpop.f32.mrf.mxu0
  %v3634 = vadd.f32 %v3605, %v3633
  %3635 = vdwg.mxu0
  %3636 = vmatpush.bf16.msra.mxu0 %v1853
  %3637 = vmatpush.bf16.msra.mxu0 %v1845
  %3638 = vmatpush.bf16.msra.mxu0 %v1837
  %3639 = vmatpush.bf16.msra.mxu0 %v1829
  %3640 = vmatpush.bf16.msra.mxu0 %v1821
  %3641 = vmatpush.bf16.msra.mxu0 %v1813
  %3642 = vmatpush.bf16.msra.mxu0 %v1805
  %3643 = vmatpush.bf16.msra.mxu0 %v1797
  %3644 = vmatmul.bf16.gmra.mxu0 %v477
  %v3645 = vpop.f32.mrf.mxu0
  %v3646 = vadd.f32 %v3617, %v3645
  %v3647 = vpop.f32.mrf.mxu0
  %v3648 = vadd.f32 %v3619, %v3647
  %3649 = vmatmul.bf16.gmra.mxu0 %v483
  %v3650 = vpop.f32.mrf.mxu0
  %v3651 = vadd.f32 %v3622, %v3650
  %v3652 = vpop.f32.mrf.mxu0
  %v3653 = vadd.f32 %v3624, %v3652
  %3654 = vmatmul.bf16.gmra.mxu0 %v489
  %v3655 = vpop.f32.mrf.mxu0
  %v3656 = vadd.f32 %v3627, %v3655
  %v3657 = vpop.f32.mrf.mxu0
  %v3658 = vadd.f32 %v3629, %v3657
  %3659 = vmatmul.bf16.gmra.mxu0 %v495
  %v3660 = vpop.f32.mrf.mxu0
  %v3661 = vadd.f32 %v3632, %v3660
  %v3662 = vpop.f32.mrf.mxu0
  %v3663 = vadd.f32 %v3634, %v3662
  %3664 = vdwg.mxu0
  %3665 = vmatpush.bf16.msra.mxu0 %v1917
  %3666 = vmatpush.bf16.msra.mxu0 %v1909
  %3667 = vmatpush.bf16.msra.mxu0 %v1901
  %3668 = vmatpush.bf16.msra.mxu0 %v1893
  %3669 = vmatpush.bf16.msra.mxu0 %v1885
  %3670 = vmatpush.bf16.msra.mxu0 %v1877
  %3671 = vmatpush.bf16.msra.mxu0 %v1869
  %3672 = vmatpush.bf16.msra.mxu0 %v1861
  %3673 = vmatmul.bf16.gmra.mxu0 %v478
  %v3674 = vpop.f32.mrf.mxu0
  %v3675 = vadd.f32 %v3646, %v3674
  %v3676 = vpop.f32.mrf.mxu0
  %v3677 = vadd.f32 %v3648, %v3676
  %3678 = vmatmul.bf16.gmra.mxu0 %v484
  %v3679 = vpop.f32.mrf.mxu0
  %v3680 = vadd.f32 %v3651, %v3679
  %v3681 = vpop.f32.mrf.mxu0
  %v3682 = vadd.f32 %v3653, %v3681
  %3683 = vmatmul.bf16.gmra.mxu0 %v490
  %v3684 = vpop.f32.mrf.mxu0
  %v3685 = vadd.f32 %v3656, %v3684
  %v3686 = vpop.f32.mrf.mxu0
  %v3687 = vadd.f32 %v3658, %v3686
  %3688 = vmatmul.bf16.gmra.mxu0 %v496
  %v3689 = vpop.f32.mrf.mxu0
  %v3690 = vadd.f32 %v3661, %v3689
  %v3691 = vpop.f32.mrf.mxu0
  %v3692 = vadd.f32 %v3663, %v3691
  %3693 = vdwg.mxu0
  %3694 = vmatpush.bf16.msra.mxu0 0
  %3695 = vmatpush.bf16.msra.mxu0 0
  %3696 = vmatpush.bf16.msra.mxu0 0
  %3697 = vmatpush.bf16.msra.mxu0 %v1957
  %3698 = vmatpush.bf16.msra.mxu0 %v1949
  %3699 = vmatpush.bf16.msra.mxu0 %v1941
  %3700 = vmatpush.bf16.msra.mxu0 %v1933
  %3701 = vmatpush.bf16.msra.mxu0 %v1925
  %3702 = vmatmul.bf16.gmra.mxu0 %v2320
  %v3703 = vpop.f32.mrf.mxu0
  %v3704 = vadd.f32 %v3675, %v3703
  %v3705 = vpop.f32.mrf.mxu0
  %v3706 = vadd.f32 %v3677, %v3705
  %3707 = vmatmul.bf16.gmra.mxu0 %v2323
  %v3708 = vpop.f32.mrf.mxu0
  %v3709 = vadd.f32 %v3680, %v3708
  %v3710 = vpop.f32.mrf.mxu0
  %v3711 = vadd.f32 %v3682, %v3710
  %3712 = vmatmul.bf16.gmra.mxu0 %v2326
  %v3713 = vpop.f32.mrf.mxu0
  %v3714 = vadd.f32 %v3685, %v3713
  %v3715 = vpop.f32.mrf.mxu0
  %v3716 = vadd.f32 %v3687, %v3715
  %3717 = vmatmul.bf16.gmra.mxu0 %v2329
  %v3718 = vpop.f32.mrf.mxu0
  %v3719 = vadd.f32 %v3690, %v3718
  %v3720 = vpop.f32.mrf.mxu0
  %v3721 = vadd.f32 %v3692, %v3720
  %3722 = vdwg.mxu0
  %v3723 = vmax.f32 %v2486, 0.0
  %v3724 = vmax.f32 %v2660, 0.0
  %v3725 = vmax.f32 %v2834, 0.0
  %v3726 = vmax.f32 %v3008, 0.0
  %v3727 = vmax.f32 %v3182, 0.0
  %v3728 = vmax.f32 %v3356, 0.0
  %v3729 = vmax.f32 %v3530, 0.0
  %v3730 = vmax.f32 %v3704, 0.0
  %v3731 = vmax.f32 %v2488, 0.0
  %v3732 = vmax.f32 %v2662, 0.0
  %v3733 = vmax.f32 %v2836, 0.0
  %v3734 = vmax.f32 %v3010, 0.0
  %v3735 = vmax.f32 %v3184, 0.0
  %v3736 = vmax.f32 %v3358, 0.0
  %v3737 = vmax.f32 %v3532, 0.0
  %v3738 = vmax.f32 %v3706, 0.0
  %v3739 = vmax.f32 %v2491, 0.0
  %v3740 = vmax.f32 %v2665, 0.0
  %v3741 = vmax.f32 %v2839, 0.0
  %v3742 = vmax.f32 %v3013, 0.0
  %v3743 = vmax.f32 %v3187, 0.0
  %v3744 = vmax.f32 %v3361, 0.0
  %v3745 = vmax.f32 %v3535, 0.0
  %v3746 = vmax.f32 %v3709, 0.0
  %v3747 = vmax.f32 %v2493, 0.0
  %v3748 = vmax.f32 %v2667, 0.0
  %v3749 = vmax.f32 %v2841, 0.0
  %v3750 = vmax.f32 %v3015, 0.0
  %v3751 = vmax.f32 %v3189, 0.0
  %v3752 = vmax.f32 %v3363, 0.0
  %v3753 = vmax.f32 %v3537, 0.0
  %v3754 = vmax.f32 %v3711, 0.0
  %v3755 = vmax.f32 %v2496, 0.0
  %v3756 = vmax.f32 %v2670, 0.0
  %v3757 = vmax.f32 %v2844, 0.0
  %v3758 = vmax.f32 %v3018, 0.0
  %v3759 = vmax.f32 %v3192, 0.0
  %v3760 = vmax.f32 %v3366, 0.0
  %v3761 = vmax.f32 %v3540, 0.0
  %v3762 = vmax.f32 %v3714, 0.0
  %v3763 = vmax.f32 %v2498, 0.0
  %v3764 = vmax.f32 %v2672, 0.0
  %v3765 = vmax.f32 %v2846, 0.0
  %v3766 = vmax.f32 %v3020, 0.0
  %v3767 = vmax.f32 %v3194, 0.0
  %v3768 = vmax.f32 %v3368, 0.0
  %v3769 = vmax.f32 %v3542, 0.0
  %v3770 = vmax.f32 %v3716, 0.0
  %v3771 = vmax.f32 %v2501, 0.0
  %v3772 = vmax.f32 %v2675, 0.0
  %v3773 = vmax.f32 %v2849, 0.0
  %v3774 = vmax.f32 %v3023, 0.0
  %v3775 = vmax.f32 %v3197, 0.0
  %v3776 = vmax.f32 %v3371, 0.0
  %v3777 = vmax.f32 %v3545, 0.0
  %v3778 = vmax.f32 %v3719, 0.0
  %v3779 = vmax.f32 %v2503, 0.0
  %v3780 = vmax.f32 %v2677, 0.0
  %v3781 = vmax.f32 %v2851, 0.0
  %v3782 = vmax.f32 %v3025, 0.0
  %v3783 = vmax.f32 %v3199, 0.0
  %v3784 = vmax.f32 %v3373, 0.0
  %v3785 = vmax.f32 %v3547, 0.0
  %v3786 = vmax.f32 %v3721, 0.0
  %v3787 = vmax.f32 %v3723, %v3725
  %v3788 = vmax.f32 %v3724, %v3726
  %v3789 = vmax.f32 %v3731, %v3733
  %v3790 = vmax.f32 %v3732, %v3734
  %v3791 = vmax.f32 %v3739, %v3741
  %v3792 = vmax.f32 %v3740, %v3742
  %v3793 = vmax.f32 %v3747, %v3749
  %v3794 = vmax.f32 %v3748, %v3750
  %v3795 = vmax.f32 %v3755, %v3757
  %v3796 = vmax.f32 %v3756, %v3758
  %v3797 = vmax.f32 %v3763, %v3765
  %v3798 = vmax.f32 %v3764, %v3766
  %v3799 = vmax.f32 %v3771, %v3773
  %v3800 = vmax.f32 %v3772, %v3774
  %v3801 = vmax.f32 %v3779, %v3781
  %v3802 = vmax.f32 %v3780, %v3782
  %v3803 = vmax.f32 %v3727, %v3729
  %v3804 = vmax.f32 %v3728, %v3730
  %v3805 = vmax.f32 %v3735, %v3737
  %v3806 = vmax.f32 %v3736, %v3738
  %v3807 = vmax.f32 %v3743, %v3745
  %v3808 = vmax.f32 %v3744, %v3746
  %v3809 = vmax.f32 %v3751, %v3753
  %v3810 = vmax.f32 %v3752, %v3754
  %v3811 = vmax.f32 %v3759, %v3761
  %v3812 = vmax.f32 %v3760, %v3762
  %v3813 = vmax.f32 %v3767, %v3769
  %v3814 = vmax.f32 %v3768, %v3770
  %v3815 = vmax.f32 %v3775, %v3777
  %v3816 = vmax.f32 %v3776, %v3778
  %v3817 = vmax.f32 %v3783, %v3785
  %v3818 = vmax.f32 %v3784, %v3786
  %v3819 = vmax.f32 %v3787, %v3803
  %v3820 = vmax.f32 %v3788, %v3804
  %v3821 = vmax.f32 %v3789, %v3805
  %v3822 = vmax.f32 %v3790, %v3806
  %v3823 = vmax.f32 %v3791, %v3807
  %v3824 = vmax.f32 %v3792, %v3808
  %v3825 = vmax.f32 %v3793, %v3809
  %v3826 = vmax.f32 %v3794, %v3810
  %v3827 = vmax.f32 %v3795, %v3811
  %v3828 = vmax.f32 %v3796, %v3812
  %v3829 = vmax.f32 %v3797, %v3813
  %v3830 = vmax.f32 %v3798, %v3814
  %v3831 = vmax.f32 %v3799, %v3815
  %v3832 = vmax.f32 %v3800, %v3816
  %v3833 = vmax.f32 %v3801, %v3817
  %v3834 = vmax.f32 %v3802, %v3818
  %v3835 = vmax.f32 %v3819, %v3827
  %v3836 = vmax.f32 %v3820, %v3828
  %v3837 = vmax.f32 %v3821, %v3829
  %v3838 = vmax.f32 %v3822, %v3830
  %v3839 = vmax.f32 %v3823, %v3831
  %v3840 = vmax.f32 %v3824, %v3832
  %v3841 = vmax.f32 %v3825, %v3833
  %v3842 = vmax.f32 %v3826, %v3834
  %3843 = vst [vmem:[#allocation2] sm:$0xff] 0
  %3844 = vst [vmem:[#allocation2 + $0x28] sm:$0xff] 0
  %v3845 = vpack.c.bf16 %v3836, %v3835
  %v3846 = vpack.c.bf16 %v3838, %v3837
  %v3847 = vpack.c.bf16 %v3840, %v3839
  %v3848 = vpack.c.bf16 %v3842, %v3841
  %3849 = vst [vmem:[#allocation2 + $0x8] sm:$0xff] %v3845
  %3850 = vst [vmem:[#allocation2 + $0x10] sm:$0xff] %v3846
  %3851 = vst [vmem:[#allocation2 + $0x18] sm:$0xff] %v3847
  %3852 = vst [vmem:[#allocation2 + $0x20] sm:$0xff] %v3848
  %v3853 = vld [vmem:[#allocation2] sm:$0xff]
  %v3854 = vld [vmem:[#allocation2 + $0x8] sm:$0xff]
  %v3855 = vld [vmem:[#allocation2 + $0x10] sm:$0xff]
  %v3856 = vld [vmem:[#allocation2 + $0x18] sm:$0xff]
  %v3857 = vld [vmem:[%s2] sm:$0xff]
  %v3858 = vld [vmem:[%s2 + $0x8] sm:$0xff]
  %v3859 = vld [vmem:[%s2 + $0x10] sm:$0xff]
  %v3860 = vld [vmem:[%s2 + $0x18] sm:$0xff]
  %v3861 = vld [vmem:[%s2 + $0x20] sm:$0xff]
  %v3862 = vld [vmem:[%s2 + $0x28] sm:$0xff]
  %v3863 = vld [vmem:[%s2 + $0x30] sm:$0xff]
  %v3864 = vld [vmem:[%s2 + $0x38] sm:$0xff]
  %v3865 = vld [vmem:[%s2 + $0x40] sm:$0xff]
  %v3866 = vld [vmem:[%s2 + $0x48] sm:$0xff]
  %v3867 = vld [vmem:[%s2 + $0x50] sm:$0xff]
  %v3868 = vld [vmem:[%s2 + $0x58] sm:$0xff]
  %v3869 = vld [vmem:[%s2 + $0x60] sm:$0xff]
  %v3870 = vld [vmem:[%s2 + $0x68] sm:$0xff]
  %v3871 = vld [vmem:[%s2 + $0x70] sm:$0xff]
  %v3872 = vld [vmem:[%s2 + $0x78] sm:$0xff]
  %v3873 = vld [vmem:[%s2 + $0x80] sm:$0xff]
  %v3874 = vld [vmem:[%s2 + $0x88] sm:$0xff]
  %v3875 = vld [vmem:[%s2 + $0x90] sm:$0xff]
  %v3876 = vld [vmem:[%s2 + $0x98] sm:$0xff]
  %v3877 = vld [vmem:[%s2 + $0xa0] sm:$0xff]
  %v3878 = vld [vmem:[%s2 + $0xa8] sm:$0xff]
  %v3879 = vld [vmem:[%s2 + $0xb0] sm:$0xff]
  %v3880 = vld [vmem:[%s2 + $0xb8] sm:$0xff]
  %v3881 = vld [vmem:[%s2 + $0xc0] sm:$0xff]
  %v3882 = vld [vmem:[%s2 + $0xc8] sm:$0xff]
  %v3883 = vld [vmem:[%s2 + $0xd0] sm:$0xff]
  %v3884 = vld [vmem:[%s2 + $0xd8] sm:$0xff]
  %v3885 = vld [vmem:[%s2 + $0xe0] sm:$0xff]
  %v3886 = vld [vmem:[%s2 + $0xe8] sm:$0xff]
  %v3887 = vld [vmem:[%s2 + $0xf0] sm:$0xff]
  %v3888 = vld [vmem:[%s2 + $0xf8] sm:$0xff]
  %v3889 = vld [vmem:[%s2 + $0x100] sm:$0xff]
  %v3890 = vld [vmem:[%s2 + $0x108] sm:$0xff]
  %v3891 = vld [vmem:[%s2 + $0x110] sm:$0xff]
  %v3892 = vld [vmem:[%s2 + $0x118] sm:$0xff]
  %v3893 = vld [vmem:[%s2 + $0x120] sm:$0xff]
  %v3894 = vld [vmem:[%s2 + $0x128] sm:$0xff]
  %v3895 = vld [vmem:[%s2 + $0x130] sm:$0xff]
  %v3896 = vld [vmem:[%s2 + $0x138] sm:$0xff]
  %v3897 = vld [vmem:[%s2 + $0x140] sm:$0xff]
  %v3898 = vld [vmem:[%s2 + $0x148] sm:$0xff]
  %v3899 = vld [vmem:[%s2 + $0x150] sm:$0xff]
  %v3900 = vld [vmem:[%s2 + $0x158] sm:$0xff]
  %v3901 = vld [vmem:[%s2 + $0x160] sm:$0xff]
  %v3902 = vld [vmem:[%s2 + $0x168] sm:$0xff]
  %v3903 = vld [vmem:[%s2 + $0x170] sm:$0xff]
  %v3904 = vld [vmem:[%s2 + $0x178] sm:$0xff]
  %v3905 = vld [vmem:[%s2 + $0x180] sm:$0xff]
  %v3906 = vld [vmem:[%s2 + $0x188] sm:$0xff]
  %v3907 = vld [vmem:[%s2 + $0x190] sm:$0xff]
  %v3908 = vld [vmem:[%s2 + $0x198] sm:$0xff]
  %v3909 = vld [vmem:[%s2 + $0x1a0] sm:$0xff]
  %v3910 = vld [vmem:[%s2 + $0x1a8] sm:$0xff]
  %v3911 = vld [vmem:[%s2 + $0x1b0] sm:$0xff]
  %v3912 = vld [vmem:[%s2 + $0x1b8] sm:$0xff]
  %v3913 = vld [vmem:[%s2 + $0x1c0] sm:$0xff]
  %v3914 = vld [vmem:[%s2 + $0x1c8] sm:$0xff]
  %v3915 = vld [vmem:[%s2 + $0x1d0] sm:$0xff]
  %v3916 = vld [vmem:[%s2 + $0x1d8] sm:$0xff]
  %v3917 = vld [vmem:[%s2 + $0x1e0] sm:$0xff]
  %v3918 = vld [vmem:[%s2 + $0x1e8] sm:$0xff]
  %v3919 = vld [vmem:[%s2 + $0x1f0] sm:$0xff]
  %v3920 = vld [vmem:[%s2 + $0x1f8] sm:$0xff]
  %v3921 = vld [vmem:[#allocation2 + $0x20] sm:$0xff]
  %s3922 = scalar_lea.vmem %s2, 512
  %v3923 = vld [vmem:[%s3922] sm:$0xff]
  %v3924 = vld [vmem:[%s3922 + $0x8] sm:$0xff]
  %v3925 = vld [vmem:[%s3922 + $0x10] sm:$0xff]
  %v3926 = vld [vmem:[%s3922 + $0x18] sm:$0xff]
  %v3927 = vld [vmem:[%s3922 + $0x20] sm:$0xff]
  %v3928 = vld [vmem:[%s3922 + $0x28] sm:$0xff]
  %v3929 = vld [vmem:[%s3922 + $0x30] sm:$0xff]
  %v3930 = vld [vmem:[%s3922 + $0x38] sm:$0xff]
  %v3931 = vld [vmem:[%s3922 + $0x40] sm:$0xff]
  %v3932 = vld [vmem:[%s3922 + $0x48] sm:$0xff]
  %v3933 = vld [vmem:[%s3922 + $0x50] sm:$0xff]
  %v3934 = vld [vmem:[%s3922 + $0x58] sm:$0xff]
  %v3935 = vld [vmem:[%s3922 + $0x60] sm:$0xff]
  %v3936 = vld [vmem:[%s3922 + $0x68] sm:$0xff]
  %v3937 = vld [vmem:[%s3922 + $0x70] sm:$0xff]
  %v3938 = vld [vmem:[%s3922 + $0x78] sm:$0xff]
  %v3939 = vld [vmem:[%s3922 + $0x80] sm:$0xff]
  %v3940 = vld [vmem:[%s3922 + $0x88] sm:$0xff]
  %v3941 = vld [vmem:[%s3922 + $0x90] sm:$0xff]
  %v3942 = vld [vmem:[%s3922 + $0x98] sm:$0xff]
  %v3943 = vld [vmem:[%s3922 + $0xa0] sm:$0xff]
  %v3944 = vld [vmem:[%s3922 + $0xa8] sm:$0xff]
  %v3945 = vld [vmem:[%s3922 + $0xb0] sm:$0xff]
  %v3946 = vld [vmem:[%s3922 + $0xb8] sm:$0xff]
  %v3947 = vld [vmem:[%s3922 + $0xc0] sm:$0xff]
  %v3948 = vld [vmem:[%s3922 + $0xc8] sm:$0xff]
  %v3949 = vld [vmem:[%s3922 + $0xd0] sm:$0xff]
  %v3950 = vld [vmem:[%s3922 + $0xd8] sm:$0xff]
  %v3951 = vld [vmem:[%s3922 + $0xe0] sm:$0xff]
  %v3952 = vld [vmem:[%s3922 + $0xe8] sm:$0xff]
  %v3953 = vld [vmem:[%s3922 + $0xf0] sm:$0xff]
  %v3954 = vld [vmem:[%s3922 + $0xf8] sm:$0xff]
  %v3955 = vld [vmem:[%s3922 + $0x100] sm:$0xff]
  %v3956 = vld [vmem:[%s3922 + $0x108] sm:$0xff]
  %v3957 = vld [vmem:[%s3922 + $0x110] sm:$0xff]
  %v3958 = vld [vmem:[%s3922 + $0x118] sm:$0xff]
  %v3959 = vld [vmem:[%s3922 + $0x120] sm:$0xff]
  %v3960 = vld [vmem:[%s3922 + $0x128] sm:$0xff]
  %v3961 = vld [vmem:[%s3922 + $0x130] sm:$0xff]
  %v3962 = vld [vmem:[%s3922 + $0x138] sm:$0xff]
  %v3963 = vld [vmem:[%s3922 + $0x140] sm:$0xff]
  %v3964 = vld [vmem:[%s3922 + $0x148] sm:$0xff]
  %v3965 = vld [vmem:[%s3922 + $0x150] sm:$0xff]
  %v3966 = vld [vmem:[%s3922 + $0x158] sm:$0xff]
  %v3967 = vld [vmem:[%s3922 + $0x160] sm:$0xff]
  %v3968 = vld [vmem:[%s3922 + $0x168] sm:$0xff]
  %v3969 = vld [vmem:[%s3922 + $0x170] sm:$0xff]
  %v3970 = vld [vmem:[%s3922 + $0x178] sm:$0xff]
  %v3971 = vld [vmem:[%s3922 + $0x180] sm:$0xff]
  %v3972 = vld [vmem:[%s3922 + $0x188] sm:$0xff]
  %v3973 = vld [vmem:[%s3922 + $0x190] sm:$0xff]
  %v3974 = vld [vmem:[%s3922 + $0x198] sm:$0xff]
  %v3975 = vld [vmem:[%s3922 + $0x1a0] sm:$0xff]
  %v3976 = vld [vmem:[%s3922 + $0x1a8] sm:$0xff]
  %v3977 = vld [vmem:[%s3922 + $0x1b0] sm:$0xff]
  %v3978 = vld [vmem:[%s3922 + $0x1b8] sm:$0xff]
  %v3979 = vld [vmem:[%s3922 + $0x1c0] sm:$0xff]
  %v3980 = vld [vmem:[%s3922 + $0x1c8] sm:$0xff]
  %v3981 = vld [vmem:[%s3922 + $0x1d0] sm:$0xff]
  %v3982 = vld [vmem:[%s3922 + $0x1d8] sm:$0xff]
  %v3983 = vld [vmem:[%s3922 + $0x1e0] sm:$0xff]
  %v3984 = vld [vmem:[%s3922 + $0x1e8] sm:$0xff]
  %v3985 = vld [vmem:[%s3922 + $0x1f0] sm:$0xff]
  %v3986 = vld [vmem:[%s3922 + $0x1f8] sm:$0xff]
  %v3991 = vunpack.c.l.b16 %v3854
  %v3992 = vunpack.c.h.b16 %v3854
  %v3993 = vunpack.c.l.b16 %v3855
  %v3994 = vunpack.c.h.b16 %v3855
  %v3995 = vunpack.c.l.b16 %v3856
  %v3996 = vunpack.c.h.b16 %v3856
  %v3997 = vunpack.c.l.b16 %v3921
  %v3998 = vunpack.c.h.b16 %v3921
  %v3999 = vpack.c.b16 %v3993, %v3991
  %v4000 = vpack.c.b16 %v3994, %v3992
  %v4001 = vpack.c.b16 %v3997, %v3995
  %v4002 = vpack.c.b16 %v3998, %v3996
  %v4071 = vunpack.c.l.b16 %v3923
  %v4072 = vunpack.c.h.b16 %v3923
  %v4073 = vunpack.c.l.b16 %v3924
  %v4074 = vunpack.c.h.b16 %v3924
  %v4075 = vunpack.c.l.b16 %v3925
  %v4076 = vunpack.c.h.b16 %v3925
  %v4077 = vunpack.c.l.b16 %v3926
  %v4078 = vunpack.c.h.b16 %v3926
  %v4079 = vunpack.c.l.b16 %v3927
  %v4080 = vunpack.c.h.b16 %v3927
  %v4081 = vunpack.c.l.b16 %v3928
  %v4082 = vunpack.c.h.b16 %v3928
  %v4083 = vunpack.c.l.b16 %v3929
  %v4084 = vunpack.c.h.b16 %v3929
  %v4085 = vunpack.c.l.b16 %v3930
  %v4086 = vunpack.c.h.b16 %v3930
  %v4087 = vunpack.c.l.b16 %v3931
  %v4088 = vunpack.c.h.b16 %v3931
  %v4089 = vunpack.c.l.b16 %v3932
  %v4090 = vunpack.c.h.b16 %v3932
  %v4091 = vunpack.c.l.b16 %v3933
  %v4092 = vunpack.c.h.b16 %v3933
  %v4093 = vunpack.c.l.b16 %v3934
  %v4094 = vunpack.c.h.b16 %v3934
  %v4095 = vunpack.c.l.b16 %v3935
  %v4096 = vunpack.c.h.b16 %v3935
  %v4097 = vunpack.c.l.b16 %v3936
  %v4098 = vunpack.c.h.b16 %v3936
  %v4099 = vunpack.c.l.b16 %v3937
  %v4100 = vunpack.c.h.b16 %v3937
  %v4101 = vunpack.c.l.b16 %v3938
  %v4102 = vunpack.c.h.b16 %v3938
  %v4103 = vunpack.c.l.b16 %v3939
  %v4104 = vunpack.c.h.b16 %v3939
  %v4105 = vunpack.c.l.b16 %v3940
  %v4106 = vunpack.c.h.b16 %v3940
  %v4107 = vunpack.c.l.b16 %v3941
  %v4108 = vunpack.c.h.b16 %v3941
  %v4109 = vunpack.c.l.b16 %v3942
  %v4110 = vunpack.c.h.b16 %v3942
  %v4111 = vunpack.c.l.b16 %v3943
  %v4112 = vunpack.c.h.b16 %v3943
  %v4113 = vunpack.c.l.b16 %v3944
  %v4114 = vunpack.c.h.b16 %v3944
  %v4115 = vunpack.c.l.b16 %v3945
  %v4116 = vunpack.c.h.b16 %v3945
  %v4117 = vunpack.c.l.b16 %v3946
  %v4118 = vunpack.c.h.b16 %v3946
  %v4119 = vunpack.c.l.b16 %v3947
  %v4120 = vunpack.c.h.b16 %v3947
  %v4121 = vunpack.c.l.b16 %v3948
  %v4122 = vunpack.c.h.b16 %v3948
  %v4123 = vunpack.c.l.b16 %v3949
  %v4124 = vunpack.c.h.b16 %v3949
  %v4125 = vunpack.c.l.b16 %v3950
  %v4126 = vunpack.c.h.b16 %v3950
  %v4127 = vunpack.c.l.b16 %v3951
  %v4128 = vunpack.c.h.b16 %v3951
  %v4129 = vunpack.c.l.b16 %v3952
  %v4130 = vunpack.c.h.b16 %v3952
  %v4131 = vunpack.c.l.b16 %v3953
  %v4132 = vunpack.c.h.b16 %v3953
  %v4133 = vunpack.c.l.b16 %v3954
  %v4134 = vunpack.c.h.b16 %v3954
  %v4135 = vunpack.c.l.b16 %v3955
  %v4136 = vunpack.c.h.b16 %v3955
  %v4137 = vunpack.c.l.b16 %v3956
  %v4138 = vunpack.c.h.b16 %v3956
  %v4139 = vunpack.c.l.b16 %v3957
  %v4140 = vunpack.c.h.b16 %v3957
  %v4141 = vunpack.c.l.b16 %v3958
  %v4142 = vunpack.c.h.b16 %v3958
  %v4143 = vunpack.c.l.b16 %v3959
  %v4144 = vunpack.c.h.b16 %v3959
  %v4145 = vunpack.c.l.b16 %v3960
  %v4146 = vunpack.c.h.b16 %v3960
  %v4147 = vunpack.c.l.b16 %v3961
  %v4148 = vunpack.c.h.b16 %v3961
  %v4149 = vunpack.c.l.b16 %v3962
  %v4150 = vunpack.c.h.b16 %v3962
  %v4151 = vunpack.c.l.b16 %v3963
  %v4152 = vunpack.c.h.b16 %v3963
  %v4153 = vunpack.c.l.b16 %v3964
  %v4154 = vunpack.c.h.b16 %v3964
  %v4155 = vunpack.c.l.b16 %v3965
  %v4156 = vunpack.c.h.b16 %v3965
  %v4157 = vunpack.c.l.b16 %v3966
  %v4158 = vunpack.c.h.b16 %v3966
  %v4159 = vunpack.c.l.b16 %v3967
  %v4160 = vunpack.c.h.b16 %v3967
  %v4161 = vunpack.c.l.b16 %v3968
  %v4162 = vunpack.c.h.b16 %v3968
  %v4163 = vunpack.c.l.b16 %v3969
  %v4164 = vunpack.c.h.b16 %v3969
  %v4165 = vunpack.c.l.b16 %v3970
  %v4166 = vunpack.c.h.b16 %v3970
  %v4167 = vunpack.c.l.b16 %v3971
  %v4168 = vunpack.c.h.b16 %v3971
  %v4169 = vunpack.c.l.b16 %v3972
  %v4170 = vunpack.c.h.b16 %v3972
  %v4171 = vunpack.c.l.b16 %v3973
  %v4172 = vunpack.c.h.b16 %v3973
  %v4173 = vunpack.c.l.b16 %v3974
  %v4174 = vunpack.c.h.b16 %v3974
  %v4175 = vunpack.c.l.b16 %v3975
  %v4176 = vunpack.c.h.b16 %v3975
  %v4177 = vunpack.c.l.b16 %v3976
  %v4178 = vunpack.c.h.b16 %v3976
  %v4179 = vunpack.c.l.b16 %v3977
  %v4180 = vunpack.c.h.b16 %v3977
  %v4181 = vunpack.c.l.b16 %v3978
  %v4182 = vunpack.c.h.b16 %v3978
  %v4183 = vunpack.c.l.b16 %v3979
  %v4184 = vunpack.c.h.b16 %v3979
  %v4185 = vunpack.c.l.b16 %v3980
  %v4186 = vunpack.c.h.b16 %v3980
  %v4187 = vunpack.c.l.b16 %v3981
  %v4188 = vunpack.c.h.b16 %v3981
  %v4189 = vunpack.c.l.b16 %v3982
  %v4190 = vunpack.c.h.b16 %v3982
  %v4191 = vunpack.c.l.b16 %v3983
  %v4192 = vunpack.c.h.b16 %v3983
  %v4193 = vunpack.c.l.b16 %v3984
  %v4194 = vunpack.c.h.b16 %v3984
  %v4195 = vunpack.c.l.b16 %v3985
  %v4196 = vunpack.c.h.b16 %v3985
  %v4197 = vunpack.c.l.b16 %v3986
  %v4198 = vunpack.c.h.b16 %v3986
  %v4199 = vpack.c.b16 %v4075, %v4071
  %v4200 = vpack.c.b16 %v4076, %v4072
  %v4201 = vpack.c.b16 %v4077, %v4073
  %v4202 = vpack.c.b16 %v4078, %v4074
  %v4203 = vpack.c.b16 %v4083, %v4079
  %v4204 = vpack.c.b16 %v4084, %v4080
  %v4205 = vpack.c.b16 %v4085, %v4081
  %v4206 = vpack.c.b16 %v4086, %v4082
  %v4207 = vpack.c.b16 %v4091, %v4087
  %v4208 = vpack.c.b16 %v4092, %v4088
  %v4209 = vpack.c.b16 %v4093, %v4089
  %v4210 = vpack.c.b16 %v4094, %v4090
  %v4211 = vpack.c.b16 %v4099, %v4095
  %v4212 = vpack.c.b16 %v4100, %v4096
  %v4213 = vpack.c.b16 %v4101, %v4097
  %v4214 = vpack.c.b16 %v4102, %v4098
  %v4215 = vpack.c.b16 %v4107, %v4103
  %v4216 = vpack.c.b16 %v4108, %v4104
  %v4217 = vpack.c.b16 %v4109, %v4105
  %v4218 = vpack.c.b16 %v4110, %v4106
  %v4219 = vpack.c.b16 %v4115, %v4111
  %v4220 = vpack.c.b16 %v4116, %v4112
  %v4221 = vpack.c.b16 %v4117, %v4113
  %v4222 = vpack.c.b16 %v4118, %v4114
  %v4223 = vpack.c.b16 %v4123, %v4119
  %v4224 = vpack.c.b16 %v4124, %v4120
  %v4225 = vpack.c.b16 %v4125, %v4121
  %v4226 = vpack.c.b16 %v4126, %v4122
  %v4227 = vpack.c.b16 %v4131, %v4127
  %v4228 = vpack.c.b16 %v4132, %v4128
  %v4229 = vpack.c.b16 %v4133, %v4129
  %v4230 = vpack.c.b16 %v4134, %v4130
  %v4231 = vpack.c.b16 %v4139, %v4135
  %v4232 = vpack.c.b16 %v4140, %v4136
  %v4233 = vpack.c.b16 %v4141, %v4137
  %v4234 = vpack.c.b16 %v4142, %v4138
  %v4235 = vpack.c.b16 %v4147, %v4143
  %v4236 = vpack.c.b16 %v4148, %v4144
  %v4237 = vpack.c.b16 %v4149, %v4145
  %v4238 = vpack.c.b16 %v4150, %v4146
  %v4239 = vpack.c.b16 %v4155, %v4151
  %v4240 = vpack.c.b16 %v4156, %v4152
  %v4241 = vpack.c.b16 %v4157, %v4153
  %v4242 = vpack.c.b16 %v4158, %v4154
  %v4243 = vpack.c.b16 %v4163, %v4159
  %v4244 = vpack.c.b16 %v4164, %v4160
  %v4245 = vpack.c.b16 %v4165, %v4161
  %v4246 = vpack.c.b16 %v4166, %v4162
  %v4247 = vpack.c.b16 %v4171, %v4167
  %v4248 = vpack.c.b16 %v4172, %v4168
  %v4249 = vpack.c.b16 %v4173, %v4169
  %v4250 = vpack.c.b16 %v4174, %v4170
  %v4251 = vpack.c.b16 %v4179, %v4175
  %v4252 = vpack.c.b16 %v4180, %v4176
  %v4253 = vpack.c.b16 %v4181, %v4177
  %v4254 = vpack.c.b16 %v4182, %v4178
  %v4255 = vpack.c.b16 %v4187, %v4183
  %v4256 = vpack.c.b16 %v4188, %v4184
  %v4257 = vpack.c.b16 %v4189, %v4185
  %v4258 = vpack.c.b16 %v4190, %v4186
  %v4259 = vpack.c.b16 %v4195, %v4191
  %v4260 = vpack.c.b16 %v4196, %v4192
  %v4261 = vpack.c.b16 %v4197, %v4193
  %v4262 = vpack.c.b16 %v4198, %v4194
  %4327 = vmatpush.bf16.msra.mxu0 %v4227
  %4328 = vmatpush.bf16.msra.mxu0 %v4223
  %4329 = vmatpush.bf16.msra.mxu0 %v4219
  %4330 = vmatpush.bf16.msra.mxu0 %v4215
  %4331 = vmatpush.bf16.msra.mxu0 %v4211
  %4332 = vmatpush.bf16.msra.mxu0 %v4207
  %4333 = vmatpush.bf16.msra.mxu0 %v4203
  %4334 = vmatpush.bf16.msra.mxu0 %v4199
  %4335 = vmatmul.bf16.gmra.mxu0 %v3999
  %v4336 = vpop.f32.mrf.mxu0
  %v4337 = vadd.f32 0.0, %v4336
  %v4338 = vpop.f32.mrf.mxu0
  %v4339 = vadd.f32 0.0, %v4338
  %4340 = vmatmul.bf16.gmra.mxu0 %v4001
  %v4341 = vpop.f32.mrf.mxu0
  %v4342 = vadd.f32 0.0, %v4341
  %v4343 = vpop.f32.mrf.mxu0
  %v4344 = vadd.f32 0.0, %v4343
  %4345 = vdwg.mxu0
  %4346 = vmatpush.bf16.msra.mxu0 %v4259
  %4347 = vmatpush.bf16.msra.mxu0 %v4255
  %4348 = vmatpush.bf16.msra.mxu0 %v4251
  %4349 = vmatpush.bf16.msra.mxu0 %v4247
  %4350 = vmatpush.bf16.msra.mxu0 %v4243
  %4351 = vmatpush.bf16.msra.mxu0 %v4239
  %4352 = vmatpush.bf16.msra.mxu0 %v4235
  %4353 = vmatpush.bf16.msra.mxu0 %v4231
  %4354 = vmatmul.bf16.gmra.mxu0 %v4000
  %v4355 = vpop.f32.mrf.mxu0
  %v4356 = vadd.f32 %v4337, %v4355
  %v4357 = vpop.f32.mrf.mxu0
  %v4358 = vadd.f32 %v4339, %v4357
  %4359 = vmatmul.bf16.gmra.mxu0 %v4002
  %v4360 = vpop.f32.mrf.mxu0
  %v4361 = vadd.f32 %v4342, %v4360
  %v4362 = vpop.f32.mrf.mxu0
  %v4363 = vadd.f32 %v4344, %v4362
  %4364 = vdwg.mxu0
  %4365 = vmatpush.bf16.msra.mxu0 %v4228
  %4366 = vmatpush.bf16.msra.mxu0 %v4224
  %4367 = vmatpush.bf16.msra.mxu0 %v4220
  %4368 = vmatpush.bf16.msra.mxu0 %v4216
  %4369 = vmatpush.bf16.msra.mxu0 %v4212
  %4370 = vmatpush.bf16.msra.mxu0 %v4208
  %4371 = vmatpush.bf16.msra.mxu0 %v4204
  %4372 = vmatpush.bf16.msra.mxu0 %v4200
  %4373 = vmatmul.bf16.gmra.mxu0 %v3999
  %v4374 = vpop.f32.mrf.mxu0
  %v4375 = vadd.f32 0.0, %v4374
  %v4376 = vpop.f32.mrf.mxu0
  %v4377 = vadd.f32 0.0, %v4376
  %4378 = vmatmul.bf16.gmra.mxu0 %v4001
  %v4379 = vpop.f32.mrf.mxu0
  %v4380 = vadd.f32 0.0, %v4379
  %v4381 = vpop.f32.mrf.mxu0
  %v4382 = vadd.f32 0.0, %v4381
  %4383 = vdwg.mxu0
  %4384 = vmatpush.bf16.msra.mxu0 %v4260
  %4385 = vmatpush.bf16.msra.mxu0 %v4256
  %4386 = vmatpush.bf16.msra.mxu0 %v4252
  %4387 = vmatpush.bf16.msra.mxu0 %v4248
  %4388 = vmatpush.bf16.msra.mxu0 %v4244
  %4389 = vmatpush.bf16.msra.mxu0 %v4240
  %4390 = vmatpush.bf16.msra.mxu0 %v4236
  %4391 = vmatpush.bf16.msra.mxu0 %v4232
  %4392 = vmatmul.bf16.gmra.mxu0 %v4000
  %v4393 = vpop.f32.mrf.mxu0
  %v4394 = vadd.f32 %v4375, %v4393
  %v4395 = vpop.f32.mrf.mxu0
  %v4396 = vadd.f32 %v4377, %v4395
  %4397 = vmatmul.bf16.gmra.mxu0 %v4002
  %v4398 = vpop.f32.mrf.mxu0
  %v4399 = vadd.f32 %v4380, %v4398
  %v4400 = vpop.f32.mrf.mxu0
  %v4401 = vadd.f32 %v4382, %v4400
  %4402 = vdwg.mxu0
  %4403 = vmatpush.bf16.msra.mxu0 %v4229
  %4404 = vmatpush.bf16.msra.mxu0 %v4225
  %4405 = vmatpush.bf16.msra.mxu0 %v4221
  %4406 = vmatpush.bf16.msra.mxu0 %v4217
  %4407 = vmatpush.bf16.msra.mxu0 %v4213
  %4408 = vmatpush.bf16.msra.mxu0 %v4209
  %4409 = vmatpush.bf16.msra.mxu0 %v4205
  %4410 = vmatpush.bf16.msra.mxu0 %v4201
  %4411 = vmatmul.bf16.gmra.mxu0 %v3999
  %v4412 = vpop.f32.mrf.mxu0
  %v4413 = vadd.f32 0.0, %v4412
  %v4414 = vpop.f32.mrf.mxu0
  %v4415 = vadd.f32 0.0, %v4414
  %4416 = vmatmul.bf16.gmra.mxu0 %v4001
  %v4417 = vpop.f32.mrf.mxu0
  %v4418 = vadd.f32 0.0, %v4417
  %v4419 = vpop.f32.mrf.mxu0
  %v4420 = vadd.f32 0.0, %v4419
  %4421 = vdwg.mxu0
  %4422 = vmatpush.bf16.msra.mxu0 %v4261
  %4423 = vmatpush.bf16.msra.mxu0 %v4257
  %4424 = vmatpush.bf16.msra.mxu0 %v4253
  %4425 = vmatpush.bf16.msra.mxu0 %v4249
  %4426 = vmatpush.bf16.msra.mxu0 %v4245
  %4427 = vmatpush.bf16.msra.mxu0 %v4241
  %4428 = vmatpush.bf16.msra.mxu0 %v4237
  %4429 = vmatpush.bf16.msra.mxu0 %v4233
  %4430 = vmatmul.bf16.gmra.mxu0 %v4000
  %v4431 = vpop.f32.mrf.mxu0
  %v4432 = vadd.f32 %v4413, %v4431
  %v4433 = vpop.f32.mrf.mxu0
  %v4434 = vadd.f32 %v4415, %v4433
  %4435 = vmatmul.bf16.gmra.mxu0 %v4002
  %v4436 = vpop.f32.mrf.mxu0
  %v4437 = vadd.f32 %v4418, %v4436
  %v4438 = vpop.f32.mrf.mxu0
  %v4439 = vadd.f32 %v4420, %v4438
  %4440 = vdwg.mxu0
  %4441 = vmatpush.bf16.msra.mxu0 %v4230
  %4442 = vmatpush.bf16.msra.mxu0 %v4226
  %4443 = vmatpush.bf16.msra.mxu0 %v4222
  %4444 = vmatpush.bf16.msra.mxu0 %v4218
  %4445 = vmatpush.bf16.msra.mxu0 %v4214
  %4446 = vmatpush.bf16.msra.mxu0 %v4210
  %4447 = vmatpush.bf16.msra.mxu0 %v4206
  %4448 = vmatpush.bf16.msra.mxu0 %v4202
  %4449 = vmatmul.bf16.gmra.mxu0 %v3999
  %v4450 = vpop.f32.mrf.mxu0
  %v4451 = vadd.f32 0.0, %v4450
  %v4452 = vpop.f32.mrf.mxu0
  %v4453 = vadd.f32 0.0, %v4452
  %4454 = vmatmul.bf16.gmra.mxu0 %v4001
  %v4455 = vpop.f32.mrf.mxu0
  %v4456 = vadd.f32 0.0, %v4455
  %v4457 = vpop.f32.mrf.mxu0
  %v4458 = vadd.f32 0.0, %v4457
  %4459 = vdwg.mxu0
  %4460 = vmatpush.bf16.msra.mxu0 %v4262
  %4461 = vmatpush.bf16.msra.mxu0 %v4258
  %4462 = vmatpush.bf16.msra.mxu0 %v4254
  %4463 = vmatpush.bf16.msra.mxu0 %v4250
  %4464 = vmatpush.bf16.msra.mxu0 %v4246
  %4465 = vmatpush.bf16.msra.mxu0 %v4242
  %4466 = vmatpush.bf16.msra.mxu0 %v4238
  %4467 = vmatpush.bf16.msra.mxu0 %v4234
  %4468 = vmatmul.bf16.gmra.mxu0 %v4000
  %v4469 = vpop.f32.mrf.mxu0
  %v4470 = vadd.f32 %v4451, %v4469
  %v4471 = vpop.f32.mrf.mxu0
  %v4472 = vadd.f32 %v4453, %v4471
  %4473 = vmatmul.bf16.gmra.mxu0 %v4002
  %v4474 = vpop.f32.mrf.mxu0
  %v4475 = vadd.f32 %v4456, %v4474
  %v4476 = vpop.f32.mrf.mxu0
  %v4477 = vadd.f32 %v4458, %v4476
  %4478 = vdwg.mxu0
  %v4480 = vunpack.c.l.b16 %v3853
  %v4481 = vunpack.c.h.b16 %v3853
  %v4482 = vpack.c.b16 %v3991, %v4480
  %v4483 = vpack.c.b16 %v3992, %v4481
  %v4484 = vpack.c.b16 %v3995, %v3993
  %v4485 = vpack.c.b16 %v3996, %v3994
  %v4554 = vunpack.c.l.b16 %v3857
  %v4555 = vunpack.c.h.b16 %v3857
  %v4556 = vunpack.c.l.b16 %v3858
  %v4557 = vunpack.c.h.b16 %v3858
  %v4558 = vunpack.c.l.b16 %v3859
  %v4559 = vunpack.c.h.b16 %v3859
  %v4560 = vunpack.c.l.b16 %v3860
  %v4561 = vunpack.c.h.b16 %v3860
  %v4562 = vunpack.c.l.b16 %v3861
  %v4563 = vunpack.c.h.b16 %v3861
  %v4564 = vunpack.c.l.b16 %v3862
  %v4565 = vunpack.c.h.b16 %v3862
  %v4566 = vunpack.c.l.b16 %v3863
  %v4567 = vunpack.c.h.b16 %v3863
  %v4568 = vunpack.c.l.b16 %v3864
  %v4569 = vunpack.c.h.b16 %v3864
  %v4570 = vunpack.c.l.b16 %v3865
  %v4571 = vunpack.c.h.b16 %v3865
  %v4572 = vunpack.c.l.b16 %v3866
  %v4573 = vunpack.c.h.b16 %v3866
  %v4574 = vunpack.c.l.b16 %v3867
  %v4575 = vunpack.c.h.b16 %v3867
  %v4576 = vunpack.c.l.b16 %v3868
  %v4577 = vunpack.c.h.b16 %v3868
  %v4578 = vunpack.c.l.b16 %v3869
  %v4579 = vunpack.c.h.b16 %v3869
  %v4580 = vunpack.c.l.b16 %v3870
  %v4581 = vunpack.c.h.b16 %v3870
  %v4582 = vunpack.c.l.b16 %v3871
  %v4583 = vunpack.c.h.b16 %v3871
  %v4584 = vunpack.c.l.b16 %v3872
  %v4585 = vunpack.c.h.b16 %v3872
  %v4586 = vunpack.c.l.b16 %v3873
  %v4587 = vunpack.c.h.b16 %v3873
  %v4588 = vunpack.c.l.b16 %v3874
  %v4589 = vunpack.c.h.b16 %v3874
  %v4590 = vunpack.c.l.b16 %v3875
  %v4591 = vunpack.c.h.b16 %v3875
  %v4592 = vunpack.c.l.b16 %v3876
  %v4593 = vunpack.c.h.b16 %v3876
  %v4594 = vunpack.c.l.b16 %v3877
  %v4595 = vunpack.c.h.b16 %v3877
  %v4596 = vunpack.c.l.b16 %v3878
  %v4597 = vunpack.c.h.b16 %v3878
  %v4598 = vunpack.c.l.b16 %v3879
  %v4599 = vunpack.c.h.b16 %v3879
  %v4600 = vunpack.c.l.b16 %v3880
  %v4601 = vunpack.c.h.b16 %v3880
  %v4602 = vunpack.c.l.b16 %v3881
  %v4603 = vunpack.c.h.b16 %v3881
  %v4604 = vunpack.c.l.b16 %v3882
  %v4605 = vunpack.c.h.b16 %v3882
  %v4606 = vunpack.c.l.b16 %v3883
  %v4607 = vunpack.c.h.b16 %v3883
  %v4608 = vunpack.c.l.b16 %v3884
  %v4609 = vunpack.c.h.b16 %v3884
  %v4610 = vunpack.c.l.b16 %v3885
  %v4611 = vunpack.c.h.b16 %v3885
  %v4612 = vunpack.c.l.b16 %v3886
  %v4613 = vunpack.c.h.b16 %v3886
  %v4614 = vunpack.c.l.b16 %v3887
  %v4615 = vunpack.c.h.b16 %v3887
  %v4616 = vunpack.c.l.b16 %v3888
  %v4617 = vunpack.c.h.b16 %v3888
  %v4618 = vunpack.c.l.b16 %v3889
  %v4619 = vunpack.c.h.b16 %v3889
  %v4620 = vunpack.c.l.b16 %v3890
  %v4621 = vunpack.c.h.b16 %v3890
  %v4622 = vunpack.c.l.b16 %v3891
  %v4623 = vunpack.c.h.b16 %v3891
  %v4624 = vunpack.c.l.b16 %v3892
  %v4625 = vunpack.c.h.b16 %v3892
  %v4626 = vunpack.c.l.b16 %v3893
  %v4627 = vunpack.c.h.b16 %v3893
  %v4628 = vunpack.c.l.b16 %v3894
  %v4629 = vunpack.c.h.b16 %v3894
  %v4630 = vunpack.c.l.b16 %v3895
  %v4631 = vunpack.c.h.b16 %v3895
  %v4632 = vunpack.c.l.b16 %v3896
  %v4633 = vunpack.c.h.b16 %v3896
  %v4634 = vunpack.c.l.b16 %v3897
  %v4635 = vunpack.c.h.b16 %v3897
  %v4636 = vunpack.c.l.b16 %v3898
  %v4637 = vunpack.c.h.b16 %v3898
  %v4638 = vunpack.c.l.b16 %v3899
  %v4639 = vunpack.c.h.b16 %v3899
  %v4640 = vunpack.c.l.b16 %v3900
  %v4641 = vunpack.c.h.b16 %v3900
  %v4642 = vunpack.c.l.b16 %v3901
  %v4643 = vunpack.c.h.b16 %v3901
  %v4644 = vunpack.c.l.b16 %v3902
  %v4645 = vunpack.c.h.b16 %v3902
  %v4646 = vunpack.c.l.b16 %v3903
  %v4647 = vunpack.c.h.b16 %v3903
  %v4648 = vunpack.c.l.b16 %v3904
  %v4649 = vunpack.c.h.b16 %v3904
  %v4650 = vunpack.c.l.b16 %v3905
  %v4651 = vunpack.c.h.b16 %v3905
  %v4652 = vunpack.c.l.b16 %v3906
  %v4653 = vunpack.c.h.b16 %v3906
  %v4654 = vunpack.c.l.b16 %v3907
  %v4655 = vunpack.c.h.b16 %v3907
  %v4656 = vunpack.c.l.b16 %v3908
  %v4657 = vunpack.c.h.b16 %v3908
  %v4658 = vunpack.c.l.b16 %v3909
  %v4659 = vunpack.c.h.b16 %v3909
  %v4660 = vunpack.c.l.b16 %v3910
  %v4661 = vunpack.c.h.b16 %v3910
  %v4662 = vunpack.c.l.b16 %v3911
  %v4663 = vunpack.c.h.b16 %v3911
  %v4664 = vunpack.c.l.b16 %v3912
  %v4665 = vunpack.c.h.b16 %v3912
  %v4666 = vunpack.c.l.b16 %v3913
  %v4667 = vunpack.c.h.b16 %v3913
  %v4668 = vunpack.c.l.b16 %v3914
  %v4669 = vunpack.c.h.b16 %v3914
  %v4670 = vunpack.c.l.b16 %v3915
  %v4671 = vunpack.c.h.b16 %v3915
  %v4672 = vunpack.c.l.b16 %v3916
  %v4673 = vunpack.c.h.b16 %v3916
  %v4674 = vunpack.c.l.b16 %v3917
  %v4675 = vunpack.c.h.b16 %v3917
  %v4676 = vunpack.c.l.b16 %v3918
  %v4677 = vunpack.c.h.b16 %v3918
  %v4678 = vunpack.c.l.b16 %v3919
  %v4679 = vunpack.c.h.b16 %v3919
  %v4680 = vunpack.c.l.b16 %v3920
  %v4681 = vunpack.c.h.b16 %v3920
  %v4682 = vpack.c.b16 %v4558, %v4554
  %v4683 = vpack.c.b16 %v4559, %v4555
  %v4684 = vpack.c.b16 %v4560, %v4556
  %v4685 = vpack.c.b16 %v4561, %v4557
  %v4686 = vpack.c.b16 %v4566, %v4562
  %v4687 = vpack.c.b16 %v4567, %v4563
  %v4688 = vpack.c.b16 %v4568, %v4564
  %v4689 = vpack.c.b16 %v4569, %v4565
  %v4690 = vpack.c.b16 %v4574, %v4570
  %v4691 = vpack.c.b16 %v4575, %v4571
  %v4692 = vpack.c.b16 %v4576, %v4572
  %v4693 = vpack.c.b16 %v4577, %v4573
  %v4694 = vpack.c.b16 %v4582, %v4578
  %v4695 = vpack.c.b16 %v4583, %v4579
  %v4696 = vpack.c.b16 %v4584, %v4580
  %v4697 = vpack.c.b16 %v4585, %v4581
  %v4698 = vpack.c.b16 %v4590, %v4586
  %v4699 = vpack.c.b16 %v4591, %v4587
  %v4700 = vpack.c.b16 %v4592, %v4588
  %v4701 = vpack.c.b16 %v4593, %v4589
  %v4702 = vpack.c.b16 %v4598, %v4594
  %v4703 = vpack.c.b16 %v4599, %v4595
  %v4704 = vpack.c.b16 %v4600, %v4596
  %v4705 = vpack.c.b16 %v4601, %v4597
  %v4706 = vpack.c.b16 %v4606, %v4602
  %v4707 = vpack.c.b16 %v4607, %v4603
  %v4708 = vpack.c.b16 %v4608, %v4604
  %v4709 = vpack.c.b16 %v4609, %v4605
  %v4710 = vpack.c.b16 %v4614, %v4610
  %v4711 = vpack.c.b16 %v4615, %v4611
  %v4712 = vpack.c.b16 %v4616, %v4612
  %v4713 = vpack.c.b16 %v4617, %v4613
  %v4714 = vpack.c.b16 %v4622, %v4618
  %v4715 = vpack.c.b16 %v4623, %v4619
  %v4716 = vpack.c.b16 %v4624, %v4620
  %v4717 = vpack.c.b16 %v4625, %v4621
  %v4718 = vpack.c.b16 %v4630, %v4626
  %v4719 = vpack.c.b16 %v4631, %v4627
  %v4720 = vpack.c.b16 %v4632, %v4628
  %v4721 = vpack.c.b16 %v4633, %v4629
  %v4722 = vpack.c.b16 %v4638, %v4634
  %v4723 = vpack.c.b16 %v4639, %v4635
  %v4724 = vpack.c.b16 %v4640, %v4636
  %v4725 = vpack.c.b16 %v4641, %v4637
  %v4726 = vpack.c.b16 %v4646, %v4642
  %v4727 = vpack.c.b16 %v4647, %v4643
  %v4728 = vpack.c.b16 %v4648, %v4644
  %v4729 = vpack.c.b16 %v4649, %v4645
  %v4730 = vpack.c.b16 %v4654, %v4650
  %v4731 = vpack.c.b16 %v4655, %v4651
  %v4732 = vpack.c.b16 %v4656, %v4652
  %v4733 = vpack.c.b16 %v4657, %v4653
  %v4734 = vpack.c.b16 %v4662, %v4658
  %v4735 = vpack.c.b16 %v4663, %v4659
  %v4736 = vpack.c.b16 %v4664, %v4660
  %v4737 = vpack.c.b16 %v4665, %v4661
  %v4738 = vpack.c.b16 %v4670, %v4666
  %v4739 = vpack.c.b16 %v4671, %v4667
  %v4740 = vpack.c.b16 %v4672, %v4668
  %v4741 = vpack.c.b16 %v4673, %v4669
  %v4742 = vpack.c.b16 %v4678, %v4674
  %v4743 = vpack.c.b16 %v4679, %v4675
  %v4744 = vpack.c.b16 %v4680, %v4676
  %v4745 = vpack.c.b16 %v4681, %v4677
  %4810 = vmatpush.bf16.msra.mxu0 %v4710
  %4811 = vmatpush.bf16.msra.mxu0 %v4706
  %4812 = vmatpush.bf16.msra.mxu0 %v4702
  %4813 = vmatpush.bf16.msra.mxu0 %v4698
  %4814 = vmatpush.bf16.msra.mxu0 %v4694
  %4815 = vmatpush.bf16.msra.mxu0 %v4690
  %4816 = vmatpush.bf16.msra.mxu0 %v4686
  %4817 = vmatpush.bf16.msra.mxu0 %v4682
  %4818 = vmatmul.bf16.gmra.mxu0 %v4482
  %v4819 = vpop.f32.mrf.mxu0
  %v4820 = vadd.f32 %v4356, %v4819
  %v4821 = vpop.f32.mrf.mxu0
  %v4822 = vadd.f32 %v4358, %v4821
  %4823 = vmatmul.bf16.gmra.mxu0 %v4484
  %v4824 = vpop.f32.mrf.mxu0
  %v4825 = vadd.f32 %v4361, %v4824
  %v4826 = vpop.f32.mrf.mxu0
  %v4827 = vadd.f32 %v4363, %v4826
  %4828 = vdwg.mxu0
  %4829 = vmatpush.bf16.msra.mxu0 %v4742
  %4830 = vmatpush.bf16.msra.mxu0 %v4738
  %4831 = vmatpush.bf16.msra.mxu0 %v4734
  %4832 = vmatpush.bf16.msra.mxu0 %v4730
  %4833 = vmatpush.bf16.msra.mxu0 %v4726
  %4834 = vmatpush.bf16.msra.mxu0 %v4722
  %4835 = vmatpush.bf16.msra.mxu0 %v4718
  %4836 = vmatpush.bf16.msra.mxu0 %v4714
  %4837 = vmatmul.bf16.gmra.mxu0 %v4483
  %v4838 = vpop.f32.mrf.mxu0
  %v4839 = vadd.f32 %v4820, %v4838
  %v4840 = vpop.f32.mrf.mxu0
  %v4841 = vadd.f32 %v4822, %v4840
  %4842 = vmatmul.bf16.gmra.mxu0 %v4485
  %v4843 = vpop.f32.mrf.mxu0
  %v4844 = vadd.f32 %v4825, %v4843
  %v4845 = vpop.f32.mrf.mxu0
  %v4846 = vadd.f32 %v4827, %v4845
  %4847 = vdwg.mxu0
  %4848 = vmatpush.bf16.msra.mxu0 %v4711
  %4849 = vmatpush.bf16.msra.mxu0 %v4707
  %4850 = vmatpush.bf16.msra.mxu0 %v4703
  %4851 = vmatpush.bf16.msra.mxu0 %v4699
  %4852 = vmatpush.bf16.msra.mxu0 %v4695
  %4853 = vmatpush.bf16.msra.mxu0 %v4691
  %4854 = vmatpush.bf16.msra.mxu0 %v4687
  %4855 = vmatpush.bf16.msra.mxu0 %v4683
  %4856 = vmatmul.bf16.gmra.mxu0 %v4482
  %v4857 = vpop.f32.mrf.mxu0
  %v4858 = vadd.f32 %v4394, %v4857
  %v4859 = vpop.f32.mrf.mxu0
  %v4860 = vadd.f32 %v4396, %v4859
  %4861 = vmatmul.bf16.gmra.mxu0 %v4484
  %v4862 = vpop.f32.mrf.mxu0
  %v4863 = vadd.f32 %v4399, %v4862
  %v4864 = vpop.f32.mrf.mxu0
  %v4865 = vadd.f32 %v4401, %v4864
  %4866 = vdwg.mxu0
  %4867 = vmatpush.bf16.msra.mxu0 %v4743
  %4868 = vmatpush.bf16.msra.mxu0 %v4739
  %4869 = vmatpush.bf16.msra.mxu0 %v4735
  %4870 = vmatpush.bf16.msra.mxu0 %v4731
  %4871 = vmatpush.bf16.msra.mxu0 %v4727
  %4872 = vmatpush.bf16.msra.mxu0 %v4723
  %4873 = vmatpush.bf16.msra.mxu0 %v4719
  %4874 = vmatpush.bf16.msra.mxu0 %v4715
  %4875 = vmatmul.bf16.gmra.mxu0 %v4483
  %v4876 = vpop.f32.mrf.mxu0
  %v4877 = vadd.f32 %v4858, %v4876
  %v4878 = vpop.f32.mrf.mxu0
  %v4879 = vadd.f32 %v4860, %v4878
  %4880 = vmatmul.bf16.gmra.mxu0 %v4485
  %v4881 = vpop.f32.mrf.mxu0
  %v4882 = vadd.f32 %v4863, %v4881
  %v4883 = vpop.f32.mrf.mxu0
  %v4884 = vadd.f32 %v4865, %v4883
  %4885 = vdwg.mxu0
  %4886 = vmatpush.bf16.msra.mxu0 %v4712
  %4887 = vmatpush.bf16.msra.mxu0 %v4708
  %4888 = vmatpush.bf16.msra.mxu0 %v4704
  %4889 = vmatpush.bf16.msra.mxu0 %v4700
  %4890 = vmatpush.bf16.msra.mxu0 %v4696
  %4891 = vmatpush.bf16.msra.mxu0 %v4692
  %4892 = vmatpush.bf16.msra.mxu0 %v4688
  %4893 = vmatpush.bf16.msra.mxu0 %v4684
  %4894 = vmatmul.bf16.gmra.mxu0 %v4482
  %v4895 = vpop.f32.mrf.mxu0
  %v4896 = vadd.f32 %v4432, %v4895
  %v4897 = vpop.f32.mrf.mxu0
  %v4898 = vadd.f32 %v4434, %v4897
  %4899 = vmatmul.bf16.gmra.mxu0 %v4484
  %v4900 = vpop.f32.mrf.mxu0
  %v4901 = vadd.f32 %v4437, %v4900
  %v4902 = vpop.f32.mrf.mxu0
  %v4903 = vadd.f32 %v4439, %v4902
  %4904 = vdwg.mxu0
  %4905 = vmatpush.bf16.msra.mxu0 %v4744
  %4906 = vmatpush.bf16.msra.mxu0 %v4740
  %4907 = vmatpush.bf16.msra.mxu0 %v4736
  %4908 = vmatpush.bf16.msra.mxu0 %v4732
  %4909 = vmatpush.bf16.msra.mxu0 %v4728
  %4910 = vmatpush.bf16.msra.mxu0 %v4724
  %4911 = vmatpush.bf16.msra.mxu0 %v4720
  %4912 = vmatpush.bf16.msra.mxu0 %v4716
  %4913 = vmatmul.bf16.gmra.mxu0 %v4483
  %v4914 = vpop.f32.mrf.mxu0
  %v4915 = vadd.f32 %v4896, %v4914
  %v4916 = vpop.f32.mrf.mxu0
  %v4917 = vadd.f32 %v4898, %v4916
  %4918 = vmatmul.bf16.gmra.mxu0 %v4485
  %v4919 = vpop.f32.mrf.mxu0
  %v4920 = vadd.f32 %v4901, %v4919
  %v4921 = vpop.f32.mrf.mxu0
  %v4922 = vadd.f32 %v4903, %v4921
  %4923 = vdwg.mxu0
  %4924 = vmatpush.bf16.msra.mxu0 %v4713
  %4925 = vmatpush.bf16.msra.mxu0 %v4709
  %4926 = vmatpush.bf16.msra.mxu0 %v4705
  %4927 = vmatpush.bf16.msra.mxu0 %v4701
  %4928 = vmatpush.bf16.msra.mxu0 %v4697
  %4929 = vmatpush.bf16.msra.mxu0 %v4693
  %4930 = vmatpush.bf16.msra.mxu0 %v4689
  %4931 = vmatpush.bf16.msra.mxu0 %v4685
  %4932 = vmatmul.bf16.gmra.mxu0 %v4482
  %v4933 = vpop.f32.mrf.mxu0
  %v4934 = vadd.f32 %v4470, %v4933
  %v4935 = vpop.f32.mrf.mxu0
  %v4936 = vadd.f32 %v4472, %v4935
  %4937 = vmatmul.bf16.gmra.mxu0 %v4484
  %v4938 = vpop.f32.mrf.mxu0
  %v4939 = vadd.f32 %v4475, %v4938
  %v4940 = vpop.f32.mrf.mxu0
  %v4941 = vadd.f32 %v4477, %v4940
  %4942 = vdwg.mxu0
  %4943 = vmatpush.bf16.msra.mxu0 %v4745
  %4944 = vmatpush.bf16.msra.mxu0 %v4741
  %4945 = vmatpush.bf16.msra.mxu0 %v4737
  %4946 = vmatpush.bf16.msra.mxu0 %v4733
  %4947 = vmatpush.bf16.msra.mxu0 %v4729
  %4948 = vmatpush.bf16.msra.mxu0 %v4725
  %4949 = vmatpush.bf16.msra.mxu0 %v4721
  %4950 = vmatpush.bf16.msra.mxu0 %v4717
  %4951 = vmatmul.bf16.gmra.mxu0 %v4483
  %v4952 = vpop.f32.mrf.mxu0
  %v4953 = vadd.f32 %v4934, %v4952
  %v4954 = vpop.f32.mrf.mxu0
  %v4955 = vadd.f32 %v4936, %v4954
  %4956 = vmatmul.bf16.gmra.mxu0 %v4485
  %v4957 = vpop.f32.mrf.mxu0
  %v4958 = vadd.f32 %v4939, %v4957
  %v4959 = vpop.f32.mrf.mxu0
  %v4960 = vadd.f32 %v4941, %v4959
  %4961 = vdwg.mxu0
  %v4962 = vld [vmem:[#allocation2 + $0x10] sm:$0xff]
  %v4963 = vld [vmem:[#allocation2 + $0x18] sm:$0xff]
  %v4964 = vld [vmem:[#allocation2 + $0x20] sm:$0xff]
  %v4965 = vld [vmem:[#allocation2 + $0x28] sm:$0xff]
  %s4966 = scalar_lea.vmem %s2, 1024
  %v4967 = vld [vmem:[%s4966] sm:$0xff]
  %v4968 = vld [vmem:[%s4966 + $0x8] sm:$0xff]
  %v4969 = vld [vmem:[%s4966 + $0x10] sm:$0xff]
  %v4970 = vld [vmem:[%s4966 + $0x18] sm:$0xff]
  %v4971 = vld [vmem:[%s4966 + $0x20] sm:$0xff]
  %v4972 = vld [vmem:[%s4966 + $0x28] sm:$0xff]
  %v4973 = vld [vmem:[%s4966 + $0x30] sm:$0xff]
  %v4974 = vld [vmem:[%s4966 + $0x38] sm:$0xff]
  %v4975 = vld [vmem:[%s4966 + $0x40] sm:$0xff]
  %v4976 = vld [vmem:[%s4966 + $0x48] sm:$0xff]
  %v4977 = vld [vmem:[%s4966 + $0x50] sm:$0xff]
  %v4978 = vld [vmem:[%s4966 + $0x58] sm:$0xff]
  %v4979 = vld [vmem:[%s4966 + $0x60] sm:$0xff]
  %v4980 = vld [vmem:[%s4966 + $0x68] sm:$0xff]
  %v4981 = vld [vmem:[%s4966 + $0x70] sm:$0xff]
  %v4982 = vld [vmem:[%s4966 + $0x78] sm:$0xff]
  %v4983 = vld [vmem:[%s4966 + $0x80] sm:$0xff]
  %v4984 = vld [vmem:[%s4966 + $0x88] sm:$0xff]
  %v4985 = vld [vmem:[%s4966 + $0x90] sm:$0xff]
  %v4986 = vld [vmem:[%s4966 + $0x98] sm:$0xff]
  %v4987 = vld [vmem:[%s4966 + $0xa0] sm:$0xff]
  %v4988 = vld [vmem:[%s4966 + $0xa8] sm:$0xff]
  %v4989 = vld [vmem:[%s4966 + $0xb0] sm:$0xff]
  %v4990 = vld [vmem:[%s4966 + $0xb8] sm:$0xff]
  %v4991 = vld [vmem:[%s4966 + $0xc0] sm:$0xff]
  %v4992 = vld [vmem:[%s4966 + $0xc8] sm:$0xff]
  %v4993 = vld [vmem:[%s4966 + $0xd0] sm:$0xff]
  %v4994 = vld [vmem:[%s4966 + $0xd8] sm:$0xff]
  %v4995 = vld [vmem:[%s4966 + $0xe0] sm:$0xff]
  %v4996 = vld [vmem:[%s4966 + $0xe8] sm:$0xff]
  %v4997 = vld [vmem:[%s4966 + $0xf0] sm:$0xff]
  %v4998 = vld [vmem:[%s4966 + $0xf8] sm:$0xff]
  %v4999 = vld [vmem:[%s4966 + $0x100] sm:$0xff]
  %v5000 = vld [vmem:[%s4966 + $0x108] sm:$0xff]
  %v5001 = vld [vmem:[%s4966 + $0x110] sm:$0xff]
  %v5002 = vld [vmem:[%s4966 + $0x118] sm:$0xff]
  %v5003 = vld [vmem:[%s4966 + $0x120] sm:$0xff]
  %v5004 = vld [vmem:[%s4966 + $0x128] sm:$0xff]
  %v5005 = vld [vmem:[%s4966 + $0x130] sm:$0xff]
  %v5006 = vld [vmem:[%s4966 + $0x138] sm:$0xff]
  %v5007 = vld [vmem:[%s4966 + $0x140] sm:$0xff]
  %v5008 = vld [vmem:[%s4966 + $0x148] sm:$0xff]
  %v5009 = vld [vmem:[%s4966 + $0x150] sm:$0xff]
  %v5010 = vld [vmem:[%s4966 + $0x158] sm:$0xff]
  %v5011 = vld [vmem:[%s4966 + $0x160] sm:$0xff]
  %v5012 = vld [vmem:[%s4966 + $0x168] sm:$0xff]
  %v5013 = vld [vmem:[%s4966 + $0x170] sm:$0xff]
  %v5014 = vld [vmem:[%s4966 + $0x178] sm:$0xff]
  %v5015 = vld [vmem:[%s4966 + $0x180] sm:$0xff]
  %v5016 = vld [vmem:[%s4966 + $0x188] sm:$0xff]
  %v5017 = vld [vmem:[%s4966 + $0x190] sm:$0xff]
  %v5018 = vld [vmem:[%s4966 + $0x198] sm:$0xff]
  %v5019 = vld [vmem:[%s4966 + $0x1a0] sm:$0xff]
  %v5020 = vld [vmem:[%s4966 + $0x1a8] sm:$0xff]
  %v5021 = vld [vmem:[%s4966 + $0x1b0] sm:$0xff]
  %v5022 = vld [vmem:[%s4966 + $0x1b8] sm:$0xff]
  %v5023 = vld [vmem:[%s4966 + $0x1c0] sm:$0xff]
  %v5024 = vld [vmem:[%s4966 + $0x1c8] sm:$0xff]
  %v5025 = vld [vmem:[%s4966 + $0x1d0] sm:$0xff]
  %v5026 = vld [vmem:[%s4966 + $0x1d8] sm:$0xff]
  %v5027 = vld [vmem:[%s4966 + $0x1e0] sm:$0xff]
  %v5028 = vld [vmem:[%s4966 + $0x1e8] sm:$0xff]
  %v5029 = vld [vmem:[%s4966 + $0x1f0] sm:$0xff]
  %v5030 = vld [vmem:[%s4966 + $0x1f8] sm:$0xff]
  %v5035 = vunpack.c.l.b16 %v4962
  %v5036 = vunpack.c.h.b16 %v4962
  %v5037 = vunpack.c.l.b16 %v4963
  %v5038 = vunpack.c.h.b16 %v4963
  %v5039 = vunpack.c.l.b16 %v4964
  %v5040 = vunpack.c.h.b16 %v4964
  %v5041 = vunpack.c.l.b16 %v4965
  %v5042 = vunpack.c.h.b16 %v4965
  %v5043 = vpack.c.b16 %v5037, %v5035
  %v5044 = vpack.c.b16 %v5038, %v5036
  %v5045 = vpack.c.b16 %v5041, %v5039
  %v5046 = vpack.c.b16 %v5042, %v5040
  %v5115 = vunpack.c.l.b16 %v4967
  %v5116 = vunpack.c.h.b16 %v4967
  %v5117 = vunpack.c.l.b16 %v4968
  %v5118 = vunpack.c.h.b16 %v4968
  %v5119 = vunpack.c.l.b16 %v4969
  %v5120 = vunpack.c.h.b16 %v4969
  %v5121 = vunpack.c.l.b16 %v4970
  %v5122 = vunpack.c.h.b16 %v4970
  %v5123 = vunpack.c.l.b16 %v4971
  %v5124 = vunpack.c.h.b16 %v4971
  %v5125 = vunpack.c.l.b16 %v4972
  %v5126 = vunpack.c.h.b16 %v4972
  %v5127 = vunpack.c.l.b16 %v4973
  %v5128 = vunpack.c.h.b16 %v4973
  %v5129 = vunpack.c.l.b16 %v4974
  %v5130 = vunpack.c.h.b16 %v4974
  %v5131 = vunpack.c.l.b16 %v4975
  %v5132 = vunpack.c.h.b16 %v4975
  %v5133 = vunpack.c.l.b16 %v4976
  %v5134 = vunpack.c.h.b16 %v4976
  %v5135 = vunpack.c.l.b16 %v4977
  %v5136 = vunpack.c.h.b16 %v4977
  %v5137 = vunpack.c.l.b16 %v4978
  %v5138 = vunpack.c.h.b16 %v4978
  %v5139 = vunpack.c.l.b16 %v4979
  %v5140 = vunpack.c.h.b16 %v4979
  %v5141 = vunpack.c.l.b16 %v4980
  %v5142 = vunpack.c.h.b16 %v4980
  %v5143 = vunpack.c.l.b16 %v4981
  %v5144 = vunpack.c.h.b16 %v4981
  %v5145 = vunpack.c.l.b16 %v4982
  %v5146 = vunpack.c.h.b16 %v4982
  %v5147 = vunpack.c.l.b16 %v4983
  %v5148 = vunpack.c.h.b16 %v4983
  %v5149 = vunpack.c.l.b16 %v4984
  %v5150 = vunpack.c.h.b16 %v4984
  %v5151 = vunpack.c.l.b16 %v4985
  %v5152 = vunpack.c.h.b16 %v4985
  %v5153 = vunpack.c.l.b16 %v4986
  %v5154 = vunpack.c.h.b16 %v4986
  %v5155 = vunpack.c.l.b16 %v4987
  %v5156 = vunpack.c.h.b16 %v4987
  %v5157 = vunpack.c.l.b16 %v4988
  %v5158 = vunpack.c.h.b16 %v4988
  %v5159 = vunpack.c.l.b16 %v4989
  %v5160 = vunpack.c.h.b16 %v4989
  %v5161 = vunpack.c.l.b16 %v4990
  %v5162 = vunpack.c.h.b16 %v4990
  %v5163 = vunpack.c.l.b16 %v4991
  %v5164 = vunpack.c.h.b16 %v4991
  %v5165 = vunpack.c.l.b16 %v4992
  %v5166 = vunpack.c.h.b16 %v4992
  %v5167 = vunpack.c.l.b16 %v4993
  %v5168 = vunpack.c.h.b16 %v4993
  %v5169 = vunpack.c.l.b16 %v4994
  %v5170 = vunpack.c.h.b16 %v4994
  %v5171 = vunpack.c.l.b16 %v4995
  %v5172 = vunpack.c.h.b16 %v4995
  %v5173 = vunpack.c.l.b16 %v4996
  %v5174 = vunpack.c.h.b16 %v4996
  %v5175 = vunpack.c.l.b16 %v4997
  %v5176 = vunpack.c.h.b16 %v4997
  %v5177 = vunpack.c.l.b16 %v4998
  %v5178 = vunpack.c.h.b16 %v4998
  %v5179 = vunpack.c.l.b16 %v4999
  %v5180 = vunpack.c.h.b16 %v4999
  %v5181 = vunpack.c.l.b16 %v5000
  %v5182 = vunpack.c.h.b16 %v5000
  %v5183 = vunpack.c.l.b16 %v5001
  %v5184 = vunpack.c.h.b16 %v5001
  %v5185 = vunpack.c.l.b16 %v5002
  %v5186 = vunpack.c.h.b16 %v5002
  %v5187 = vunpack.c.l.b16 %v5003
  %v5188 = vunpack.c.h.b16 %v5003
  %v5189 = vunpack.c.l.b16 %v5004
  %v5190 = vunpack.c.h.b16 %v5004
  %v5191 = vunpack.c.l.b16 %v5005
  %v5192 = vunpack.c.h.b16 %v5005
  %v5193 = vunpack.c.l.b16 %v5006
  %v5194 = vunpack.c.h.b16 %v5006
  %v5195 = vunpack.c.l.b16 %v5007
  %v5196 = vunpack.c.h.b16 %v5007
  %v5197 = vunpack.c.l.b16 %v5008
  %v5198 = vunpack.c.h.b16 %v5008
  %v5199 = vunpack.c.l.b16 %v5009
  %v5200 = vunpack.c.h.b16 %v5009
  %v5201 = vunpack.c.l.b16 %v5010
  %v5202 = vunpack.c.h.b16 %v5010
  %v5203 = vunpack.c.l.b16 %v5011
  %v5204 = vunpack.c.h.b16 %v5011
  %v5205 = vunpack.c.l.b16 %v5012
  %v5206 = vunpack.c.h.b16 %v5012
  %v5207 = vunpack.c.l.b16 %v5013
  %v5208 = vunpack.c.h.b16 %v5013
  %v5209 = vunpack.c.l.b16 %v5014
  %v5210 = vunpack.c.h.b16 %v5014
  %v5211 = vunpack.c.l.b16 %v5015
  %v5212 = vunpack.c.h.b16 %v5015
  %v5213 = vunpack.c.l.b16 %v5016
  %v5214 = vunpack.c.h.b16 %v5016
  %v5215 = vunpack.c.l.b16 %v5017
  %v5216 = vunpack.c.h.b16 %v5017
  %v5217 = vunpack.c.l.b16 %v5018
  %v5218 = vunpack.c.h.b16 %v5018
  %v5219 = vunpack.c.l.b16 %v5019
  %v5220 = vunpack.c.h.b16 %v5019
  %v5221 = vunpack.c.l.b16 %v5020
  %v5222 = vunpack.c.h.b16 %v5020
  %v5223 = vunpack.c.l.b16 %v5021
  %v5224 = vunpack.c.h.b16 %v5021
  %v5225 = vunpack.c.l.b16 %v5022
  %v5226 = vunpack.c.h.b16 %v5022
  %v5227 = vunpack.c.l.b16 %v5023
  %v5228 = vunpack.c.h.b16 %v5023
  %v5229 = vunpack.c.l.b16 %v5024
  %v5230 = vunpack.c.h.b16 %v5024
  %v5231 = vunpack.c.l.b16 %v5025
  %v5232 = vunpack.c.h.b16 %v5025
  %v5233 = vunpack.c.l.b16 %v5026
  %v5234 = vunpack.c.h.b16 %v5026
  %v5235 = vunpack.c.l.b16 %v5027
  %v5236 = vunpack.c.h.b16 %v5027
  %v5237 = vunpack.c.l.b16 %v5028
  %v5238 = vunpack.c.h.b16 %v5028
  %v5239 = vunpack.c.l.b16 %v5029
  %v5240 = vunpack.c.h.b16 %v5029
  %v5241 = vunpack.c.l.b16 %v5030
  %v5242 = vunpack.c.h.b16 %v5030
  %v5243 = vpack.c.b16 %v5119, %v5115
  %v5244 = vpack.c.b16 %v5120, %v5116
  %v5245 = vpack.c.b16 %v5121, %v5117
  %v5246 = vpack.c.b16 %v5122, %v5118
  %v5247 = vpack.c.b16 %v5127, %v5123
  %v5248 = vpack.c.b16 %v5128, %v5124
  %v5249 = vpack.c.b16 %v5129, %v5125
  %v5250 = vpack.c.b16 %v5130, %v5126
  %v5251 = vpack.c.b16 %v5135, %v5131
  %v5252 = vpack.c.b16 %v5136, %v5132
  %v5253 = vpack.c.b16 %v5137, %v5133
  %v5254 = vpack.c.b16 %v5138, %v5134
  %v5255 = vpack.c.b16 %v5143, %v5139
  %v5256 = vpack.c.b16 %v5144, %v5140
  %v5257 = vpack.c.b16 %v5145, %v5141
  %v5258 = vpack.c.b16 %v5146, %v5142
  %v5259 = vpack.c.b16 %v5151, %v5147
  %v5260 = vpack.c.b16 %v5152, %v5148
  %v5261 = vpack.c.b16 %v5153, %v5149
  %v5262 = vpack.c.b16 %v5154, %v5150
  %v5263 = vpack.c.b16 %v5159, %v5155
  %v5264 = vpack.c.b16 %v5160, %v5156
  %v5265 = vpack.c.b16 %v5161, %v5157
  %v5266 = vpack.c.b16 %v5162, %v5158
  %v5267 = vpack.c.b16 %v5167, %v5163
  %v5268 = vpack.c.b16 %v5168, %v5164
  %v5269 = vpack.c.b16 %v5169, %v5165
  %v5270 = vpack.c.b16 %v5170, %v5166
  %v5271 = vpack.c.b16 %v5175, %v5171
  %v5272 = vpack.c.b16 %v5176, %v5172
  %v5273 = vpack.c.b16 %v5177, %v5173
  %v5274 = vpack.c.b16 %v5178, %v5174
  %v5275 = vpack.c.b16 %v5183, %v5179
  %v5276 = vpack.c.b16 %v5184, %v5180
  %v5277 = vpack.c.b16 %v5185, %v5181
  %v5278 = vpack.c.b16 %v5186, %v5182
  %v5279 = vpack.c.b16 %v5191, %v5187
  %v5280 = vpack.c.b16 %v5192, %v5188
  %v5281 = vpack.c.b16 %v5193, %v5189
  %v5282 = vpack.c.b16 %v5194, %v5190
  %v5283 = vpack.c.b16 %v5199, %v5195
  %v5284 = vpack.c.b16 %v5200, %v5196
  %v5285 = vpack.c.b16 %v5201, %v5197
  %v5286 = vpack.c.b16 %v5202, %v5198
  %v5287 = vpack.c.b16 %v5207, %v5203
  %v5288 = vpack.c.b16 %v5208, %v5204
  %v5289 = vpack.c.b16 %v5209, %v5205
  %v5290 = vpack.c.b16 %v5210, %v5206
  %v5291 = vpack.c.b16 %v5215, %v5211
  %v5292 = vpack.c.b16 %v5216, %v5212
  %v5293 = vpack.c.b16 %v5217, %v5213
  %v5294 = vpack.c.b16 %v5218, %v5214
  %v5295 = vpack.c.b16 %v5223, %v5219
  %v5296 = vpack.c.b16 %v5224, %v5220
  %v5297 = vpack.c.b16 %v5225, %v5221
  %v5298 = vpack.c.b16 %v5226, %v5222
  %v5299 = vpack.c.b16 %v5231, %v5227
  %v5300 = vpack.c.b16 %v5232, %v5228
  %v5301 = vpack.c.b16 %v5233, %v5229
  %v5302 = vpack.c.b16 %v5234, %v5230
  %v5303 = vpack.c.b16 %v5239, %v5235
  %v5304 = vpack.c.b16 %v5240, %v5236
  %v5305 = vpack.c.b16 %v5241, %v5237
  %v5306 = vpack.c.b16 %v5242, %v5238
  %5371 = vmatpush.bf16.msra.mxu0 %v5271
  %5372 = vmatpush.bf16.msra.mxu0 %v5267
  %5373 = vmatpush.bf16.msra.mxu0 %v5263
  %5374 = vmatpush.bf16.msra.mxu0 %v5259
  %5375 = vmatpush.bf16.msra.mxu0 %v5255
  %5376 = vmatpush.bf16.msra.mxu0 %v5251
  %5377 = vmatpush.bf16.msra.mxu0 %v5247
  %5378 = vmatpush.bf16.msra.mxu0 %v5243
  %5379 = vmatmul.bf16.gmra.mxu0 %v5043
  %v5380 = vpop.f32.mrf.mxu0
  %v5381 = vadd.f32 0.0, %v5380
  %v5382 = vpop.f32.mrf.mxu0
  %v5383 = vadd.f32 0.0, %v5382
  %5384 = vmatmul.bf16.gmra.mxu0 %v5045
  %v5385 = vpop.f32.mrf.mxu0
  %v5386 = vadd.f32 0.0, %v5385
  %v5387 = vpop.f32.mrf.mxu0
  %v5388 = vadd.f32 0.0, %v5387
  %5389 = vdwg.mxu0
  %5390 = vmatpush.bf16.msra.mxu0 %v5303
  %5391 = vmatpush.bf16.msra.mxu0 %v5299
  %5392 = vmatpush.bf16.msra.mxu0 %v5295
  %5393 = vmatpush.bf16.msra.mxu0 %v5291
  %5394 = vmatpush.bf16.msra.mxu0 %v5287
  %5395 = vmatpush.bf16.msra.mxu0 %v5283
  %5396 = vmatpush.bf16.msra.mxu0 %v5279
  %5397 = vmatpush.bf16.msra.mxu0 %v5275
  %5398 = vmatmul.bf16.gmra.mxu0 %v5044
  %v5399 = vpop.f32.mrf.mxu0
  %v5400 = vadd.f32 %v5381, %v5399
  %v5401 = vpop.f32.mrf.mxu0
  %v5402 = vadd.f32 %v5383, %v5401
  %5403 = vmatmul.bf16.gmra.mxu0 %v5046
  %v5404 = vpop.f32.mrf.mxu0
  %v5405 = vadd.f32 %v5386, %v5404
  %v5406 = vpop.f32.mrf.mxu0
  %v5407 = vadd.f32 %v5388, %v5406
  %5408 = vdwg.mxu0
  %5409 = vmatpush.bf16.msra.mxu0 %v5272
  %5410 = vmatpush.bf16.msra.mxu0 %v5268
  %5411 = vmatpush.bf16.msra.mxu0 %v5264
  %5412 = vmatpush.bf16.msra.mxu0 %v5260
  %5413 = vmatpush.bf16.msra.mxu0 %v5256
  %5414 = vmatpush.bf16.msra.mxu0 %v5252
  %5415 = vmatpush.bf16.msra.mxu0 %v5248
  %5416 = vmatpush.bf16.msra.mxu0 %v5244
  %5417 = vmatmul.bf16.gmra.mxu0 %v5043
  %v5418 = vpop.f32.mrf.mxu0
  %v5419 = vadd.f32 0.0, %v5418
  %v5420 = vpop.f32.mrf.mxu0
  %v5421 = vadd.f32 0.0, %v5420
  %5422 = vmatmul.bf16.gmra.mxu0 %v5045
  %v5423 = vpop.f32.mrf.mxu0
  %v5424 = vadd.f32 0.0, %v5423
  %v5425 = vpop.f32.mrf.mxu0
  %v5426 = vadd.f32 0.0, %v5425
  %5427 = vdwg.mxu0
  %5428 = vmatpush.bf16.msra.mxu0 %v5304
  %5429 = vmatpush.bf16.msra.mxu0 %v5300
  %5430 = vmatpush.bf16.msra.mxu0 %v5296
  %5431 = vmatpush.bf16.msra.mxu0 %v5292
  %5432 = vmatpush.bf16.msra.mxu0 %v5288
  %5433 = vmatpush.bf16.msra.mxu0 %v5284
  %5434 = vmatpush.bf16.msra.mxu0 %v5280
  %5435 = vmatpush.bf16.msra.mxu0 %v5276
  %5436 = vmatmul.bf16.gmra.mxu0 %v5044
  %v5437 = vpop.f32.mrf.mxu0
  %v5438 = vadd.f32 %v5419, %v5437
  %v5439 = vpop.f32.mrf.mxu0
  %v5440 = vadd.f32 %v5421, %v5439
  %5441 = vmatmul.bf16.gmra.mxu0 %v5046
  %v5442 = vpop.f32.mrf.mxu0
  %v5443 = vadd.f32 %v5424, %v5442
  %v5444 = vpop.f32.mrf.mxu0
  %v5445 = vadd.f32 %v5426, %v5444
  %5446 = vdwg.mxu0
  %5447 = vmatpush.bf16.msra.mxu0 %v5273
  %5448 = vmatpush.bf16.msra.mxu0 %v5269
  %5449 = vmatpush.bf16.msra.mxu0 %v5265
  %5450 = vmatpush.bf16.msra.mxu0 %v5261
  %5451 = vmatpush.bf16.msra.mxu0 %v5257
  %5452 = vmatpush.bf16.msra.mxu0 %v5253
  %5453 = vmatpush.bf16.msra.mxu0 %v5249
  %5454 = vmatpush.bf16.msra.mxu0 %v5245
  %5455 = vmatmul.bf16.gmra.mxu0 %v5043
  %v5456 = vpop.f32.mrf.mxu0
  %v5457 = vadd.f32 0.0, %v5456
  %v5458 = vpop.f32.mrf.mxu0
  %v5459 = vadd.f32 0.0, %v5458
  %5460 = vmatmul.bf16.gmra.mxu0 %v5045
  %v5461 = vpop.f32.mrf.mxu0
  %v5462 = vadd.f32 0.0, %v5461
  %v5463 = vpop.f32.mrf.mxu0
  %v5464 = vadd.f32 0.0, %v5463
  %5465 = vdwg.mxu0
  %5466 = vmatpush.bf16.msra.mxu0 %v5305
  %5467 = vmatpush.bf16.msra.mxu0 %v5301
  %5468 = vmatpush.bf16.msra.mxu0 %v5297
  %5469 = vmatpush.bf16.msra.mxu0 %v5293
  %5470 = vmatpush.bf16.msra.mxu0 %v5289
  %5471 = vmatpush.bf16.msra.mxu0 %v5285
  %5472 = vmatpush.bf16.msra.mxu0 %v5281
  %5473 = vmatpush.bf16.msra.mxu0 %v5277
  %5474 = vmatmul.bf16.gmra.mxu0 %v5044
  %v5475 = vpop.f32.mrf.mxu0
  %v5476 = vadd.f32 %v5457, %v5475
  %v5477 = vpop.f32.mrf.mxu0
  %v5478 = vadd.f32 %v5459, %v5477
  %5479 = vmatmul.bf16.gmra.mxu0 %v5046
  %v5480 = vpop.f32.mrf.mxu0
  %v5481 = vadd.f32 %v5462, %v5480
  %v5482 = vpop.f32.mrf.mxu0
  %v5483 = vadd.f32 %v5464, %v5482
  %5484 = vdwg.mxu0
  %5485 = vmatpush.bf16.msra.mxu0 %v5274
  %5486 = vmatpush.bf16.msra.mxu0 %v5270
  %5487 = vmatpush.bf16.msra.mxu0 %v5266
  %5488 = vmatpush.bf16.msra.mxu0 %v5262
  %5489 = vmatpush.bf16.msra.mxu0 %v5258
  %5490 = vmatpush.bf16.msra.mxu0 %v5254
  %5491 = vmatpush.bf16.msra.mxu0 %v5250
  %5492 = vmatpush.bf16.msra.mxu0 %v5246
  %5493 = vmatmul.bf16.gmra.mxu0 %v5043
  %v5494 = vpop.f32.mrf.mxu0
  %v5495 = vadd.f32 0.0, %v5494
  %v5496 = vpop.f32.mrf.mxu0
  %v5497 = vadd.f32 0.0, %v5496
  %5498 = vmatmul.bf16.gmra.mxu0 %v5045
  %v5499 = vpop.f32.mrf.mxu0
  %v5500 = vadd.f32 0.0, %v5499
  %v5501 = vpop.f32.mrf.mxu0
  %v5502 = vadd.f32 0.0, %v5501
  %5503 = vdwg.mxu0
  %5504 = vmatpush.bf16.msra.mxu0 %v5306
  %5505 = vmatpush.bf16.msra.mxu0 %v5302
  %5506 = vmatpush.bf16.msra.mxu0 %v5298
  %5507 = vmatpush.bf16.msra.mxu0 %v5294
  %5508 = vmatpush.bf16.msra.mxu0 %v5290
  %5509 = vmatpush.bf16.msra.mxu0 %v5286
  %5510 = vmatpush.bf16.msra.mxu0 %v5282
  %5511 = vmatpush.bf16.msra.mxu0 %v5278
  %5512 = vmatmul.bf16.gmra.mxu0 %v5044
  %v5513 = vpop.f32.mrf.mxu0
  %v5514 = vadd.f32 %v5495, %v5513
  %v5515 = vpop.f32.mrf.mxu0
  %v5516 = vadd.f32 %v5497, %v5515
  %5517 = vmatmul.bf16.gmra.mxu0 %v5046
  %v5518 = vpop.f32.mrf.mxu0
  %v5519 = vadd.f32 %v5500, %v5518
  %v5520 = vpop.f32.mrf.mxu0
  %v5521 = vadd.f32 %v5502, %v5520
  %5522 = vdwg.mxu0
  %v5523 = vadd.f32 %v4839, %v5400
  %v5524 = vadd.f32 %v4877, %v5438
  %v5525 = vadd.f32 %v4915, %v5476
  %v5526 = vadd.f32 %v4953, %v5514
  %v5527 = vadd.f32 %v4841, %v5402
  %v5528 = vadd.f32 %v4879, %v5440
  %v5529 = vadd.f32 %v4917, %v5478
  %v5530 = vadd.f32 %v4955, %v5516
  %v5531 = vadd.f32 %v4844, %v5405
  %v5532 = vadd.f32 %v4882, %v5443
  %v5533 = vadd.f32 %v4920, %v5481
  %v5534 = vadd.f32 %v4958, %v5519
  %v5535 = vadd.f32 %v4846, %v5407
  %v5536 = vadd.f32 %v4884, %v5445
  %v5537 = vadd.f32 %v4922, %v5483
  %v5538 = vadd.f32 %v4960, %v5521
  %v5539 = vmax.f32 %v5523, 0.0
  %v5540 = vmax.f32 %v5524, 0.0
  %v5541 = vmax.f32 %v5525, 0.0
  %v5542 = vmax.f32 %v5526, 0.0
  %v5543 = vmax.f32 %v5527, 0.0
  %v5544 = vmax.f32 %v5528, 0.0
  %v5545 = vmax.f32 %v5529, 0.0
  %v5546 = vmax.f32 %v5530, 0.0
  %v5547 = vmax.f32 %v5531, 0.0
  %v5548 = vmax.f32 %v5532, 0.0
  %v5549 = vmax.f32 %v5533, 0.0
  %v5550 = vmax.f32 %v5534, 0.0
  %v5551 = vmax.f32 %v5535, 0.0
  %v5552 = vmax.f32 %v5536, 0.0
  %v5553 = vmax.f32 %v5537, 0.0
  %v5554 = vmax.f32 %v5538, 0.0
  %v5555 = vmax.f32 %v5539, %v5540
  %v5556 = vmax.f32 %v5543, %v5544
  %v5557 = vmax.f32 %v5547, %v5548
  %v5558 = vmax.f32 %v5551, %v5552
  %v5559 = vmax.f32 %v5541, %v5542
  %v5560 = vmax.f32 %v5545, %v5546
  %v5561 = vmax.f32 %v5549, %v5550
  %v5562 = vmax.f32 %v5553, %v5554
  %v5563 = vmax.f32 %v5555, %v5559
  %v5564 = vmax.f32 %v5556, %v5560
  %v5565 = vmax.f32 %v5557, %v5561
  %v5566 = vmax.f32 %v5558, %v5562
  %v5567 = vmax.f32 %v5563, %v5564
  %v5568 = vpack.c.bf16 %v5567, %v5567
  %v5569 = vld [vmem:[%s3] sm:$0xf]
  %v5570 = vld [vmem:[%s3 + $0x4] sm:$0xf]
  %v5571 = vld [vmem:[%s3 + $0x8] sm:$0xf]
  %v5572 = vld [vmem:[%s3 + $0xc] sm:$0xf]
  %v5573 = vld [vmem:[%s3 + $0x10] sm:$0xf]
  %v5574 = vld [vmem:[%s3 + $0x14] sm:$0xf]
  %v5575 = vld [vmem:[%s3 + $0x18] sm:$0xf]
  %v5576 = vld [vmem:[%s3 + $0x1c] sm:$0xf]
  %v5577 = vld [vmem:[%s3 + $0x20] sm:$0xf]
  %v5578 = vld [vmem:[%s3 + $0x24] sm:$0xf]
  %v5579 = vld [vmem:[%s3 + $0x28] sm:$0xf]
  %v5580 = vld [vmem:[%s3 + $0x2c] sm:$0xf]
  %v5581 = vld [vmem:[%s3 + $0x30] sm:$0xf]
  %v5582 = vld [vmem:[%s3 + $0x34] sm:$0xf]
  %v5583 = vld [vmem:[%s3 + $0x38] sm:$0xf]
  %v5584 = vld [vmem:[%s3 + $0x3c] sm:$0xf]
  %v5585 = vmax.f32 %v5565, %v5566
  %v5586 = vpack.c.bf16 %v5585, %v5585
  %v5587 = vld [vmem:[%s3 + $0x40] sm:$0xf]
  %v5588 = vld [vmem:[%s3 + $0x44] sm:$0xf]
  %v5589 = vld [vmem:[%s3 + $0x48] sm:$0xf]
  %v5590 = vld [vmem:[%s3 + $0x4c] sm:$0xf]
  %v5591 = vld [vmem:[%s3 + $0x50] sm:$0xf]
  %v5592 = vld [vmem:[%s3 + $0x54] sm:$0xf]
  %v5593 = vld [vmem:[%s3 + $0x58] sm:$0xf]
  %v5594 = vld [vmem:[%s3 + $0x5c] sm:$0xf]
  %v5595 = vld [vmem:[%s3 + $0x60] sm:$0xf]
  %v5596 = vld [vmem:[%s3 + $0x64] sm:$0xf]
  %v5597 = vld [vmem:[%s3 + $0x68] sm:$0xf]
  %v5598 = vld [vmem:[%s3 + $0x6c] sm:$0xf]
  %v5599 = vld [vmem:[%s3 + $0x70] sm:$0xf]
  %v5600 = vld [vmem:[%s3 + $0x74] sm:$0xf]
  %v5601 = vld [vmem:[%s3 + $0x78] sm:$0xf]
  %v5602 = vld [vmem:[%s3 + $0x7c] sm:$0xf]
  %v5619 = vunpack.c.l.b16 %v5587
  %v5620 = vunpack.c.l.b16 %v5588
  %v5621 = vunpack.c.l.b16 %v5589
  %v5622 = vunpack.c.l.b16 %v5590
  %v5623 = vunpack.c.l.b16 %v5591
  %v5624 = vunpack.c.l.b16 %v5592
  %v5625 = vunpack.c.l.b16 %v5593
  %v5626 = vunpack.c.l.b16 %v5594
  %v5627 = vunpack.c.l.b16 %v5595
  %v5628 = vunpack.c.l.b16 %v5596
  %v5629 = vunpack.c.l.b16 %v5597
  %v5630 = vunpack.c.l.b16 %v5598
  %v5631 = vunpack.c.l.b16 %v5599
  %v5632 = vunpack.c.l.b16 %v5600
  %v5633 = vunpack.c.l.b16 %v5601
  %v5634 = vunpack.c.l.b16 %v5602
  %v5635 = vpack.c.b16 %v5620, %v5619
  %v5636 = vpack.c.b16 %v5622, %v5621
  %v5637 = vpack.c.b16 %v5624, %v5623
  %v5638 = vpack.c.b16 %v5626, %v5625
  %v5639 = vpack.c.b16 %v5628, %v5627
  %v5640 = vpack.c.b16 %v5630, %v5629
  %v5641 = vpack.c.b16 %v5632, %v5631
  %v5642 = vpack.c.b16 %v5634, %v5633
  %5651 = vmatpush.bf16.msra.mxu0 %v5642
  %5652 = vmatpush.bf16.msra.mxu0 %v5641
  %5653 = vmatpush.bf16.msra.mxu0 %v5640
  %5654 = vmatpush.bf16.msra.mxu0 %v5639
  %5655 = vmatpush.bf16.msra.mxu0 %v5638
  %5656 = vmatpush.bf16.msra.mxu0 %v5637
  %5657 = vmatpush.bf16.msra.mxu0 %v5636
  %5658 = vmatpush.bf16.msra.mxu0 %v5635
  %5659 = vmatmul.bf16.gmra.mxu0 %v5586
  %v5660 = vpop.f32.mrf.mxu0
  %v5661 = vadd.f32 0.0, %v5660
  %v5662 = vpop.f32.mrf.mxu0
  %5663 = vdwg.mxu0
  %v5680 = vunpack.c.l.b16 %v5569
  %v5681 = vunpack.c.l.b16 %v5570
  %v5682 = vunpack.c.l.b16 %v5571
  %v5683 = vunpack.c.l.b16 %v5572
  %v5684 = vunpack.c.l.b16 %v5573
  %v5685 = vunpack.c.l.b16 %v5574
  %v5686 = vunpack.c.l.b16 %v5575
  %v5687 = vunpack.c.l.b16 %v5576
  %v5688 = vunpack.c.l.b16 %v5577
  %v5689 = vunpack.c.l.b16 %v5578
  %v5690 = vunpack.c.l.b16 %v5579
  %v5691 = vunpack.c.l.b16 %v5580
  %v5692 = vunpack.c.l.b16 %v5581
  %v5693 = vunpack.c.l.b16 %v5582
  %v5694 = vunpack.c.l.b16 %v5583
  %v5695 = vunpack.c.l.b16 %v5584
  %v5696 = vpack.c.b16 %v5681, %v5680
  %v5697 = vpack.c.b16 %v5683, %v5682
  %v5698 = vpack.c.b16 %v5685, %v5684
  %v5699 = vpack.c.b16 %v5687, %v5686
  %v5700 = vpack.c.b16 %v5689, %v5688
  %v5701 = vpack.c.b16 %v5691, %v5690
  %v5702 = vpack.c.b16 %v5693, %v5692
  %v5703 = vpack.c.b16 %v5695, %v5694
  %5712 = vmatpush.bf16.msra.mxu0 %v5703
  %5713 = vmatpush.bf16.msra.mxu0 %v5702
  %5714 = vmatpush.bf16.msra.mxu0 %v5701
  %5715 = vmatpush.bf16.msra.mxu0 %v5700
  %5716 = vmatpush.bf16.msra.mxu0 %v5699
  %5717 = vmatpush.bf16.msra.mxu0 %v5698
  %5718 = vmatpush.bf16.msra.mxu0 %v5697
  %5719 = vmatpush.bf16.msra.mxu0 %v5696
  %5720 = vmatmul.bf16.gmra.mxu0 %v5568
  %v5721 = vpop.f32.mrf.mxu0
  %v5722 = vadd.f32 %v5661, %v5721
  %v5723 = vpop.f32.mrf.mxu0
  %5724 = vdwg.mxu0
  %vm5725 = vcmask 15360
  %5726 = vst.msk [vmem:[%s4] sm:$0xff] %vm5725, %v5722
  // Predicated region
  $region18: #{_forward_impl.1} parent=0 // pred_check
    _
  $region19: #{_forward_impl.1} parent=0 // pred_check_branch
    %5728 = sbr.rel (0) target = $region21
  $region20: #{_forward_impl.1} parent=0 // pred_region
    _
  $region21: #{_forward_impl.1} parent=0 // pred_fallthru
    _
  // Predicated region
  $region22: #{_forward_impl.1} parent=0 // pred_check
    _
  $region23: #{_forward_impl.1} parent=0 // pred_check_branch
    %5730 = sbr.rel (0) target = $region25
  $region24: #{_forward_impl.1} parent=0 // pred_region
    _
  $region25: #{_forward_impl.1} parent=0 // pred_fallthru
    _

</llo_original>
